<compile_context>
chip_gen: v7x
topology: tpu7x:2x2x1
jax: 0.10.0
libtpu: 0.0.40
codegen_flags: <defaults>
</compile_context>

<pallas_src>
import functools
import math

import jax
import jax.numpy as jnp
from jax import lax
from jax.experimental import pallas as pl
from jax.experimental.pallas import tpu as pltpu


def _round_up(x, m):
    return (x + m - 1) // m * m


def _dcn_kernel(x2_ref, crd_ref, w_ref, b_ref, o_ref, cols_ref, *,
                H, W, KK, Cin_p, TQ):
    """One (batch, query-tile) step.

    x2_ref   : (1, W*Cin_p, H)   bf16   x re-laid as row = w*Cin_p + c, col = h
    crd_ref  : (1, 3, KK, TQ)    f32    stacked [py, px, mask] for this tile
    w_ref    : (Cout, KK*Cin_p)  bf16   conv weights (tap-major, channel-minor)
    b_ref    : (Cout, 1)         f32    bias
    o_ref    : (1, Cout, TQ)     f32    output tile (queries in lanes)
    cols_ref : (KK*Cin_p, TQ)    bf16   scratch: per-tap sampled channels
    """
    x2 = x2_ref[0]                                 # (W*Cin_p, H) bf16

    py = crd_ref[0, 0]                             # (KK, TQ) absolute y coords
    px = crd_ref[0, 1]                             # (KK, TQ) absolute x coords
    m = crd_ref[0, 2]                              # (KK, TQ) modulation mask

    # Clamp so int32 index math stays safe even for huge offsets; values
    # outside [-1, H] / [-1, W] contribute exactly 0 anyway (zero padding).
    py = jnp.clip(py, -1.0, float(H))
    px = jnp.clip(px, -1.0, float(W))

    h0f = jnp.floor(py)
    w0f = jnp.floor(px)
    lh = py - h0f                                  # (KK, TQ)
    lw = px - w0f
    h0 = h0f.astype(jnp.int32)
    w0 = w0f.astype(jnp.int32)

    # Separable per-corner weights.  Validity is implicit: an out-of-range
    # h0/w0 matches no row/column of the one-hot.  The modulation mask folds
    # into the horizontal factor.  Coefficients stay f32 (v5e-friendly) and
    # only A_k is cast to bf16 right before the MXU.
    wy0 = 1.0 - lh
    wy1 = lh
    wx0 = (1.0 - lw) * m
    wx1 = lw * m

    h_iota = lax.broadcasted_iota(jnp.int32, (H, TQ), 0)
    w_iota = lax.broadcasted_iota(jnp.int32, (W, TQ), 0)

    for k in range(KK):                            # KK is small & static
        h0k = h0[k:k + 1]                          # (1, TQ)
        w0k = w0[k:k + 1]
        # Weighted vertical / horizontal one-hots: (H, TQ) and (W, TQ).
        a_k = (jnp.where(h_iota == h0k, wy0[k:k + 1], 0.0)
               + jnp.where(h_iota == h0k + 1, wy1[k:k + 1], 0.0))
        b_k = (jnp.where(w_iota == w0k, wx0[k:k + 1], 0.0)
               + jnp.where(w_iota == w0k + 1, wx1[k:k + 1], 0.0))
        # Stage 1 (MXU): contract over H.  (W*Cin_p, H) @ (H, TQ) -> f32.
        t_k = jnp.dot(x2, a_k.astype(jnp.bfloat16),
                      preferred_element_type=jnp.float32)
        # Stage 2 (VPU): horizontal weights * mask, reduce over the leading W
        # axis (pure elementwise adds across (Cin_p, TQ) slabs, no XLU).
        t3 = t_k.reshape(W, Cin_p, TQ) * b_k.reshape(W, 1, TQ)
        col = jnp.sum(t3, axis=0)                  # (Cin_p, TQ) f32
        # Static, 16-row-aligned bf16 scratch write (Cin_p is a multiple of 16).
        cols_ref[k * Cin_p:(k + 1) * Cin_p, :] = col.astype(jnp.bfloat16)

    # Single conv contraction over K = KK*Cin_p (bf16 operands, f32 acc).
    out = jnp.dot(w_ref[...], cols_ref[...], preferred_element_type=jnp.float32)
    o_ref[0] = (out + b_ref[...]).astype(o_ref.dtype)


def dcn_v2_forward(x, offset, mask, weight, bias, stride, padding, dilation,
                   deformable_groups=1, tq=256):
    """Modulated deformable conv v2 forward (torchvision.ops.deform_conv2d).

    `tq` is the output-pixel tile (lanes).  Guidance: 256-512 on v5e/v6e
    (128 MiB VMEM), <=256 on v7x (64 MiB VMEM per TensorCore).
    """
    # TODO(synk): only deformable_groups == 1 is implemented in the kernel.
    assert deformable_groups == 1, "deformable_groups > 1 not implemented"
    B, Cin, H, W = x.shape
    Cout, Cin_w, Kh, Kw = weight.shape
    assert Cin_w == Cin
    sh, sw = stride
    ph, pw = padding
    dh, dw = dilation
    KK = Kh * Kw
    Ho = (H + 2 * ph - dh * (Kh - 1) - 1) // sh + 1
    Wo = (W + 2 * pw - dw * (Kw - 1) - 1) // sw + 1
    HoWo = Ho * Wo
    assert offset.shape == (B, 2 * deformable_groups * KK, Ho, Wo)
    assert mask.shape == (B, deformable_groups * KK, Ho, Wo)

    f32 = jnp.float32
    bf16 = jnp.bfloat16

    # Query tile: multiple of 128 so output stores are lane-dense.
    TQ = max(128, min(_round_up(tq, 128), _round_up(HoWo, 128)))
    n_tiles = -(-HoWo // TQ)
    HoWo_p = n_tiles * TQ
    # bf16 packs 2 rows per sublane -> native tile is (16, 128); pad channels
    # to 16 so x slabs and scratch writes stay on native tiles.
    Cin_p = _round_up(Cin, 16)

    # ---- layout glue: NCHW -> (width*channels)-in-sublanes / H-in-lanes ----
    x_l = x.astype(f32)
    if Cin_p != Cin:
        x_l = jnp.pad(x_l, ((0, 0), (0, Cin_p - Cin), (0, 0), (0, 0)))
    # x2[b, w*Cin_p + c, h] = x[b, c, h, w]
    x2 = jnp.transpose(x_l, (0, 3, 1, 2)).reshape(B, W * Cin_p, H).astype(bf16)

    def pad_q(a):
        if HoWo_p == HoWo:
            return a
        pad = [(0, 0)] * (a.ndim - 1) + [(0, HoWo_p - HoWo)]
        return jnp.pad(a, pad)

    # Base (undeformed) sampling grid per kernel tap, added in the wrapper so
    # the kernel gets one fused coordinate operand instead of five tiny DMAs.
    khs = jnp.repeat(jnp.arange(Kh), Kw)
    kws = jnp.tile(jnp.arange(Kw), Kh)
    base_y = ((jnp.arange(Ho) * sh - ph)[None, :, None]
              + (khs * dh)[:, None, None])
    base_x = ((jnp.arange(Wo) * sw - pw)[None, None, :]
              + (kws * dw)[:, None, None])
    base_y = jnp.broadcast_to(base_y, (KK, Ho, Wo)).reshape(KK, HoWo).astype(f32)
    base_x = jnp.broadcast_to(base_x, (KK, Ho, Wo)).reshape(KK, HoWo).astype(f32)

    offy = offset[:, 0::2].reshape(B, KK, HoWo).astype(f32)   # y offsets
    offx = offset[:, 1::2].reshape(B, KK, HoWo).astype(f32)   # x offsets
    msk = mask.reshape(B, KK, HoWo).astype(f32)

    py = pad_q(base_y[None] + offy)
    px = pad_q(base_x[None] + offx)
    msk_p = pad_q(msk)                      # padded queries: mask=0 -> no work
    coords = jnp.stack([py, px, msk_p], axis=1)        # (B, 3, KK, HoWo_p)

    # weight[co, ci, kh, kw] -> (Cout, KK*Cin_p), tap-major / channel-minor,
    # bf16 so the conv contraction runs at native MXU rate.
    w_p = weight.astype(f32)
    if Cin_p != Cin:
        w_p = jnp.pad(w_p, ((0, 0), (0, Cin_p - Cin), (0, 0), (0, 0)))
    w_all = jnp.transpose(w_p, (0, 2, 3, 1)).reshape(Cout, KK * Cin_p).astype(bf16)
    bvec = bias.reshape(Cout, 1).astype(f32)

    kernel = functools.partial(_dcn_kernel, H=H, W=W, KK=KK, Cin_p=Cin_p, TQ=TQ)

    flops = (2 * B * n_tiles * KK * Cin_p * H * W * TQ        # gather matmuls
             + 2 * B * n_tiles * Cout * KK * Cin_p * TQ)      # conv contraction
    bytes_accessed = int(x2.size * 2 + coords.size * 4
                         + w_all.size * 2 + bvec.size * 4
                         + B * Cout * HoWo_p * 4)

    # VMEM budget: double-buffered operands + scratch + per-tap intermediates.
    # TODO(synk): on v7x, single-buffer x2 (constant block across the inner
    # tile axis) to reclaim Cin_p*W*H*2 bytes of headroom.
    vmem_est = (2 * (W * Cin_p * H) * 2          # x2 (bf16, double-buffered)
                + 2 * (3 * KK * TQ) * 4          # coords
                + 2 * (Cout * KK * Cin_p) * 2    # weight
                + 2 * (Cout * TQ) * 4            # output tile
                + KK * Cin_p * TQ * 2            # cols scratch
                + W * Cin_p * TQ * 4             # t_k intermediate
                + 8 * (H + W + KK) * TQ * 4)     # one-hots / coefficients
    vmem_limit = int(min(96 * 1024 * 1024, max(32 * 1024 * 1024, 2 * vmem_est)))

    out = pl.pallas_call(
        kernel,
        out_shape=jax.ShapeDtypeStruct((B, Cout, HoWo_p), f32),
        grid_spec=pltpu.PrefetchScalarGridSpec(
            num_scalar_prefetch=0,
            grid=(B, n_tiles),          # q-tile axis innermost: x2 stays resident
            in_specs=[
                pl.BlockSpec((1, W * Cin_p, H), lambda b, t: (b, 0, 0)),   # x2
                pl.BlockSpec((1, 3, KK, TQ), lambda b, t: (b, 0, 0, t)),   # coords
                pl.BlockSpec((Cout, KK * Cin_p), lambda b, t: (0, 0)),     # weight
                pl.BlockSpec((Cout, 1), lambda b, t: (0, 0)),              # bias
            ],
            out_specs=pl.BlockSpec((1, Cout, TQ), lambda b, t: (b, 0, t)),
            scratch_shapes=[pltpu.VMEM((KK * Cin_p, TQ), bf16)],
        ),
        compiler_params=pltpu.CompilerParams(
            dimension_semantics=("parallel", "parallel"),
            vmem_limit_bytes=vmem_limit),
        cost_estimate=pl.CostEstimate(flops=flops, transcendentals=0,
                                      bytes_accessed=bytes_accessed),
    )(x2, coords, w_all, bvec)

    return out[:, :, :HoWo].reshape(B, Cout, Ho, Wo)


def dcn_v2_reference(x, offset, mask, weight, bias, stride, padding, dilation):
    """Pure-JAX reference (gather-based, f32) for validation."""
    B, Cin, H, W = x.shape
    Cout, _, Kh, Kw = weight.shape
    sh, sw = stride
    ph, pw = padding
    dh, dw = dilation
    KK = Kh * Kw
    Ho = (H + 2 * ph - dh * (Kh - 1) - 1) // sh + 1
    Wo = (W + 2 * pw - dw * (Kw - 1) - 1) // sw + 1

    offy = offset[:, 0::2].astype(jnp.float32)   # (B, KK, Ho, Wo)
    offx = offset[:, 1::2].astype(jnp.float32)
    msk = mask.astype(jnp.float32)

    khs = jnp.repeat(jnp.arange(Kh), Kw)
    kws = jnp.tile(jnp.arange(Kw), Kh)
    base_y = (jnp.arange(Ho) * sh - ph)[None, :, None] + (khs * dh)[:, None, None]
    base_x = (jnp.arange(Wo) * sw - pw)[None, None, :] + (kws * dw)[:, None, None]
    py = base_y[None].astype(jnp.float32) + offy
    px = base_x[None].astype(jnp.float32) + offx

    h0 = jnp.floor(py)
    w0 = jnp.floor(px)
    lh = py - h0
    lw = px - w0
    xf = x.reshape(B, Cin, H * W).astype(jnp.float32)

    def corner(hc, wc, wt):
        valid = (hc >= 0) & (hc < H) & (wc >= 0) & (wc < W)
        hcc = jnp.clip(hc, 0, H - 1).astype(jnp.int32)
        wcc = jnp.clip(wc, 0, W - 1).astype(jnp.int32)
        idx = (hcc * W + wcc).reshape(B, -1)
        vals = jax.vmap(lambda xb, ib: xb[:, ib])(xf, idx)   # (B, Cin, KK*Ho*Wo)
        vals = vals.reshape(B, Cin, KK, Ho, Wo)
        return vals * (wt * valid.astype(jnp.float32))[:, None]

    sampled = (corner(h0, w0, (1 - lh) * (1 - lw)) +
               corner(h0, w0 + 1, (1 - lh) * lw) +
               corner(h0 + 1, w0, lh * (1 - lw)) +
               corner(h0 + 1, w0 + 1, lh * lw))
    sampled = sampled * msk[:, None]
    wflat = weight.reshape(Cout, Cin, KK).astype(jnp.float32)
    return jnp.einsum('ock,bckhw->bohw', wflat, sampled) + bias[None, :, None, None]


if __name__ == "__main__":
    B, Cin, H, W = 2, 4, 16, 16
    Cout = 8
    Kh = Kw = 3
    stride = (1, 1)
    padding = (1, 1)
    dilation = (1, 1)
    dg = 1
    KK = Kh * Kw
    Ho = (H + 2 * padding[0] - dilation[0] * (Kh - 1) - 1) // stride[0] + 1
    Wo = (W + 2 * padding[1] - dilation[1] * (Kw - 1) - 1) // stride[1] + 1

    key = jax.random.PRNGKey(0)
    k1, k2, k3, k4 = jax.random.split(key, 4)
    x = jax.random.normal(k1, (B, Cin, H, W), jnp.float32)
    offset = 2.0 * jax.random.normal(k2, (B, 2 * dg * KK, Ho, Wo), jnp.float32)
    mask = jax.nn.sigmoid(jax.random.normal(k3, (B, dg * KK, Ho, Wo), jnp.float32))

    # Deterministic parameter init matching DCNv2.reset_parameters().
    n = Cin * Kh * Kw
    stdv = 1.0 / math.sqrt(n)
    weight = jax.random.uniform(k4, (Cout, Cin, Kh, Kw), jnp.float32, -stdv, stdv)
    bias = jnp.zeros((Cout,), jnp.float32)

    out = dcn_v2_forward(x, offset, mask, weight, bias,
                         stride, padding, dilation, dg, tq=256)
    out = jax.block_until_ready(out)

    ref = dcn_v2_reference(x, offset, mask, weight, bias,
                           stride, padding, dilation)
    assert out.shape == ref.shape == (B, Cout, Ho, Wo)
    err = float(jnp.max(jnp.abs(out - ref)))
    # Tolerance accounts for the bf16 gather/conv matmul operands (f32 acc).
    if not err < 5e-2:
        raise AssertionError(f"kernel/reference mismatch: max abs err = {err}")
    print("KERNEL_OK")
</pallas_src>

<mosaic_0001>
module attributes {stable_mosaic.version = 11 : i64} {
  func.func @_dcn_kernel(%arg0: i32, %arg1: i32, %arg2: memref<1x256x16xbf16, #tpu.memory_space<vmem>>, %arg3: memref<1x3x9x256xf32, #tpu.memory_space<vmem>>, %arg4: memref<8x144xbf16, #tpu.memory_space<vmem>>, %arg5: memref<8x1xf32, #tpu.memory_space<vmem>>, %arg6: memref<1x8x256xf32, #tpu.memory_space<vmem>>, %arg7: memref<144x256xbf16, #tpu.memory_space<vmem>>) attributes {dimension_semantics = [#tpu.dimension_semantics<parallel>, #tpu.dimension_semantics<parallel>], iteration_bounds = array<i64: 2, 1>, scalar_prefetch = 0 : i64, scratch_operands = 1 : i64, tpu.core_type = #tpu.core_type<tc>, window_params = [{transform_indices = @transform_0, window_bounds = array<i64: 1, 256, 16>}, {transform_indices = @transform_1, window_bounds = array<i64: 1, 3, 9, 256>}, {pipeline_mode = #tpu.pipeline_mode<synchronous>, transform_indices = @transform_2, window_bounds = array<i64: 8, 144>}, {pipeline_mode = #tpu.pipeline_mode<synchronous>, transform_indices = @transform_3, window_bounds = array<i64: 8, 1>}, {transform_indices = @transform_4, window_bounds = array<i64: 1, 8, 256>}]} {
    %c0 = arith.constant 0 : index
    %c0_0 = arith.constant 0 : index
    %c0_1 = arith.constant 0 : index
    %0 = vector.load %arg2[%c0, %c0_0, %c0_1] : memref<1x256x16xbf16, #tpu.memory_space<vmem>>, vector<1x256x16xbf16>
    %1 = vector.shape_cast %0 : vector<1x256x16xbf16> to vector<256x16xbf16>
    %c0_2 = arith.constant 0 : index
    %c0_3 = arith.constant 0 : index
    %c0_4 = arith.constant 0 : index
    %c0_5 = arith.constant 0 : index
    %2 = vector.load %arg3[%c0_2, %c0_3, %c0_4, %c0_5] : memref<1x3x9x256xf32, #tpu.memory_space<vmem>>, vector<1x1x9x256xf32>
    %3 = vector.shape_cast %2 : vector<1x1x9x256xf32> to vector<9x256xf32>
    %c0_6 = arith.constant 0 : index
    %c1 = arith.constant 1 : index
    %c0_7 = arith.constant 0 : index
    %c0_8 = arith.constant 0 : index
    %4 = vector.load %arg3[%c0_6, %c1, %c0_7, %c0_8] : memref<1x3x9x256xf32, #tpu.memory_space<vmem>>, vector<1x1x9x256xf32>
    %5 = vector.shape_cast %4 : vector<1x1x9x256xf32> to vector<9x256xf32>
    %c0_9 = arith.constant 0 : index
    %c2 = arith.constant 2 : index
    %c0_10 = arith.constant 0 : index
    %c0_11 = arith.constant 0 : index
    %6 = vector.load %arg3[%c0_9, %c2, %c0_10, %c0_11] : memref<1x3x9x256xf32, #tpu.memory_space<vmem>>, vector<1x1x9x256xf32>
    %7 = vector.shape_cast %6 : vector<1x1x9x256xf32> to vector<9x256xf32>
    %cst = arith.constant -1.000000e+00 : f32
    %cst_12 = arith.constant 1.600000e+01 : f32
    %8 = vector.broadcast %cst : f32 to vector<9x256xf32>
    %9 = arith.maximumf %8, %3 : vector<9x256xf32>
    %10 = vector.broadcast %cst_12 : f32 to vector<9x256xf32>
    %11 = arith.minimumf %10, %9 : vector<9x256xf32>
    %cst_13 = arith.constant -1.000000e+00 : f32
    %cst_14 = arith.constant 1.600000e+01 : f32
    %12 = vector.broadcast %cst_13 : f32 to vector<9x256xf32>
    %13 = arith.maximumf %12, %5 : vector<9x256xf32>
    %14 = vector.broadcast %cst_14 : f32 to vector<9x256xf32>
    %15 = arith.minimumf %14, %13 : vector<9x256xf32>
    %16 = math.floor %11 : vector<9x256xf32>
    %17 = math.floor %15 : vector<9x256xf32>
    %18 = arith.subf %11, %16 : vector<9x256xf32>
    %19 = arith.subf %15, %17 : vector<9x256xf32>
    %20 = arith.fptosi %16 : vector<9x256xf32> to vector<9x256xi32>
    %21 = arith.fptosi %17 : vector<9x256xf32> to vector<9x256xi32>
    %cst_15 = arith.constant 1.000000e+00 : f32
    %22 = vector.broadcast %cst_15 : f32 to vector<9x256xf32>
    %23 = arith.subf %22, %18 : vector<9x256xf32>
    %cst_16 = arith.constant 1.000000e+00 : f32
    %24 = vector.broadcast %cst_16 : f32 to vector<9x256xf32>
    %25 = arith.subf %24, %19 : vector<9x256xf32>
    %26 = arith.mulf %25, %7 : vector<9x256xf32>
    %27 = arith.mulf %19, %7 : vector<9x256xf32>
    %28 = tpu.iota {dimensions = array<i32: 0>} : vector<16x256xi32>
    %29 = tpu.iota {dimensions = array<i32: 0>} : vector<16x256xi32>
    %30 = vector.extract_strided_slice %20 {offsets = [0, 0], sizes = [1, 256], strides = [1, 1]} : vector<9x256xi32> to vector<1x256xi32>
    %31 = vector.extract_strided_slice %21 {offsets = [0, 0], sizes = [1, 256], strides = [1, 1]} : vector<9x256xi32> to vector<1x256xi32>
    %32 = vector.broadcast %30 : vector<1x256xi32> to vector<16x256xi32>
    %33 = arith.cmpi eq, %28, %32 : vector<16x256xi32>
    %34 = vector.extract_strided_slice %23 {offsets = [0, 0], sizes = [1, 256], strides = [1, 1]} : vector<9x256xf32> to vector<1x256xf32>
    %cst_17 = arith.constant 0.000000e+00 : f32
    %35 = vector.shape_cast %34 : vector<1x256xf32> to vector<1x256xf32>
    %36 = vector.broadcast %35 : vector<1x256xf32> to vector<16x256xf32>
    %37 = vector.broadcast %cst_17 : f32 to vector<16x256xf32>
    %38 = arith.select %33, %36, %37 : vector<16x256xi1>, vector<16x256xf32>
    %c1_i32 = arith.constant 1 : i32
    %39 = vector.broadcast %c1_i32 : i32 to vector<1x256xi32>
    %40 = arith.addi %30, %39 : vector<1x256xi32>
    %41 = vector.broadcast %40 : vector<1x256xi32> to vector<16x256xi32>
    %42 = arith.cmpi eq, %28, %41 : vector<16x256xi32>
    %43 = vector.extract_strided_slice %18 {offsets = [0, 0], sizes = [1, 256], strides = [1, 1]} : vector<9x256xf32> to vector<1x256xf32>
    %cst_18 = arith.constant 0.000000e+00 : f32
    %44 = vector.shape_cast %43 : vector<1x256xf32> to vector<1x256xf32>
    %45 = vector.broadcast %44 : vector<1x256xf32> to vector<16x256xf32>
    %46 = vector.broadcast %cst_18 : f32 to vector<16x256xf32>
    %47 = arith.select %42, %45, %46 : vector<16x256xi1>, vector<16x256xf32>
    %48 = arith.addf %38, %47 : vector<16x256xf32>
    %49 = vector.broadcast %31 : vector<1x256xi32> to vector<16x256xi32>
    %50 = arith.cmpi eq, %29, %49 : vector<16x256xi32>
    %51 = vector.extract_strided_slice %26 {offsets = [0, 0], sizes = [1, 256], strides = [1, 1]} : vector<9x256xf32> to vector<1x256xf32>
    %cst_19 = arith.constant 0.000000e+00 : f32
    %52 = vector.shape_cast %51 : vector<1x256xf32> to vector<1x256xf32>
    %53 = vector.broadcast %52 : vector<1x256xf32> to vector<16x256xf32>
    %54 = vector.broadcast %cst_19 : f32 to vector<16x256xf32>
    %55 = arith.select %50, %53, %54 : vector<16x256xi1>, vector<16x256xf32>
    %c1_i32_20 = arith.constant 1 : i32
    %56 = vector.broadcast %c1_i32_20 : i32 to vector<1x256xi32>
    %57 = arith.addi %31, %56 : vector<1x256xi32>
    %58 = vector.broadcast %57 : vector<1x256xi32> to vector<16x256xi32>
    %59 = arith.cmpi eq, %29, %58 : vector<16x256xi32>
    %60 = vector.extract_strided_slice %27 {offsets = [0, 0], sizes = [1, 256], strides = [1, 1]} : vector<9x256xf32> to vector<1x256xf32>
    %cst_21 = arith.constant 0.000000e+00 : f32
    %61 = vector.shape_cast %60 : vector<1x256xf32> to vector<1x256xf32>
    %62 = vector.broadcast %61 : vector<1x256xf32> to vector<16x256xf32>
    %63 = vector.broadcast %cst_21 : f32 to vector<16x256xf32>
    %64 = arith.select %59, %62, %63 : vector<16x256xi1>, vector<16x256xf32>
    %65 = arith.addf %55, %64 : vector<16x256xf32>
    %66 = arith.truncf %48 : vector<16x256xf32> to vector<16x256xbf16>
    %cst_22 = arith.constant dense<0.000000e+00> : vector<256x256xf32>
    %67 = tpu.matmul %1, %66, %cst_22 {dimension_numbers = #tpu.dot_dimension_numbers<[1], [0], [0], [1], [0, 0, 1, 1], [], []>} : vector<256x16xbf16>, vector<16x256xbf16>, vector<256x256xf32> -> vector<256x256xf32>
    %68 = vector.shape_cast %67 : vector<256x256xf32> to vector<16x16x256xf32>
    %69 = vector.shape_cast %65 : vector<16x256xf32> to vector<16x1x256xf32>
    %70 = vector.broadcast %69 : vector<16x1x256xf32> to vector<16x16x256xf32>
    %71 = arith.mulf %68, %70 : vector<16x16x256xf32>
    %cst_23 = arith.constant dense<0.000000e+00> : vector<16x256xf32>
    %72 = vector.multi_reduction <add>, %71, %cst_23 [0] : vector<16x16x256xf32> to vector<16x256xf32>
    %73 = arith.truncf %72 : vector<16x256xf32> to vector<16x256xbf16>
    %c0_24 = arith.constant 0 : index
    %c0_25 = arith.constant 0 : index
    %74 = vector.load %arg7[%c0_24, %c0_25] : memref<144x256xbf16, #tpu.memory_space<vmem>>, vector<16x256xbf16>
    tpu.vector_store %arg7[%c0_24, %c0_25], %73 {strides = array<i32>} : memref<144x256xbf16, #tpu.memory_space<vmem>>, vector<16x256xbf16>,
    %75 = vector.extract_strided_slice %20 {offsets = [1, 0], sizes = [1, 256], strides = [1, 1]} : vector<9x256xi32> to vector<1x256xi32>
    %76 = vector.extract_strided_slice %21 {offsets = [1, 0], sizes = [1, 256], strides = [1, 1]} : vector<9x256xi32> to vector<1x256xi32>
    %77 = vector.broadcast %75 : vector<1x256xi32> to vector<16x256xi32>
    %78 = arith.cmpi eq, %28, %77 : vector<16x256xi32>
    %79 = vector.extract_strided_slice %23 {offsets = [1, 0], sizes = [1, 256], strides = [1, 1]} : vector<9x256xf32> to vector<1x256xf32>
    %cst_26 = arith.constant 0.000000e+00 : f32
    %80 = vector.shape_cast %79 : vector<1x256xf32> to vector<1x256xf32>
    %81 = vector.broadcast %80 : vector<1x256xf32> to vector<16x256xf32>
    %82 = vector.broadcast %cst_26 : f32 to vector<16x256xf32>
    %83 = arith.select %78, %81, %82 : vector<16x256xi1>, vector<16x256xf32>
    %c1_i32_27 = arith.constant 1 : i32
    %84 = vector.broadcast %c1_i32_27 : i32 to vector<1x256xi32>
    %85 = arith.addi %75, %84 : vector<1x256xi32>
    %86 = vector.broadcast %85 : vector<1x256xi32> to vector<16x256xi32>
    %87 = arith.cmpi eq, %28, %86 : vector<16x256xi32>
    %88 = vector.extract_strided_slice %18 {offsets = [1, 0], sizes = [1, 256], strides = [1, 1]} : vector<9x256xf32> to vector<1x256xf32>
    %cst_28 = arith.constant 0.000000e+00 : f32
    %89 = vector.shape_cast %88 : vector<1x256xf32> to vector<1x256xf32>
    %90 = vector.broadcast %89 : vector<1x256xf32> to vector<16x256xf32>
    %91 = vector.broadcast %cst_28 : f32 to vector<16x256xf32>
    %92 = arith.select %87, %90, %91 : vector<16x256xi1>, vector<16x256xf32>
    %93 = arith.addf %83, %92 : vector<16x256xf32>
    %94 = vector.broadcast %76 : vector<1x256xi32> to vector<16x256xi32>
    %95 = arith.cmpi eq, %29, %94 : vector<16x256xi32>
    %96 = vector.extract_strided_slice %26 {offsets = [1, 0], sizes = [1, 256], strides = [1, 1]} : vector<9x256xf32> to vector<1x256xf32>
    %cst_29 = arith.constant 0.000000e+00 : f32
    %97 = vector.shape_cast %96 : vector<1x256xf32> to vector<1x256xf32>
    %98 = vector.broadcast %97 : vector<1x256xf32> to vector<16x256xf32>
    %99 = vector.broadcast %cst_29 : f32 to vector<16x256xf32>
    %100 = arith.select %95, %98, %99 : vector<16x256xi1>, vector<16x256xf32>
    %c1_i32_30 = arith.constant 1 : i32
    %101 = vector.broadcast %c1_i32_30 : i32 to vector<1x256xi32>
    %102 = arith.addi %76, %101 : vector<1x256xi32>
    %103 = vector.broadcast %102 : vector<1x256xi32> to vector<16x256xi32>
    %104 = arith.cmpi eq, %29, %103 : vector<16x256xi32>
    %105 = vector.extract_strided_slice %27 {offsets = [1, 0], sizes = [1, 256], strides = [1, 1]} : vector<9x256xf32> to vector<1x256xf32>
    %cst_31 = arith.constant 0.000000e+00 : f32
    %106 = vector.shape_cast %105 : vector<1x256xf32> to vector<1x256xf32>
    %107 = vector.broadcast %106 : vector<1x256xf32> to vector<16x256xf32>
    %108 = vector.broadcast %cst_31 : f32 to vector<16x256xf32>
    %109 = arith.select %104, %107, %108 : vector<16x256xi1>, vector<16x256xf32>
    %110 = arith.addf %100, %109 : vector<16x256xf32>
    %111 = arith.truncf %93 : vector<16x256xf32> to vector<16x256xbf16>
    %cst_32 = arith.constant dense<0.000000e+00> : vector<256x256xf32>
    %112 = tpu.matmul %1, %111, %cst_32 {dimension_numbers = #tpu.dot_dimension_numbers<[1], [0], [0], [1], [0, 0, 1, 1], [], []>} : vector<256x16xbf16>, vector<16x256xbf16>, vector<256x256xf32> -> vector<256x256xf32>
    %113 = vector.shape_cast %112 : vector<256x256xf32> to vector<16x16x256xf32>
    %114 = vector.shape_cast %110 : vector<16x256xf32> to vector<16x1x256xf32>
    %115 = vector.broadcast %114 : vector<16x1x256xf32> to vector<16x16x256xf32>
    %116 = arith.mulf %113, %115 : vector<16x16x256xf32>
    %cst_33 = arith.constant dense<0.000000e+00> : vector<16x256xf32>
    %117 = vector.multi_reduction <add>, %116, %cst_33 [0] : vector<16x16x256xf32> to vector<16x256xf32>
    %118 = arith.truncf %117 : vector<16x256xf32> to vector<16x256xbf16>
    %c16 = arith.constant 16 : index
    %c0_34 = arith.constant 0 : index
    %119 = vector.load %arg7[%c16, %c0_34] : memref<144x256xbf16, #tpu.memory_space<vmem>>, vector<16x256xbf16>
    tpu.vector_store %arg7[%c16, %c0_34], %118 {strides = array<i32>} : memref<144x256xbf16, #tpu.memory_space<vmem>>, vector<16x256xbf16>,
    %120 = vector.extract_strided_slice %20 {offsets = [2, 0], sizes = [1, 256], strides = [1, 1]} : vector<9x256xi32> to vector<1x256xi32>
    %121 = vector.extract_strided_slice %21 {offsets = [2, 0], sizes = [1, 256], strides = [1, 1]} : vector<9x256xi32> to vector<1x256xi32>
    %122 = vector.broadcast %120 : vector<1x256xi32> to vector<16x256xi32>
    %123 = arith.cmpi eq, %28, %122 : vector<16x256xi32>
    %124 = vector.extract_strided_slice %23 {offsets = [2, 0], sizes = [1, 256], strides = [1, 1]} : vector<9x256xf32> to vector<1x256xf32>
    %cst_35 = arith.constant 0.000000e+00 : f32
    %125 = vector.shape_cast %124 : vector<1x256xf32> to vector<1x256xf32>
    %126 = vector.broadcast %125 : vector<1x256xf32> to vector<16x256xf32>
    %127 = vector.broadcast %cst_35 : f32 to vector<16x256xf32>
    %128 = arith.select %123, %126, %127 : vector<16x256xi1>, vector<16x256xf32>
    %c1_i32_36 = arith.constant 1 : i32
    %129 = vector.broadcast %c1_i32_36 : i32 to vector<1x256xi32>
    %130 = arith.addi %120, %129 : vector<1x256xi32>
    %131 = vector.broadcast %130 : vector<1x256xi32> to vector<16x256xi32>
    %132 = arith.cmpi eq, %28, %131 : vector<16x256xi32>
    %133 = vector.extract_strided_slice %18 {offsets = [2, 0], sizes = [1, 256], strides = [1, 1]} : vector<9x256xf32> to vector<1x256xf32>
    %cst_37 = arith.constant 0.000000e+00 : f32
    %134 = vector.shape_cast %133 : vector<1x256xf32> to vector<1x256xf32>
    %135 = vector.broadcast %134 : vector<1x256xf32> to vector<16x256xf32>
    %136 = vector.broadcast %cst_37 : f32 to vector<16x256xf32>
    %137 = arith.select %132, %135, %136 : vector<16x256xi1>, vector<16x256xf32>
    %138 = arith.addf %128, %137 : vector<16x256xf32>
    %139 = vector.broadcast %121 : vector<1x256xi32> to vector<16x256xi32>
    %140 = arith.cmpi eq, %29, %139 : vector<16x256xi32>
    %141 = vector.extract_strided_slice %26 {offsets = [2, 0], sizes = [1, 256], strides = [1, 1]} : vector<9x256xf32> to vector<1x256xf32>
    %cst_38 = arith.constant 0.000000e+00 : f32
    %142 = vector.shape_cast %141 : vector<1x256xf32> to vector<1x256xf32>
    %143 = vector.broadcast %142 : vector<1x256xf32> to vector<16x256xf32>
    %144 = vector.broadcast %cst_38 : f32 to vector<16x256xf32>
    %145 = arith.select %140, %143, %144 : vector<16x256xi1>, vector<16x256xf32>
    %c1_i32_39 = arith.constant 1 : i32
    %146 = vector.broadcast %c1_i32_39 : i32 to vector<1x256xi32>
    %147 = arith.addi %121, %146 : vector<1x256xi32>
    %148 = vector.broadcast %147 : vector<1x256xi32> to vector<16x256xi32>
    %149 = arith.cmpi eq, %29, %148 : vector<16x256xi32>
    %150 = vector.extract_strided_slice %27 {offsets = [2, 0], sizes = [1, 256], strides = [1, 1]} : vector<9x256xf32> to vector<1x256xf32>
    %cst_40 = arith.constant 0.000000e+00 : f32
    %151 = vector.shape_cast %150 : vector<1x256xf32> to vector<1x256xf32>
    %152 = vector.broadcast %151 : vector<1x256xf32> to vector<16x256xf32>
    %153 = vector.broadcast %cst_40 : f32 to vector<16x256xf32>
    %154 = arith.select %149, %152, %153 : vector<16x256xi1>, vector<16x256xf32>
    %155 = arith.addf %145, %154 : vector<16x256xf32>
    %156 = arith.truncf %138 : vector<16x256xf32> to vector<16x256xbf16>
    %cst_41 = arith.constant dense<0.000000e+00> : vector<256x256xf32>
    %157 = tpu.matmul %1, %156, %cst_41 {dimension_numbers = #tpu.dot_dimension_numbers<[1], [0], [0], [1], [0, 0, 1, 1], [], []>} : vector<256x16xbf16>, vector<16x256xbf16>, vector<256x256xf32> -> vector<256x256xf32>
    %158 = vector.shape_cast %157 : vector<256x256xf32> to vector<16x16x256xf32>
    %159 = vector.shape_cast %155 : vector<16x256xf32> to vector<16x1x256xf32>
    %160 = vector.broadcast %159 : vector<16x1x256xf32> to vector<16x16x256xf32>
    %161 = arith.mulf %158, %160 : vector<16x16x256xf32>
    %cst_42 = arith.constant dense<0.000000e+00> : vector<16x256xf32>
    %162 = vector.multi_reduction <add>, %161, %cst_42 [0] : vector<16x16x256xf32> to vector<16x256xf32>
    %163 = arith.truncf %162 : vector<16x256xf32> to vector<16x256xbf16>
    %c32 = arith.constant 32 : index
    %c0_43 = arith.constant 0 : index
    %164 = vector.load %arg7[%c32, %c0_43] : memref<144x256xbf16, #tpu.memory_space<vmem>>, vector<16x256xbf16>
    tpu.vector_store %arg7[%c32, %c0_43], %163 {strides = array<i32>} : memref<144x256xbf16, #tpu.memory_space<vmem>>, vector<16x256xbf16>,
    %165 = vector.extract_strided_slice %20 {offsets = [3, 0], sizes = [1, 256], strides = [1, 1]} : vector<9x256xi32> to vector<1x256xi32>
    %166 = vector.extract_strided_slice %21 {offsets = [3, 0], sizes = [1, 256], strides = [1, 1]} : vector<9x256xi32> to vector<1x256xi32>
    %167 = vector.broadcast %165 : vector<1x256xi32> to vector<16x256xi32>
    %168 = arith.cmpi eq, %28, %167 : vector<16x256xi32>
    %169 = vector.extract_strided_slice %23 {offsets = [3, 0], sizes = [1, 256], strides = [1, 1]} : vector<9x256xf32> to vector<1x256xf32>
    %cst_44 = arith.constant 0.000000e+00 : f32
    %170 = vector.shape_cast %169 : vector<1x256xf32> to vector<1x256xf32>
    %171 = vector.broadcast %170 : vector<1x256xf32> to vector<16x256xf32>
    %172 = vector.broadcast %cst_44 : f32 to vector<16x256xf32>
    %173 = arith.select %168, %171, %172 : vector<16x256xi1>, vector<16x256xf32>
    %c1_i32_45 = arith.constant 1 : i32
    %174 = vector.broadcast %c1_i32_45 : i32 to vector<1x256xi32>
    %175 = arith.addi %165, %174 : vector<1x256xi32>
    %176 = vector.broadcast %175 : vector<1x256xi32> to vector<16x256xi32>
    %177 = arith.cmpi eq, %28, %176 : vector<16x256xi32>
    %178 = vector.extract_strided_slice %18 {offsets = [3, 0], sizes = [1, 256], strides = [1, 1]} : vector<9x256xf32> to vector<1x256xf32>
    %cst_46 = arith.constant 0.000000e+00 : f32
    %179 = vector.shape_cast %178 : vector<1x256xf32> to vector<1x256xf32>
    %180 = vector.broadcast %179 : vector<1x256xf32> to vector<16x256xf32>
    %181 = vector.broadcast %cst_46 : f32 to vector<16x256xf32>
    %182 = arith.select %177, %180, %181 : vector<16x256xi1>, vector<16x256xf32>
    %183 = arith.addf %173, %182 : vector<16x256xf32>
    %184 = vector.broadcast %166 : vector<1x256xi32> to vector<16x256xi32>
    %185 = arith.cmpi eq, %29, %184 : vector<16x256xi32>
    %186 = vector.extract_strided_slice %26 {offsets = [3, 0], sizes = [1, 256], strides = [1, 1]} : vector<9x256xf32> to vector<1x256xf32>
    %cst_47 = arith.constant 0.000000e+00 : f32
    %187 = vector.shape_cast %186 : vector<1x256xf32> to vector<1x256xf32>
    %188 = vector.broadcast %187 : vector<1x256xf32> to vector<16x256xf32>
    %189 = vector.broadcast %cst_47 : f32 to vector<16x256xf32>
    %190 = arith.select %185, %188, %189 : vector<16x256xi1>, vector<16x256xf32>
    %c1_i32_48 = arith.constant 1 : i32
    %191 = vector.broadcast %c1_i32_48 : i32 to vector<1x256xi32>
    %192 = arith.addi %166, %191 : vector<1x256xi32>
    %193 = vector.broadcast %192 : vector<1x256xi32> to vector<16x256xi32>
    %194 = arith.cmpi eq, %29, %193 : vector<16x256xi32>
    %195 = vector.extract_strided_slice %27 {offsets = [3, 0], sizes = [1, 256], strides = [1, 1]} : vector<9x256xf32> to vector<1x256xf32>
    %cst_49 = arith.constant 0.000000e+00 : f32
    %196 = vector.shape_cast %195 : vector<1x256xf32> to vector<1x256xf32>
    %197 = vector.broadcast %196 : vector<1x256xf32> to vector<16x256xf32>
    %198 = vector.broadcast %cst_49 : f32 to vector<16x256xf32>
    %199 = arith.select %194, %197, %198 : vector<16x256xi1>, vector<16x256xf32>
    %200 = arith.addf %190, %199 : vector<16x256xf32>
    %201 = arith.truncf %183 : vector<16x256xf32> to vector<16x256xbf16>
    %cst_50 = arith.constant dense<0.000000e+00> : vector<256x256xf32>
    %202 = tpu.matmul %1, %201, %cst_50 {dimension_numbers = #tpu.dot_dimension_numbers<[1], [0], [0], [1], [0, 0, 1, 1], [], []>} : vector<256x16xbf16>, vector<16x256xbf16>, vector<256x256xf32> -> vector<256x256xf32>
    %203 = vector.shape_cast %202 : vector<256x256xf32> to vector<16x16x256xf32>
    %204 = vector.shape_cast %200 : vector<16x256xf32> to vector<16x1x256xf32>
    %205 = vector.broadcast %204 : vector<16x1x256xf32> to vector<16x16x256xf32>
    %206 = arith.mulf %203, %205 : vector<16x16x256xf32>
    %cst_51 = arith.constant dense<0.000000e+00> : vector<16x256xf32>
    %207 = vector.multi_reduction <add>, %206, %cst_51 [0] : vector<16x16x256xf32> to vector<16x256xf32>
    %208 = arith.truncf %207 : vector<16x256xf32> to vector<16x256xbf16>
    %c48 = arith.constant 48 : index
    %c0_52 = arith.constant 0 : index
    %209 = vector.load %arg7[%c48, %c0_52] : memref<144x256xbf16, #tpu.memory_space<vmem>>, vector<16x256xbf16>
    tpu.vector_store %arg7[%c48, %c0_52], %208 {strides = array<i32>} : memref<144x256xbf16, #tpu.memory_space<vmem>>, vector<16x256xbf16>,
    %210 = vector.extract_strided_slice %20 {offsets = [4, 0], sizes = [1, 256], strides = [1, 1]} : vector<9x256xi32> to vector<1x256xi32>
    %211 = vector.extract_strided_slice %21 {offsets = [4, 0], sizes = [1, 256], strides = [1, 1]} : vector<9x256xi32> to vector<1x256xi32>
    %212 = vector.broadcast %210 : vector<1x256xi32> to vector<16x256xi32>
    %213 = arith.cmpi eq, %28, %212 : vector<16x256xi32>
    %214 = vector.extract_strided_slice %23 {offsets = [4, 0], sizes = [1, 256], strides = [1, 1]} : vector<9x256xf32> to vector<1x256xf32>
    %cst_53 = arith.constant 0.000000e+00 : f32
    %215 = vector.shape_cast %214 : vector<1x256xf32> to vector<1x256xf32>
    %216 = vector.broadcast %215 : vector<1x256xf32> to vector<16x256xf32>
    %217 = vector.broadcast %cst_53 : f32 to vector<16x256xf32>
    %218 = arith.select %213, %216, %217 : vector<16x256xi1>, vector<16x256xf32>
    %c1_i32_54 = arith.constant 1 : i32
    %219 = vector.broadcast %c1_i32_54 : i32 to vector<1x256xi32>
    %220 = arith.addi %210, %219 : vector<1x256xi32>
    %221 = vector.broadcast %220 : vector<1x256xi32> to vector<16x256xi32>
    %222 = arith.cmpi eq, %28, %221 : vector<16x256xi32>
    %223 = vector.extract_strided_slice %18 {offsets = [4, 0], sizes = [1, 256], strides = [1, 1]} : vector<9x256xf32> to vector<1x256xf32>
    %cst_55 = arith.constant 0.000000e+00 : f32
    %224 = vector.shape_cast %223 : vector<1x256xf32> to vector<1x256xf32>
    %225 = vector.broadcast %224 : vector<1x256xf32> to vector<16x256xf32>
    %226 = vector.broadcast %cst_55 : f32 to vector<16x256xf32>
    %227 = arith.select %222, %225, %226 : vector<16x256xi1>, vector<16x256xf32>
    %228 = arith.addf %218, %227 : vector<16x256xf32>
    %229 = vector.broadcast %211 : vector<1x256xi32> to vector<16x256xi32>
    %230 = arith.cmpi eq, %29, %229 : vector<16x256xi32>
    %231 = vector.extract_strided_slice %26 {offsets = [4, 0], sizes = [1, 256], strides = [1, 1]} : vector<9x256xf32> to vector<1x256xf32>
    %cst_56 = arith.constant 0.000000e+00 : f32
    %232 = vector.shape_cast %231 : vector<1x256xf32> to vector<1x256xf32>
    %233 = vector.broadcast %232 : vector<1x256xf32> to vector<16x256xf32>
    %234 = vector.broadcast %cst_56 : f32 to vector<16x256xf32>
    %235 = arith.select %230, %233, %234 : vector<16x256xi1>, vector<16x256xf32>
    %c1_i32_57 = arith.constant 1 : i32
    %236 = vector.broadcast %c1_i32_57 : i32 to vector<1x256xi32>
    %237 = arith.addi %211, %236 : vector<1x256xi32>
    %238 = vector.broadcast %237 : vector<1x256xi32> to vector<16x256xi32>
    %239 = arith.cmpi eq, %29, %238 : vector<16x256xi32>
    %240 = vector.extract_strided_slice %27 {offsets = [4, 0], sizes = [1, 256], strides = [1, 1]} : vector<9x256xf32> to vector<1x256xf32>
    %cst_58 = arith.constant 0.000000e+00 : f32
    %241 = vector.shape_cast %240 : vector<1x256xf32> to vector<1x256xf32>
    %242 = vector.broadcast %241 : vector<1x256xf32> to vector<16x256xf32>
    %243 = vector.broadcast %cst_58 : f32 to vector<16x256xf32>
    %244 = arith.select %239, %242, %243 : vector<16x256xi1>, vector<16x256xf32>
    %245 = arith.addf %235, %244 : vector<16x256xf32>
    %246 = arith.truncf %228 : vector<16x256xf32> to vector<16x256xbf16>
    %cst_59 = arith.constant dense<0.000000e+00> : vector<256x256xf32>
    %247 = tpu.matmul %1, %246, %cst_59 {dimension_numbers = #tpu.dot_dimension_numbers<[1], [0], [0], [1], [0, 0, 1, 1], [], []>} : vector<256x16xbf16>, vector<16x256xbf16>, vector<256x256xf32> -> vector<256x256xf32>
    %248 = vector.shape_cast %247 : vector<256x256xf32> to vector<16x16x256xf32>
    %249 = vector.shape_cast %245 : vector<16x256xf32> to vector<16x1x256xf32>
    %250 = vector.broadcast %249 : vector<16x1x256xf32> to vector<16x16x256xf32>
    %251 = arith.mulf %248, %250 : vector<16x16x256xf32>
    %cst_60 = arith.constant dense<0.000000e+00> : vector<16x256xf32>
    %252 = vector.multi_reduction <add>, %251, %cst_60 [0] : vector<16x16x256xf32> to vector<16x256xf32>
    %253 = arith.truncf %252 : vector<16x256xf32> to vector<16x256xbf16>
    %c64 = arith.constant 64 : index
    %c0_61 = arith.constant 0 : index
    %254 = vector.load %arg7[%c64, %c0_61] : memref<144x256xbf16, #tpu.memory_space<vmem>>, vector<16x256xbf16>
    tpu.vector_store %arg7[%c64, %c0_61], %253 {strides = array<i32>} : memref<144x256xbf16, #tpu.memory_space<vmem>>, vector<16x256xbf16>,
    %255 = vector.extract_strided_slice %20 {offsets = [5, 0], sizes = [1, 256], strides = [1, 1]} : vector<9x256xi32> to vector<1x256xi32>
    %256 = vector.extract_strided_slice %21 {offsets = [5, 0], sizes = [1, 256], strides = [1, 1]} : vector<9x256xi32> to vector<1x256xi32>
    %257 = vector.broadcast %255 : vector<1x256xi32> to vector<16x256xi32>
    %258 = arith.cmpi eq, %28, %257 : vector<16x256xi32>
    %259 = vector.extract_strided_slice %23 {offsets = [5, 0], sizes = [1, 256], strides = [1, 1]} : vector<9x256xf32> to vector<1x256xf32>
    %cst_62 = arith.constant 0.000000e+00 : f32
    %260 = vector.shape_cast %259 : vector<1x256xf32> to vector<1x256xf32>
    %261 = vector.broadcast %260 : vector<1x256xf32> to vector<16x256xf32>
    %262 = vector.broadcast %cst_62 : f32 to vector<16x256xf32>
    %263 = arith.select %258, %261, %262 : vector<16x256xi1>, vector<16x256xf32>
    %c1_i32_63 = arith.constant 1 : i32
    %264 = vector.broadcast %c1_i32_63 : i32 to vector<1x256xi32>
    %265 = arith.addi %255, %264 : vector<1x256xi32>
    %266 = vector.broadcast %265 : vector<1x256xi32> to vector<16x256xi32>
    %267 = arith.cmpi eq, %28, %266 : vector<16x256xi32>
    %268 = vector.extract_strided_slice %18 {offsets = [5, 0], sizes = [1, 256], strides = [1, 1]} : vector<9x256xf32> to vector<1x256xf32>
    %cst_64 = arith.constant 0.000000e+00 : f32
    %269 = vector.shape_cast %268 : vector<1x256xf32> to vector<1x256xf32>
    %270 = vector.broadcast %269 : vector<1x256xf32> to vector<16x256xf32>
    %271 = vector.broadcast %cst_64 : f32 to vector<16x256xf32>
    %272 = arith.select %267, %270, %271 : vector<16x256xi1>, vector<16x256xf32>
    %273 = arith.addf %263, %272 : vector<16x256xf32>
    %274 = vector.broadcast %256 : vector<1x256xi32> to vector<16x256xi32>
    %275 = arith.cmpi eq, %29, %274 : vector<16x256xi32>
    %276 = vector.extract_strided_slice %26 {offsets = [5, 0], sizes = [1, 256], strides = [1, 1]} : vector<9x256xf32> to vector<1x256xf32>
    %cst_65 = arith.constant 0.000000e+00 : f32
    %277 = vector.shape_cast %276 : vector<1x256xf32> to vector<1x256xf32>
    %278 = vector.broadcast %277 : vector<1x256xf32> to vector<16x256xf32>
    %279 = vector.broadcast %cst_65 : f32 to vector<16x256xf32>
    %280 = arith.select %275, %278, %279 : vector<16x256xi1>, vector<16x256xf32>
    %c1_i32_66 = arith.constant 1 : i32
    %281 = vector.broadcast %c1_i32_66 : i32 to vector<1x256xi32>
    %282 = arith.addi %256, %281 : vector<1x256xi32>
    %283 = vector.broadcast %282 : vector<1x256xi32> to vector<16x256xi32>
    %284 = arith.cmpi eq, %29, %283 : vector<16x256xi32>
    %285 = vector.extract_strided_slice %27 {offsets = [5, 0], sizes = [1, 256], strides = [1, 1]} : vector<9x256xf32> to vector<1x256xf32>
    %cst_67 = arith.constant 0.000000e+00 : f32
    %286 = vector.shape_cast %285 : vector<1x256xf32> to vector<1x256xf32>
    %287 = vector.broadcast %286 : vector<1x256xf32> to vector<16x256xf32>
    %288 = vector.broadcast %cst_67 : f32 to vector<16x256xf32>
    %289 = arith.select %284, %287, %288 : vector<16x256xi1>, vector<16x256xf32>
    %290 = arith.addf %280, %289 : vector<16x256xf32>
    %291 = arith.truncf %273 : vector<16x256xf32> to vector<16x256xbf16>
    %cst_68 = arith.constant dense<0.000000e+00> : vector<256x256xf32>
    %292 = tpu.matmul %1, %291, %cst_68 {dimension_numbers = #tpu.dot_dimension_numbers<[1], [0], [0], [1], [0, 0, 1, 1], [], []>} : vector<256x16xbf16>, vector<16x256xbf16>, vector<256x256xf32> -> vector<256x256xf32>
    %293 = vector.shape_cast %292 : vector<256x256xf32> to vector<16x16x256xf32>
    %294 = vector.shape_cast %290 : vector<16x256xf32> to vector<16x1x256xf32>
    %295 = vector.broadcast %294 : vector<16x1x256xf32> to vector<16x16x256xf32>
    %296 = arith.mulf %293, %295 : vector<16x16x256xf32>
    %cst_69 = arith.constant dense<0.000000e+00> : vector<16x256xf32>
    %297 = vector.multi_reduction <add>, %296, %cst_69 [0] : vector<16x16x256xf32> to vector<16x256xf32>
    %298 = arith.truncf %297 : vector<16x256xf32> to vector<16x256xbf16>
    %c80 = arith.constant 80 : index
    %c0_70 = arith.constant 0 : index
    %299 = vector.load %arg7[%c80, %c0_70] : memref<144x256xbf16, #tpu.memory_space<vmem>>, vector<16x256xbf16>
    tpu.vector_store %arg7[%c80, %c0_70], %298 {strides = array<i32>} : memref<144x256xbf16, #tpu.memory_space<vmem>>, vector<16x256xbf16>,
    %300 = vector.extract_strided_slice %20 {offsets = [6, 0], sizes = [1, 256], strides = [1, 1]} : vector<9x256xi32> to vector<1x256xi32>
    %301 = vector.extract_strided_slice %21 {offsets = [6, 0], sizes = [1, 256], strides = [1, 1]} : vector<9x256xi32> to vector<1x256xi32>
    %302 = vector.broadcast %300 : vector<1x256xi32> to vector<16x256xi32>
    %303 = arith.cmpi eq, %28, %302 : vector<16x256xi32>
    %304 = vector.extract_strided_slice %23 {offsets = [6, 0], sizes = [1, 256], strides = [1, 1]} : vector<9x256xf32> to vector<1x256xf32>
    %cst_71 = arith.constant 0.000000e+00 : f32
    %305 = vector.shape_cast %304 : vector<1x256xf32> to vector<1x256xf32>
    %306 = vector.broadcast %305 : vector<1x256xf32> to vector<16x256xf32>
    %307 = vector.broadcast %cst_71 : f32 to vector<16x256xf32>
    %308 = arith.select %303, %306, %307 : vector<16x256xi1>, vector<16x256xf32>
    %c1_i32_72 = arith.constant 1 : i32
    %309 = vector.broadcast %c1_i32_72 : i32 to vector<1x256xi32>
    %310 = arith.addi %300, %309 : vector<1x256xi32>
    %311 = vector.broadcast %310 : vector<1x256xi32> to vector<16x256xi32>
    %312 = arith.cmpi eq, %28, %311 : vector<16x256xi32>
    %313 = vector.extract_strided_slice %18 {offsets = [6, 0], sizes = [1, 256], strides = [1, 1]} : vector<9x256xf32> to vector<1x256xf32>
    %cst_73 = arith.constant 0.000000e+00 : f32
    %314 = vector.shape_cast %313 : vector<1x256xf32> to vector<1x256xf32>
    %315 = vector.broadcast %314 : vector<1x256xf32> to vector<16x256xf32>
    %316 = vector.broadcast %cst_73 : f32 to vector<16x256xf32>
    %317 = arith.select %312, %315, %316 : vector<16x256xi1>, vector<16x256xf32>
    %318 = arith.addf %308, %317 : vector<16x256xf32>
    %319 = vector.broadcast %301 : vector<1x256xi32> to vector<16x256xi32>
    %320 = arith.cmpi eq, %29, %319 : vector<16x256xi32>
    %321 = vector.extract_strided_slice %26 {offsets = [6, 0], sizes = [1, 256], strides = [1, 1]} : vector<9x256xf32> to vector<1x256xf32>
    %cst_74 = arith.constant 0.000000e+00 : f32
    %322 = vector.shape_cast %321 : vector<1x256xf32> to vector<1x256xf32>
    %323 = vector.broadcast %322 : vector<1x256xf32> to vector<16x256xf32>
    %324 = vector.broadcast %cst_74 : f32 to vector<16x256xf32>
    %325 = arith.select %320, %323, %324 : vector<16x256xi1>, vector<16x256xf32>
    %c1_i32_75 = arith.constant 1 : i32
    %326 = vector.broadcast %c1_i32_75 : i32 to vector<1x256xi32>
    %327 = arith.addi %301, %326 : vector<1x256xi32>
    %328 = vector.broadcast %327 : vector<1x256xi32> to vector<16x256xi32>
    %329 = arith.cmpi eq, %29, %328 : vector<16x256xi32>
    %330 = vector.extract_strided_slice %27 {offsets = [6, 0], sizes = [1, 256], strides = [1, 1]} : vector<9x256xf32> to vector<1x256xf32>
    %cst_76 = arith.constant 0.000000e+00 : f32
    %331 = vector.shape_cast %330 : vector<1x256xf32> to vector<1x256xf32>
    %332 = vector.broadcast %331 : vector<1x256xf32> to vector<16x256xf32>
    %333 = vector.broadcast %cst_76 : f32 to vector<16x256xf32>
    %334 = arith.select %329, %332, %333 : vector<16x256xi1>, vector<16x256xf32>
    %335 = arith.addf %325, %334 : vector<16x256xf32>
    %336 = arith.truncf %318 : vector<16x256xf32> to vector<16x256xbf16>
    %cst_77 = arith.constant dense<0.000000e+00> : vector<256x256xf32>
    %337 = tpu.matmul %1, %336, %cst_77 {dimension_numbers = #tpu.dot_dimension_numbers<[1], [0], [0], [1], [0, 0, 1, 1], [], []>} : vector<256x16xbf16>, vector<16x256xbf16>, vector<256x256xf32> -> vector<256x256xf32>
    %338 = vector.shape_cast %337 : vector<256x256xf32> to vector<16x16x256xf32>
    %339 = vector.shape_cast %335 : vector<16x256xf32> to vector<16x1x256xf32>
    %340 = vector.broadcast %339 : vector<16x1x256xf32> to vector<16x16x256xf32>
    %341 = arith.mulf %338, %340 : vector<16x16x256xf32>
    %cst_78 = arith.constant dense<0.000000e+00> : vector<16x256xf32>
    %342 = vector.multi_reduction <add>, %341, %cst_78 [0] : vector<16x16x256xf32> to vector<16x256xf32>
    %343 = arith.truncf %342 : vector<16x256xf32> to vector<16x256xbf16>
    %c96 = arith.constant 96 : index
    %c0_79 = arith.constant 0 : index
    %344 = vector.load %arg7[%c96, %c0_79] : memref<144x256xbf16, #tpu.memory_space<vmem>>, vector<16x256xbf16>
    tpu.vector_store %arg7[%c96, %c0_79], %343 {strides = array<i32>} : memref<144x256xbf16, #tpu.memory_space<vmem>>, vector<16x256xbf16>,
    %345 = vector.extract_strided_slice %20 {offsets = [7, 0], sizes = [1, 256], strides = [1, 1]} : vector<9x256xi32> to vector<1x256xi32>
    %346 = vector.extract_strided_slice %21 {offsets = [7, 0], sizes = [1, 256], strides = [1, 1]} : vector<9x256xi32> to vector<1x256xi32>
    %347 = vector.broadcast %345 : vector<1x256xi32> to vector<16x256xi32>
    %348 = arith.cmpi eq, %28, %347 : vector<16x256xi32>
    %349 = vector.extract_strided_slice %23 {offsets = [7, 0], sizes = [1, 256], strides = [1, 1]} : vector<9x256xf32> to vector<1x256xf32>
    %cst_80 = arith.constant 0.000000e+00 : f32
    %350 = vector.shape_cast %349 : vector<1x256xf32> to vector<1x256xf32>
    %351 = vector.broadcast %350 : vector<1x256xf32> to vector<16x256xf32>
    %352 = vector.broadcast %cst_80 : f32 to vector<16x256xf32>
    %353 = arith.select %348, %351, %352 : vector<16x256xi1>, vector<16x256xf32>
    %c1_i32_81 = arith.constant 1 : i32
    %354 = vector.broadcast %c1_i32_81 : i32 to vector<1x256xi32>
    %355 = arith.addi %345, %354 : vector<1x256xi32>
    %356 = vector.broadcast %355 : vector<1x256xi32> to vector<16x256xi32>
    %357 = arith.cmpi eq, %28, %356 : vector<16x256xi32>
    %358 = vector.extract_strided_slice %18 {offsets = [7, 0], sizes = [1, 256], strides = [1, 1]} : vector<9x256xf32> to vector<1x256xf32>
    %cst_82 = arith.constant 0.000000e+00 : f32
    %359 = vector.shape_cast %358 : vector<1x256xf32> to vector<1x256xf32>
    %360 = vector.broadcast %359 : vector<1x256xf32> to vector<16x256xf32>
    %361 = vector.broadcast %cst_82 : f32 to vector<16x256xf32>
    %362 = arith.select %357, %360, %361 : vector<16x256xi1>, vector<16x256xf32>
    %363 = arith.addf %353, %362 : vector<16x256xf32>
    %364 = vector.broadcast %346 : vector<1x256xi32> to vector<16x256xi32>
    %365 = arith.cmpi eq, %29, %364 : vector<16x256xi32>
    %366 = vector.extract_strided_slice %26 {offsets = [7, 0], sizes = [1, 256], strides = [1, 1]} : vector<9x256xf32> to vector<1x256xf32>
    %cst_83 = arith.constant 0.000000e+00 : f32
    %367 = vector.shape_cast %366 : vector<1x256xf32> to vector<1x256xf32>
    %368 = vector.broadcast %367 : vector<1x256xf32> to vector<16x256xf32>
    %369 = vector.broadcast %cst_83 : f32 to vector<16x256xf32>
    %370 = arith.select %365, %368, %369 : vector<16x256xi1>, vector<16x256xf32>
    %c1_i32_84 = arith.constant 1 : i32
    %371 = vector.broadcast %c1_i32_84 : i32 to vector<1x256xi32>
    %372 = arith.addi %346, %371 : vector<1x256xi32>
    %373 = vector.broadcast %372 : vector<1x256xi32> to vector<16x256xi32>
    %374 = arith.cmpi eq, %29, %373 : vector<16x256xi32>
    %375 = vector.extract_strided_slice %27 {offsets = [7, 0], sizes = [1, 256], strides = [1, 1]} : vector<9x256xf32> to vector<1x256xf32>
    %cst_85 = arith.constant 0.000000e+00 : f32
    %376 = vector.shape_cast %375 : vector<1x256xf32> to vector<1x256xf32>
    %377 = vector.broadcast %376 : vector<1x256xf32> to vector<16x256xf32>
    %378 = vector.broadcast %cst_85 : f32 to vector<16x256xf32>
    %379 = arith.select %374, %377, %378 : vector<16x256xi1>, vector<16x256xf32>
    %380 = arith.addf %370, %379 : vector<16x256xf32>
    %381 = arith.truncf %363 : vector<16x256xf32> to vector<16x256xbf16>
    %cst_86 = arith.constant dense<0.000000e+00> : vector<256x256xf32>
    %382 = tpu.matmul %1, %381, %cst_86 {dimension_numbers = #tpu.dot_dimension_numbers<[1], [0], [0], [1], [0, 0, 1, 1], [], []>} : vector<256x16xbf16>, vector<16x256xbf16>, vector<256x256xf32> -> vector<256x256xf32>
    %383 = vector.shape_cast %382 : vector<256x256xf32> to vector<16x16x256xf32>
    %384 = vector.shape_cast %380 : vector<16x256xf32> to vector<16x1x256xf32>
    %385 = vector.broadcast %384 : vector<16x1x256xf32> to vector<16x16x256xf32>
    %386 = arith.mulf %383, %385 : vector<16x16x256xf32>
    %cst_87 = arith.constant dense<0.000000e+00> : vector<16x256xf32>
    %387 = vector.multi_reduction <add>, %386, %cst_87 [0] : vector<16x16x256xf32> to vector<16x256xf32>
    %388 = arith.truncf %387 : vector<16x256xf32> to vector<16x256xbf16>
    %c112 = arith.constant 112 : index
    %c0_88 = arith.constant 0 : index
    %389 = vector.load %arg7[%c112, %c0_88] : memref<144x256xbf16, #tpu.memory_space<vmem>>, vector<16x256xbf16>
    tpu.vector_store %arg7[%c112, %c0_88], %388 {strides = array<i32>} : memref<144x256xbf16, #tpu.memory_space<vmem>>, vector<16x256xbf16>,
    %390 = vector.extract_strided_slice %20 {offsets = [8, 0], sizes = [1, 256], strides = [1, 1]} : vector<9x256xi32> to vector<1x256xi32>
    %391 = vector.extract_strided_slice %21 {offsets = [8, 0], sizes = [1, 256], strides = [1, 1]} : vector<9x256xi32> to vector<1x256xi32>
    %392 = vector.broadcast %390 : vector<1x256xi32> to vector<16x256xi32>
    %393 = arith.cmpi eq, %28, %392 : vector<16x256xi32>
    %394 = vector.extract_strided_slice %23 {offsets = [8, 0], sizes = [1, 256], strides = [1, 1]} : vector<9x256xf32> to vector<1x256xf32>
    %cst_89 = arith.constant 0.000000e+00 : f32
    %395 = vector.shape_cast %394 : vector<1x256xf32> to vector<1x256xf32>
    %396 = vector.broadcast %395 : vector<1x256xf32> to vector<16x256xf32>
    %397 = vector.broadcast %cst_89 : f32 to vector<16x256xf32>
    %398 = arith.select %393, %396, %397 : vector<16x256xi1>, vector<16x256xf32>
    %c1_i32_90 = arith.constant 1 : i32
    %399 = vector.broadcast %c1_i32_90 : i32 to vector<1x256xi32>
    %400 = arith.addi %390, %399 : vector<1x256xi32>
    %401 = vector.broadcast %400 : vector<1x256xi32> to vector<16x256xi32>
    %402 = arith.cmpi eq, %28, %401 : vector<16x256xi32>
    %403 = vector.extract_strided_slice %18 {offsets = [8, 0], sizes = [1, 256], strides = [1, 1]} : vector<9x256xf32> to vector<1x256xf32>
    %cst_91 = arith.constant 0.000000e+00 : f32
    %404 = vector.shape_cast %403 : vector<1x256xf32> to vector<1x256xf32>
    %405 = vector.broadcast %404 : vector<1x256xf32> to vector<16x256xf32>
    %406 = vector.broadcast %cst_91 : f32 to vector<16x256xf32>
    %407 = arith.select %402, %405, %406 : vector<16x256xi1>, vector<16x256xf32>
    %408 = arith.addf %398, %407 : vector<16x256xf32>
    %409 = vector.broadcast %391 : vector<1x256xi32> to vector<16x256xi32>
    %410 = arith.cmpi eq, %29, %409 : vector<16x256xi32>
    %411 = vector.extract_strided_slice %26 {offsets = [8, 0], sizes = [1, 256], strides = [1, 1]} : vector<9x256xf32> to vector<1x256xf32>
    %cst_92 = arith.constant 0.000000e+00 : f32
    %412 = vector.shape_cast %411 : vector<1x256xf32> to vector<1x256xf32>
    %413 = vector.broadcast %412 : vector<1x256xf32> to vector<16x256xf32>
    %414 = vector.broadcast %cst_92 : f32 to vector<16x256xf32>
    %415 = arith.select %410, %413, %414 : vector<16x256xi1>, vector<16x256xf32>
    %c1_i32_93 = arith.constant 1 : i32
    %416 = vector.broadcast %c1_i32_93 : i32 to vector<1x256xi32>
    %417 = arith.addi %391, %416 : vector<1x256xi32>
    %418 = vector.broadcast %417 : vector<1x256xi32> to vector<16x256xi32>
    %419 = arith.cmpi eq, %29, %418 : vector<16x256xi32>
    %420 = vector.extract_strided_slice %27 {offsets = [8, 0], sizes = [1, 256], strides = [1, 1]} : vector<9x256xf32> to vector<1x256xf32>
    %cst_94 = arith.constant 0.000000e+00 : f32
    %421 = vector.shape_cast %420 : vector<1x256xf32> to vector<1x256xf32>
    %422 = vector.broadcast %421 : vector<1x256xf32> to vector<16x256xf32>
    %423 = vector.broadcast %cst_94 : f32 to vector<16x256xf32>
    %424 = arith.select %419, %422, %423 : vector<16x256xi1>, vector<16x256xf32>
    %425 = arith.addf %415, %424 : vector<16x256xf32>
    %426 = arith.truncf %408 : vector<16x256xf32> to vector<16x256xbf16>
    %cst_95 = arith.constant dense<0.000000e+00> : vector<256x256xf32>
    %427 = tpu.matmul %1, %426, %cst_95 {dimension_numbers = #tpu.dot_dimension_numbers<[1], [0], [0], [1], [0, 0, 1, 1], [], []>} : vector<256x16xbf16>, vector<16x256xbf16>, vector<256x256xf32> -> vector<256x256xf32>
    %428 = vector.shape_cast %427 : vector<256x256xf32> to vector<16x16x256xf32>
    %429 = vector.shape_cast %425 : vector<16x256xf32> to vector<16x1x256xf32>
    %430 = vector.broadcast %429 : vector<16x1x256xf32> to vector<16x16x256xf32>
    %431 = arith.mulf %428, %430 : vector<16x16x256xf32>
    %cst_96 = arith.constant dense<0.000000e+00> : vector<16x256xf32>
    %432 = vector.multi_reduction <add>, %431, %cst_96 [0] : vector<16x16x256xf32> to vector<16x256xf32>
    %433 = arith.truncf %432 : vector<16x256xf32> to vector<16x256xbf16>
    %c128 = arith.constant 128 : index
    %c0_97 = arith.constant 0 : index
    %434 = vector.load %arg7[%c128, %c0_97] : memref<144x256xbf16, #tpu.memory_space<vmem>>, vector<16x256xbf16>
    tpu.vector_store %arg7[%c128, %c0_97], %433 {strides = array<i32>} : memref<144x256xbf16, #tpu.memory_space<vmem>>, vector<16x256xbf16>,
    %c0_98 = arith.constant 0 : index
    %c0_99 = arith.constant 0 : index
    %435 = vector.load %arg4[%c0_98, %c0_99] : memref<8x144xbf16, #tpu.memory_space<vmem>>, vector<8x144xbf16>
    %c0_100 = arith.constant 0 : index
    %c0_101 = arith.constant 0 : index
    %436 = vector.load %arg7[%c0_100, %c0_101] : memref<144x256xbf16, #tpu.memory_space<vmem>>, vector<144x256xbf16>
    %cst_102 = arith.constant dense<0.000000e+00> : vector<8x256xf32>
    %437 = tpu.matmul %435, %436, %cst_102 {dimension_numbers = #tpu.dot_dimension_numbers<[1], [0], [0], [1], [0, 0, 1, 1], [], []>} : vector<8x144xbf16>, vector<144x256xbf16>, vector<8x256xf32> -> vector<8x256xf32>
    %c0_103 = arith.constant 0 : index
    %c0_104 = arith.constant 0 : index
    %438 = vector.load %arg5[%c0_103, %c0_104] : memref<8x1xf32, #tpu.memory_space<vmem>>, vector<8x1xf32>
    %439 = vector.broadcast %438 : vector<8x1xf32> to vector<8x256xf32>
    %440 = arith.addf %437, %439 : vector<8x256xf32>
    %c0_105 = arith.constant 0 : index
    %c0_106 = arith.constant 0 : index
    %c0_107 = arith.constant 0 : index
    %441 = vector.load %arg6[%c0_105, %c0_106, %c0_107] : memref<1x8x256xf32, #tpu.memory_space<vmem>>, vector<1x8x256xf32>
    %442 = vector.shape_cast %441 : vector<1x8x256xf32> to vector<8x256xf32>
    %443 = vector.shape_cast %440 : vector<8x256xf32> to vector<1x8x256xf32>
    tpu.vector_store %arg6[%c0_105, %c0_106, %c0_107], %443 {strides = array<i32>} : memref<1x8x256xf32, #tpu.memory_space<vmem>>, vector<1x8x256xf32>,
    return
  }
  func.func @transform_0(%arg0: i32, %arg1: i32) -> (i32, i32, i32) {
    %c0_i32 = arith.constant 0 : i32
    %c0_i32_0 = arith.constant 0 : i32
    %c0_i32_1 = arith.constant 0 : i32
    return %arg0, %c0_i32, %c0_i32_0 : i32, i32, i32
  }
  func.func @transform_1(%arg0: i32, %arg1: i32) -> (i32, i32, i32, i32) {
    %c0_i32 = arith.constant 0 : i32
    %c0_i32_0 = arith.constant 0 : i32
    %c0_i32_1 = arith.constant 0 : i32
    return %arg0, %c0_i32, %c0_i32_0, %arg1 : i32, i32, i32, i32
  }
  func.func @transform_2(%arg0: i32, %arg1: i32) -> (i32, i32) {
    %c0_i32 = arith.constant 0 : i32
    %c0_i32_0 = arith.constant 0 : i32
    %c0_i32_1 = arith.constant 0 : i32
    return %c0_i32, %c0_i32_0 : i32, i32
  }
  func.func @transform_3(%arg0: i32, %arg1: i32) -> (i32, i32) {
    %c0_i32 = arith.constant 0 : i32
    %c0_i32_0 = arith.constant 0 : i32
    %c0_i32_1 = arith.constant 0 : i32
    return %c0_i32, %c0_i32_0 : i32, i32
  }
  func.func @transform_4(%arg0: i32, %arg1: i32) -> (i32, i32, i32) {
    %c0_i32 = arith.constant 0 : i32
    %c0_i32_0 = arith.constant 0 : i32
    return %arg0, %c0_i32, %arg1 : i32, i32, i32
  }
}

</mosaic_0001>

<llo_original>
// kernel: tpu_custom_call.1
$region0: #{tpu_custom_call.1}
  #allocation0 [shape = 'u32[]', space=smem, size = 0x4, offset = 0x4, fixed_abs, tag = 'smem constant byte address 0x4 - core index']
  #allocation1 [shape = 'u32[144,128]{1,0:T(1,128)}', space=vmem, size = 0x12000, scoped, tag = 'internal scratch']
  #allocation2 [shape = 'bf16[144,256]{1,0:T(16,128)(2,1)}', space=vmem, size = 0x12000, scoped, tag = 'scratch operand']
  %s0 = inlined_call_operand.vmem [shape: bf16[2,256,16], index: 0, kind: input, shape index: {}]
  %s1 = inlined_call_operand.vmem [shape: f32[2,3,9,256], index: 1, kind: input, shape index: {}]
  %s2 = inlined_call_operand.vmem [shape: bf16[8,144], index: 2, kind: input, shape index: {}]
  %s3 = inlined_call_operand.vmem [shape: f32[8,1], index: 3, kind: input, shape index: {}]
  %s4 = inlined_call_operand.hbm [shape: f32[2,8,256], index: 4, kind: output, shape index: {}]
  %s5 = sld [smem:[#allocation0]]
  $region49: #{tpu_custom_call.1} parent=0
    _
  %s7 = ssub.s32 1, %s5
  %s8 = scalar_select 0, %s7, %s5
  $region1: #{tpu_custom_call.1} parent=0
    #allocation3 [shape = 'u8[16384]{0}', space=vmem, size = 0x4000, scoped, tag = 'output window, operand 0']
    #allocation4 [shape = 's32[2]{0}', space=sflag, size = 0x8, scoped, tag = 'scoped memory for tpu_custom_call.1']
    %9 = vsyncpa [#allocation4], 0
    %s10 = scalar_lea.sflag [#allocation4], 1
    %11 = vsyncpa %s10, 0
    loop: start=0, step=1, limit=4
    $region2: #{tpu_custom_call.1} parent=1 // loop_pre_header
      _
    $region3: #{tpu_custom_call.1} parent=1 // loop_header
      %s13 = sphi 0, %s17
      %p14 = scmp.ge.s32.totalorder %s13, 4
      %s20 = sphi 0, %s32
      %s21 = sphi 0, %s28
      %s22 = sphi 0, %s20
      %s23 = sphi 0, %s21
      %s24 = sphi 0, %s22
      %s25 = sphi 0, %s23
      %s35 = sphi 0, %s37
      %s38 = sphi 0, %s35
      %s39 = sphi 0, %s38
      %s55 = sphi 0, %s39
      %s63 = sphi 0, %s65
      %s66 = sphi 0, %s63
      %s67 = sphi 0, %s66
      %s83 = sphi 0, %s67
      %s87 = sphi 0, %s87
      %s89 = sphi 0, %s87
      %s90 = sphi 0, %s89
      %s104 = sphi 0, %s90
      %s108 = sphi 0, %s108
      %s110 = sphi 0, %s108
      %s111 = sphi 0, %s110
      %s125 = sphi 0, %s111
      %s133 = sphi 0, %s135
      %s136 = sphi 0, %s133
      %s137 = sphi 0, %s136
      %s153 = sphi 0, %s137
    $region4: #{tpu_custom_call.1} parent=1 // loop_header_branch
      %16 = sbr.rel (%p14) target = $region8
    $region5: #{tpu_custom_call.1} parent=1 // loop_body
      %s18 = ssub.s32 %s13, 1
      %s19 = ssub.s32 %s13, 2
      %s26 = sadd.s32 1, %s21
      %p27 = scmp.ge.s32.totalorder %s26, 1
      %s28 = scalar_select %p27, 0, %s26
      %s29 = sadd.s32 1, %s20
      %s30 = scalar_select %p27, %s29, %s20
      %p31 = scmp.ge.s32.totalorder %s30, 2
      %s32 = scalar_select %p31, 0, %s30
      %s33 = ssub.s32 %s20, %s32
      %p34 = scmp.eq.s32.totalorder %s33, 0
      %s36 = sadd.s32 %s35, 1
      %s37 = scalar_select %p34, %s35, %s36
      %p40 = pneg %p34
      %p41 = scmp.eq.s32.totalorder %s13, 1
      %p42 = por %p40, %p41
      %p43 = scmp.ne.s32.totalorder %s35, %s38
      %p44 = scmp.eq.s32.totalorder %s13, 0
      %p45 = por %p43, %p44
      %p46 = scmp.ne.s32.totalorder %s35, %s38
      %p47 = scmp.eq.s32.totalorder %s18, 1
      %p48 = por %p46, %p47
      %p49 = scmp.ne.s32.totalorder %s38, %s39
      %p50 = scmp.eq.s32.totalorder %s18, 0
      %p51 = por %p49, %p50
      %p52 = scmp.ne.s32.totalorder %s38, %s39
      %p53 = scmp.eq.s32.totalorder %s19, 1
      %p54 = por %p52, %p53
      %p56 = scmp.ne.s32.totalorder %s39, %s55
      %p57 = scmp.eq.s32.totalorder %s19, 0
      %p58 = por %p56, %p57
      %s59 = ssub.s32 %s20, %s32
      %s60 = ssub.s32 %s21, %s28
      %s61 = sor.u32 %s59, %s60
      %p62 = scmp.eq.s32.totalorder %s61, 0
      %s64 = sadd.s32 %s63, 1
      %s65 = scalar_select %p62, %s63, %s64
      %p68 = pneg %p62
      %p69 = scmp.eq.s32.totalorder %s13, 1
      %p70 = por %p68, %p69
      %p71 = scmp.ne.s32.totalorder %s63, %s66
      %p72 = scmp.eq.s32.totalorder %s13, 0
      %p73 = por %p71, %p72
      %p74 = scmp.ne.s32.totalorder %s63, %s66
      %p75 = scmp.eq.s32.totalorder %s18, 1
      %p76 = por %p74, %p75
      %p77 = scmp.ne.s32.totalorder %s66, %s67
      %p78 = scmp.eq.s32.totalorder %s18, 0
      %p79 = por %p77, %p78
      %p80 = scmp.ne.s32.totalorder %s66, %s67
      %p81 = scmp.eq.s32.totalorder %s19, 1
      %p82 = por %p80, %p81
      %p84 = scmp.ne.s32.totalorder %s67, %s83
      %p85 = scmp.eq.s32.totalorder %s19, 0
      %p86 = por %p84, %p85
      %s88 = sadd.s32 %s87, 1
      %p91 = scmp.eq.s32.totalorder %s13, 1
      %p92 = scmp.ne.s32.totalorder %s87, %s89
      %p93 = scmp.eq.s32.totalorder %s13, 0
      %p94 = por %p92, %p93
      %p95 = scmp.ne.s32.totalorder %s87, %s89
      %p96 = scmp.eq.s32.totalorder %s18, 1
      %p97 = por %p95, %p96
      %p98 = scmp.ne.s32.totalorder %s89, %s90
      %p99 = scmp.eq.s32.totalorder %s18, 0
      %p100 = por %p98, %p99
      %p101 = scmp.ne.s32.totalorder %s89, %s90
      %p102 = scmp.eq.s32.totalorder %s19, 1
      %p103 = por %p101, %p102
      %p105 = scmp.ne.s32.totalorder %s90, %s104
      %p106 = scmp.eq.s32.totalorder %s19, 0
      %p107 = por %p105, %p106
      %s109 = sadd.s32 %s108, 1
      %p112 = scmp.eq.s32.totalorder %s13, 1
      %p113 = scmp.ne.s32.totalorder %s108, %s110
      %p114 = scmp.eq.s32.totalorder %s13, 0
      %p115 = por %p113, %p114
      %p116 = scmp.ne.s32.totalorder %s108, %s110
      %p117 = scmp.eq.s32.totalorder %s18, 1
      %p118 = por %p116, %p117
      %p119 = scmp.ne.s32.totalorder %s110, %s111
      %p120 = scmp.eq.s32.totalorder %s18, 0
      %p121 = por %p119, %p120
      %p122 = scmp.ne.s32.totalorder %s110, %s111
      %p123 = scmp.eq.s32.totalorder %s19, 1
      %p124 = por %p122, %p123
      %p126 = scmp.ne.s32.totalorder %s111, %s125
      %p127 = scmp.eq.s32.totalorder %s19, 0
      %p128 = por %p126, %p127
      %s129 = ssub.s32 %s20, %s32
      %s130 = ssub.s32 %s21, %s28
      %s131 = sor.u32 %s129, %s130
      %p132 = scmp.eq.s32.totalorder %s131, 0
      %s134 = sadd.s32 %s133, 1
      %s135 = scalar_select %p132, %s133, %s134
      %p138 = pneg %p132
      %p139 = scmp.eq.s32.totalorder %s13, 1
      %p140 = por %p138, %p139
      %p141 = scmp.ne.s32.totalorder %s133, %s136
      %p142 = scmp.eq.s32.totalorder %s13, 0
      %p143 = por %p141, %p142
      %p144 = scmp.ne.s32.totalorder %s133, %s136
      %p145 = scmp.eq.s32.totalorder %s18, 1
      %p146 = por %p144, %p145
      %p147 = scmp.ne.s32.totalorder %s136, %s137
      %p148 = scmp.eq.s32.totalorder %s18, 0
      %p149 = por %p147, %p148
      %p150 = scmp.ne.s32.totalorder %s136, %s137
      %p151 = scmp.eq.s32.totalorder %s19, 1
      %p152 = por %p150, %p151
      %p154 = scmp.ne.s32.totalorder %s137, %s153
      %p155 = scmp.eq.s32.totalorder %s19, 0
      %p156 = por %p154, %p155
      %p157 = scmp.le.s32.totalorder 1, %s13
      %p158 = scmp.lt.s32.totalorder %s13, 3
      %p159 = pnand %p157, %p158
      %p160 = pneg %p159
      // Predicated region
      $region9: #{tpu_custom_call.1} parent=5 // pred_check
        _
      $region10: #{tpu_custom_call.1} parent=5 // pred_check_branch
        %162 = sbr.rel (%p159) target = $region12
      $region11: #{tpu_custom_call.1} parent=5 // pred_region
        %s163 = ssub.s32 %s13, 1
        // Predicated region
        $region13: #{tpu_custom_call.1} parent=11 // pred_check
          %p164 = pneg %p100
        $region14: #{tpu_custom_call.1} parent=11 // pred_check_branch
          %166 = sbr.rel (%p164) target = $region16
        $region15: #{tpu_custom_call.1} parent=11 // pred_region
          _
        $region16: #{tpu_custom_call.1} parent=11 // pred_fallthru
          _
        // Predicated region
        $region17: #{tpu_custom_call.1} parent=11 // pred_check
          %p167 = pneg %p121
        $region18: #{tpu_custom_call.1} parent=11 // pred_check_branch
          %169 = sbr.rel (%p167) target = $region20
        $region19: #{tpu_custom_call.1} parent=11 // pred_region
          _
        $region20: #{tpu_custom_call.1} parent=11 // pred_fallthru
          _
      $region12: #{tpu_custom_call.1} parent=5 // pred_fallthru
        _
      %p170 = scmp.lt.s32.totalorder %s13, 2
      // Predicated region
      $region21: #{tpu_custom_call.1} parent=5 // pred_check
        %p171 = pneg %p170
      $region22: #{tpu_custom_call.1} parent=5 // pred_check_branch
        %173 = sbr.rel (%p171) target = $region24
      $region23: #{tpu_custom_call.1} parent=5 // pred_region
        // Predicated region
        $region25: #{tpu_custom_call.1} parent=23 // pred_check
          %p174 = pneg %p45
        $region26: #{tpu_custom_call.1} parent=23 // pred_check_branch
          %176 = sbr.rel (%p174) target = $region28
        $region27: #{tpu_custom_call.1} parent=23 // pred_region
          %p177 = scmp.lt.s32.totalorder %s20, 1
          %s178 = scalar_select %p177, %s20, 1
          %s179 = smul.addr %s178, 32
          %s180 = smul.addr %s179, 4
          %s181 = scalar_lea.vmem %s0, %s180
        $region28: #{tpu_custom_call.1} parent=23 // pred_fallthru
          _
        // Predicated region
        $region29: #{tpu_custom_call.1} parent=23 // pred_check
          %p182 = pneg %p73
        $region30: #{tpu_custom_call.1} parent=23 // pred_check_branch
          %184 = sbr.rel (%p182) target = $region32
        $region31: #{tpu_custom_call.1} parent=23 // pred_region
          %s185 = smul.u32 2, %s21
          %p186 = scmp.lt.s32.totalorder %s20, 1
          %s187 = scalar_select %p186, %s20, 1
          %p188 = scmp.lt.s32.totalorder %s185, 1
          %s189 = scalar_select %p188, %s185, 1
          %s190 = smul.addr %s187, 12
          %s191 = sadd.s32 %s189, %s190
          %s192 = smul.addr %s191, 8
          %s193 = scalar_lea.vmem %s1, %s192
          %s194 = smul.u32 2, %s21
        $region32: #{tpu_custom_call.1} parent=23 // pred_fallthru
          _
      $region24: #{tpu_custom_call.1} parent=5 // pred_fallthru
        _
      %p195 = scmp.le.s32.totalorder 1, %s13
      %p196 = scmp.lt.s32.totalorder %s13, 3
      %p197 = pnand %p195, %p196
      %p198 = pneg %p197
      // Predicated region
      $region33: #{tpu_custom_call.1} parent=5 // pred_check
        _
      $region34: #{tpu_custom_call.1} parent=5 // pred_check_branch
        %200 = sbr.rel (%p197) target = $region36
      $region35: #{tpu_custom_call.1} parent=5 // pred_region
        %s201 = ssub.s32 %s13, 1
        %p202 = scmp.lt.s32.totalorder %s22, 1
        %s203 = scalar_select %p202, %s22, 1
        %s204 = smul.addr %s203, 32
        %s205 = smul.addr %s204, 4
        %s206 = scalar_lea.vmem %s0, %s205
        %p207 = pneg %p51
        %p208 = pneg %p48
        %s209 = smul.u32 2, %s23
        %p210 = scmp.lt.s32.totalorder %s22, 1
        %s211 = scalar_select %p210, %s22, 1
        %p212 = scmp.lt.s32.totalorder %s209, 1
        %s213 = scalar_select %p212, %s209, 1
        %s214 = smul.addr %s211, 12
        %s215 = sadd.s32 %s213, %s214
        %s216 = smul.addr %s215, 8
        %s217 = scalar_lea.vmem %s1, %s216
        %p218 = pneg %p79
        %p219 = pneg %p76
        %p220 = pneg %p100
        %p221 = pneg %p97
        %p222 = pneg %p121
        %p223 = pneg %p118
        %p224 = pneg %p149
        %p225 = pneg %p146
        %s226 = sand.u32 %s136, 1
        %s227 = scalar_lea.sflag [#allocation4], %s226
        %s228 = sand.u32 %s136, 1
        %s229 = smul.addr %s228, 16
        %s230 = scalar_lea.vmem [#allocation3], %s229
        %p231 = scmp.lt.s32.totalorder %s22, 1
        %s232 = scalar_select %p231, %s22, 1
        %s233 = smul.addr %s232, 32
        %s234 = smul.addr %s233, 4
        %s235 = scalar_lea.vmem %s0, %s234
        %s236 = smul.u32 2, %s23
        %p237 = scmp.lt.s32.totalorder %s22, 1
        %s238 = scalar_select %p237, %s22, 1
        %p239 = scmp.lt.s32.totalorder %s236, 1
        %s240 = scalar_select %p239, %s236, 1
        %s241 = smul.addr %s238, 12
        %s242 = sadd.s32 %s240, %s241
        %s243 = smul.addr %s242, 8
        %s244 = scalar_lea.vmem %s1, %s243
        %s245 = smul.u32 2, %s23
        %s246 = smul.u32 2, %s23
        %v248 = vld [vmem:[%s235] sm:$0xf]
        %v249 = vld [vmem:[%s235 + $0x4] sm:$0xf]
        %v250 = vld [vmem:[%s235 + $0x8] sm:$0xf]
        %v251 = vld [vmem:[%s235 + $0xc] sm:$0xf]
        %v252 = vld [vmem:[%s235 + $0x10] sm:$0xf]
        %v253 = vld [vmem:[%s235 + $0x14] sm:$0xf]
        %v254 = vld [vmem:[%s235 + $0x18] sm:$0xf]
        %v255 = vld [vmem:[%s235 + $0x1c] sm:$0xf]
        %v256 = vld [vmem:[%s235 + $0x20] sm:$0xf]
        %v257 = vld [vmem:[%s235 + $0x24] sm:$0xf]
        %v258 = vld [vmem:[%s235 + $0x28] sm:$0xf]
        %v259 = vld [vmem:[%s235 + $0x2c] sm:$0xf]
        %v260 = vld [vmem:[%s235 + $0x30] sm:$0xf]
        %v261 = vld [vmem:[%s235 + $0x34] sm:$0xf]
        %v262 = vld [vmem:[%s235 + $0x38] sm:$0xf]
        %v263 = vld [vmem:[%s235 + $0x3c] sm:$0xf]
        %v264 = vld [vmem:[%s235 + $0x40] sm:$0xf]
        %v265 = vld [vmem:[%s235 + $0x44] sm:$0xf]
        %v266 = vld [vmem:[%s235 + $0x48] sm:$0xf]
        %v267 = vld [vmem:[%s235 + $0x4c] sm:$0xf]
        %v268 = vld [vmem:[%s235 + $0x50] sm:$0xf]
        %v269 = vld [vmem:[%s235 + $0x54] sm:$0xf]
        %v270 = vld [vmem:[%s235 + $0x58] sm:$0xf]
        %v271 = vld [vmem:[%s235 + $0x5c] sm:$0xf]
        %v272 = vld [vmem:[%s235 + $0x60] sm:$0xf]
        %v273 = vld [vmem:[%s235 + $0x64] sm:$0xf]
        %v274 = vld [vmem:[%s235 + $0x68] sm:$0xf]
        %v275 = vld [vmem:[%s235 + $0x6c] sm:$0xf]
        %v276 = vld [vmem:[%s235 + $0x70] sm:$0xf]
        %v277 = vld [vmem:[%s235 + $0x74] sm:$0xf]
        %v278 = vld [vmem:[%s235 + $0x78] sm:$0xf]
        %v279 = vld [vmem:[%s235 + $0x7c] sm:$0xf]
        %v280 = vld [vmem:[%s244] sm:$0xff]
        %v281 = vld [vmem:[%s244 + $0x8] sm:$0xff]
        %v282 = vld [vmem:[%s244 + $0x10] sm:$0x1]
        %v283 = vld [vmem:[%s244 + $0x18] sm:$0x1]
        %s284 = scalar_lea.vmem %s244, 32
        %v285 = vld [vmem:[%s284] sm:$0xff]
        %v286 = vld [vmem:[%s284 + $0x8] sm:$0xff]
        %v287 = vld [vmem:[%s284 + $0x10] sm:$0x1]
        %v288 = vld [vmem:[%s284 + $0x18] sm:$0x1]
        %s289 = scalar_lea.vmem %s244, 64
        %v290 = vld [vmem:[%s289] sm:$0xff]
        %v291 = vld [vmem:[%s289 + $0x8] sm:$0xff]
        %v292 = vld [vmem:[%s289 + $0x10] sm:$0x1]
        %v293 = vld [vmem:[%s289 + $0x18] sm:$0x1]
        %v294 = vmax.f32 %v280, -1.0
        %v295 = vmax.f32 %v281, -1.0
        %v296 = vmax.f32 %v282, -1.0
        %v297 = vmax.f32 %v283, -1.0
        %v298 = vmin.f32 %v294, 16.0
        %v299 = vmin.f32 %v295, 16.0
        %v300 = vmin.f32 %v296, 16.0
        %v301 = vmin.f32 %v297, 16.0
        %v302 = vmax.f32 %v285, -1.0
        %v303 = vmax.f32 %v286, -1.0
        %v304 = vmax.f32 %v287, -1.0
        %v305 = vmax.f32 %v288, -1.0
        %v306 = vmin.f32 %v302, 16.0
        %v307 = vmin.f32 %v303, 16.0
        %v308 = vmin.f32 %v304, 16.0
        %v309 = vmin.f32 %v305, 16.0
        %v310 = vfloor.f32 %v298
        %v311 = vfloor.f32 %v299
        %v312 = vfloor.f32 %v300
        %v313 = vfloor.f32 %v301
        %v314 = vfloor.f32 %v306
        %v315 = vfloor.f32 %v307
        %v316 = vfloor.f32 %v308
        %v317 = vfloor.f32 %v309
        %v318 = vsub.f32 %v298, %v310
        %v319 = vsub.f32 %v299, %v311
        %v320 = vsub.f32 %v300, %v312
        %v321 = vsub.f32 %v301, %v313
        %v322 = vsub.f32 %v306, %v314
        %v323 = vsub.f32 %v307, %v315
        %v324 = vsub.f32 %v308, %v316
        %v325 = vsub.f32 %v309, %v317
        %v326 = vcvt.f32.s32.to.zero.pseudo %v310
        %v327 = vcvt.f32.s32.to.zero.pseudo %v311
        %v328 = vcvt.f32.s32.to.zero.pseudo %v312
        %v329 = vcvt.f32.s32.to.zero.pseudo %v313
        %v330 = vcvt.f32.s32.to.zero.pseudo %v314
        %v331 = vcvt.f32.s32.to.zero.pseudo %v315
        %v332 = vcvt.f32.s32.to.zero.pseudo %v316
        %v333 = vcvt.f32.s32.to.zero.pseudo %v317
        %v334 = vsub.f32 1.0, %v318
        %v335 = vsub.f32 1.0, %v319
        %v336 = vsub.f32 1.0, %v320
        %v337 = vsub.f32 1.0, %v321
        %v338 = vsub.f32 1.0, %v322
        %v339 = vsub.f32 1.0, %v323
        %v340 = vsub.f32 1.0, %v324
        %v341 = vsub.f32 1.0, %v325
        %v342 = vmul.f32 %v338, %v290
        %v343 = vmul.f32 %v339, %v291
        %v344 = vmul.f32 %v340, %v292
        %v345 = vmul.f32 %v341, %v293
        %v346 = vmul.f32 %v322, %v290
        %v347 = vmul.f32 %v323, %v291
        %v348 = vmul.f32 %v324, %v292
        %v349 = vmul.f32 %v325, %v293
        %v350 = vlaneseq
        %v351 = vshrl.u32 %v350, 7
        %v352 = vadd.s32 %v351, 8
        %v353 = vlaneseq
        %v354 = vshrl.u32 %v353, 7
        %v355 = vsub.s32 0, %v354
        %v356 = vrot.slane %v326, %v355
        %v357 = vlaneseq
        %v358 = vshrl.u32 %v357, 7
        %v359 = vsub.s32 0, %v358
        %v360 = vrot.slane %v327, %v359
        %vm361 = vcmp.eq.s32.totalorder %v351, %v356
        %vm362 = vcmp.eq.s32.totalorder %v351, %v360
        %vm363 = vcmp.eq.s32.totalorder %v352, %v356
        %vm364 = vcmp.eq.s32.totalorder %v352, %v360
        %v365 = vlaneseq
        %v366 = vshrl.u32 %v365, 7
        %v367 = vsub.s32 0, %v366
        %v368 = vrot.slane %v334, %v367
        %v369 = vlaneseq
        %v370 = vshrl.u32 %v369, 7
        %v371 = vsub.s32 0, %v370
        %v372 = vrot.slane %v335, %v371
        %v373 = vsel %vm361, %v368, 0.0
        %v374 = vsel %vm362, %v372, 0.0
        %v375 = vsel %vm363, %v368, 0.0
        %v376 = vsel %vm364, %v372, 0.0
        %v377 = vadd.s32 %v326, 1
        %v378 = vadd.s32 %v327, 1
        %v379 = vlaneseq
        %v380 = vshrl.u32 %v379, 7
        %v381 = vsub.s32 0, %v380
        %v382 = vrot.slane %v377, %v381
        %v383 = vlaneseq
        %v384 = vshrl.u32 %v383, 7
        %v385 = vsub.s32 0, %v384
        %v386 = vrot.slane %v378, %v385
        %vm387 = vcmp.eq.s32.totalorder %v351, %v382
        %vm388 = vcmp.eq.s32.totalorder %v351, %v386
        %vm389 = vcmp.eq.s32.totalorder %v352, %v382
        %vm390 = vcmp.eq.s32.totalorder %v352, %v386
        %v391 = vlaneseq
        %v392 = vshrl.u32 %v391, 7
        %v393 = vsub.s32 0, %v392
        %v394 = vrot.slane %v318, %v393
        %v395 = vlaneseq
        %v396 = vshrl.u32 %v395, 7
        %v397 = vsub.s32 0, %v396
        %v398 = vrot.slane %v319, %v397
        %v399 = vsel %vm387, %v394, 0.0
        %v400 = vsel %vm388, %v398, 0.0
        %v401 = vsel %vm389, %v394, 0.0
        %v402 = vsel %vm390, %v398, 0.0
        %v403 = vadd.f32 %v373, %v399
        %v404 = vadd.f32 %v374, %v400
        %v405 = vadd.f32 %v375, %v401
        %v406 = vadd.f32 %v376, %v402
        %v407 = vlaneseq
        %v408 = vshrl.u32 %v407, 7
        %v409 = vsub.s32 0, %v408
        %v410 = vrot.slane %v330, %v409
        %v411 = vlaneseq
        %v412 = vshrl.u32 %v411, 7
        %v413 = vsub.s32 0, %v412
        %v414 = vrot.slane %v331, %v413
        %vm415 = vcmp.eq.s32.totalorder %v351, %v410
        %vm416 = vcmp.eq.s32.totalorder %v351, %v414
        %vm417 = vcmp.eq.s32.totalorder %v352, %v410
        %vm418 = vcmp.eq.s32.totalorder %v352, %v414
        %v419 = vlaneseq
        %v420 = vshrl.u32 %v419, 7
        %v421 = vsub.s32 0, %v420
        %v422 = vrot.slane %v342, %v421
        %v423 = vlaneseq
        %v424 = vshrl.u32 %v423, 7
        %v425 = vsub.s32 0, %v424
        %v426 = vrot.slane %v343, %v425
        %v427 = vsel %vm415, %v422, 0.0
        %v428 = vsel %vm416, %v426, 0.0
        %v429 = vsel %vm417, %v422, 0.0
        %v430 = vsel %vm418, %v426, 0.0
        %v431 = vadd.s32 %v330, 1
        %v432 = vadd.s32 %v331, 1
        %v433 = vlaneseq
        %v434 = vshrl.u32 %v433, 7
        %v435 = vsub.s32 0, %v434
        %v436 = vrot.slane %v431, %v435
        %v437 = vlaneseq
        %v438 = vshrl.u32 %v437, 7
        %v439 = vsub.s32 0, %v438
        %v440 = vrot.slane %v432, %v439
        %vm441 = vcmp.eq.s32.totalorder %v351, %v436
        %vm442 = vcmp.eq.s32.totalorder %v351, %v440
        %vm443 = vcmp.eq.s32.totalorder %v352, %v436
        %vm444 = vcmp.eq.s32.totalorder %v352, %v440
        %v445 = vlaneseq
        %v446 = vshrl.u32 %v445, 7
        %v447 = vsub.s32 0, %v446
        %v448 = vrot.slane %v346, %v447
        %v449 = vlaneseq
        %v450 = vshrl.u32 %v449, 7
        %v451 = vsub.s32 0, %v450
        %v452 = vrot.slane %v347, %v451
        %v453 = vsel %vm441, %v448, 0.0
        %v454 = vsel %vm442, %v452, 0.0
        %v455 = vsel %vm443, %v448, 0.0
        %v456 = vsel %vm444, %v452, 0.0
        %v457 = vadd.f32 %v427, %v453
        %v458 = vadd.f32 %v428, %v454
        %v459 = vadd.f32 %v429, %v455
        %v460 = vadd.f32 %v430, %v456
        %v461 = vpack.c.bf16 %v405, %v403
        %v462 = vpack.c.bf16 %v406, %v404
        %v495 = vunpack.c.l.b16 %v248
        %v496 = vunpack.c.l.b16 %v249
        %v497 = vunpack.c.l.b16 %v250
        %v498 = vunpack.c.l.b16 %v251
        %v499 = vunpack.c.l.b16 %v252
        %v500 = vunpack.c.l.b16 %v253
        %v501 = vunpack.c.l.b16 %v254
        %v502 = vunpack.c.l.b16 %v255
        %v503 = vunpack.c.l.b16 %v256
        %v504 = vunpack.c.l.b16 %v257
        %v505 = vunpack.c.l.b16 %v258
        %v506 = vunpack.c.l.b16 %v259
        %v507 = vunpack.c.l.b16 %v260
        %v508 = vunpack.c.l.b16 %v261
        %v509 = vunpack.c.l.b16 %v262
        %v510 = vunpack.c.l.b16 %v263
        %v511 = vunpack.c.l.b16 %v264
        %v512 = vunpack.c.l.b16 %v265
        %v513 = vunpack.c.l.b16 %v266
        %v514 = vunpack.c.l.b16 %v267
        %v515 = vunpack.c.l.b16 %v268
        %v516 = vunpack.c.l.b16 %v269
        %v517 = vunpack.c.l.b16 %v270
        %v518 = vunpack.c.l.b16 %v271
        %v519 = vunpack.c.l.b16 %v272
        %v520 = vunpack.c.l.b16 %v273
        %v521 = vunpack.c.l.b16 %v274
        %v522 = vunpack.c.l.b16 %v275
        %v523 = vunpack.c.l.b16 %v276
        %v524 = vunpack.c.l.b16 %v277
        %v525 = vunpack.c.l.b16 %v278
        %v526 = vunpack.c.l.b16 %v279
        %v527 = vpack.c.b16 %v496, %v495
        %v528 = vpack.c.b16 %v498, %v497
        %v529 = vpack.c.b16 %v500, %v499
        %v530 = vpack.c.b16 %v502, %v501
        %v531 = vpack.c.b16 %v504, %v503
        %v532 = vpack.c.b16 %v506, %v505
        %v533 = vpack.c.b16 %v508, %v507
        %v534 = vpack.c.b16 %v510, %v509
        %v535 = vpack.c.b16 %v512, %v511
        %v536 = vpack.c.b16 %v514, %v513
        %v537 = vpack.c.b16 %v516, %v515
        %v538 = vpack.c.b16 %v518, %v517
        %v539 = vpack.c.b16 %v520, %v519
        %v540 = vpack.c.b16 %v522, %v521
        %v541 = vpack.c.b16 %v524, %v523
        %v542 = vpack.c.b16 %v526, %v525
        %vm543 = vcmask 130048
        %v545 = vsel %vm543, %v527, 0
        %v548 = vsel %vm543, %v528, 0
        %v551 = vsel %vm543, %v529, 0
        %v554 = vsel %vm543, %v530, 0
        %v557 = vsel %vm543, %v531, 0
        %v560 = vsel %vm543, %v532, 0
        %v563 = vsel %vm543, %v533, 0
        %v566 = vsel %vm543, %v534, 0
        %v569 = vsel %vm543, %v535, 0
        %v572 = vsel %vm543, %v536, 0
        %v575 = vsel %vm543, %v537, 0
        %v578 = vsel %vm543, %v538, 0
        %v581 = vsel %vm543, %v539, 0
        %v584 = vsel %vm543, %v540, 0
        %v587 = vsel %vm543, %v541, 0
        %v590 = vsel %vm543, %v542, 0
        %592 = vmatprep.subr.bf16.mxu0 %v462
        %593 = vmatpush1.bf16.msra.mxu0 %v461
        %594 = vmatprep.subr.bf16.mxu0 0
        %595 = vmatpush1.bf16.msra.mxu0 0
        %596 = vmatprep.subr.bf16.mxu0 0
        %597 = vmatpush1.bf16.msra.mxu0 0
        %598 = vmatprep.subr.bf16.mxu0 0
        %599 = vmatpush1.bf16.msra.mxu0 0
        %600 = vmatprep.subr.bf16.mxu0 0
        %601 = vmatpush1.bf16.msra.mxu0 0
        %602 = vmatprep.subr.bf16.mxu0 0
        %603 = vmatpush1.bf16.msra.mxu0 0
        %604 = vmatprep.subr.bf16.mxu0 0
        %605 = vmatpush1.bf16.msra.mxu0 0
        %606 = vmatprep.subr.bf16.mxu0 0
        %607 = vmatpush1.bf16.msra.mxu0 0
        %608 = vmatprep.subr.bf16.mxu0 0
        %609 = vmatpush1.bf16.msra.mxu0 0
        %610 = vmatprep.subr.bf16.mxu0 0
        %611 = vmatpush1.bf16.msra.mxu0 0
        %612 = vmatprep.subr.bf16.mxu0 0
        %613 = vmatpush1.bf16.msra.mxu0 0
        %614 = vmatprep.subr.bf16.mxu0 0
        %615 = vmatpush1.bf16.msra.mxu0 0
        %616 = vmatprep.subr.bf16.mxu0 0
        %617 = vmatpush1.bf16.msra.mxu0 0
        %618 = vmatprep.subr.bf16.mxu0 0
        %619 = vmatpush1.bf16.msra.mxu0 0
        %620 = vmatprep.subr.bf16.mxu0 0
        %621 = vmatpush1.bf16.msra.mxu0 0
        %622 = vmatprep.subr.bf16.mxu0 0
        %623 = vmatpush1.bf16.msra.mxu0 0
        %624 = vmatprep.mubr.bf16.mxu0 0
        %625 = vmatmul.mubr.bf16.gmra.mrb[0].mxu0 %v545
        %v626 = vpop.f32.mrb[0].mxu0
        %v627 = vadd.f32 0.0, %v626
        %v628 = vpop.f32.mrb[0].mxu0
        %v629 = vadd.f32 0.0, %v628
        %v630 = vpop.f32.mrb[0].mxu0
        %v631 = vadd.f32 0.0, %v630
        %v632 = vpop.f32.mrb[0].mxu0
        %v633 = vadd.f32 0.0, %v632
        %634 = vmatprep.mubr.bf16.mxu0 0
        %635 = vmatmul.mubr.bf16.gmra.mrb[0].mxu0 %v548
        %v636 = vpop.f32.mrb[0].mxu0
        %v637 = vadd.f32 0.0, %v636
        %v638 = vpop.f32.mrb[0].mxu0
        %v639 = vadd.f32 0.0, %v638
        %v640 = vpop.f32.mrb[0].mxu0
        %v641 = vadd.f32 0.0, %v640
        %v642 = vpop.f32.mrb[0].mxu0
        %v643 = vadd.f32 0.0, %v642
        %644 = vmatprep.mubr.bf16.mxu0 0
        %645 = vmatmul.mubr.bf16.gmra.mrb[0].mxu0 %v551
        %v646 = vpop.f32.mrb[0].mxu0
        %v647 = vadd.f32 0.0, %v646
        %v648 = vpop.f32.mrb[0].mxu0
        %v649 = vadd.f32 0.0, %v648
        %v650 = vpop.f32.mrb[0].mxu0
        %v651 = vadd.f32 0.0, %v650
        %v652 = vpop.f32.mrb[0].mxu0
        %v653 = vadd.f32 0.0, %v652
        %654 = vmatprep.mubr.bf16.mxu0 0
        %655 = vmatmul.mubr.bf16.gmra.mrb[0].mxu0 %v554
        %v656 = vpop.f32.mrb[0].mxu0
        %v657 = vadd.f32 0.0, %v656
        %v658 = vpop.f32.mrb[0].mxu0
        %v659 = vadd.f32 0.0, %v658
        %v660 = vpop.f32.mrb[0].mxu0
        %v661 = vadd.f32 0.0, %v660
        %v662 = vpop.f32.mrb[0].mxu0
        %v663 = vadd.f32 0.0, %v662
        %664 = vmatprep.mubr.bf16.mxu0 0
        %665 = vmatmul.mubr.bf16.gmra.mrb[0].mxu0 %v557
        %v666 = vpop.f32.mrb[0].mxu0
        %v667 = vadd.f32 0.0, %v666
        %v668 = vpop.f32.mrb[0].mxu0
        %v669 = vadd.f32 0.0, %v668
        %v670 = vpop.f32.mrb[0].mxu0
        %v671 = vadd.f32 0.0, %v670
        %v672 = vpop.f32.mrb[0].mxu0
        %v673 = vadd.f32 0.0, %v672
        %674 = vmatprep.mubr.bf16.mxu0 0
        %675 = vmatmul.mubr.bf16.gmra.mrb[0].mxu0 %v560
        %v676 = vpop.f32.mrb[0].mxu0
        %v677 = vadd.f32 0.0, %v676
        %v678 = vpop.f32.mrb[0].mxu0
        %v679 = vadd.f32 0.0, %v678
        %v680 = vpop.f32.mrb[0].mxu0
        %v681 = vadd.f32 0.0, %v680
        %v682 = vpop.f32.mrb[0].mxu0
        %v683 = vadd.f32 0.0, %v682
        %684 = vmatprep.mubr.bf16.mxu0 0
        %685 = vmatmul.mubr.bf16.gmra.mrb[0].mxu0 %v563
        %v686 = vpop.f32.mrb[0].mxu0
        %v687 = vadd.f32 0.0, %v686
        %v688 = vpop.f32.mrb[0].mxu0
        %v689 = vadd.f32 0.0, %v688
        %v690 = vpop.f32.mrb[0].mxu0
        %v691 = vadd.f32 0.0, %v690
        %v692 = vpop.f32.mrb[0].mxu0
        %v693 = vadd.f32 0.0, %v692
        %694 = vmatprep.mubr.bf16.mxu0 0
        %695 = vmatmul.mubr.bf16.gmra.mrb[0].mxu0 %v566
        %v696 = vpop.f32.mrb[0].mxu0
        %v697 = vadd.f32 0.0, %v696
        %v698 = vpop.f32.mrb[0].mxu0
        %v699 = vadd.f32 0.0, %v698
        %v700 = vpop.f32.mrb[0].mxu0
        %v701 = vadd.f32 0.0, %v700
        %v702 = vpop.f32.mrb[0].mxu0
        %v703 = vadd.f32 0.0, %v702
        %704 = vmatprep.mubr.bf16.mxu0 0
        %705 = vmatmul.mubr.bf16.gmra.mrb[0].mxu0 %v569
        %v706 = vpop.f32.mrb[0].mxu0
        %v707 = vadd.f32 0.0, %v706
        %v708 = vpop.f32.mrb[0].mxu0
        %v709 = vadd.f32 0.0, %v708
        %v710 = vpop.f32.mrb[0].mxu0
        %v711 = vadd.f32 0.0, %v710
        %v712 = vpop.f32.mrb[0].mxu0
        %v713 = vadd.f32 0.0, %v712
        %714 = vmatprep.mubr.bf16.mxu0 0
        %715 = vmatmul.mubr.bf16.gmra.mrb[0].mxu0 %v572
        %v716 = vpop.f32.mrb[0].mxu0
        %v717 = vadd.f32 0.0, %v716
        %v718 = vpop.f32.mrb[0].mxu0
        %v719 = vadd.f32 0.0, %v718
        %v720 = vpop.f32.mrb[0].mxu0
        %v721 = vadd.f32 0.0, %v720
        %v722 = vpop.f32.mrb[0].mxu0
        %v723 = vadd.f32 0.0, %v722
        %724 = vmatprep.mubr.bf16.mxu0 0
        %725 = vmatmul.mubr.bf16.gmra.mrb[0].mxu0 %v575
        %v726 = vpop.f32.mrb[0].mxu0
        %v727 = vadd.f32 0.0, %v726
        %v728 = vpop.f32.mrb[0].mxu0
        %v729 = vadd.f32 0.0, %v728
        %v730 = vpop.f32.mrb[0].mxu0
        %v731 = vadd.f32 0.0, %v730
        %v732 = vpop.f32.mrb[0].mxu0
        %v733 = vadd.f32 0.0, %v732
        %734 = vmatprep.mubr.bf16.mxu0 0
        %735 = vmatmul.mubr.bf16.gmra.mrb[0].mxu0 %v578
        %v736 = vpop.f32.mrb[0].mxu0
        %v737 = vadd.f32 0.0, %v736
        %v738 = vpop.f32.mrb[0].mxu0
        %v739 = vadd.f32 0.0, %v738
        %v740 = vpop.f32.mrb[0].mxu0
        %v741 = vadd.f32 0.0, %v740
        %v742 = vpop.f32.mrb[0].mxu0
        %v743 = vadd.f32 0.0, %v742
        %744 = vmatprep.mubr.bf16.mxu0 0
        %745 = vmatmul.mubr.bf16.gmra.mrb[0].mxu0 %v581
        %v746 = vpop.f32.mrb[0].mxu0
        %v747 = vadd.f32 0.0, %v746
        %v748 = vpop.f32.mrb[0].mxu0
        %v749 = vadd.f32 0.0, %v748
        %v750 = vpop.f32.mrb[0].mxu0
        %v751 = vadd.f32 0.0, %v750
        %v752 = vpop.f32.mrb[0].mxu0
        %v753 = vadd.f32 0.0, %v752
        %754 = vmatprep.mubr.bf16.mxu0 0
        %755 = vmatmul.mubr.bf16.gmra.mrb[0].mxu0 %v584
        %v756 = vpop.f32.mrb[0].mxu0
        %v757 = vadd.f32 0.0, %v756
        %v758 = vpop.f32.mrb[0].mxu0
        %v759 = vadd.f32 0.0, %v758
        %v760 = vpop.f32.mrb[0].mxu0
        %v761 = vadd.f32 0.0, %v760
        %v762 = vpop.f32.mrb[0].mxu0
        %v763 = vadd.f32 0.0, %v762
        %764 = vmatprep.mubr.bf16.mxu0 0
        %765 = vmatmul.mubr.bf16.gmra.mrb[0].mxu0 %v587
        %v766 = vpop.f32.mrb[0].mxu0
        %v767 = vadd.f32 0.0, %v766
        %v768 = vpop.f32.mrb[0].mxu0
        %v769 = vadd.f32 0.0, %v768
        %v770 = vpop.f32.mrb[0].mxu0
        %v771 = vadd.f32 0.0, %v770
        %v772 = vpop.f32.mrb[0].mxu0
        %v773 = vadd.f32 0.0, %v772
        %774 = vmatprep.mubr.bf16.mxu0 0
        %775 = vmatmul.mubr.bf16.gmra.mrb[0].mxu0 %v590
        %v776 = vpop.f32.mrb[0].mxu0
        %v777 = vadd.f32 0.0, %v776
        %v778 = vpop.f32.mrb[0].mxu0
        %v779 = vadd.f32 0.0, %v778
        %v780 = vpop.f32.mrb[0].mxu0
        %v781 = vadd.f32 0.0, %v780
        %v782 = vpop.f32.mrb[0].mxu0
        %v783 = vadd.f32 0.0, %v782
        %784 = vdwg.mxu0
        %v789 = vcombine.low %v457, %v458
        %v790 = vcombine.high %v457, %v458
        %v792 = vunpack.c.l.s4 1966171168
        %v793 = vunpack.c.0.s8 %v792
        %v794 = vlaneseq
        %v795 = vshrl.u32 %v794, 7
        %v796 = vsub.s32 %v793, %v795
        %v797 = vrot.slane %v789, %v796
        %v799 = vunpack.c.l.s4 1966171168
        %v800 = vunpack.c.0.s8 %v799
        %v801 = vlaneseq
        %v802 = vshrl.u32 %v801, 7
        %v803 = vsub.s32 %v800, %v802
        %v804 = vrot.slane %v790, %v803
        %v805 = vcombine.high %v797, %v797
        %v806 = vcombine.high %v804, %v804
        %v808 = vunpack.c.l.s4 1966171168
        %v809 = vunpack.c.0.s8 %v808
        %v810 = vlaneseq
        %v811 = vshrl.u32 %v810, 7
        %v812 = vsub.s32 %v809, %v811
        %v813 = vrot.slane %v797, %v812
        %v815 = vunpack.c.l.s4 1966171168
        %v816 = vunpack.c.0.s8 %v815
        %v817 = vlaneseq
        %v818 = vshrl.u32 %v817, 7
        %v819 = vsub.s32 %v816, %v818
        %v820 = vrot.slane %v804, %v819
        %v822 = vunpack.c.l.s4 1966171168
        %v823 = vunpack.c.0.s8 %v822
        %v824 = vlaneseq
        %v825 = vshrl.u32 %v824, 7
        %v826 = vsub.s32 %v823, %v825
        %v827 = vrot.slane %v805, %v826
        %v829 = vunpack.c.l.s4 1966171168
        %v830 = vunpack.c.0.s8 %v829
        %v831 = vlaneseq
        %v832 = vshrl.u32 %v831, 7
        %v833 = vsub.s32 %v830, %v832
        %v834 = vrot.slane %v806, %v833
        %v835 = vcombine.high %v813, %v813
        %v836 = vcombine.high %v820, %v820
        %v837 = vcombine.high %v827, %v827
        %v838 = vcombine.high %v834, %v834
        %v839 = vcombine.low %v459, %v460
        %v840 = vcombine.high %v459, %v460
        %v842 = vunpack.c.l.s4 1966171168
        %v843 = vunpack.c.0.s8 %v842
        %v844 = vlaneseq
        %v845 = vshrl.u32 %v844, 7
        %v846 = vsub.s32 %v843, %v845
        %v847 = vrot.slane %v839, %v846
        %v849 = vunpack.c.l.s4 1966171168
        %v850 = vunpack.c.0.s8 %v849
        %v851 = vlaneseq
        %v852 = vshrl.u32 %v851, 7
        %v853 = vsub.s32 %v850, %v852
        %v854 = vrot.slane %v840, %v853
        %v855 = vcombine.high %v847, %v847
        %v856 = vcombine.high %v854, %v854
        %v858 = vunpack.c.l.s4 1966171168
        %v859 = vunpack.c.0.s8 %v858
        %v860 = vlaneseq
        %v861 = vshrl.u32 %v860, 7
        %v862 = vsub.s32 %v859, %v861
        %v863 = vrot.slane %v847, %v862
        %v865 = vunpack.c.l.s4 1966171168
        %v866 = vunpack.c.0.s8 %v865
        %v867 = vlaneseq
        %v868 = vshrl.u32 %v867, 7
        %v869 = vsub.s32 %v866, %v868
        %v870 = vrot.slane %v854, %v869
        %v872 = vunpack.c.l.s4 1966171168
        %v873 = vunpack.c.0.s8 %v872
        %v874 = vlaneseq
        %v875 = vshrl.u32 %v874, 7
        %v876 = vsub.s32 %v873, %v875
        %v877 = vrot.slane %v855, %v876
        %v879 = vunpack.c.l.s4 1966171168
        %v880 = vunpack.c.0.s8 %v879
        %v881 = vlaneseq
        %v882 = vshrl.u32 %v881, 7
        %v883 = vsub.s32 %v880, %v882
        %v884 = vrot.slane %v856, %v883
        %v885 = vcombine.high %v863, %v863
        %v886 = vcombine.high %v870, %v870
        %v887 = vcombine.high %v877, %v877
        %v888 = vcombine.high %v884, %v884
        %v889 = vlaneseq
        %v890 = vshrl.u32 %v889, 7
        %v891 = vsub.s32 0, %v890
        %v892 = vrot.slane %v813, %v891
        %v893 = vlaneseq
        %v894 = vshrl.u32 %v893, 7
        %v895 = vsub.s32 1, %v894
        %v896 = vrot.slane %v813, %v895
        %v897 = vlaneseq
        %v898 = vshrl.u32 %v897, 7
        %v899 = vsub.s32 0, %v898
        %v900 = vrot.slane %v827, %v899
        %v901 = vlaneseq
        %v902 = vshrl.u32 %v901, 7
        %v903 = vsub.s32 1, %v902
        %v904 = vrot.slane %v827, %v903
        %v905 = vlaneseq
        %v906 = vshrl.u32 %v905, 7
        %v907 = vsub.s32 0, %v906
        %v908 = vrot.slane %v835, %v907
        %v909 = vlaneseq
        %v910 = vshrl.u32 %v909, 7
        %v911 = vsub.s32 1, %v910
        %v912 = vrot.slane %v835, %v911
        %v913 = vlaneseq
        %v914 = vshrl.u32 %v913, 7
        %v915 = vsub.s32 0, %v914
        %v916 = vrot.slane %v837, %v915
        %v917 = vlaneseq
        %v918 = vshrl.u32 %v917, 7
        %v919 = vsub.s32 1, %v918
        %v920 = vrot.slane %v837, %v919
        %v921 = vlaneseq
        %v922 = vshrl.u32 %v921, 7
        %v923 = vsub.s32 0, %v922
        %v924 = vrot.slane %v820, %v923
        %v925 = vlaneseq
        %v926 = vshrl.u32 %v925, 7
        %v927 = vsub.s32 1, %v926
        %v928 = vrot.slane %v820, %v927
        %v929 = vlaneseq
        %v930 = vshrl.u32 %v929, 7
        %v931 = vsub.s32 0, %v930
        %v932 = vrot.slane %v834, %v931
        %v933 = vlaneseq
        %v934 = vshrl.u32 %v933, 7
        %v935 = vsub.s32 1, %v934
        %v936 = vrot.slane %v834, %v935
        %v937 = vlaneseq
        %v938 = vshrl.u32 %v937, 7
        %v939 = vsub.s32 0, %v938
        %v940 = vrot.slane %v836, %v939
        %v941 = vlaneseq
        %v942 = vshrl.u32 %v941, 7
        %v943 = vsub.s32 1, %v942
        %v944 = vrot.slane %v836, %v943
        %v945 = vlaneseq
        %v946 = vshrl.u32 %v945, 7
        %v947 = vsub.s32 0, %v946
        %v948 = vrot.slane %v838, %v947
        %v949 = vlaneseq
        %v950 = vshrl.u32 %v949, 7
        %v951 = vsub.s32 1, %v950
        %v952 = vrot.slane %v838, %v951
        %v953 = vlaneseq
        %v954 = vshrl.u32 %v953, 7
        %v955 = vsub.s32 0, %v954
        %v956 = vrot.slane %v863, %v955
        %v957 = vlaneseq
        %v958 = vshrl.u32 %v957, 7
        %v959 = vsub.s32 1, %v958
        %v960 = vrot.slane %v863, %v959
        %v961 = vlaneseq
        %v962 = vshrl.u32 %v961, 7
        %v963 = vsub.s32 0, %v962
        %v964 = vrot.slane %v877, %v963
        %v965 = vlaneseq
        %v966 = vshrl.u32 %v965, 7
        %v967 = vsub.s32 1, %v966
        %v968 = vrot.slane %v877, %v967
        %v969 = vlaneseq
        %v970 = vshrl.u32 %v969, 7
        %v971 = vsub.s32 0, %v970
        %v972 = vrot.slane %v885, %v971
        %v973 = vlaneseq
        %v974 = vshrl.u32 %v973, 7
        %v975 = vsub.s32 1, %v974
        %v976 = vrot.slane %v885, %v975
        %v977 = vlaneseq
        %v978 = vshrl.u32 %v977, 7
        %v979 = vsub.s32 0, %v978
        %v980 = vrot.slane %v887, %v979
        %v981 = vlaneseq
        %v982 = vshrl.u32 %v981, 7
        %v983 = vsub.s32 1, %v982
        %v984 = vrot.slane %v887, %v983
        %v985 = vlaneseq
        %v986 = vshrl.u32 %v985, 7
        %v987 = vsub.s32 0, %v986
        %v988 = vrot.slane %v870, %v987
        %v989 = vlaneseq
        %v990 = vshrl.u32 %v989, 7
        %v991 = vsub.s32 1, %v990
        %v992 = vrot.slane %v870, %v991
        %v993 = vlaneseq
        %v994 = vshrl.u32 %v993, 7
        %v995 = vsub.s32 0, %v994
        %v996 = vrot.slane %v884, %v995
        %v997 = vlaneseq
        %v998 = vshrl.u32 %v997, 7
        %v999 = vsub.s32 1, %v998
        %v1000 = vrot.slane %v884, %v999
        %v1001 = vlaneseq
        %v1002 = vshrl.u32 %v1001, 7
        %v1003 = vsub.s32 0, %v1002
        %v1004 = vrot.slane %v886, %v1003
        %v1005 = vlaneseq
        %v1006 = vshrl.u32 %v1005, 7
        %v1007 = vsub.s32 1, %v1006
        %v1008 = vrot.slane %v886, %v1007
        %v1009 = vlaneseq
        %v1010 = vshrl.u32 %v1009, 7
        %v1011 = vsub.s32 0, %v1010
        %v1012 = vrot.slane %v888, %v1011
        %v1013 = vlaneseq
        %v1014 = vshrl.u32 %v1013, 7
        %v1015 = vsub.s32 1, %v1014
        %v1016 = vrot.slane %v888, %v1015
        %v1049 = vmul.f32 %v627, %v892
        %v1050 = vmul.f32 %v629, %v896
        %v1051 = vmul.f32 %v631, %v892
        %v1052 = vmul.f32 %v633, %v896
        %v1053 = vmul.f32 %v637, %v900
        %v1054 = vmul.f32 %v639, %v904
        %v1055 = vmul.f32 %v641, %v900
        %v1056 = vmul.f32 %v643, %v904
        %v1057 = vmul.f32 %v647, %v908
        %v1058 = vmul.f32 %v649, %v912
        %v1059 = vmul.f32 %v651, %v908
        %v1060 = vmul.f32 %v653, %v912
        %v1061 = vmul.f32 %v657, %v916
        %v1062 = vmul.f32 %v659, %v920
        %v1063 = vmul.f32 %v661, %v916
        %v1064 = vmul.f32 %v663, %v920
        %v1065 = vmul.f32 %v667, %v924
        %v1066 = vmul.f32 %v669, %v928
        %v1067 = vmul.f32 %v671, %v924
        %v1068 = vmul.f32 %v673, %v928
        %v1069 = vmul.f32 %v677, %v932
        %v1070 = vmul.f32 %v679, %v936
        %v1071 = vmul.f32 %v681, %v932
        %v1072 = vmul.f32 %v683, %v936
        %v1073 = vmul.f32 %v687, %v940
        %v1074 = vmul.f32 %v689, %v944
        %v1075 = vmul.f32 %v691, %v940
        %v1076 = vmul.f32 %v693, %v944
        %v1077 = vmul.f32 %v697, %v948
        %v1078 = vmul.f32 %v699, %v952
        %v1079 = vmul.f32 %v701, %v948
        %v1080 = vmul.f32 %v703, %v952
        %v1081 = vmul.f32 %v707, %v956
        %v1082 = vmul.f32 %v709, %v960
        %v1083 = vmul.f32 %v711, %v956
        %v1084 = vmul.f32 %v713, %v960
        %v1085 = vmul.f32 %v717, %v964
        %v1086 = vmul.f32 %v719, %v968
        %v1087 = vmul.f32 %v721, %v964
        %v1088 = vmul.f32 %v723, %v968
        %v1089 = vmul.f32 %v727, %v972
        %v1090 = vmul.f32 %v729, %v976
        %v1091 = vmul.f32 %v731, %v972
        %v1092 = vmul.f32 %v733, %v976
        %v1093 = vmul.f32 %v737, %v980
        %v1094 = vmul.f32 %v739, %v984
        %v1095 = vmul.f32 %v741, %v980
        %v1096 = vmul.f32 %v743, %v984
        %v1097 = vmul.f32 %v747, %v988
        %v1098 = vmul.f32 %v749, %v992
        %v1099 = vmul.f32 %v751, %v988
        %v1100 = vmul.f32 %v753, %v992
        %v1101 = vmul.f32 %v757, %v996
        %v1102 = vmul.f32 %v759, %v1000
        %v1103 = vmul.f32 %v761, %v996
        %v1104 = vmul.f32 %v763, %v1000
        %v1105 = vmul.f32 %v767, %v1004
        %v1106 = vmul.f32 %v769, %v1008
        %v1107 = vmul.f32 %v771, %v1004
        %v1108 = vmul.f32 %v773, %v1008
        %v1109 = vmul.f32 %v777, %v1012
        %v1110 = vmul.f32 %v779, %v1016
        %v1111 = vmul.f32 %v781, %v1012
        %v1112 = vmul.f32 %v783, %v1016
        %v1113 = vadd.f32 %v1049, %v1053
        %v1114 = vadd.f32 %v1113, %v1057
        %v1115 = vadd.f32 %v1114, %v1061
        %v1116 = vadd.f32 %v1115, %v1065
        %v1117 = vadd.f32 %v1116, %v1069
        %v1118 = vadd.f32 %v1117, %v1073
        %v1119 = vadd.f32 %v1118, %v1077
        %v1120 = vadd.f32 %v1119, %v1081
        %v1121 = vadd.f32 %v1120, %v1085
        %v1122 = vadd.f32 %v1121, %v1089
        %v1123 = vadd.f32 %v1122, %v1093
        %v1124 = vadd.f32 %v1123, %v1097
        %v1125 = vadd.f32 %v1124, %v1101
        %v1126 = vadd.f32 %v1125, %v1105
        %v1127 = vadd.f32 %v1126, %v1109
        %v1128 = vadd.f32 %v1050, %v1054
        %v1129 = vadd.f32 %v1128, %v1058
        %v1130 = vadd.f32 %v1129, %v1062
        %v1131 = vadd.f32 %v1130, %v1066
        %v1132 = vadd.f32 %v1131, %v1070
        %v1133 = vadd.f32 %v1132, %v1074
        %v1134 = vadd.f32 %v1133, %v1078
        %v1135 = vadd.f32 %v1134, %v1082
        %v1136 = vadd.f32 %v1135, %v1086
        %v1137 = vadd.f32 %v1136, %v1090
        %v1138 = vadd.f32 %v1137, %v1094
        %v1139 = vadd.f32 %v1138, %v1098
        %v1140 = vadd.f32 %v1139, %v1102
        %v1141 = vadd.f32 %v1140, %v1106
        %v1142 = vadd.f32 %v1141, %v1110
        %v1143 = vadd.f32 %v1051, %v1055
        %v1144 = vadd.f32 %v1143, %v1059
        %v1145 = vadd.f32 %v1144, %v1063
        %v1146 = vadd.f32 %v1145, %v1067
        %v1147 = vadd.f32 %v1146, %v1071
        %v1148 = vadd.f32 %v1147, %v1075
        %v1149 = vadd.f32 %v1148, %v1079
        %v1150 = vadd.f32 %v1149, %v1083
        %v1151 = vadd.f32 %v1150, %v1087
        %v1152 = vadd.f32 %v1151, %v1091
        %v1153 = vadd.f32 %v1152, %v1095
        %v1154 = vadd.f32 %v1153, %v1099
        %v1155 = vadd.f32 %v1154, %v1103
        %v1156 = vadd.f32 %v1155, %v1107
        %v1157 = vadd.f32 %v1156, %v1111
        %v1158 = vadd.f32 %v1052, %v1056
        %v1159 = vadd.f32 %v1158, %v1060
        %v1160 = vadd.f32 %v1159, %v1064
        %v1161 = vadd.f32 %v1160, %v1068
        %v1162 = vadd.f32 %v1161, %v1072
        %v1163 = vadd.f32 %v1162, %v1076
        %v1164 = vadd.f32 %v1163, %v1080
        %v1165 = vadd.f32 %v1164, %v1084
        %v1166 = vadd.f32 %v1165, %v1088
        %v1167 = vadd.f32 %v1166, %v1092
        %v1168 = vadd.f32 %v1167, %v1096
        %v1169 = vadd.f32 %v1168, %v1100
        %v1170 = vadd.f32 %v1169, %v1104
        %v1171 = vadd.f32 %v1170, %v1108
        %v1172 = vadd.f32 %v1171, %v1112
        %v1173 = vpack.c.bf16 %v1157, %v1127
        %v1174 = vpack.c.bf16 %v1172, %v1142
        %1175 = vst [vmem:[#allocation2] sm:$0xff] %v1173
        %1176 = vst [vmem:[#allocation2 + $0x8] sm:$0xff] %v1174
        %v1177 = vlaneseq
        %v1178 = vshrl.u32 %v1177, 7
        %v1179 = vsub.s32 1, %v1178
        %v1180 = vrot.slane %v326, %v1179
        %v1181 = vlaneseq
        %v1182 = vshrl.u32 %v1181, 7
        %v1183 = vsub.s32 1, %v1182
        %v1184 = vrot.slane %v327, %v1183
        %vm1185 = vcmp.eq.s32.totalorder %v351, %v1180
        %vm1186 = vcmp.eq.s32.totalorder %v351, %v1184
        %vm1187 = vcmp.eq.s32.totalorder %v352, %v1180
        %vm1188 = vcmp.eq.s32.totalorder %v352, %v1184
        %v1189 = vlaneseq
        %v1190 = vshrl.u32 %v1189, 7
        %v1191 = vsub.s32 1, %v1190
        %v1192 = vrot.slane %v334, %v1191
        %v1193 = vlaneseq
        %v1194 = vshrl.u32 %v1193, 7
        %v1195 = vsub.s32 1, %v1194
        %v1196 = vrot.slane %v335, %v1195
        %v1197 = vsel %vm1185, %v1192, 0.0
        %v1198 = vsel %vm1186, %v1196, 0.0
        %v1199 = vsel %vm1187, %v1192, 0.0
        %v1200 = vsel %vm1188, %v1196, 0.0
        %v1201 = vlaneseq
        %v1202 = vshrl.u32 %v1201, 7
        %v1203 = vsub.s32 1, %v1202
        %v1204 = vrot.slane %v377, %v1203
        %v1205 = vlaneseq
        %v1206 = vshrl.u32 %v1205, 7
        %v1207 = vsub.s32 1, %v1206
        %v1208 = vrot.slane %v378, %v1207
        %vm1209 = vcmp.eq.s32.totalorder %v351, %v1204
        %vm1210 = vcmp.eq.s32.totalorder %v351, %v1208
        %vm1211 = vcmp.eq.s32.totalorder %v352, %v1204
        %vm1212 = vcmp.eq.s32.totalorder %v352, %v1208
        %v1213 = vlaneseq
        %v1214 = vshrl.u32 %v1213, 7
        %v1215 = vsub.s32 1, %v1214
        %v1216 = vrot.slane %v318, %v1215
        %v1217 = vlaneseq
        %v1218 = vshrl.u32 %v1217, 7
        %v1219 = vsub.s32 1, %v1218
        %v1220 = vrot.slane %v319, %v1219
        %v1221 = vsel %vm1209, %v1216, 0.0
        %v1222 = vsel %vm1210, %v1220, 0.0
        %v1223 = vsel %vm1211, %v1216, 0.0
        %v1224 = vsel %vm1212, %v1220, 0.0
        %v1225 = vadd.f32 %v1197, %v1221
        %v1226 = vadd.f32 %v1198, %v1222
        %v1227 = vadd.f32 %v1199, %v1223
        %v1228 = vadd.f32 %v1200, %v1224
        %v1229 = vlaneseq
        %v1230 = vshrl.u32 %v1229, 7
        %v1231 = vsub.s32 1, %v1230
        %v1232 = vrot.slane %v330, %v1231
        %v1233 = vlaneseq
        %v1234 = vshrl.u32 %v1233, 7
        %v1235 = vsub.s32 1, %v1234
        %v1236 = vrot.slane %v331, %v1235
        %vm1237 = vcmp.eq.s32.totalorder %v351, %v1232
        %vm1238 = vcmp.eq.s32.totalorder %v351, %v1236
        %vm1239 = vcmp.eq.s32.totalorder %v352, %v1232
        %vm1240 = vcmp.eq.s32.totalorder %v352, %v1236
        %v1241 = vlaneseq
        %v1242 = vshrl.u32 %v1241, 7
        %v1243 = vsub.s32 1, %v1242
        %v1244 = vrot.slane %v342, %v1243
        %v1245 = vlaneseq
        %v1246 = vshrl.u32 %v1245, 7
        %v1247 = vsub.s32 1, %v1246
        %v1248 = vrot.slane %v343, %v1247
        %v1249 = vsel %vm1237, %v1244, 0.0
        %v1250 = vsel %vm1238, %v1248, 0.0
        %v1251 = vsel %vm1239, %v1244, 0.0
        %v1252 = vsel %vm1240, %v1248, 0.0
        %v1253 = vlaneseq
        %v1254 = vshrl.u32 %v1253, 7
        %v1255 = vsub.s32 1, %v1254
        %v1256 = vrot.slane %v431, %v1255
        %v1257 = vlaneseq
        %v1258 = vshrl.u32 %v1257, 7
        %v1259 = vsub.s32 1, %v1258
        %v1260 = vrot.slane %v432, %v1259
        %vm1261 = vcmp.eq.s32.totalorder %v351, %v1256
        %vm1262 = vcmp.eq.s32.totalorder %v351, %v1260
        %vm1263 = vcmp.eq.s32.totalorder %v352, %v1256
        %vm1264 = vcmp.eq.s32.totalorder %v352, %v1260
        %v1265 = vlaneseq
        %v1266 = vshrl.u32 %v1265, 7
        %v1267 = vsub.s32 1, %v1266
        %v1268 = vrot.slane %v346, %v1267
        %v1269 = vlaneseq
        %v1270 = vshrl.u32 %v1269, 7
        %v1271 = vsub.s32 1, %v1270
        %v1272 = vrot.slane %v347, %v1271
        %v1273 = vsel %vm1261, %v1268, 0.0
        %v1274 = vsel %vm1262, %v1272, 0.0
        %v1275 = vsel %vm1263, %v1268, 0.0
        %v1276 = vsel %vm1264, %v1272, 0.0
        %v1277 = vadd.f32 %v1249, %v1273
        %v1278 = vadd.f32 %v1250, %v1274
        %v1279 = vadd.f32 %v1251, %v1275
        %v1280 = vadd.f32 %v1252, %v1276
        %v1281 = vpack.c.bf16 %v1227, %v1225
        %v1282 = vpack.c.bf16 %v1228, %v1226
        %1283 = vmatprep.subr.bf16.mxu0 %v1282
        %1284 = vmatpush1.bf16.msra.mxu0 %v1281
        %1285 = vmatprep.subr.bf16.mxu0 0
        %1286 = vmatpush1.bf16.msra.mxu0 0
        %1287 = vmatprep.subr.bf16.mxu0 0
        %1288 = vmatpush1.bf16.msra.mxu0 0
        %1289 = vmatprep.subr.bf16.mxu0 0
        %1290 = vmatpush1.bf16.msra.mxu0 0
        %1291 = vmatprep.subr.bf16.mxu0 0
        %1292 = vmatpush1.bf16.msra.mxu0 0
        %1293 = vmatprep.subr.bf16.mxu0 0
        %1294 = vmatpush1.bf16.msra.mxu0 0
        %1295 = vmatprep.subr.bf16.mxu0 0
        %1296 = vmatpush1.bf16.msra.mxu0 0
        %1297 = vmatprep.subr.bf16.mxu0 0
        %1298 = vmatpush1.bf16.msra.mxu0 0
        %1299 = vmatprep.subr.bf16.mxu0 0
        %1300 = vmatpush1.bf16.msra.mxu0 0
        %1301 = vmatprep.subr.bf16.mxu0 0
        %1302 = vmatpush1.bf16.msra.mxu0 0
        %1303 = vmatprep.subr.bf16.mxu0 0
        %1304 = vmatpush1.bf16.msra.mxu0 0
        %1305 = vmatprep.subr.bf16.mxu0 0
        %1306 = vmatpush1.bf16.msra.mxu0 0
        %1307 = vmatprep.subr.bf16.mxu0 0
        %1308 = vmatpush1.bf16.msra.mxu0 0
        %1309 = vmatprep.subr.bf16.mxu0 0
        %1310 = vmatpush1.bf16.msra.mxu0 0
        %1311 = vmatprep.subr.bf16.mxu0 0
        %1312 = vmatpush1.bf16.msra.mxu0 0
        %1313 = vmatprep.subr.bf16.mxu0 0
        %1314 = vmatpush1.bf16.msra.mxu0 0
        %1315 = vmatprep.mubr.bf16.mxu0 0
        %1316 = vmatmul.mubr.bf16.gmra.mrb[0].mxu0 %v545
        %v1317 = vpop.f32.mrb[0].mxu0
        %v1318 = vadd.f32 0.0, %v1317
        %v1319 = vpop.f32.mrb[0].mxu0
        %v1320 = vadd.f32 0.0, %v1319
        %v1321 = vpop.f32.mrb[0].mxu0
        %v1322 = vadd.f32 0.0, %v1321
        %v1323 = vpop.f32.mrb[0].mxu0
        %v1324 = vadd.f32 0.0, %v1323
        %1325 = vmatprep.mubr.bf16.mxu0 0
        %1326 = vmatmul.mubr.bf16.gmra.mrb[0].mxu0 %v548
        %v1327 = vpop.f32.mrb[0].mxu0
        %v1328 = vadd.f32 0.0, %v1327
        %v1329 = vpop.f32.mrb[0].mxu0
        %v1330 = vadd.f32 0.0, %v1329
        %v1331 = vpop.f32.mrb[0].mxu0
        %v1332 = vadd.f32 0.0, %v1331
        %v1333 = vpop.f32.mrb[0].mxu0
        %v1334 = vadd.f32 0.0, %v1333
        %1335 = vmatprep.mubr.bf16.mxu0 0
        %1336 = vmatmul.mubr.bf16.gmra.mrb[0].mxu0 %v551
        %v1337 = vpop.f32.mrb[0].mxu0
        %v1338 = vadd.f32 0.0, %v1337
        %v1339 = vpop.f32.mrb[0].mxu0
        %v1340 = vadd.f32 0.0, %v1339
        %v1341 = vpop.f32.mrb[0].mxu0
        %v1342 = vadd.f32 0.0, %v1341
        %v1343 = vpop.f32.mrb[0].mxu0
        %v1344 = vadd.f32 0.0, %v1343
        %1345 = vmatprep.mubr.bf16.mxu0 0
        %1346 = vmatmul.mubr.bf16.gmra.mrb[0].mxu0 %v554
        %v1347 = vpop.f32.mrb[0].mxu0
        %v1348 = vadd.f32 0.0, %v1347
        %v1349 = vpop.f32.mrb[0].mxu0
        %v1350 = vadd.f32 0.0, %v1349
        %v1351 = vpop.f32.mrb[0].mxu0
        %v1352 = vadd.f32 0.0, %v1351
        %v1353 = vpop.f32.mrb[0].mxu0
        %v1354 = vadd.f32 0.0, %v1353
        %1355 = vmatprep.mubr.bf16.mxu0 0
        %1356 = vmatmul.mubr.bf16.gmra.mrb[0].mxu0 %v557
        %v1357 = vpop.f32.mrb[0].mxu0
        %v1358 = vadd.f32 0.0, %v1357
        %v1359 = vpop.f32.mrb[0].mxu0
        %v1360 = vadd.f32 0.0, %v1359
        %v1361 = vpop.f32.mrb[0].mxu0
        %v1362 = vadd.f32 0.0, %v1361
        %v1363 = vpop.f32.mrb[0].mxu0
        %v1364 = vadd.f32 0.0, %v1363
        %1365 = vmatprep.mubr.bf16.mxu0 0
        %1366 = vmatmul.mubr.bf16.gmra.mrb[0].mxu0 %v560
        %v1367 = vpop.f32.mrb[0].mxu0
        %v1368 = vadd.f32 0.0, %v1367
        %v1369 = vpop.f32.mrb[0].mxu0
        %v1370 = vadd.f32 0.0, %v1369
        %v1371 = vpop.f32.mrb[0].mxu0
        %v1372 = vadd.f32 0.0, %v1371
        %v1373 = vpop.f32.mrb[0].mxu0
        %v1374 = vadd.f32 0.0, %v1373
        %1375 = vmatprep.mubr.bf16.mxu0 0
        %1376 = vmatmul.mubr.bf16.gmra.mrb[0].mxu0 %v563
        %v1377 = vpop.f32.mrb[0].mxu0
        %v1378 = vadd.f32 0.0, %v1377
        %v1379 = vpop.f32.mrb[0].mxu0
        %v1380 = vadd.f32 0.0, %v1379
        %v1381 = vpop.f32.mrb[0].mxu0
        %v1382 = vadd.f32 0.0, %v1381
        %v1383 = vpop.f32.mrb[0].mxu0
        %v1384 = vadd.f32 0.0, %v1383
        %1385 = vmatprep.mubr.bf16.mxu0 0
        %1386 = vmatmul.mubr.bf16.gmra.mrb[0].mxu0 %v566
        %v1387 = vpop.f32.mrb[0].mxu0
        %v1388 = vadd.f32 0.0, %v1387
        %v1389 = vpop.f32.mrb[0].mxu0
        %v1390 = vadd.f32 0.0, %v1389
        %v1391 = vpop.f32.mrb[0].mxu0
        %v1392 = vadd.f32 0.0, %v1391
        %v1393 = vpop.f32.mrb[0].mxu0
        %v1394 = vadd.f32 0.0, %v1393
        %1395 = vmatprep.mubr.bf16.mxu0 0
        %1396 = vmatmul.mubr.bf16.gmra.mrb[0].mxu0 %v569
        %v1397 = vpop.f32.mrb[0].mxu0
        %v1398 = vadd.f32 0.0, %v1397
        %v1399 = vpop.f32.mrb[0].mxu0
        %v1400 = vadd.f32 0.0, %v1399
        %v1401 = vpop.f32.mrb[0].mxu0
        %v1402 = vadd.f32 0.0, %v1401
        %v1403 = vpop.f32.mrb[0].mxu0
        %v1404 = vadd.f32 0.0, %v1403
        %1405 = vmatprep.mubr.bf16.mxu0 0
        %1406 = vmatmul.mubr.bf16.gmra.mrb[0].mxu0 %v572
        %v1407 = vpop.f32.mrb[0].mxu0
        %v1408 = vadd.f32 0.0, %v1407
        %v1409 = vpop.f32.mrb[0].mxu0
        %v1410 = vadd.f32 0.0, %v1409
        %v1411 = vpop.f32.mrb[0].mxu0
        %v1412 = vadd.f32 0.0, %v1411
        %v1413 = vpop.f32.mrb[0].mxu0
        %v1414 = vadd.f32 0.0, %v1413
        %1415 = vmatprep.mubr.bf16.mxu0 0
        %1416 = vmatmul.mubr.bf16.gmra.mrb[0].mxu0 %v575
        %v1417 = vpop.f32.mrb[0].mxu0
        %v1418 = vadd.f32 0.0, %v1417
        %v1419 = vpop.f32.mrb[0].mxu0
        %v1420 = vadd.f32 0.0, %v1419
        %v1421 = vpop.f32.mrb[0].mxu0
        %v1422 = vadd.f32 0.0, %v1421
        %v1423 = vpop.f32.mrb[0].mxu0
        %v1424 = vadd.f32 0.0, %v1423
        %1425 = vmatprep.mubr.bf16.mxu0 0
        %1426 = vmatmul.mubr.bf16.gmra.mrb[0].mxu0 %v578
        %v1427 = vpop.f32.mrb[0].mxu0
        %v1428 = vadd.f32 0.0, %v1427
        %v1429 = vpop.f32.mrb[0].mxu0
        %v1430 = vadd.f32 0.0, %v1429
        %v1431 = vpop.f32.mrb[0].mxu0
        %v1432 = vadd.f32 0.0, %v1431
        %v1433 = vpop.f32.mrb[0].mxu0
        %v1434 = vadd.f32 0.0, %v1433
        %1435 = vmatprep.mubr.bf16.mxu0 0
        %1436 = vmatmul.mubr.bf16.gmra.mrb[0].mxu0 %v581
        %v1437 = vpop.f32.mrb[0].mxu0
        %v1438 = vadd.f32 0.0, %v1437
        %v1439 = vpop.f32.mrb[0].mxu0
        %v1440 = vadd.f32 0.0, %v1439
        %v1441 = vpop.f32.mrb[0].mxu0
        %v1442 = vadd.f32 0.0, %v1441
        %v1443 = vpop.f32.mrb[0].mxu0
        %v1444 = vadd.f32 0.0, %v1443
        %1445 = vmatprep.mubr.bf16.mxu0 0
        %1446 = vmatmul.mubr.bf16.gmra.mrb[0].mxu0 %v584
        %v1447 = vpop.f32.mrb[0].mxu0
        %v1448 = vadd.f32 0.0, %v1447
        %v1449 = vpop.f32.mrb[0].mxu0
        %v1450 = vadd.f32 0.0, %v1449
        %v1451 = vpop.f32.mrb[0].mxu0
        %v1452 = vadd.f32 0.0, %v1451
        %v1453 = vpop.f32.mrb[0].mxu0
        %v1454 = vadd.f32 0.0, %v1453
        %1455 = vmatprep.mubr.bf16.mxu0 0
        %1456 = vmatmul.mubr.bf16.gmra.mrb[0].mxu0 %v587
        %v1457 = vpop.f32.mrb[0].mxu0
        %v1458 = vadd.f32 0.0, %v1457
        %v1459 = vpop.f32.mrb[0].mxu0
        %v1460 = vadd.f32 0.0, %v1459
        %v1461 = vpop.f32.mrb[0].mxu0
        %v1462 = vadd.f32 0.0, %v1461
        %v1463 = vpop.f32.mrb[0].mxu0
        %v1464 = vadd.f32 0.0, %v1463
        %1465 = vmatprep.mubr.bf16.mxu0 0
        %1466 = vmatmul.mubr.bf16.gmra.mrb[0].mxu0 %v590
        %v1467 = vpop.f32.mrb[0].mxu0
        %v1468 = vadd.f32 0.0, %v1467
        %v1469 = vpop.f32.mrb[0].mxu0
        %v1470 = vadd.f32 0.0, %v1469
        %v1471 = vpop.f32.mrb[0].mxu0
        %v1472 = vadd.f32 0.0, %v1471
        %v1473 = vpop.f32.mrb[0].mxu0
        %v1474 = vadd.f32 0.0, %v1473
        %1475 = vdwg.mxu0
        %v1480 = vcombine.low %v1277, %v1278
        %v1481 = vcombine.high %v1277, %v1278
        %v1483 = vunpack.c.l.s4 1966171168
        %v1484 = vunpack.c.0.s8 %v1483
        %v1485 = vlaneseq
        %v1486 = vshrl.u32 %v1485, 7
        %v1487 = vsub.s32 %v1484, %v1486
        %v1488 = vrot.slane %v1480, %v1487
        %v1490 = vunpack.c.l.s4 1966171168
        %v1491 = vunpack.c.0.s8 %v1490
        %v1492 = vlaneseq
        %v1493 = vshrl.u32 %v1492, 7
        %v1494 = vsub.s32 %v1491, %v1493
        %v1495 = vrot.slane %v1481, %v1494
        %v1496 = vcombine.high %v1488, %v1488
        %v1497 = vcombine.high %v1495, %v1495
        %v1499 = vunpack.c.l.s4 1966171168
        %v1500 = vunpack.c.0.s8 %v1499
        %v1501 = vlaneseq
        %v1502 = vshrl.u32 %v1501, 7
        %v1503 = vsub.s32 %v1500, %v1502
        %v1504 = vrot.slane %v1488, %v1503
        %v1506 = vunpack.c.l.s4 1966171168
        %v1507 = vunpack.c.0.s8 %v1506
        %v1508 = vlaneseq
        %v1509 = vshrl.u32 %v1508, 7
        %v1510 = vsub.s32 %v1507, %v1509
        %v1511 = vrot.slane %v1495, %v1510
        %v1513 = vunpack.c.l.s4 1966171168
        %v1514 = vunpack.c.0.s8 %v1513
        %v1515 = vlaneseq
        %v1516 = vshrl.u32 %v1515, 7
        %v1517 = vsub.s32 %v1514, %v1516
        %v1518 = vrot.slane %v1496, %v1517
        %v1520 = vunpack.c.l.s4 1966171168
        %v1521 = vunpack.c.0.s8 %v1520
        %v1522 = vlaneseq
        %v1523 = vshrl.u32 %v1522, 7
        %v1524 = vsub.s32 %v1521, %v1523
        %v1525 = vrot.slane %v1497, %v1524
        %v1526 = vcombine.high %v1504, %v1504
        %v1527 = vcombine.high %v1511, %v1511
        %v1528 = vcombine.high %v1518, %v1518
        %v1529 = vcombine.high %v1525, %v1525
        %v1530 = vcombine.low %v1279, %v1280
        %v1531 = vcombine.high %v1279, %v1280
        %v1533 = vunpack.c.l.s4 1966171168
        %v1534 = vunpack.c.0.s8 %v1533
        %v1535 = vlaneseq
        %v1536 = vshrl.u32 %v1535, 7
        %v1537 = vsub.s32 %v1534, %v1536
        %v1538 = vrot.slane %v1530, %v1537
        %v1540 = vunpack.c.l.s4 1966171168
        %v1541 = vunpack.c.0.s8 %v1540
        %v1542 = vlaneseq
        %v1543 = vshrl.u32 %v1542, 7
        %v1544 = vsub.s32 %v1541, %v1543
        %v1545 = vrot.slane %v1531, %v1544
        %v1546 = vcombine.high %v1538, %v1538
        %v1547 = vcombine.high %v1545, %v1545
        %v1549 = vunpack.c.l.s4 1966171168
        %v1550 = vunpack.c.0.s8 %v1549
        %v1551 = vlaneseq
        %v1552 = vshrl.u32 %v1551, 7
        %v1553 = vsub.s32 %v1550, %v1552
        %v1554 = vrot.slane %v1538, %v1553
        %v1556 = vunpack.c.l.s4 1966171168
        %v1557 = vunpack.c.0.s8 %v1556
        %v1558 = vlaneseq
        %v1559 = vshrl.u32 %v1558, 7
        %v1560 = vsub.s32 %v1557, %v1559
        %v1561 = vrot.slane %v1545, %v1560
        %v1563 = vunpack.c.l.s4 1966171168
        %v1564 = vunpack.c.0.s8 %v1563
        %v1565 = vlaneseq
        %v1566 = vshrl.u32 %v1565, 7
        %v1567 = vsub.s32 %v1564, %v1566
        %v1568 = vrot.slane %v1546, %v1567
        %v1570 = vunpack.c.l.s4 1966171168
        %v1571 = vunpack.c.0.s8 %v1570
        %v1572 = vlaneseq
        %v1573 = vshrl.u32 %v1572, 7
        %v1574 = vsub.s32 %v1571, %v1573
        %v1575 = vrot.slane %v1547, %v1574
        %v1576 = vcombine.high %v1554, %v1554
        %v1577 = vcombine.high %v1561, %v1561
        %v1578 = vcombine.high %v1568, %v1568
        %v1579 = vcombine.high %v1575, %v1575
        %v1580 = vlaneseq
        %v1581 = vshrl.u32 %v1580, 7
        %v1582 = vsub.s32 0, %v1581
        %v1583 = vrot.slane %v1504, %v1582
        %v1584 = vlaneseq
        %v1585 = vshrl.u32 %v1584, 7
        %v1586 = vsub.s32 1, %v1585
        %v1587 = vrot.slane %v1504, %v1586
        %v1588 = vlaneseq
        %v1589 = vshrl.u32 %v1588, 7
        %v1590 = vsub.s32 0, %v1589
        %v1591 = vrot.slane %v1518, %v1590
        %v1592 = vlaneseq
        %v1593 = vshrl.u32 %v1592, 7
        %v1594 = vsub.s32 1, %v1593
        %v1595 = vrot.slane %v1518, %v1594
        %v1596 = vlaneseq
        %v1597 = vshrl.u32 %v1596, 7
        %v1598 = vsub.s32 0, %v1597
        %v1599 = vrot.slane %v1526, %v1598
        %v1600 = vlaneseq
        %v1601 = vshrl.u32 %v1600, 7
        %v1602 = vsub.s32 1, %v1601
        %v1603 = vrot.slane %v1526, %v1602
        %v1604 = vlaneseq
        %v1605 = vshrl.u32 %v1604, 7
        %v1606 = vsub.s32 0, %v1605
        %v1607 = vrot.slane %v1528, %v1606
        %v1608 = vlaneseq
        %v1609 = vshrl.u32 %v1608, 7
        %v1610 = vsub.s32 1, %v1609
        %v1611 = vrot.slane %v1528, %v1610
        %v1612 = vlaneseq
        %v1613 = vshrl.u32 %v1612, 7
        %v1614 = vsub.s32 0, %v1613
        %v1615 = vrot.slane %v1511, %v1614
        %v1616 = vlaneseq
        %v1617 = vshrl.u32 %v1616, 7
        %v1618 = vsub.s32 1, %v1617
        %v1619 = vrot.slane %v1511, %v1618
        %v1620 = vlaneseq
        %v1621 = vshrl.u32 %v1620, 7
        %v1622 = vsub.s32 0, %v1621
        %v1623 = vrot.slane %v1525, %v1622
        %v1624 = vlaneseq
        %v1625 = vshrl.u32 %v1624, 7
        %v1626 = vsub.s32 1, %v1625
        %v1627 = vrot.slane %v1525, %v1626
        %v1628 = vlaneseq
        %v1629 = vshrl.u32 %v1628, 7
        %v1630 = vsub.s32 0, %v1629
        %v1631 = vrot.slane %v1527, %v1630
        %v1632 = vlaneseq
        %v1633 = vshrl.u32 %v1632, 7
        %v1634 = vsub.s32 1, %v1633
        %v1635 = vrot.slane %v1527, %v1634
        %v1636 = vlaneseq
        %v1637 = vshrl.u32 %v1636, 7
        %v1638 = vsub.s32 0, %v1637
        %v1639 = vrot.slane %v1529, %v1638
        %v1640 = vlaneseq
        %v1641 = vshrl.u32 %v1640, 7
        %v1642 = vsub.s32 1, %v1641
        %v1643 = vrot.slane %v1529, %v1642
        %v1644 = vlaneseq
        %v1645 = vshrl.u32 %v1644, 7
        %v1646 = vsub.s32 0, %v1645
        %v1647 = vrot.slane %v1554, %v1646
        %v1648 = vlaneseq
        %v1649 = vshrl.u32 %v1648, 7
        %v1650 = vsub.s32 1, %v1649
        %v1651 = vrot.slane %v1554, %v1650
        %v1652 = vlaneseq
        %v1653 = vshrl.u32 %v1652, 7
        %v1654 = vsub.s32 0, %v1653
        %v1655 = vrot.slane %v1568, %v1654
        %v1656 = vlaneseq
        %v1657 = vshrl.u32 %v1656, 7
        %v1658 = vsub.s32 1, %v1657
        %v1659 = vrot.slane %v1568, %v1658
        %v1660 = vlaneseq
        %v1661 = vshrl.u32 %v1660, 7
        %v1662 = vsub.s32 0, %v1661
        %v1663 = vrot.slane %v1576, %v1662
        %v1664 = vlaneseq
        %v1665 = vshrl.u32 %v1664, 7
        %v1666 = vsub.s32 1, %v1665
        %v1667 = vrot.slane %v1576, %v1666
        %v1668 = vlaneseq
        %v1669 = vshrl.u32 %v1668, 7
        %v1670 = vsub.s32 0, %v1669
        %v1671 = vrot.slane %v1578, %v1670
        %v1672 = vlaneseq
        %v1673 = vshrl.u32 %v1672, 7
        %v1674 = vsub.s32 1, %v1673
        %v1675 = vrot.slane %v1578, %v1674
        %v1676 = vlaneseq
        %v1677 = vshrl.u32 %v1676, 7
        %v1678 = vsub.s32 0, %v1677
        %v1679 = vrot.slane %v1561, %v1678
        %v1680 = vlaneseq
        %v1681 = vshrl.u32 %v1680, 7
        %v1682 = vsub.s32 1, %v1681
        %v1683 = vrot.slane %v1561, %v1682
        %v1684 = vlaneseq
        %v1685 = vshrl.u32 %v1684, 7
        %v1686 = vsub.s32 0, %v1685
        %v1687 = vrot.slane %v1575, %v1686
        %v1688 = vlaneseq
        %v1689 = vshrl.u32 %v1688, 7
        %v1690 = vsub.s32 1, %v1689
        %v1691 = vrot.slane %v1575, %v1690
        %v1692 = vlaneseq
        %v1693 = vshrl.u32 %v1692, 7
        %v1694 = vsub.s32 0, %v1693
        %v1695 = vrot.slane %v1577, %v1694
        %v1696 = vlaneseq
        %v1697 = vshrl.u32 %v1696, 7
        %v1698 = vsub.s32 1, %v1697
        %v1699 = vrot.slane %v1577, %v1698
        %v1700 = vlaneseq
        %v1701 = vshrl.u32 %v1700, 7
        %v1702 = vsub.s32 0, %v1701
        %v1703 = vrot.slane %v1579, %v1702
        %v1704 = vlaneseq
        %v1705 = vshrl.u32 %v1704, 7
        %v1706 = vsub.s32 1, %v1705
        %v1707 = vrot.slane %v1579, %v1706
        %v1740 = vmul.f32 %v1318, %v1583
        %v1741 = vmul.f32 %v1320, %v1587
        %v1742 = vmul.f32 %v1322, %v1583
        %v1743 = vmul.f32 %v1324, %v1587
        %v1744 = vmul.f32 %v1328, %v1591
        %v1745 = vmul.f32 %v1330, %v1595
        %v1746 = vmul.f32 %v1332, %v1591
        %v1747 = vmul.f32 %v1334, %v1595
        %v1748 = vmul.f32 %v1338, %v1599
        %v1749 = vmul.f32 %v1340, %v1603
        %v1750 = vmul.f32 %v1342, %v1599
        %v1751 = vmul.f32 %v1344, %v1603
        %v1752 = vmul.f32 %v1348, %v1607
        %v1753 = vmul.f32 %v1350, %v1611
        %v1754 = vmul.f32 %v1352, %v1607
        %v1755 = vmul.f32 %v1354, %v1611
        %v1756 = vmul.f32 %v1358, %v1615
        %v1757 = vmul.f32 %v1360, %v1619
        %v1758 = vmul.f32 %v1362, %v1615
        %v1759 = vmul.f32 %v1364, %v1619
        %v1760 = vmul.f32 %v1368, %v1623
        %v1761 = vmul.f32 %v1370, %v1627
        %v1762 = vmul.f32 %v1372, %v1623
        %v1763 = vmul.f32 %v1374, %v1627
        %v1764 = vmul.f32 %v1378, %v1631
        %v1765 = vmul.f32 %v1380, %v1635
        %v1766 = vmul.f32 %v1382, %v1631
        %v1767 = vmul.f32 %v1384, %v1635
        %v1768 = vmul.f32 %v1388, %v1639
        %v1769 = vmul.f32 %v1390, %v1643
        %v1770 = vmul.f32 %v1392, %v1639
        %v1771 = vmul.f32 %v1394, %v1643
        %v1772 = vmul.f32 %v1398, %v1647
        %v1773 = vmul.f32 %v1400, %v1651
        %v1774 = vmul.f32 %v1402, %v1647
        %v1775 = vmul.f32 %v1404, %v1651
        %v1776 = vmul.f32 %v1408, %v1655
        %v1777 = vmul.f32 %v1410, %v1659
        %v1778 = vmul.f32 %v1412, %v1655
        %v1779 = vmul.f32 %v1414, %v1659
        %v1780 = vmul.f32 %v1418, %v1663
        %v1781 = vmul.f32 %v1420, %v1667
        %v1782 = vmul.f32 %v1422, %v1663
        %v1783 = vmul.f32 %v1424, %v1667
        %v1784 = vmul.f32 %v1428, %v1671
        %v1785 = vmul.f32 %v1430, %v1675
        %v1786 = vmul.f32 %v1432, %v1671
        %v1787 = vmul.f32 %v1434, %v1675
        %v1788 = vmul.f32 %v1438, %v1679
        %v1789 = vmul.f32 %v1440, %v1683
        %v1790 = vmul.f32 %v1442, %v1679
        %v1791 = vmul.f32 %v1444, %v1683
        %v1792 = vmul.f32 %v1448, %v1687
        %v1793 = vmul.f32 %v1450, %v1691
        %v1794 = vmul.f32 %v1452, %v1687
        %v1795 = vmul.f32 %v1454, %v1691
        %v1796 = vmul.f32 %v1458, %v1695
        %v1797 = vmul.f32 %v1460, %v1699
        %v1798 = vmul.f32 %v1462, %v1695
        %v1799 = vmul.f32 %v1464, %v1699
        %v1800 = vmul.f32 %v1468, %v1703
        %v1801 = vmul.f32 %v1470, %v1707
        %v1802 = vmul.f32 %v1472, %v1703
        %v1803 = vmul.f32 %v1474, %v1707
        %v1804 = vadd.f32 %v1740, %v1744
        %v1805 = vadd.f32 %v1804, %v1748
        %v1806 = vadd.f32 %v1805, %v1752
        %v1807 = vadd.f32 %v1806, %v1756
        %v1808 = vadd.f32 %v1807, %v1760
        %v1809 = vadd.f32 %v1808, %v1764
        %v1810 = vadd.f32 %v1809, %v1768
        %v1811 = vadd.f32 %v1810, %v1772
        %v1812 = vadd.f32 %v1811, %v1776
        %v1813 = vadd.f32 %v1812, %v1780
        %v1814 = vadd.f32 %v1813, %v1784
        %v1815 = vadd.f32 %v1814, %v1788
        %v1816 = vadd.f32 %v1815, %v1792
        %v1817 = vadd.f32 %v1816, %v1796
        %v1818 = vadd.f32 %v1817, %v1800
        %v1819 = vadd.f32 %v1741, %v1745
        %v1820 = vadd.f32 %v1819, %v1749
        %v1821 = vadd.f32 %v1820, %v1753
        %v1822 = vadd.f32 %v1821, %v1757
        %v1823 = vadd.f32 %v1822, %v1761
        %v1824 = vadd.f32 %v1823, %v1765
        %v1825 = vadd.f32 %v1824, %v1769
        %v1826 = vadd.f32 %v1825, %v1773
        %v1827 = vadd.f32 %v1826, %v1777
        %v1828 = vadd.f32 %v1827, %v1781
        %v1829 = vadd.f32 %v1828, %v1785
        %v1830 = vadd.f32 %v1829, %v1789
        %v1831 = vadd.f32 %v1830, %v1793
        %v1832 = vadd.f32 %v1831, %v1797
        %v1833 = vadd.f32 %v1832, %v1801
        %v1834 = vadd.f32 %v1742, %v1746
        %v1835 = vadd.f32 %v1834, %v1750
        %v1836 = vadd.f32 %v1835, %v1754
        %v1837 = vadd.f32 %v1836, %v1758
        %v1838 = vadd.f32 %v1837, %v1762
        %v1839 = vadd.f32 %v1838, %v1766
        %v1840 = vadd.f32 %v1839, %v1770
        %v1841 = vadd.f32 %v1840, %v1774
        %v1842 = vadd.f32 %v1841, %v1778
        %v1843 = vadd.f32 %v1842, %v1782
        %v1844 = vadd.f32 %v1843, %v1786
        %v1845 = vadd.f32 %v1844, %v1790
        %v1846 = vadd.f32 %v1845, %v1794
        %v1847 = vadd.f32 %v1846, %v1798
        %v1848 = vadd.f32 %v1847, %v1802
        %v1849 = vadd.f32 %v1743, %v1747
        %v1850 = vadd.f32 %v1849, %v1751
        %v1851 = vadd.f32 %v1850, %v1755
        %v1852 = vadd.f32 %v1851, %v1759
        %v1853 = vadd.f32 %v1852, %v1763
        %v1854 = vadd.f32 %v1853, %v1767
        %v1855 = vadd.f32 %v1854, %v1771
        %v1856 = vadd.f32 %v1855, %v1775
        %v1857 = vadd.f32 %v1856, %v1779
        %v1858 = vadd.f32 %v1857, %v1783
        %v1859 = vadd.f32 %v1858, %v1787
        %v1860 = vadd.f32 %v1859, %v1791
        %v1861 = vadd.f32 %v1860, %v1795
        %v1862 = vadd.f32 %v1861, %v1799
        %v1863 = vadd.f32 %v1862, %v1803
        %v1864 = vpack.c.bf16 %v1848, %v1818
        %v1865 = vpack.c.bf16 %v1863, %v1833
        %1866 = vst [vmem:[#allocation2 + $0x10] sm:$0xff] %v1864
        %1867 = vst [vmem:[#allocation2 + $0x18] sm:$0xff] %v1865
        %v1868 = vlaneseq
        %v1869 = vshrl.u32 %v1868, 7
        %v1870 = vsub.s32 2, %v1869
        %v1871 = vrot.slane %v326, %v1870
        %v1872 = vlaneseq
        %v1873 = vshrl.u32 %v1872, 7
        %v1874 = vsub.s32 2, %v1873
        %v1875 = vrot.slane %v327, %v1874
        %vm1876 = vcmp.eq.s32.totalorder %v351, %v1871
        %vm1877 = vcmp.eq.s32.totalorder %v351, %v1875
        %vm1878 = vcmp.eq.s32.totalorder %v352, %v1871
        %vm1879 = vcmp.eq.s32.totalorder %v352, %v1875
        %v1880 = vlaneseq
        %v1881 = vshrl.u32 %v1880, 7
        %v1882 = vsub.s32 2, %v1881
        %v1883 = vrot.slane %v334, %v1882
        %v1884 = vlaneseq
        %v1885 = vshrl.u32 %v1884, 7
        %v1886 = vsub.s32 2, %v1885
        %v1887 = vrot.slane %v335, %v1886
        %v1888 = vsel %vm1876, %v1883, 0.0
        %v1889 = vsel %vm1877, %v1887, 0.0
        %v1890 = vsel %vm1878, %v1883, 0.0
        %v1891 = vsel %vm1879, %v1887, 0.0
        %v1892 = vlaneseq
        %v1893 = vshrl.u32 %v1892, 7
        %v1894 = vsub.s32 2, %v1893
        %v1895 = vrot.slane %v377, %v1894
        %v1896 = vlaneseq
        %v1897 = vshrl.u32 %v1896, 7
        %v1898 = vsub.s32 2, %v1897
        %v1899 = vrot.slane %v378, %v1898
        %vm1900 = vcmp.eq.s32.totalorder %v351, %v1895
        %vm1901 = vcmp.eq.s32.totalorder %v351, %v1899
        %vm1902 = vcmp.eq.s32.totalorder %v352, %v1895
        %vm1903 = vcmp.eq.s32.totalorder %v352, %v1899
        %v1904 = vlaneseq
        %v1905 = vshrl.u32 %v1904, 7
        %v1906 = vsub.s32 2, %v1905
        %v1907 = vrot.slane %v318, %v1906
        %v1908 = vlaneseq
        %v1909 = vshrl.u32 %v1908, 7
        %v1910 = vsub.s32 2, %v1909
        %v1911 = vrot.slane %v319, %v1910
        %v1912 = vsel %vm1900, %v1907, 0.0
        %v1913 = vsel %vm1901, %v1911, 0.0
        %v1914 = vsel %vm1902, %v1907, 0.0
        %v1915 = vsel %vm1903, %v1911, 0.0
        %v1916 = vadd.f32 %v1888, %v1912
        %v1917 = vadd.f32 %v1889, %v1913
        %v1918 = vadd.f32 %v1890, %v1914
        %v1919 = vadd.f32 %v1891, %v1915
        %v1920 = vlaneseq
        %v1921 = vshrl.u32 %v1920, 7
        %v1922 = vsub.s32 2, %v1921
        %v1923 = vrot.slane %v330, %v1922
        %v1924 = vlaneseq
        %v1925 = vshrl.u32 %v1924, 7
        %v1926 = vsub.s32 2, %v1925
        %v1927 = vrot.slane %v331, %v1926
        %vm1928 = vcmp.eq.s32.totalorder %v351, %v1923
        %vm1929 = vcmp.eq.s32.totalorder %v351, %v1927
        %vm1930 = vcmp.eq.s32.totalorder %v352, %v1923
        %vm1931 = vcmp.eq.s32.totalorder %v352, %v1927
        %v1932 = vlaneseq
        %v1933 = vshrl.u32 %v1932, 7
        %v1934 = vsub.s32 2, %v1933
        %v1935 = vrot.slane %v342, %v1934
        %v1936 = vlaneseq
        %v1937 = vshrl.u32 %v1936, 7
        %v1938 = vsub.s32 2, %v1937
        %v1939 = vrot.slane %v343, %v1938
        %v1940 = vsel %vm1928, %v1935, 0.0
        %v1941 = vsel %vm1929, %v1939, 0.0
        %v1942 = vsel %vm1930, %v1935, 0.0
        %v1943 = vsel %vm1931, %v1939, 0.0
        %v1944 = vlaneseq
        %v1945 = vshrl.u32 %v1944, 7
        %v1946 = vsub.s32 2, %v1945
        %v1947 = vrot.slane %v431, %v1946
        %v1948 = vlaneseq
        %v1949 = vshrl.u32 %v1948, 7
        %v1950 = vsub.s32 2, %v1949
        %v1951 = vrot.slane %v432, %v1950
        %vm1952 = vcmp.eq.s32.totalorder %v351, %v1947
        %vm1953 = vcmp.eq.s32.totalorder %v351, %v1951
        %vm1954 = vcmp.eq.s32.totalorder %v352, %v1947
        %vm1955 = vcmp.eq.s32.totalorder %v352, %v1951
        %v1956 = vlaneseq
        %v1957 = vshrl.u32 %v1956, 7
        %v1958 = vsub.s32 2, %v1957
        %v1959 = vrot.slane %v346, %v1958
        %v1960 = vlaneseq
        %v1961 = vshrl.u32 %v1960, 7
        %v1962 = vsub.s32 2, %v1961
        %v1963 = vrot.slane %v347, %v1962
        %v1964 = vsel %vm1952, %v1959, 0.0
        %v1965 = vsel %vm1953, %v1963, 0.0
        %v1966 = vsel %vm1954, %v1959, 0.0
        %v1967 = vsel %vm1955, %v1963, 0.0
        %v1968 = vadd.f32 %v1940, %v1964
        %v1969 = vadd.f32 %v1941, %v1965
        %v1970 = vadd.f32 %v1942, %v1966
        %v1971 = vadd.f32 %v1943, %v1967
        %v1972 = vpack.c.bf16 %v1918, %v1916
        %v1973 = vpack.c.bf16 %v1919, %v1917
        %1974 = vmatprep.subr.bf16.mxu0 %v1973
        %1975 = vmatpush1.bf16.msra.mxu0 %v1972
        %1976 = vmatprep.subr.bf16.mxu0 0
        %1977 = vmatpush1.bf16.msra.mxu0 0
        %1978 = vmatprep.subr.bf16.mxu0 0
        %1979 = vmatpush1.bf16.msra.mxu0 0
        %1980 = vmatprep.subr.bf16.mxu0 0
        %1981 = vmatpush1.bf16.msra.mxu0 0
        %1982 = vmatprep.subr.bf16.mxu0 0
        %1983 = vmatpush1.bf16.msra.mxu0 0
        %1984 = vmatprep.subr.bf16.mxu0 0
        %1985 = vmatpush1.bf16.msra.mxu0 0
        %1986 = vmatprep.subr.bf16.mxu0 0
        %1987 = vmatpush1.bf16.msra.mxu0 0
        %1988 = vmatprep.subr.bf16.mxu0 0
        %1989 = vmatpush1.bf16.msra.mxu0 0
        %1990 = vmatprep.subr.bf16.mxu0 0
        %1991 = vmatpush1.bf16.msra.mxu0 0
        %1992 = vmatprep.subr.bf16.mxu0 0
        %1993 = vmatpush1.bf16.msra.mxu0 0
        %1994 = vmatprep.subr.bf16.mxu0 0
        %1995 = vmatpush1.bf16.msra.mxu0 0
        %1996 = vmatprep.subr.bf16.mxu0 0
        %1997 = vmatpush1.bf16.msra.mxu0 0
        %1998 = vmatprep.subr.bf16.mxu0 0
        %1999 = vmatpush1.bf16.msra.mxu0 0
        %2000 = vmatprep.subr.bf16.mxu0 0
        %2001 = vmatpush1.bf16.msra.mxu0 0
        %2002 = vmatprep.subr.bf16.mxu0 0
        %2003 = vmatpush1.bf16.msra.mxu0 0
        %2004 = vmatprep.subr.bf16.mxu0 0
        %2005 = vmatpush1.bf16.msra.mxu0 0
        %2006 = vmatprep.mubr.bf16.mxu0 0
        %2007 = vmatmul.mubr.bf16.gmra.mrb[0].mxu0 %v545
        %v2008 = vpop.f32.mrb[0].mxu0
        %v2009 = vadd.f32 0.0, %v2008
        %v2010 = vpop.f32.mrb[0].mxu0
        %v2011 = vadd.f32 0.0, %v2010
        %v2012 = vpop.f32.mrb[0].mxu0
        %v2013 = vadd.f32 0.0, %v2012
        %v2014 = vpop.f32.mrb[0].mxu0
        %v2015 = vadd.f32 0.0, %v2014
        %2016 = vmatprep.mubr.bf16.mxu0 0
        %2017 = vmatmul.mubr.bf16.gmra.mrb[0].mxu0 %v548
        %v2018 = vpop.f32.mrb[0].mxu0
        %v2019 = vadd.f32 0.0, %v2018
        %v2020 = vpop.f32.mrb[0].mxu0
        %v2021 = vadd.f32 0.0, %v2020
        %v2022 = vpop.f32.mrb[0].mxu0
        %v2023 = vadd.f32 0.0, %v2022
        %v2024 = vpop.f32.mrb[0].mxu0
        %v2025 = vadd.f32 0.0, %v2024
        %2026 = vmatprep.mubr.bf16.mxu0 0
        %2027 = vmatmul.mubr.bf16.gmra.mrb[0].mxu0 %v551
        %v2028 = vpop.f32.mrb[0].mxu0
        %v2029 = vadd.f32 0.0, %v2028
        %v2030 = vpop.f32.mrb[0].mxu0
        %v2031 = vadd.f32 0.0, %v2030
        %v2032 = vpop.f32.mrb[0].mxu0
        %v2033 = vadd.f32 0.0, %v2032
        %v2034 = vpop.f32.mrb[0].mxu0
        %v2035 = vadd.f32 0.0, %v2034
        %2036 = vmatprep.mubr.bf16.mxu0 0
        %2037 = vmatmul.mubr.bf16.gmra.mrb[0].mxu0 %v554
        %v2038 = vpop.f32.mrb[0].mxu0
        %v2039 = vadd.f32 0.0, %v2038
        %v2040 = vpop.f32.mrb[0].mxu0
        %v2041 = vadd.f32 0.0, %v2040
        %v2042 = vpop.f32.mrb[0].mxu0
        %v2043 = vadd.f32 0.0, %v2042
        %v2044 = vpop.f32.mrb[0].mxu0
        %v2045 = vadd.f32 0.0, %v2044
        %2046 = vmatprep.mubr.bf16.mxu0 0
        %2047 = vmatmul.mubr.bf16.gmra.mrb[0].mxu0 %v557
        %v2048 = vpop.f32.mrb[0].mxu0
        %v2049 = vadd.f32 0.0, %v2048
        %v2050 = vpop.f32.mrb[0].mxu0
        %v2051 = vadd.f32 0.0, %v2050
        %v2052 = vpop.f32.mrb[0].mxu0
        %v2053 = vadd.f32 0.0, %v2052
        %v2054 = vpop.f32.mrb[0].mxu0
        %v2055 = vadd.f32 0.0, %v2054
        %2056 = vmatprep.mubr.bf16.mxu0 0
        %2057 = vmatmul.mubr.bf16.gmra.mrb[0].mxu0 %v560
        %v2058 = vpop.f32.mrb[0].mxu0
        %v2059 = vadd.f32 0.0, %v2058
        %v2060 = vpop.f32.mrb[0].mxu0
        %v2061 = vadd.f32 0.0, %v2060
        %v2062 = vpop.f32.mrb[0].mxu0
        %v2063 = vadd.f32 0.0, %v2062
        %v2064 = vpop.f32.mrb[0].mxu0
        %v2065 = vadd.f32 0.0, %v2064
        %2066 = vmatprep.mubr.bf16.mxu0 0
        %2067 = vmatmul.mubr.bf16.gmra.mrb[0].mxu0 %v563
        %v2068 = vpop.f32.mrb[0].mxu0
        %v2069 = vadd.f32 0.0, %v2068
        %v2070 = vpop.f32.mrb[0].mxu0
        %v2071 = vadd.f32 0.0, %v2070
        %v2072 = vpop.f32.mrb[0].mxu0
        %v2073 = vadd.f32 0.0, %v2072
        %v2074 = vpop.f32.mrb[0].mxu0
        %v2075 = vadd.f32 0.0, %v2074
        %2076 = vmatprep.mubr.bf16.mxu0 0
        %2077 = vmatmul.mubr.bf16.gmra.mrb[0].mxu0 %v566
        %v2078 = vpop.f32.mrb[0].mxu0
        %v2079 = vadd.f32 0.0, %v2078
        %v2080 = vpop.f32.mrb[0].mxu0
        %v2081 = vadd.f32 0.0, %v2080
        %v2082 = vpop.f32.mrb[0].mxu0
        %v2083 = vadd.f32 0.0, %v2082
        %v2084 = vpop.f32.mrb[0].mxu0
        %v2085 = vadd.f32 0.0, %v2084
        %2086 = vmatprep.mubr.bf16.mxu0 0
        %2087 = vmatmul.mubr.bf16.gmra.mrb[0].mxu0 %v569
        %v2088 = vpop.f32.mrb[0].mxu0
        %v2089 = vadd.f32 0.0, %v2088
        %v2090 = vpop.f32.mrb[0].mxu0
        %v2091 = vadd.f32 0.0, %v2090
        %v2092 = vpop.f32.mrb[0].mxu0
        %v2093 = vadd.f32 0.0, %v2092
        %v2094 = vpop.f32.mrb[0].mxu0
        %v2095 = vadd.f32 0.0, %v2094
        %2096 = vmatprep.mubr.bf16.mxu0 0
        %2097 = vmatmul.mubr.bf16.gmra.mrb[0].mxu0 %v572
        %v2098 = vpop.f32.mrb[0].mxu0
        %v2099 = vadd.f32 0.0, %v2098
        %v2100 = vpop.f32.mrb[0].mxu0
        %v2101 = vadd.f32 0.0, %v2100
        %v2102 = vpop.f32.mrb[0].mxu0
        %v2103 = vadd.f32 0.0, %v2102
        %v2104 = vpop.f32.mrb[0].mxu0
        %v2105 = vadd.f32 0.0, %v2104
        %2106 = vmatprep.mubr.bf16.mxu0 0
        %2107 = vmatmul.mubr.bf16.gmra.mrb[0].mxu0 %v575
        %v2108 = vpop.f32.mrb[0].mxu0
        %v2109 = vadd.f32 0.0, %v2108
        %v2110 = vpop.f32.mrb[0].mxu0
        %v2111 = vadd.f32 0.0, %v2110
        %v2112 = vpop.f32.mrb[0].mxu0
        %v2113 = vadd.f32 0.0, %v2112
        %v2114 = vpop.f32.mrb[0].mxu0
        %v2115 = vadd.f32 0.0, %v2114
        %2116 = vmatprep.mubr.bf16.mxu0 0
        %2117 = vmatmul.mubr.bf16.gmra.mrb[0].mxu0 %v578
        %v2118 = vpop.f32.mrb[0].mxu0
        %v2119 = vadd.f32 0.0, %v2118
        %v2120 = vpop.f32.mrb[0].mxu0
        %v2121 = vadd.f32 0.0, %v2120
        %v2122 = vpop.f32.mrb[0].mxu0
        %v2123 = vadd.f32 0.0, %v2122
        %v2124 = vpop.f32.mrb[0].mxu0
        %v2125 = vadd.f32 0.0, %v2124
        %2126 = vmatprep.mubr.bf16.mxu0 0
        %2127 = vmatmul.mubr.bf16.gmra.mrb[0].mxu0 %v581
        %v2128 = vpop.f32.mrb[0].mxu0
        %v2129 = vadd.f32 0.0, %v2128
        %v2130 = vpop.f32.mrb[0].mxu0
        %v2131 = vadd.f32 0.0, %v2130
        %v2132 = vpop.f32.mrb[0].mxu0
        %v2133 = vadd.f32 0.0, %v2132
        %v2134 = vpop.f32.mrb[0].mxu0
        %v2135 = vadd.f32 0.0, %v2134
        %2136 = vmatprep.mubr.bf16.mxu0 0
        %2137 = vmatmul.mubr.bf16.gmra.mrb[0].mxu0 %v584
        %v2138 = vpop.f32.mrb[0].mxu0
        %v2139 = vadd.f32 0.0, %v2138
        %v2140 = vpop.f32.mrb[0].mxu0
        %v2141 = vadd.f32 0.0, %v2140
        %v2142 = vpop.f32.mrb[0].mxu0
        %v2143 = vadd.f32 0.0, %v2142
        %v2144 = vpop.f32.mrb[0].mxu0
        %v2145 = vadd.f32 0.0, %v2144
        %2146 = vmatprep.mubr.bf16.mxu0 0
        %2147 = vmatmul.mubr.bf16.gmra.mrb[0].mxu0 %v587
        %v2148 = vpop.f32.mrb[0].mxu0
        %v2149 = vadd.f32 0.0, %v2148
        %v2150 = vpop.f32.mrb[0].mxu0
        %v2151 = vadd.f32 0.0, %v2150
        %v2152 = vpop.f32.mrb[0].mxu0
        %v2153 = vadd.f32 0.0, %v2152
        %v2154 = vpop.f32.mrb[0].mxu0
        %v2155 = vadd.f32 0.0, %v2154
        %2156 = vmatprep.mubr.bf16.mxu0 0
        %2157 = vmatmul.mubr.bf16.gmra.mrb[0].mxu0 %v590
        %v2158 = vpop.f32.mrb[0].mxu0
        %v2159 = vadd.f32 0.0, %v2158
        %v2160 = vpop.f32.mrb[0].mxu0
        %v2161 = vadd.f32 0.0, %v2160
        %v2162 = vpop.f32.mrb[0].mxu0
        %v2163 = vadd.f32 0.0, %v2162
        %v2164 = vpop.f32.mrb[0].mxu0
        %v2165 = vadd.f32 0.0, %v2164
        %2166 = vdwg.mxu0
        %v2171 = vcombine.low %v1968, %v1969
        %v2172 = vcombine.high %v1968, %v1969
        %v2174 = vunpack.c.l.s4 1966171168
        %v2175 = vunpack.c.0.s8 %v2174
        %v2176 = vlaneseq
        %v2177 = vshrl.u32 %v2176, 7
        %v2178 = vsub.s32 %v2175, %v2177
        %v2179 = vrot.slane %v2171, %v2178
        %v2181 = vunpack.c.l.s4 1966171168
        %v2182 = vunpack.c.0.s8 %v2181
        %v2183 = vlaneseq
        %v2184 = vshrl.u32 %v2183, 7
        %v2185 = vsub.s32 %v2182, %v2184
        %v2186 = vrot.slane %v2172, %v2185
        %v2187 = vcombine.high %v2179, %v2179
        %v2188 = vcombine.high %v2186, %v2186
        %v2190 = vunpack.c.l.s4 1966171168
        %v2191 = vunpack.c.0.s8 %v2190
        %v2192 = vlaneseq
        %v2193 = vshrl.u32 %v2192, 7
        %v2194 = vsub.s32 %v2191, %v2193
        %v2195 = vrot.slane %v2179, %v2194
        %v2197 = vunpack.c.l.s4 1966171168
        %v2198 = vunpack.c.0.s8 %v2197
        %v2199 = vlaneseq
        %v2200 = vshrl.u32 %v2199, 7
        %v2201 = vsub.s32 %v2198, %v2200
        %v2202 = vrot.slane %v2186, %v2201
        %v2204 = vunpack.c.l.s4 1966171168
        %v2205 = vunpack.c.0.s8 %v2204
        %v2206 = vlaneseq
        %v2207 = vshrl.u32 %v2206, 7
        %v2208 = vsub.s32 %v2205, %v2207
        %v2209 = vrot.slane %v2187, %v2208
        %v2211 = vunpack.c.l.s4 1966171168
        %v2212 = vunpack.c.0.s8 %v2211
        %v2213 = vlaneseq
        %v2214 = vshrl.u32 %v2213, 7
        %v2215 = vsub.s32 %v2212, %v2214
        %v2216 = vrot.slane %v2188, %v2215
        %v2217 = vcombine.high %v2195, %v2195
        %v2218 = vcombine.high %v2202, %v2202
        %v2219 = vcombine.high %v2209, %v2209
        %v2220 = vcombine.high %v2216, %v2216
        %v2221 = vcombine.low %v1970, %v1971
        %v2222 = vcombine.high %v1970, %v1971
        %v2224 = vunpack.c.l.s4 1966171168
        %v2225 = vunpack.c.0.s8 %v2224
        %v2226 = vlaneseq
        %v2227 = vshrl.u32 %v2226, 7
        %v2228 = vsub.s32 %v2225, %v2227
        %v2229 = vrot.slane %v2221, %v2228
        %v2231 = vunpack.c.l.s4 1966171168
        %v2232 = vunpack.c.0.s8 %v2231
        %v2233 = vlaneseq
        %v2234 = vshrl.u32 %v2233, 7
        %v2235 = vsub.s32 %v2232, %v2234
        %v2236 = vrot.slane %v2222, %v2235
        %v2237 = vcombine.high %v2229, %v2229
        %v2238 = vcombine.high %v2236, %v2236
        %v2240 = vunpack.c.l.s4 1966171168
        %v2241 = vunpack.c.0.s8 %v2240
        %v2242 = vlaneseq
        %v2243 = vshrl.u32 %v2242, 7
        %v2244 = vsub.s32 %v2241, %v2243
        %v2245 = vrot.slane %v2229, %v2244
        %v2247 = vunpack.c.l.s4 1966171168
        %v2248 = vunpack.c.0.s8 %v2247
        %v2249 = vlaneseq
        %v2250 = vshrl.u32 %v2249, 7
        %v2251 = vsub.s32 %v2248, %v2250
        %v2252 = vrot.slane %v2236, %v2251
        %v2254 = vunpack.c.l.s4 1966171168
        %v2255 = vunpack.c.0.s8 %v2254
        %v2256 = vlaneseq
        %v2257 = vshrl.u32 %v2256, 7
        %v2258 = vsub.s32 %v2255, %v2257
        %v2259 = vrot.slane %v2237, %v2258
        %v2261 = vunpack.c.l.s4 1966171168
        %v2262 = vunpack.c.0.s8 %v2261
        %v2263 = vlaneseq
        %v2264 = vshrl.u32 %v2263, 7
        %v2265 = vsub.s32 %v2262, %v2264
        %v2266 = vrot.slane %v2238, %v2265
        %v2267 = vcombine.high %v2245, %v2245
        %v2268 = vcombine.high %v2252, %v2252
        %v2269 = vcombine.high %v2259, %v2259
        %v2270 = vcombine.high %v2266, %v2266
        %v2271 = vlaneseq
        %v2272 = vshrl.u32 %v2271, 7
        %v2273 = vsub.s32 0, %v2272
        %v2274 = vrot.slane %v2195, %v2273
        %v2275 = vlaneseq
        %v2276 = vshrl.u32 %v2275, 7
        %v2277 = vsub.s32 1, %v2276
        %v2278 = vrot.slane %v2195, %v2277
        %v2279 = vlaneseq
        %v2280 = vshrl.u32 %v2279, 7
        %v2281 = vsub.s32 0, %v2280
        %v2282 = vrot.slane %v2209, %v2281
        %v2283 = vlaneseq
        %v2284 = vshrl.u32 %v2283, 7
        %v2285 = vsub.s32 1, %v2284
        %v2286 = vrot.slane %v2209, %v2285
        %v2287 = vlaneseq
        %v2288 = vshrl.u32 %v2287, 7
        %v2289 = vsub.s32 0, %v2288
        %v2290 = vrot.slane %v2217, %v2289
        %v2291 = vlaneseq
        %v2292 = vshrl.u32 %v2291, 7
        %v2293 = vsub.s32 1, %v2292
        %v2294 = vrot.slane %v2217, %v2293
        %v2295 = vlaneseq
        %v2296 = vshrl.u32 %v2295, 7
        %v2297 = vsub.s32 0, %v2296
        %v2298 = vrot.slane %v2219, %v2297
        %v2299 = vlaneseq
        %v2300 = vshrl.u32 %v2299, 7
        %v2301 = vsub.s32 1, %v2300
        %v2302 = vrot.slane %v2219, %v2301
        %v2303 = vlaneseq
        %v2304 = vshrl.u32 %v2303, 7
        %v2305 = vsub.s32 0, %v2304
        %v2306 = vrot.slane %v2202, %v2305
        %v2307 = vlaneseq
        %v2308 = vshrl.u32 %v2307, 7
        %v2309 = vsub.s32 1, %v2308
        %v2310 = vrot.slane %v2202, %v2309
        %v2311 = vlaneseq
        %v2312 = vshrl.u32 %v2311, 7
        %v2313 = vsub.s32 0, %v2312
        %v2314 = vrot.slane %v2216, %v2313
        %v2315 = vlaneseq
        %v2316 = vshrl.u32 %v2315, 7
        %v2317 = vsub.s32 1, %v2316
        %v2318 = vrot.slane %v2216, %v2317
        %v2319 = vlaneseq
        %v2320 = vshrl.u32 %v2319, 7
        %v2321 = vsub.s32 0, %v2320
        %v2322 = vrot.slane %v2218, %v2321
        %v2323 = vlaneseq
        %v2324 = vshrl.u32 %v2323, 7
        %v2325 = vsub.s32 1, %v2324
        %v2326 = vrot.slane %v2218, %v2325
        %v2327 = vlaneseq
        %v2328 = vshrl.u32 %v2327, 7
        %v2329 = vsub.s32 0, %v2328
        %v2330 = vrot.slane %v2220, %v2329
        %v2331 = vlaneseq
        %v2332 = vshrl.u32 %v2331, 7
        %v2333 = vsub.s32 1, %v2332
        %v2334 = vrot.slane %v2220, %v2333
        %v2335 = vlaneseq
        %v2336 = vshrl.u32 %v2335, 7
        %v2337 = vsub.s32 0, %v2336
        %v2338 = vrot.slane %v2245, %v2337
        %v2339 = vlaneseq
        %v2340 = vshrl.u32 %v2339, 7
        %v2341 = vsub.s32 1, %v2340
        %v2342 = vrot.slane %v2245, %v2341
        %v2343 = vlaneseq
        %v2344 = vshrl.u32 %v2343, 7
        %v2345 = vsub.s32 0, %v2344
        %v2346 = vrot.slane %v2259, %v2345
        %v2347 = vlaneseq
        %v2348 = vshrl.u32 %v2347, 7
        %v2349 = vsub.s32 1, %v2348
        %v2350 = vrot.slane %v2259, %v2349
        %v2351 = vlaneseq
        %v2352 = vshrl.u32 %v2351, 7
        %v2353 = vsub.s32 0, %v2352
        %v2354 = vrot.slane %v2267, %v2353
        %v2355 = vlaneseq
        %v2356 = vshrl.u32 %v2355, 7
        %v2357 = vsub.s32 1, %v2356
        %v2358 = vrot.slane %v2267, %v2357
        %v2359 = vlaneseq
        %v2360 = vshrl.u32 %v2359, 7
        %v2361 = vsub.s32 0, %v2360
        %v2362 = vrot.slane %v2269, %v2361
        %v2363 = vlaneseq
        %v2364 = vshrl.u32 %v2363, 7
        %v2365 = vsub.s32 1, %v2364
        %v2366 = vrot.slane %v2269, %v2365
        %v2367 = vlaneseq
        %v2368 = vshrl.u32 %v2367, 7
        %v2369 = vsub.s32 0, %v2368
        %v2370 = vrot.slane %v2252, %v2369
        %v2371 = vlaneseq
        %v2372 = vshrl.u32 %v2371, 7
        %v2373 = vsub.s32 1, %v2372
        %v2374 = vrot.slane %v2252, %v2373
        %v2375 = vlaneseq
        %v2376 = vshrl.u32 %v2375, 7
        %v2377 = vsub.s32 0, %v2376
        %v2378 = vrot.slane %v2266, %v2377
        %v2379 = vlaneseq
        %v2380 = vshrl.u32 %v2379, 7
        %v2381 = vsub.s32 1, %v2380
        %v2382 = vrot.slane %v2266, %v2381
        %v2383 = vlaneseq
        %v2384 = vshrl.u32 %v2383, 7
        %v2385 = vsub.s32 0, %v2384
        %v2386 = vrot.slane %v2268, %v2385
        %v2387 = vlaneseq
        %v2388 = vshrl.u32 %v2387, 7
        %v2389 = vsub.s32 1, %v2388
        %v2390 = vrot.slane %v2268, %v2389
        %v2391 = vlaneseq
        %v2392 = vshrl.u32 %v2391, 7
        %v2393 = vsub.s32 0, %v2392
        %v2394 = vrot.slane %v2270, %v2393
        %v2395 = vlaneseq
        %v2396 = vshrl.u32 %v2395, 7
        %v2397 = vsub.s32 1, %v2396
        %v2398 = vrot.slane %v2270, %v2397
        %v2431 = vmul.f32 %v2009, %v2274
        %v2432 = vmul.f32 %v2011, %v2278
        %v2433 = vmul.f32 %v2013, %v2274
        %v2434 = vmul.f32 %v2015, %v2278
        %v2435 = vmul.f32 %v2019, %v2282
        %v2436 = vmul.f32 %v2021, %v2286
        %v2437 = vmul.f32 %v2023, %v2282
        %v2438 = vmul.f32 %v2025, %v2286
        %v2439 = vmul.f32 %v2029, %v2290
        %v2440 = vmul.f32 %v2031, %v2294
        %v2441 = vmul.f32 %v2033, %v2290
        %v2442 = vmul.f32 %v2035, %v2294
        %v2443 = vmul.f32 %v2039, %v2298
        %v2444 = vmul.f32 %v2041, %v2302
        %v2445 = vmul.f32 %v2043, %v2298
        %v2446 = vmul.f32 %v2045, %v2302
        %v2447 = vmul.f32 %v2049, %v2306
        %v2448 = vmul.f32 %v2051, %v2310
        %v2449 = vmul.f32 %v2053, %v2306
        %v2450 = vmul.f32 %v2055, %v2310
        %v2451 = vmul.f32 %v2059, %v2314
        %v2452 = vmul.f32 %v2061, %v2318
        %v2453 = vmul.f32 %v2063, %v2314
        %v2454 = vmul.f32 %v2065, %v2318
        %v2455 = vmul.f32 %v2069, %v2322
        %v2456 = vmul.f32 %v2071, %v2326
        %v2457 = vmul.f32 %v2073, %v2322
        %v2458 = vmul.f32 %v2075, %v2326
        %v2459 = vmul.f32 %v2079, %v2330
        %v2460 = vmul.f32 %v2081, %v2334
        %v2461 = vmul.f32 %v2083, %v2330
        %v2462 = vmul.f32 %v2085, %v2334
        %v2463 = vmul.f32 %v2089, %v2338
        %v2464 = vmul.f32 %v2091, %v2342
        %v2465 = vmul.f32 %v2093, %v2338
        %v2466 = vmul.f32 %v2095, %v2342
        %v2467 = vmul.f32 %v2099, %v2346
        %v2468 = vmul.f32 %v2101, %v2350
        %v2469 = vmul.f32 %v2103, %v2346
        %v2470 = vmul.f32 %v2105, %v2350
        %v2471 = vmul.f32 %v2109, %v2354
        %v2472 = vmul.f32 %v2111, %v2358
        %v2473 = vmul.f32 %v2113, %v2354
        %v2474 = vmul.f32 %v2115, %v2358
        %v2475 = vmul.f32 %v2119, %v2362
        %v2476 = vmul.f32 %v2121, %v2366
        %v2477 = vmul.f32 %v2123, %v2362
        %v2478 = vmul.f32 %v2125, %v2366
        %v2479 = vmul.f32 %v2129, %v2370
        %v2480 = vmul.f32 %v2131, %v2374
        %v2481 = vmul.f32 %v2133, %v2370
        %v2482 = vmul.f32 %v2135, %v2374
        %v2483 = vmul.f32 %v2139, %v2378
        %v2484 = vmul.f32 %v2141, %v2382
        %v2485 = vmul.f32 %v2143, %v2378
        %v2486 = vmul.f32 %v2145, %v2382
        %v2487 = vmul.f32 %v2149, %v2386
        %v2488 = vmul.f32 %v2151, %v2390
        %v2489 = vmul.f32 %v2153, %v2386
        %v2490 = vmul.f32 %v2155, %v2390
        %v2491 = vmul.f32 %v2159, %v2394
        %v2492 = vmul.f32 %v2161, %v2398
        %v2493 = vmul.f32 %v2163, %v2394
        %v2494 = vmul.f32 %v2165, %v2398
        %v2495 = vadd.f32 %v2431, %v2435
        %v2496 = vadd.f32 %v2495, %v2439
        %v2497 = vadd.f32 %v2496, %v2443
        %v2498 = vadd.f32 %v2497, %v2447
        %v2499 = vadd.f32 %v2498, %v2451
        %v2500 = vadd.f32 %v2499, %v2455
        %v2501 = vadd.f32 %v2500, %v2459
        %v2502 = vadd.f32 %v2501, %v2463
        %v2503 = vadd.f32 %v2502, %v2467
        %v2504 = vadd.f32 %v2503, %v2471
        %v2505 = vadd.f32 %v2504, %v2475
        %v2506 = vadd.f32 %v2505, %v2479
        %v2507 = vadd.f32 %v2506, %v2483
        %v2508 = vadd.f32 %v2507, %v2487
        %v2509 = vadd.f32 %v2508, %v2491
        %v2510 = vadd.f32 %v2432, %v2436
        %v2511 = vadd.f32 %v2510, %v2440
        %v2512 = vadd.f32 %v2511, %v2444
        %v2513 = vadd.f32 %v2512, %v2448
        %v2514 = vadd.f32 %v2513, %v2452
        %v2515 = vadd.f32 %v2514, %v2456
        %v2516 = vadd.f32 %v2515, %v2460
        %v2517 = vadd.f32 %v2516, %v2464
        %v2518 = vadd.f32 %v2517, %v2468
        %v2519 = vadd.f32 %v2518, %v2472
        %v2520 = vadd.f32 %v2519, %v2476
        %v2521 = vadd.f32 %v2520, %v2480
        %v2522 = vadd.f32 %v2521, %v2484
        %v2523 = vadd.f32 %v2522, %v2488
        %v2524 = vadd.f32 %v2523, %v2492
        %v2525 = vadd.f32 %v2433, %v2437
        %v2526 = vadd.f32 %v2525, %v2441
        %v2527 = vadd.f32 %v2526, %v2445
        %v2528 = vadd.f32 %v2527, %v2449
        %v2529 = vadd.f32 %v2528, %v2453
        %v2530 = vadd.f32 %v2529, %v2457
        %v2531 = vadd.f32 %v2530, %v2461
        %v2532 = vadd.f32 %v2531, %v2465
        %v2533 = vadd.f32 %v2532, %v2469
        %v2534 = vadd.f32 %v2533, %v2473
        %v2535 = vadd.f32 %v2534, %v2477
        %v2536 = vadd.f32 %v2535, %v2481
        %v2537 = vadd.f32 %v2536, %v2485
        %v2538 = vadd.f32 %v2537, %v2489
        %v2539 = vadd.f32 %v2538, %v2493
        %v2540 = vadd.f32 %v2434, %v2438
        %v2541 = vadd.f32 %v2540, %v2442
        %v2542 = vadd.f32 %v2541, %v2446
        %v2543 = vadd.f32 %v2542, %v2450
        %v2544 = vadd.f32 %v2543, %v2454
        %v2545 = vadd.f32 %v2544, %v2458
        %v2546 = vadd.f32 %v2545, %v2462
        %v2547 = vadd.f32 %v2546, %v2466
        %v2548 = vadd.f32 %v2547, %v2470
        %v2549 = vadd.f32 %v2548, %v2474
        %v2550 = vadd.f32 %v2549, %v2478
        %v2551 = vadd.f32 %v2550, %v2482
        %v2552 = vadd.f32 %v2551, %v2486
        %v2553 = vadd.f32 %v2552, %v2490
        %v2554 = vadd.f32 %v2553, %v2494
        %v2555 = vpack.c.bf16 %v2539, %v2509
        %v2556 = vpack.c.bf16 %v2554, %v2524
        %2557 = vst [vmem:[#allocation2 + $0x20] sm:$0xff] %v2555
        %2558 = vst [vmem:[#allocation2 + $0x28] sm:$0xff] %v2556
        %v2559 = vlaneseq
        %v2560 = vshrl.u32 %v2559, 7
        %v2561 = vsub.s32 3, %v2560
        %v2562 = vrot.slane %v326, %v2561
        %v2563 = vlaneseq
        %v2564 = vshrl.u32 %v2563, 7
        %v2565 = vsub.s32 3, %v2564
        %v2566 = vrot.slane %v327, %v2565
        %vm2567 = vcmp.eq.s32.totalorder %v351, %v2562
        %vm2568 = vcmp.eq.s32.totalorder %v351, %v2566
        %vm2569 = vcmp.eq.s32.totalorder %v352, %v2562
        %vm2570 = vcmp.eq.s32.totalorder %v352, %v2566
        %v2571 = vlaneseq
        %v2572 = vshrl.u32 %v2571, 7
        %v2573 = vsub.s32 3, %v2572
        %v2574 = vrot.slane %v334, %v2573
        %v2575 = vlaneseq
        %v2576 = vshrl.u32 %v2575, 7
        %v2577 = vsub.s32 3, %v2576
        %v2578 = vrot.slane %v335, %v2577
        %v2579 = vsel %vm2567, %v2574, 0.0
        %v2580 = vsel %vm2568, %v2578, 0.0
        %v2581 = vsel %vm2569, %v2574, 0.0
        %v2582 = vsel %vm2570, %v2578, 0.0
        %v2583 = vlaneseq
        %v2584 = vshrl.u32 %v2583, 7
        %v2585 = vsub.s32 3, %v2584
        %v2586 = vrot.slane %v377, %v2585
        %v2587 = vlaneseq
        %v2588 = vshrl.u32 %v2587, 7
        %v2589 = vsub.s32 3, %v2588
        %v2590 = vrot.slane %v378, %v2589
        %vm2591 = vcmp.eq.s32.totalorder %v351, %v2586
        %vm2592 = vcmp.eq.s32.totalorder %v351, %v2590
        %vm2593 = vcmp.eq.s32.totalorder %v352, %v2586
        %vm2594 = vcmp.eq.s32.totalorder %v352, %v2590
        %v2595 = vlaneseq
        %v2596 = vshrl.u32 %v2595, 7
        %v2597 = vsub.s32 3, %v2596
        %v2598 = vrot.slane %v318, %v2597
        %v2599 = vlaneseq
        %v2600 = vshrl.u32 %v2599, 7
        %v2601 = vsub.s32 3, %v2600
        %v2602 = vrot.slane %v319, %v2601
        %v2603 = vsel %vm2591, %v2598, 0.0
        %v2604 = vsel %vm2592, %v2602, 0.0
        %v2605 = vsel %vm2593, %v2598, 0.0
        %v2606 = vsel %vm2594, %v2602, 0.0
        %v2607 = vadd.f32 %v2579, %v2603
        %v2608 = vadd.f32 %v2580, %v2604
        %v2609 = vadd.f32 %v2581, %v2605
        %v2610 = vadd.f32 %v2582, %v2606
        %v2611 = vlaneseq
        %v2612 = vshrl.u32 %v2611, 7
        %v2613 = vsub.s32 3, %v2612
        %v2614 = vrot.slane %v330, %v2613
        %v2615 = vlaneseq
        %v2616 = vshrl.u32 %v2615, 7
        %v2617 = vsub.s32 3, %v2616
        %v2618 = vrot.slane %v331, %v2617
        %vm2619 = vcmp.eq.s32.totalorder %v351, %v2614
        %vm2620 = vcmp.eq.s32.totalorder %v351, %v2618
        %vm2621 = vcmp.eq.s32.totalorder %v352, %v2614
        %vm2622 = vcmp.eq.s32.totalorder %v352, %v2618
        %v2623 = vlaneseq
        %v2624 = vshrl.u32 %v2623, 7
        %v2625 = vsub.s32 3, %v2624
        %v2626 = vrot.slane %v342, %v2625
        %v2627 = vlaneseq
        %v2628 = vshrl.u32 %v2627, 7
        %v2629 = vsub.s32 3, %v2628
        %v2630 = vrot.slane %v343, %v2629
        %v2631 = vsel %vm2619, %v2626, 0.0
        %v2632 = vsel %vm2620, %v2630, 0.0
        %v2633 = vsel %vm2621, %v2626, 0.0
        %v2634 = vsel %vm2622, %v2630, 0.0
        %v2635 = vlaneseq
        %v2636 = vshrl.u32 %v2635, 7
        %v2637 = vsub.s32 3, %v2636
        %v2638 = vrot.slane %v431, %v2637
        %v2639 = vlaneseq
        %v2640 = vshrl.u32 %v2639, 7
        %v2641 = vsub.s32 3, %v2640
        %v2642 = vrot.slane %v432, %v2641
        %vm2643 = vcmp.eq.s32.totalorder %v351, %v2638
        %vm2644 = vcmp.eq.s32.totalorder %v351, %v2642
        %vm2645 = vcmp.eq.s32.totalorder %v352, %v2638
        %vm2646 = vcmp.eq.s32.totalorder %v352, %v2642
        %v2647 = vlaneseq
        %v2648 = vshrl.u32 %v2647, 7
        %v2649 = vsub.s32 3, %v2648
        %v2650 = vrot.slane %v346, %v2649
        %v2651 = vlaneseq
        %v2652 = vshrl.u32 %v2651, 7
        %v2653 = vsub.s32 3, %v2652
        %v2654 = vrot.slane %v347, %v2653
        %v2655 = vsel %vm2643, %v2650, 0.0
        %v2656 = vsel %vm2644, %v2654, 0.0
        %v2657 = vsel %vm2645, %v2650, 0.0
        %v2658 = vsel %vm2646, %v2654, 0.0
        %v2659 = vadd.f32 %v2631, %v2655
        %v2660 = vadd.f32 %v2632, %v2656
        %v2661 = vadd.f32 %v2633, %v2657
        %v2662 = vadd.f32 %v2634, %v2658
        %v2663 = vpack.c.bf16 %v2609, %v2607
        %v2664 = vpack.c.bf16 %v2610, %v2608
        %2665 = vmatprep.subr.bf16.mxu0 %v2664
        %2666 = vmatpush1.bf16.msra.mxu0 %v2663
        %2667 = vmatprep.subr.bf16.mxu0 0
        %2668 = vmatpush1.bf16.msra.mxu0 0
        %2669 = vmatprep.subr.bf16.mxu0 0
        %2670 = vmatpush1.bf16.msra.mxu0 0
        %2671 = vmatprep.subr.bf16.mxu0 0
        %2672 = vmatpush1.bf16.msra.mxu0 0
        %2673 = vmatprep.subr.bf16.mxu0 0
        %2674 = vmatpush1.bf16.msra.mxu0 0
        %2675 = vmatprep.subr.bf16.mxu0 0
        %2676 = vmatpush1.bf16.msra.mxu0 0
        %2677 = vmatprep.subr.bf16.mxu0 0
        %2678 = vmatpush1.bf16.msra.mxu0 0
        %2679 = vmatprep.subr.bf16.mxu0 0
        %2680 = vmatpush1.bf16.msra.mxu0 0
        %2681 = vmatprep.subr.bf16.mxu0 0
        %2682 = vmatpush1.bf16.msra.mxu0 0
        %2683 = vmatprep.subr.bf16.mxu0 0
        %2684 = vmatpush1.bf16.msra.mxu0 0
        %2685 = vmatprep.subr.bf16.mxu0 0
        %2686 = vmatpush1.bf16.msra.mxu0 0
        %2687 = vmatprep.subr.bf16.mxu0 0
        %2688 = vmatpush1.bf16.msra.mxu0 0
        %2689 = vmatprep.subr.bf16.mxu0 0
        %2690 = vmatpush1.bf16.msra.mxu0 0
        %2691 = vmatprep.subr.bf16.mxu0 0
        %2692 = vmatpush1.bf16.msra.mxu0 0
        %2693 = vmatprep.subr.bf16.mxu0 0
        %2694 = vmatpush1.bf16.msra.mxu0 0
        %2695 = vmatprep.subr.bf16.mxu0 0
        %2696 = vmatpush1.bf16.msra.mxu0 0
        %2697 = vmatprep.mubr.bf16.mxu0 0
        %2698 = vmatmul.mubr.bf16.gmra.mrb[0].mxu0 %v545
        %v2699 = vpop.f32.mrb[0].mxu0
        %v2700 = vadd.f32 0.0, %v2699
        %v2701 = vpop.f32.mrb[0].mxu0
        %v2702 = vadd.f32 0.0, %v2701
        %v2703 = vpop.f32.mrb[0].mxu0
        %v2704 = vadd.f32 0.0, %v2703
        %v2705 = vpop.f32.mrb[0].mxu0
        %v2706 = vadd.f32 0.0, %v2705
        %2707 = vmatprep.mubr.bf16.mxu0 0
        %2708 = vmatmul.mubr.bf16.gmra.mrb[0].mxu0 %v548
        %v2709 = vpop.f32.mrb[0].mxu0
        %v2710 = vadd.f32 0.0, %v2709
        %v2711 = vpop.f32.mrb[0].mxu0
        %v2712 = vadd.f32 0.0, %v2711
        %v2713 = vpop.f32.mrb[0].mxu0
        %v2714 = vadd.f32 0.0, %v2713
        %v2715 = vpop.f32.mrb[0].mxu0
        %v2716 = vadd.f32 0.0, %v2715
        %2717 = vmatprep.mubr.bf16.mxu0 0
        %2718 = vmatmul.mubr.bf16.gmra.mrb[0].mxu0 %v551
        %v2719 = vpop.f32.mrb[0].mxu0
        %v2720 = vadd.f32 0.0, %v2719
        %v2721 = vpop.f32.mrb[0].mxu0
        %v2722 = vadd.f32 0.0, %v2721
        %v2723 = vpop.f32.mrb[0].mxu0
        %v2724 = vadd.f32 0.0, %v2723
        %v2725 = vpop.f32.mrb[0].mxu0
        %v2726 = vadd.f32 0.0, %v2725
        %2727 = vmatprep.mubr.bf16.mxu0 0
        %2728 = vmatmul.mubr.bf16.gmra.mrb[0].mxu0 %v554
        %v2729 = vpop.f32.mrb[0].mxu0
        %v2730 = vadd.f32 0.0, %v2729
        %v2731 = vpop.f32.mrb[0].mxu0
        %v2732 = vadd.f32 0.0, %v2731
        %v2733 = vpop.f32.mrb[0].mxu0
        %v2734 = vadd.f32 0.0, %v2733
        %v2735 = vpop.f32.mrb[0].mxu0
        %v2736 = vadd.f32 0.0, %v2735
        %2737 = vmatprep.mubr.bf16.mxu0 0
        %2738 = vmatmul.mubr.bf16.gmra.mrb[0].mxu0 %v557
        %v2739 = vpop.f32.mrb[0].mxu0
        %v2740 = vadd.f32 0.0, %v2739
        %v2741 = vpop.f32.mrb[0].mxu0
        %v2742 = vadd.f32 0.0, %v2741
        %v2743 = vpop.f32.mrb[0].mxu0
        %v2744 = vadd.f32 0.0, %v2743
        %v2745 = vpop.f32.mrb[0].mxu0
        %v2746 = vadd.f32 0.0, %v2745
        %2747 = vmatprep.mubr.bf16.mxu0 0
        %2748 = vmatmul.mubr.bf16.gmra.mrb[0].mxu0 %v560
        %v2749 = vpop.f32.mrb[0].mxu0
        %v2750 = vadd.f32 0.0, %v2749
        %v2751 = vpop.f32.mrb[0].mxu0
        %v2752 = vadd.f32 0.0, %v2751
        %v2753 = vpop.f32.mrb[0].mxu0
        %v2754 = vadd.f32 0.0, %v2753
        %v2755 = vpop.f32.mrb[0].mxu0
        %v2756 = vadd.f32 0.0, %v2755
        %2757 = vmatprep.mubr.bf16.mxu0 0
        %2758 = vmatmul.mubr.bf16.gmra.mrb[0].mxu0 %v563
        %v2759 = vpop.f32.mrb[0].mxu0
        %v2760 = vadd.f32 0.0, %v2759
        %v2761 = vpop.f32.mrb[0].mxu0
        %v2762 = vadd.f32 0.0, %v2761
        %v2763 = vpop.f32.mrb[0].mxu0
        %v2764 = vadd.f32 0.0, %v2763
        %v2765 = vpop.f32.mrb[0].mxu0
        %v2766 = vadd.f32 0.0, %v2765
        %2767 = vmatprep.mubr.bf16.mxu0 0
        %2768 = vmatmul.mubr.bf16.gmra.mrb[0].mxu0 %v566
        %v2769 = vpop.f32.mrb[0].mxu0
        %v2770 = vadd.f32 0.0, %v2769
        %v2771 = vpop.f32.mrb[0].mxu0
        %v2772 = vadd.f32 0.0, %v2771
        %v2773 = vpop.f32.mrb[0].mxu0
        %v2774 = vadd.f32 0.0, %v2773
        %v2775 = vpop.f32.mrb[0].mxu0
        %v2776 = vadd.f32 0.0, %v2775
        %2777 = vmatprep.mubr.bf16.mxu0 0
        %2778 = vmatmul.mubr.bf16.gmra.mrb[0].mxu0 %v569
        %v2779 = vpop.f32.mrb[0].mxu0
        %v2780 = vadd.f32 0.0, %v2779
        %v2781 = vpop.f32.mrb[0].mxu0
        %v2782 = vadd.f32 0.0, %v2781
        %v2783 = vpop.f32.mrb[0].mxu0
        %v2784 = vadd.f32 0.0, %v2783
        %v2785 = vpop.f32.mrb[0].mxu0
        %v2786 = vadd.f32 0.0, %v2785
        %2787 = vmatprep.mubr.bf16.mxu0 0
        %2788 = vmatmul.mubr.bf16.gmra.mrb[0].mxu0 %v572
        %v2789 = vpop.f32.mrb[0].mxu0
        %v2790 = vadd.f32 0.0, %v2789
        %v2791 = vpop.f32.mrb[0].mxu0
        %v2792 = vadd.f32 0.0, %v2791
        %v2793 = vpop.f32.mrb[0].mxu0
        %v2794 = vadd.f32 0.0, %v2793
        %v2795 = vpop.f32.mrb[0].mxu0
        %v2796 = vadd.f32 0.0, %v2795
        %2797 = vmatprep.mubr.bf16.mxu0 0
        %2798 = vmatmul.mubr.bf16.gmra.mrb[0].mxu0 %v575
        %v2799 = vpop.f32.mrb[0].mxu0
        %v2800 = vadd.f32 0.0, %v2799
        %v2801 = vpop.f32.mrb[0].mxu0
        %v2802 = vadd.f32 0.0, %v2801
        %v2803 = vpop.f32.mrb[0].mxu0
        %v2804 = vadd.f32 0.0, %v2803
        %v2805 = vpop.f32.mrb[0].mxu0
        %v2806 = vadd.f32 0.0, %v2805
        %2807 = vmatprep.mubr.bf16.mxu0 0
        %2808 = vmatmul.mubr.bf16.gmra.mrb[0].mxu0 %v578
        %v2809 = vpop.f32.mrb[0].mxu0
        %v2810 = vadd.f32 0.0, %v2809
        %v2811 = vpop.f32.mrb[0].mxu0
        %v2812 = vadd.f32 0.0, %v2811
        %v2813 = vpop.f32.mrb[0].mxu0
        %v2814 = vadd.f32 0.0, %v2813
        %v2815 = vpop.f32.mrb[0].mxu0
        %v2816 = vadd.f32 0.0, %v2815
        %2817 = vmatprep.mubr.bf16.mxu0 0
        %2818 = vmatmul.mubr.bf16.gmra.mrb[0].mxu0 %v581
        %v2819 = vpop.f32.mrb[0].mxu0
        %v2820 = vadd.f32 0.0, %v2819
        %v2821 = vpop.f32.mrb[0].mxu0
        %v2822 = vadd.f32 0.0, %v2821
        %v2823 = vpop.f32.mrb[0].mxu0
        %v2824 = vadd.f32 0.0, %v2823
        %v2825 = vpop.f32.mrb[0].mxu0
        %v2826 = vadd.f32 0.0, %v2825
        %2827 = vmatprep.mubr.bf16.mxu0 0
        %2828 = vmatmul.mubr.bf16.gmra.mrb[0].mxu0 %v584
        %v2829 = vpop.f32.mrb[0].mxu0
        %v2830 = vadd.f32 0.0, %v2829
        %v2831 = vpop.f32.mrb[0].mxu0
        %v2832 = vadd.f32 0.0, %v2831
        %v2833 = vpop.f32.mrb[0].mxu0
        %v2834 = vadd.f32 0.0, %v2833
        %v2835 = vpop.f32.mrb[0].mxu0
        %v2836 = vadd.f32 0.0, %v2835
        %2837 = vmatprep.mubr.bf16.mxu0 0
        %2838 = vmatmul.mubr.bf16.gmra.mrb[0].mxu0 %v587
        %v2839 = vpop.f32.mrb[0].mxu0
        %v2840 = vadd.f32 0.0, %v2839
        %v2841 = vpop.f32.mrb[0].mxu0
        %v2842 = vadd.f32 0.0, %v2841
        %v2843 = vpop.f32.mrb[0].mxu0
        %v2844 = vadd.f32 0.0, %v2843
        %v2845 = vpop.f32.mrb[0].mxu0
        %v2846 = vadd.f32 0.0, %v2845
        %2847 = vmatprep.mubr.bf16.mxu0 0
        %2848 = vmatmul.mubr.bf16.gmra.mrb[0].mxu0 %v590
        %v2849 = vpop.f32.mrb[0].mxu0
        %v2850 = vadd.f32 0.0, %v2849
        %v2851 = vpop.f32.mrb[0].mxu0
        %v2852 = vadd.f32 0.0, %v2851
        %v2853 = vpop.f32.mrb[0].mxu0
        %v2854 = vadd.f32 0.0, %v2853
        %v2855 = vpop.f32.mrb[0].mxu0
        %v2856 = vadd.f32 0.0, %v2855
        %2857 = vdwg.mxu0
        %v2862 = vcombine.low %v2659, %v2660
        %v2863 = vcombine.high %v2659, %v2660
        %v2865 = vunpack.c.l.s4 1966171168
        %v2866 = vunpack.c.0.s8 %v2865
        %v2867 = vlaneseq
        %v2868 = vshrl.u32 %v2867, 7
        %v2869 = vsub.s32 %v2866, %v2868
        %v2870 = vrot.slane %v2862, %v2869
        %v2872 = vunpack.c.l.s4 1966171168
        %v2873 = vunpack.c.0.s8 %v2872
        %v2874 = vlaneseq
        %v2875 = vshrl.u32 %v2874, 7
        %v2876 = vsub.s32 %v2873, %v2875
        %v2877 = vrot.slane %v2863, %v2876
        %v2878 = vcombine.high %v2870, %v2870
        %v2879 = vcombine.high %v2877, %v2877
        %v2881 = vunpack.c.l.s4 1966171168
        %v2882 = vunpack.c.0.s8 %v2881
        %v2883 = vlaneseq
        %v2884 = vshrl.u32 %v2883, 7
        %v2885 = vsub.s32 %v2882, %v2884
        %v2886 = vrot.slane %v2870, %v2885
        %v2888 = vunpack.c.l.s4 1966171168
        %v2889 = vunpack.c.0.s8 %v2888
        %v2890 = vlaneseq
        %v2891 = vshrl.u32 %v2890, 7
        %v2892 = vsub.s32 %v2889, %v2891
        %v2893 = vrot.slane %v2877, %v2892
        %v2895 = vunpack.c.l.s4 1966171168
        %v2896 = vunpack.c.0.s8 %v2895
        %v2897 = vlaneseq
        %v2898 = vshrl.u32 %v2897, 7
        %v2899 = vsub.s32 %v2896, %v2898
        %v2900 = vrot.slane %v2878, %v2899
        %v2902 = vunpack.c.l.s4 1966171168
        %v2903 = vunpack.c.0.s8 %v2902
        %v2904 = vlaneseq
        %v2905 = vshrl.u32 %v2904, 7
        %v2906 = vsub.s32 %v2903, %v2905
        %v2907 = vrot.slane %v2879, %v2906
        %v2908 = vcombine.high %v2886, %v2886
        %v2909 = vcombine.high %v2893, %v2893
        %v2910 = vcombine.high %v2900, %v2900
        %v2911 = vcombine.high %v2907, %v2907
        %v2912 = vcombine.low %v2661, %v2662
        %v2913 = vcombine.high %v2661, %v2662
        %v2915 = vunpack.c.l.s4 1966171168
        %v2916 = vunpack.c.0.s8 %v2915
        %v2917 = vlaneseq
        %v2918 = vshrl.u32 %v2917, 7
        %v2919 = vsub.s32 %v2916, %v2918
        %v2920 = vrot.slane %v2912, %v2919
        %v2922 = vunpack.c.l.s4 1966171168
        %v2923 = vunpack.c.0.s8 %v2922
        %v2924 = vlaneseq
        %v2925 = vshrl.u32 %v2924, 7
        %v2926 = vsub.s32 %v2923, %v2925
        %v2927 = vrot.slane %v2913, %v2926
        %v2928 = vcombine.high %v2920, %v2920
        %v2929 = vcombine.high %v2927, %v2927
        %v2931 = vunpack.c.l.s4 1966171168
        %v2932 = vunpack.c.0.s8 %v2931
        %v2933 = vlaneseq
        %v2934 = vshrl.u32 %v2933, 7
        %v2935 = vsub.s32 %v2932, %v2934
        %v2936 = vrot.slane %v2920, %v2935
        %v2938 = vunpack.c.l.s4 1966171168
        %v2939 = vunpack.c.0.s8 %v2938
        %v2940 = vlaneseq
        %v2941 = vshrl.u32 %v2940, 7
        %v2942 = vsub.s32 %v2939, %v2941
        %v2943 = vrot.slane %v2927, %v2942
        %v2945 = vunpack.c.l.s4 1966171168
        %v2946 = vunpack.c.0.s8 %v2945
        %v2947 = vlaneseq
        %v2948 = vshrl.u32 %v2947, 7
        %v2949 = vsub.s32 %v2946, %v2948
        %v2950 = vrot.slane %v2928, %v2949
        %v2952 = vunpack.c.l.s4 1966171168
        %v2953 = vunpack.c.0.s8 %v2952
        %v2954 = vlaneseq
        %v2955 = vshrl.u32 %v2954, 7
        %v2956 = vsub.s32 %v2953, %v2955
        %v2957 = vrot.slane %v2929, %v2956
        %v2958 = vcombine.high %v2936, %v2936
        %v2959 = vcombine.high %v2943, %v2943
        %v2960 = vcombine.high %v2950, %v2950
        %v2961 = vcombine.high %v2957, %v2957
        %v2962 = vlaneseq
        %v2963 = vshrl.u32 %v2962, 7
        %v2964 = vsub.s32 0, %v2963
        %v2965 = vrot.slane %v2886, %v2964
        %v2966 = vlaneseq
        %v2967 = vshrl.u32 %v2966, 7
        %v2968 = vsub.s32 1, %v2967
        %v2969 = vrot.slane %v2886, %v2968
        %v2970 = vlaneseq
        %v2971 = vshrl.u32 %v2970, 7
        %v2972 = vsub.s32 0, %v2971
        %v2973 = vrot.slane %v2900, %v2972
        %v2974 = vlaneseq
        %v2975 = vshrl.u32 %v2974, 7
        %v2976 = vsub.s32 1, %v2975
        %v2977 = vrot.slane %v2900, %v2976
        %v2978 = vlaneseq
        %v2979 = vshrl.u32 %v2978, 7
        %v2980 = vsub.s32 0, %v2979
        %v2981 = vrot.slane %v2908, %v2980
        %v2982 = vlaneseq
        %v2983 = vshrl.u32 %v2982, 7
        %v2984 = vsub.s32 1, %v2983
        %v2985 = vrot.slane %v2908, %v2984
        %v2986 = vlaneseq
        %v2987 = vshrl.u32 %v2986, 7
        %v2988 = vsub.s32 0, %v2987
        %v2989 = vrot.slane %v2910, %v2988
        %v2990 = vlaneseq
        %v2991 = vshrl.u32 %v2990, 7
        %v2992 = vsub.s32 1, %v2991
        %v2993 = vrot.slane %v2910, %v2992
        %v2994 = vlaneseq
        %v2995 = vshrl.u32 %v2994, 7
        %v2996 = vsub.s32 0, %v2995
        %v2997 = vrot.slane %v2893, %v2996
        %v2998 = vlaneseq
        %v2999 = vshrl.u32 %v2998, 7
        %v3000 = vsub.s32 1, %v2999
        %v3001 = vrot.slane %v2893, %v3000
        %v3002 = vlaneseq
        %v3003 = vshrl.u32 %v3002, 7
        %v3004 = vsub.s32 0, %v3003
        %v3005 = vrot.slane %v2907, %v3004
        %v3006 = vlaneseq
        %v3007 = vshrl.u32 %v3006, 7
        %v3008 = vsub.s32 1, %v3007
        %v3009 = vrot.slane %v2907, %v3008
        %v3010 = vlaneseq
        %v3011 = vshrl.u32 %v3010, 7
        %v3012 = vsub.s32 0, %v3011
        %v3013 = vrot.slane %v2909, %v3012
        %v3014 = vlaneseq
        %v3015 = vshrl.u32 %v3014, 7
        %v3016 = vsub.s32 1, %v3015
        %v3017 = vrot.slane %v2909, %v3016
        %v3018 = vlaneseq
        %v3019 = vshrl.u32 %v3018, 7
        %v3020 = vsub.s32 0, %v3019
        %v3021 = vrot.slane %v2911, %v3020
        %v3022 = vlaneseq
        %v3023 = vshrl.u32 %v3022, 7
        %v3024 = vsub.s32 1, %v3023
        %v3025 = vrot.slane %v2911, %v3024
        %v3026 = vlaneseq
        %v3027 = vshrl.u32 %v3026, 7
        %v3028 = vsub.s32 0, %v3027
        %v3029 = vrot.slane %v2936, %v3028
        %v3030 = vlaneseq
        %v3031 = vshrl.u32 %v3030, 7
        %v3032 = vsub.s32 1, %v3031
        %v3033 = vrot.slane %v2936, %v3032
        %v3034 = vlaneseq
        %v3035 = vshrl.u32 %v3034, 7
        %v3036 = vsub.s32 0, %v3035
        %v3037 = vrot.slane %v2950, %v3036
        %v3038 = vlaneseq
        %v3039 = vshrl.u32 %v3038, 7
        %v3040 = vsub.s32 1, %v3039
        %v3041 = vrot.slane %v2950, %v3040
        %v3042 = vlaneseq
        %v3043 = vshrl.u32 %v3042, 7
        %v3044 = vsub.s32 0, %v3043
        %v3045 = vrot.slane %v2958, %v3044
        %v3046 = vlaneseq
        %v3047 = vshrl.u32 %v3046, 7
        %v3048 = vsub.s32 1, %v3047
        %v3049 = vrot.slane %v2958, %v3048
        %v3050 = vlaneseq
        %v3051 = vshrl.u32 %v3050, 7
        %v3052 = vsub.s32 0, %v3051
        %v3053 = vrot.slane %v2960, %v3052
        %v3054 = vlaneseq
        %v3055 = vshrl.u32 %v3054, 7
        %v3056 = vsub.s32 1, %v3055
        %v3057 = vrot.slane %v2960, %v3056
        %v3058 = vlaneseq
        %v3059 = vshrl.u32 %v3058, 7
        %v3060 = vsub.s32 0, %v3059
        %v3061 = vrot.slane %v2943, %v3060
        %v3062 = vlaneseq
        %v3063 = vshrl.u32 %v3062, 7
        %v3064 = vsub.s32 1, %v3063
        %v3065 = vrot.slane %v2943, %v3064
        %v3066 = vlaneseq
        %v3067 = vshrl.u32 %v3066, 7
        %v3068 = vsub.s32 0, %v3067
        %v3069 = vrot.slane %v2957, %v3068
        %v3070 = vlaneseq
        %v3071 = vshrl.u32 %v3070, 7
        %v3072 = vsub.s32 1, %v3071
        %v3073 = vrot.slane %v2957, %v3072
        %v3074 = vlaneseq
        %v3075 = vshrl.u32 %v3074, 7
        %v3076 = vsub.s32 0, %v3075
        %v3077 = vrot.slane %v2959, %v3076
        %v3078 = vlaneseq
        %v3079 = vshrl.u32 %v3078, 7
        %v3080 = vsub.s32 1, %v3079
        %v3081 = vrot.slane %v2959, %v3080
        %v3082 = vlaneseq
        %v3083 = vshrl.u32 %v3082, 7
        %v3084 = vsub.s32 0, %v3083
        %v3085 = vrot.slane %v2961, %v3084
        %v3086 = vlaneseq
        %v3087 = vshrl.u32 %v3086, 7
        %v3088 = vsub.s32 1, %v3087
        %v3089 = vrot.slane %v2961, %v3088
        %v3122 = vmul.f32 %v2700, %v2965
        %v3123 = vmul.f32 %v2702, %v2969
        %v3124 = vmul.f32 %v2704, %v2965
        %v3125 = vmul.f32 %v2706, %v2969
        %v3126 = vmul.f32 %v2710, %v2973
        %v3127 = vmul.f32 %v2712, %v2977
        %v3128 = vmul.f32 %v2714, %v2973
        %v3129 = vmul.f32 %v2716, %v2977
        %v3130 = vmul.f32 %v2720, %v2981
        %v3131 = vmul.f32 %v2722, %v2985
        %v3132 = vmul.f32 %v2724, %v2981
        %v3133 = vmul.f32 %v2726, %v2985
        %v3134 = vmul.f32 %v2730, %v2989
        %v3135 = vmul.f32 %v2732, %v2993
        %v3136 = vmul.f32 %v2734, %v2989
        %v3137 = vmul.f32 %v2736, %v2993
        %v3138 = vmul.f32 %v2740, %v2997
        %v3139 = vmul.f32 %v2742, %v3001
        %v3140 = vmul.f32 %v2744, %v2997
        %v3141 = vmul.f32 %v2746, %v3001
        %v3142 = vmul.f32 %v2750, %v3005
        %v3143 = vmul.f32 %v2752, %v3009
        %v3144 = vmul.f32 %v2754, %v3005
        %v3145 = vmul.f32 %v2756, %v3009
        %v3146 = vmul.f32 %v2760, %v3013
        %v3147 = vmul.f32 %v2762, %v3017
        %v3148 = vmul.f32 %v2764, %v3013
        %v3149 = vmul.f32 %v2766, %v3017
        %v3150 = vmul.f32 %v2770, %v3021
        %v3151 = vmul.f32 %v2772, %v3025
        %v3152 = vmul.f32 %v2774, %v3021
        %v3153 = vmul.f32 %v2776, %v3025
        %v3154 = vmul.f32 %v2780, %v3029
        %v3155 = vmul.f32 %v2782, %v3033
        %v3156 = vmul.f32 %v2784, %v3029
        %v3157 = vmul.f32 %v2786, %v3033
        %v3158 = vmul.f32 %v2790, %v3037
        %v3159 = vmul.f32 %v2792, %v3041
        %v3160 = vmul.f32 %v2794, %v3037
        %v3161 = vmul.f32 %v2796, %v3041
        %v3162 = vmul.f32 %v2800, %v3045
        %v3163 = vmul.f32 %v2802, %v3049
        %v3164 = vmul.f32 %v2804, %v3045
        %v3165 = vmul.f32 %v2806, %v3049
        %v3166 = vmul.f32 %v2810, %v3053
        %v3167 = vmul.f32 %v2812, %v3057
        %v3168 = vmul.f32 %v2814, %v3053
        %v3169 = vmul.f32 %v2816, %v3057
        %v3170 = vmul.f32 %v2820, %v3061
        %v3171 = vmul.f32 %v2822, %v3065
        %v3172 = vmul.f32 %v2824, %v3061
        %v3173 = vmul.f32 %v2826, %v3065
        %v3174 = vmul.f32 %v2830, %v3069
        %v3175 = vmul.f32 %v2832, %v3073
        %v3176 = vmul.f32 %v2834, %v3069
        %v3177 = vmul.f32 %v2836, %v3073
        %v3178 = vmul.f32 %v2840, %v3077
        %v3179 = vmul.f32 %v2842, %v3081
        %v3180 = vmul.f32 %v2844, %v3077
        %v3181 = vmul.f32 %v2846, %v3081
        %v3182 = vmul.f32 %v2850, %v3085
        %v3183 = vmul.f32 %v2852, %v3089
        %v3184 = vmul.f32 %v2854, %v3085
        %v3185 = vmul.f32 %v2856, %v3089
        %v3186 = vadd.f32 %v3122, %v3126
        %v3187 = vadd.f32 %v3186, %v3130
        %v3188 = vadd.f32 %v3187, %v3134
        %v3189 = vadd.f32 %v3188, %v3138
        %v3190 = vadd.f32 %v3189, %v3142
        %v3191 = vadd.f32 %v3190, %v3146
        %v3192 = vadd.f32 %v3191, %v3150
        %v3193 = vadd.f32 %v3192, %v3154
        %v3194 = vadd.f32 %v3193, %v3158
        %v3195 = vadd.f32 %v3194, %v3162
        %v3196 = vadd.f32 %v3195, %v3166
        %v3197 = vadd.f32 %v3196, %v3170
        %v3198 = vadd.f32 %v3197, %v3174
        %v3199 = vadd.f32 %v3198, %v3178
        %v3200 = vadd.f32 %v3199, %v3182
        %v3201 = vadd.f32 %v3123, %v3127
        %v3202 = vadd.f32 %v3201, %v3131
        %v3203 = vadd.f32 %v3202, %v3135
        %v3204 = vadd.f32 %v3203, %v3139
        %v3205 = vadd.f32 %v3204, %v3143
        %v3206 = vadd.f32 %v3205, %v3147
        %v3207 = vadd.f32 %v3206, %v3151
        %v3208 = vadd.f32 %v3207, %v3155
        %v3209 = vadd.f32 %v3208, %v3159
        %v3210 = vadd.f32 %v3209, %v3163
        %v3211 = vadd.f32 %v3210, %v3167
        %v3212 = vadd.f32 %v3211, %v3171
        %v3213 = vadd.f32 %v3212, %v3175
        %v3214 = vadd.f32 %v3213, %v3179
        %v3215 = vadd.f32 %v3214, %v3183
        %v3216 = vadd.f32 %v3124, %v3128
        %v3217 = vadd.f32 %v3216, %v3132
        %v3218 = vadd.f32 %v3217, %v3136
        %v3219 = vadd.f32 %v3218, %v3140
        %v3220 = vadd.f32 %v3219, %v3144
        %v3221 = vadd.f32 %v3220, %v3148
        %v3222 = vadd.f32 %v3221, %v3152
        %v3223 = vadd.f32 %v3222, %v3156
        %v3224 = vadd.f32 %v3223, %v3160
        %v3225 = vadd.f32 %v3224, %v3164
        %v3226 = vadd.f32 %v3225, %v3168
        %v3227 = vadd.f32 %v3226, %v3172
        %v3228 = vadd.f32 %v3227, %v3176
        %v3229 = vadd.f32 %v3228, %v3180
        %v3230 = vadd.f32 %v3229, %v3184
        %v3231 = vadd.f32 %v3125, %v3129
        %v3232 = vadd.f32 %v3231, %v3133
        %v3233 = vadd.f32 %v3232, %v3137
        %v3234 = vadd.f32 %v3233, %v3141
        %v3235 = vadd.f32 %v3234, %v3145
        %v3236 = vadd.f32 %v3235, %v3149
        %v3237 = vadd.f32 %v3236, %v3153
        %v3238 = vadd.f32 %v3237, %v3157
        %v3239 = vadd.f32 %v3238, %v3161
        %v3240 = vadd.f32 %v3239, %v3165
        %v3241 = vadd.f32 %v3240, %v3169
        %v3242 = vadd.f32 %v3241, %v3173
        %v3243 = vadd.f32 %v3242, %v3177
        %v3244 = vadd.f32 %v3243, %v3181
        %v3245 = vadd.f32 %v3244, %v3185
        %v3246 = vpack.c.bf16 %v3230, %v3200
        %v3247 = vpack.c.bf16 %v3245, %v3215
        %3248 = vst [vmem:[#allocation2 + $0x30] sm:$0xff] %v3246
        %3249 = vst [vmem:[#allocation2 + $0x38] sm:$0xff] %v3247
        %v3250 = vlaneseq
        %v3251 = vshrl.u32 %v3250, 7
        %v3252 = vsub.s32 4, %v3251
        %v3253 = vrot.slane %v326, %v3252
        %v3254 = vlaneseq
        %v3255 = vshrl.u32 %v3254, 7
        %v3256 = vsub.s32 4, %v3255
        %v3257 = vrot.slane %v327, %v3256
        %vm3258 = vcmp.eq.s32.totalorder %v351, %v3253
        %vm3259 = vcmp.eq.s32.totalorder %v351, %v3257
        %vm3260 = vcmp.eq.s32.totalorder %v352, %v3253
        %vm3261 = vcmp.eq.s32.totalorder %v352, %v3257
        %v3262 = vlaneseq
        %v3263 = vshrl.u32 %v3262, 7
        %v3264 = vsub.s32 4, %v3263
        %v3265 = vrot.slane %v334, %v3264
        %v3266 = vlaneseq
        %v3267 = vshrl.u32 %v3266, 7
        %v3268 = vsub.s32 4, %v3267
        %v3269 = vrot.slane %v335, %v3268
        %v3270 = vsel %vm3258, %v3265, 0.0
        %v3271 = vsel %vm3259, %v3269, 0.0
        %v3272 = vsel %vm3260, %v3265, 0.0
        %v3273 = vsel %vm3261, %v3269, 0.0
        %v3274 = vlaneseq
        %v3275 = vshrl.u32 %v3274, 7
        %v3276 = vsub.s32 4, %v3275
        %v3277 = vrot.slane %v377, %v3276
        %v3278 = vlaneseq
        %v3279 = vshrl.u32 %v3278, 7
        %v3280 = vsub.s32 4, %v3279
        %v3281 = vrot.slane %v378, %v3280
        %vm3282 = vcmp.eq.s32.totalorder %v351, %v3277
        %vm3283 = vcmp.eq.s32.totalorder %v351, %v3281
        %vm3284 = vcmp.eq.s32.totalorder %v352, %v3277
        %vm3285 = vcmp.eq.s32.totalorder %v352, %v3281
        %v3286 = vlaneseq
        %v3287 = vshrl.u32 %v3286, 7
        %v3288 = vsub.s32 4, %v3287
        %v3289 = vrot.slane %v318, %v3288
        %v3290 = vlaneseq
        %v3291 = vshrl.u32 %v3290, 7
        %v3292 = vsub.s32 4, %v3291
        %v3293 = vrot.slane %v319, %v3292
        %v3294 = vsel %vm3282, %v3289, 0.0
        %v3295 = vsel %vm3283, %v3293, 0.0
        %v3296 = vsel %vm3284, %v3289, 0.0
        %v3297 = vsel %vm3285, %v3293, 0.0
        %v3298 = vadd.f32 %v3270, %v3294
        %v3299 = vadd.f32 %v3271, %v3295
        %v3300 = vadd.f32 %v3272, %v3296
        %v3301 = vadd.f32 %v3273, %v3297
        %v3302 = vlaneseq
        %v3303 = vshrl.u32 %v3302, 7
        %v3304 = vsub.s32 4, %v3303
        %v3305 = vrot.slane %v330, %v3304
        %v3306 = vlaneseq
        %v3307 = vshrl.u32 %v3306, 7
        %v3308 = vsub.s32 4, %v3307
        %v3309 = vrot.slane %v331, %v3308
        %vm3310 = vcmp.eq.s32.totalorder %v351, %v3305
        %vm3311 = vcmp.eq.s32.totalorder %v351, %v3309
        %vm3312 = vcmp.eq.s32.totalorder %v352, %v3305
        %vm3313 = vcmp.eq.s32.totalorder %v352, %v3309
        %v3314 = vlaneseq
        %v3315 = vshrl.u32 %v3314, 7
        %v3316 = vsub.s32 4, %v3315
        %v3317 = vrot.slane %v342, %v3316
        %v3318 = vlaneseq
        %v3319 = vshrl.u32 %v3318, 7
        %v3320 = vsub.s32 4, %v3319
        %v3321 = vrot.slane %v343, %v3320
        %v3322 = vsel %vm3310, %v3317, 0.0
        %v3323 = vsel %vm3311, %v3321, 0.0
        %v3324 = vsel %vm3312, %v3317, 0.0
        %v3325 = vsel %vm3313, %v3321, 0.0
        %v3326 = vlaneseq
        %v3327 = vshrl.u32 %v3326, 7
        %v3328 = vsub.s32 4, %v3327
        %v3329 = vrot.slane %v431, %v3328
        %v3330 = vlaneseq
        %v3331 = vshrl.u32 %v3330, 7
        %v3332 = vsub.s32 4, %v3331
        %v3333 = vrot.slane %v432, %v3332
        %vm3334 = vcmp.eq.s32.totalorder %v351, %v3329
        %vm3335 = vcmp.eq.s32.totalorder %v351, %v3333
        %vm3336 = vcmp.eq.s32.totalorder %v352, %v3329
        %vm3337 = vcmp.eq.s32.totalorder %v352, %v3333
        %v3338 = vlaneseq
        %v3339 = vshrl.u32 %v3338, 7
        %v3340 = vsub.s32 4, %v3339
        %v3341 = vrot.slane %v346, %v3340
        %v3342 = vlaneseq
        %v3343 = vshrl.u32 %v3342, 7
        %v3344 = vsub.s32 4, %v3343
        %v3345 = vrot.slane %v347, %v3344
        %v3346 = vsel %vm3334, %v3341, 0.0
        %v3347 = vsel %vm3335, %v3345, 0.0
        %v3348 = vsel %vm3336, %v3341, 0.0
        %v3349 = vsel %vm3337, %v3345, 0.0
        %v3350 = vadd.f32 %v3322, %v3346
        %v3351 = vadd.f32 %v3323, %v3347
        %v3352 = vadd.f32 %v3324, %v3348
        %v3353 = vadd.f32 %v3325, %v3349
        %v3354 = vpack.c.bf16 %v3300, %v3298
        %v3355 = vpack.c.bf16 %v3301, %v3299
        %3356 = vmatprep.subr.bf16.mxu0 %v3355
        %3357 = vmatpush1.bf16.msra.mxu0 %v3354
        %3358 = vmatprep.subr.bf16.mxu0 0
        %3359 = vmatpush1.bf16.msra.mxu0 0
        %3360 = vmatprep.subr.bf16.mxu0 0
        %3361 = vmatpush1.bf16.msra.mxu0 0
        %3362 = vmatprep.subr.bf16.mxu0 0
        %3363 = vmatpush1.bf16.msra.mxu0 0
        %3364 = vmatprep.subr.bf16.mxu0 0
        %3365 = vmatpush1.bf16.msra.mxu0 0
        %3366 = vmatprep.subr.bf16.mxu0 0
        %3367 = vmatpush1.bf16.msra.mxu0 0
        %3368 = vmatprep.subr.bf16.mxu0 0
        %3369 = vmatpush1.bf16.msra.mxu0 0
        %3370 = vmatprep.subr.bf16.mxu0 0
        %3371 = vmatpush1.bf16.msra.mxu0 0
        %3372 = vmatprep.subr.bf16.mxu0 0
        %3373 = vmatpush1.bf16.msra.mxu0 0
        %3374 = vmatprep.subr.bf16.mxu0 0
        %3375 = vmatpush1.bf16.msra.mxu0 0
        %3376 = vmatprep.subr.bf16.mxu0 0
        %3377 = vmatpush1.bf16.msra.mxu0 0
        %3378 = vmatprep.subr.bf16.mxu0 0
        %3379 = vmatpush1.bf16.msra.mxu0 0
        %3380 = vmatprep.subr.bf16.mxu0 0
        %3381 = vmatpush1.bf16.msra.mxu0 0
        %3382 = vmatprep.subr.bf16.mxu0 0
        %3383 = vmatpush1.bf16.msra.mxu0 0
        %3384 = vmatprep.subr.bf16.mxu0 0
        %3385 = vmatpush1.bf16.msra.mxu0 0
        %3386 = vmatprep.subr.bf16.mxu0 0
        %3387 = vmatpush1.bf16.msra.mxu0 0
        %3388 = vmatprep.mubr.bf16.mxu0 0
        %3389 = vmatmul.mubr.bf16.gmra.mrb[0].mxu0 %v545
        %v3390 = vpop.f32.mrb[0].mxu0
        %v3391 = vadd.f32 0.0, %v3390
        %v3392 = vpop.f32.mrb[0].mxu0
        %v3393 = vadd.f32 0.0, %v3392
        %v3394 = vpop.f32.mrb[0].mxu0
        %v3395 = vadd.f32 0.0, %v3394
        %v3396 = vpop.f32.mrb[0].mxu0
        %v3397 = vadd.f32 0.0, %v3396
        %3398 = vmatprep.mubr.bf16.mxu0 0
        %3399 = vmatmul.mubr.bf16.gmra.mrb[0].mxu0 %v548
        %v3400 = vpop.f32.mrb[0].mxu0
        %v3401 = vadd.f32 0.0, %v3400
        %v3402 = vpop.f32.mrb[0].mxu0
        %v3403 = vadd.f32 0.0, %v3402
        %v3404 = vpop.f32.mrb[0].mxu0
        %v3405 = vadd.f32 0.0, %v3404
        %v3406 = vpop.f32.mrb[0].mxu0
        %v3407 = vadd.f32 0.0, %v3406
        %3408 = vmatprep.mubr.bf16.mxu0 0
        %3409 = vmatmul.mubr.bf16.gmra.mrb[0].mxu0 %v551
        %v3410 = vpop.f32.mrb[0].mxu0
        %v3411 = vadd.f32 0.0, %v3410
        %v3412 = vpop.f32.mrb[0].mxu0
        %v3413 = vadd.f32 0.0, %v3412
        %v3414 = vpop.f32.mrb[0].mxu0
        %v3415 = vadd.f32 0.0, %v3414
        %v3416 = vpop.f32.mrb[0].mxu0
        %v3417 = vadd.f32 0.0, %v3416
        %3418 = vmatprep.mubr.bf16.mxu0 0
        %3419 = vmatmul.mubr.bf16.gmra.mrb[0].mxu0 %v554
        %v3420 = vpop.f32.mrb[0].mxu0
        %v3421 = vadd.f32 0.0, %v3420
        %v3422 = vpop.f32.mrb[0].mxu0
        %v3423 = vadd.f32 0.0, %v3422
        %v3424 = vpop.f32.mrb[0].mxu0
        %v3425 = vadd.f32 0.0, %v3424
        %v3426 = vpop.f32.mrb[0].mxu0
        %v3427 = vadd.f32 0.0, %v3426
        %3428 = vmatprep.mubr.bf16.mxu0 0
        %3429 = vmatmul.mubr.bf16.gmra.mrb[0].mxu0 %v557
        %v3430 = vpop.f32.mrb[0].mxu0
        %v3431 = vadd.f32 0.0, %v3430
        %v3432 = vpop.f32.mrb[0].mxu0
        %v3433 = vadd.f32 0.0, %v3432
        %v3434 = vpop.f32.mrb[0].mxu0
        %v3435 = vadd.f32 0.0, %v3434
        %v3436 = vpop.f32.mrb[0].mxu0
        %v3437 = vadd.f32 0.0, %v3436
        %3438 = vmatprep.mubr.bf16.mxu0 0
        %3439 = vmatmul.mubr.bf16.gmra.mrb[0].mxu0 %v560
        %v3440 = vpop.f32.mrb[0].mxu0
        %v3441 = vadd.f32 0.0, %v3440
        %v3442 = vpop.f32.mrb[0].mxu0
        %v3443 = vadd.f32 0.0, %v3442
        %v3444 = vpop.f32.mrb[0].mxu0
        %v3445 = vadd.f32 0.0, %v3444
        %v3446 = vpop.f32.mrb[0].mxu0
        %v3447 = vadd.f32 0.0, %v3446
        %3448 = vmatprep.mubr.bf16.mxu0 0
        %3449 = vmatmul.mubr.bf16.gmra.mrb[0].mxu0 %v563
        %v3450 = vpop.f32.mrb[0].mxu0
        %v3451 = vadd.f32 0.0, %v3450
        %v3452 = vpop.f32.mrb[0].mxu0
        %v3453 = vadd.f32 0.0, %v3452
        %v3454 = vpop.f32.mrb[0].mxu0
        %v3455 = vadd.f32 0.0, %v3454
        %v3456 = vpop.f32.mrb[0].mxu0
        %v3457 = vadd.f32 0.0, %v3456
        %3458 = vmatprep.mubr.bf16.mxu0 0
        %3459 = vmatmul.mubr.bf16.gmra.mrb[0].mxu0 %v566
        %v3460 = vpop.f32.mrb[0].mxu0
        %v3461 = vadd.f32 0.0, %v3460
        %v3462 = vpop.f32.mrb[0].mxu0
        %v3463 = vadd.f32 0.0, %v3462
        %v3464 = vpop.f32.mrb[0].mxu0
        %v3465 = vadd.f32 0.0, %v3464
        %v3466 = vpop.f32.mrb[0].mxu0
        %v3467 = vadd.f32 0.0, %v3466
        %3468 = vmatprep.mubr.bf16.mxu0 0
        %3469 = vmatmul.mubr.bf16.gmra.mrb[0].mxu0 %v569
        %v3470 = vpop.f32.mrb[0].mxu0
        %v3471 = vadd.f32 0.0, %v3470
        %v3472 = vpop.f32.mrb[0].mxu0
        %v3473 = vadd.f32 0.0, %v3472
        %v3474 = vpop.f32.mrb[0].mxu0
        %v3475 = vadd.f32 0.0, %v3474
        %v3476 = vpop.f32.mrb[0].mxu0
        %v3477 = vadd.f32 0.0, %v3476
        %3478 = vmatprep.mubr.bf16.mxu0 0
        %3479 = vmatmul.mubr.bf16.gmra.mrb[0].mxu0 %v572
        %v3480 = vpop.f32.mrb[0].mxu0
        %v3481 = vadd.f32 0.0, %v3480
        %v3482 = vpop.f32.mrb[0].mxu0
        %v3483 = vadd.f32 0.0, %v3482
        %v3484 = vpop.f32.mrb[0].mxu0
        %v3485 = vadd.f32 0.0, %v3484
        %v3486 = vpop.f32.mrb[0].mxu0
        %v3487 = vadd.f32 0.0, %v3486
        %3488 = vmatprep.mubr.bf16.mxu0 0
        %3489 = vmatmul.mubr.bf16.gmra.mrb[0].mxu0 %v575
        %v3490 = vpop.f32.mrb[0].mxu0
        %v3491 = vadd.f32 0.0, %v3490
        %v3492 = vpop.f32.mrb[0].mxu0
        %v3493 = vadd.f32 0.0, %v3492
        %v3494 = vpop.f32.mrb[0].mxu0
        %v3495 = vadd.f32 0.0, %v3494
        %v3496 = vpop.f32.mrb[0].mxu0
        %v3497 = vadd.f32 0.0, %v3496
        %3498 = vmatprep.mubr.bf16.mxu0 0
        %3499 = vmatmul.mubr.bf16.gmra.mrb[0].mxu0 %v578
        %v3500 = vpop.f32.mrb[0].mxu0
        %v3501 = vadd.f32 0.0, %v3500
        %v3502 = vpop.f32.mrb[0].mxu0
        %v3503 = vadd.f32 0.0, %v3502
        %v3504 = vpop.f32.mrb[0].mxu0
        %v3505 = vadd.f32 0.0, %v3504
        %v3506 = vpop.f32.mrb[0].mxu0
        %v3507 = vadd.f32 0.0, %v3506
        %3508 = vmatprep.mubr.bf16.mxu0 0
        %3509 = vmatmul.mubr.bf16.gmra.mrb[0].mxu0 %v581
        %v3510 = vpop.f32.mrb[0].mxu0
        %v3511 = vadd.f32 0.0, %v3510
        %v3512 = vpop.f32.mrb[0].mxu0
        %v3513 = vadd.f32 0.0, %v3512
        %v3514 = vpop.f32.mrb[0].mxu0
        %v3515 = vadd.f32 0.0, %v3514
        %v3516 = vpop.f32.mrb[0].mxu0
        %v3517 = vadd.f32 0.0, %v3516
        %3518 = vmatprep.mubr.bf16.mxu0 0
        %3519 = vmatmul.mubr.bf16.gmra.mrb[0].mxu0 %v584
        %v3520 = vpop.f32.mrb[0].mxu0
        %v3521 = vadd.f32 0.0, %v3520
        %v3522 = vpop.f32.mrb[0].mxu0
        %v3523 = vadd.f32 0.0, %v3522
        %v3524 = vpop.f32.mrb[0].mxu0
        %v3525 = vadd.f32 0.0, %v3524
        %v3526 = vpop.f32.mrb[0].mxu0
        %v3527 = vadd.f32 0.0, %v3526
        %3528 = vmatprep.mubr.bf16.mxu0 0
        %3529 = vmatmul.mubr.bf16.gmra.mrb[0].mxu0 %v587
        %v3530 = vpop.f32.mrb[0].mxu0
        %v3531 = vadd.f32 0.0, %v3530
        %v3532 = vpop.f32.mrb[0].mxu0
        %v3533 = vadd.f32 0.0, %v3532
        %v3534 = vpop.f32.mrb[0].mxu0
        %v3535 = vadd.f32 0.0, %v3534
        %v3536 = vpop.f32.mrb[0].mxu0
        %v3537 = vadd.f32 0.0, %v3536
        %3538 = vmatprep.mubr.bf16.mxu0 0
        %3539 = vmatmul.mubr.bf16.gmra.mrb[0].mxu0 %v590
        %v3540 = vpop.f32.mrb[0].mxu0
        %v3541 = vadd.f32 0.0, %v3540
        %v3542 = vpop.f32.mrb[0].mxu0
        %v3543 = vadd.f32 0.0, %v3542
        %v3544 = vpop.f32.mrb[0].mxu0
        %v3545 = vadd.f32 0.0, %v3544
        %v3546 = vpop.f32.mrb[0].mxu0
        %v3547 = vadd.f32 0.0, %v3546
        %3548 = vdwg.mxu0
        %v3553 = vcombine.low %v3350, %v3351
        %v3554 = vcombine.high %v3350, %v3351
        %v3556 = vunpack.c.l.s4 1966171168
        %v3557 = vunpack.c.0.s8 %v3556
        %v3558 = vlaneseq
        %v3559 = vshrl.u32 %v3558, 7
        %v3560 = vsub.s32 %v3557, %v3559
        %v3561 = vrot.slane %v3553, %v3560
        %v3563 = vunpack.c.l.s4 1966171168
        %v3564 = vunpack.c.0.s8 %v3563
        %v3565 = vlaneseq
        %v3566 = vshrl.u32 %v3565, 7
        %v3567 = vsub.s32 %v3564, %v3566
        %v3568 = vrot.slane %v3554, %v3567
        %v3569 = vcombine.high %v3561, %v3561
        %v3570 = vcombine.high %v3568, %v3568
        %v3572 = vunpack.c.l.s4 1966171168
        %v3573 = vunpack.c.0.s8 %v3572
        %v3574 = vlaneseq
        %v3575 = vshrl.u32 %v3574, 7
        %v3576 = vsub.s32 %v3573, %v3575
        %v3577 = vrot.slane %v3561, %v3576
        %v3579 = vunpack.c.l.s4 1966171168
        %v3580 = vunpack.c.0.s8 %v3579
        %v3581 = vlaneseq
        %v3582 = vshrl.u32 %v3581, 7
        %v3583 = vsub.s32 %v3580, %v3582
        %v3584 = vrot.slane %v3568, %v3583
        %v3586 = vunpack.c.l.s4 1966171168
        %v3587 = vunpack.c.0.s8 %v3586
        %v3588 = vlaneseq
        %v3589 = vshrl.u32 %v3588, 7
        %v3590 = vsub.s32 %v3587, %v3589
        %v3591 = vrot.slane %v3569, %v3590
        %v3593 = vunpack.c.l.s4 1966171168
        %v3594 = vunpack.c.0.s8 %v3593
        %v3595 = vlaneseq
        %v3596 = vshrl.u32 %v3595, 7
        %v3597 = vsub.s32 %v3594, %v3596
        %v3598 = vrot.slane %v3570, %v3597
        %v3599 = vcombine.high %v3577, %v3577
        %v3600 = vcombine.high %v3584, %v3584
        %v3601 = vcombine.high %v3591, %v3591
        %v3602 = vcombine.high %v3598, %v3598
        %v3603 = vcombine.low %v3352, %v3353
        %v3604 = vcombine.high %v3352, %v3353
        %v3606 = vunpack.c.l.s4 1966171168
        %v3607 = vunpack.c.0.s8 %v3606
        %v3608 = vlaneseq
        %v3609 = vshrl.u32 %v3608, 7
        %v3610 = vsub.s32 %v3607, %v3609
        %v3611 = vrot.slane %v3603, %v3610
        %v3613 = vunpack.c.l.s4 1966171168
        %v3614 = vunpack.c.0.s8 %v3613
        %v3615 = vlaneseq
        %v3616 = vshrl.u32 %v3615, 7
        %v3617 = vsub.s32 %v3614, %v3616
        %v3618 = vrot.slane %v3604, %v3617
        %v3619 = vcombine.high %v3611, %v3611
        %v3620 = vcombine.high %v3618, %v3618
        %v3622 = vunpack.c.l.s4 1966171168
        %v3623 = vunpack.c.0.s8 %v3622
        %v3624 = vlaneseq
        %v3625 = vshrl.u32 %v3624, 7
        %v3626 = vsub.s32 %v3623, %v3625
        %v3627 = vrot.slane %v3611, %v3626
        %v3629 = vunpack.c.l.s4 1966171168
        %v3630 = vunpack.c.0.s8 %v3629
        %v3631 = vlaneseq
        %v3632 = vshrl.u32 %v3631, 7
        %v3633 = vsub.s32 %v3630, %v3632
        %v3634 = vrot.slane %v3618, %v3633
        %v3636 = vunpack.c.l.s4 1966171168
        %v3637 = vunpack.c.0.s8 %v3636
        %v3638 = vlaneseq
        %v3639 = vshrl.u32 %v3638, 7
        %v3640 = vsub.s32 %v3637, %v3639
        %v3641 = vrot.slane %v3619, %v3640
        %v3643 = vunpack.c.l.s4 1966171168
        %v3644 = vunpack.c.0.s8 %v3643
        %v3645 = vlaneseq
        %v3646 = vshrl.u32 %v3645, 7
        %v3647 = vsub.s32 %v3644, %v3646
        %v3648 = vrot.slane %v3620, %v3647
        %v3649 = vcombine.high %v3627, %v3627
        %v3650 = vcombine.high %v3634, %v3634
        %v3651 = vcombine.high %v3641, %v3641
        %v3652 = vcombine.high %v3648, %v3648
        %v3653 = vlaneseq
        %v3654 = vshrl.u32 %v3653, 7
        %v3655 = vsub.s32 0, %v3654
        %v3656 = vrot.slane %v3577, %v3655
        %v3657 = vlaneseq
        %v3658 = vshrl.u32 %v3657, 7
        %v3659 = vsub.s32 1, %v3658
        %v3660 = vrot.slane %v3577, %v3659
        %v3661 = vlaneseq
        %v3662 = vshrl.u32 %v3661, 7
        %v3663 = vsub.s32 0, %v3662
        %v3664 = vrot.slane %v3591, %v3663
        %v3665 = vlaneseq
        %v3666 = vshrl.u32 %v3665, 7
        %v3667 = vsub.s32 1, %v3666
        %v3668 = vrot.slane %v3591, %v3667
        %v3669 = vlaneseq
        %v3670 = vshrl.u32 %v3669, 7
        %v3671 = vsub.s32 0, %v3670
        %v3672 = vrot.slane %v3599, %v3671
        %v3673 = vlaneseq
        %v3674 = vshrl.u32 %v3673, 7
        %v3675 = vsub.s32 1, %v3674
        %v3676 = vrot.slane %v3599, %v3675
        %v3677 = vlaneseq
        %v3678 = vshrl.u32 %v3677, 7
        %v3679 = vsub.s32 0, %v3678
        %v3680 = vrot.slane %v3601, %v3679
        %v3681 = vlaneseq
        %v3682 = vshrl.u32 %v3681, 7
        %v3683 = vsub.s32 1, %v3682
        %v3684 = vrot.slane %v3601, %v3683
        %v3685 = vlaneseq
        %v3686 = vshrl.u32 %v3685, 7
        %v3687 = vsub.s32 0, %v3686
        %v3688 = vrot.slane %v3584, %v3687
        %v3689 = vlaneseq
        %v3690 = vshrl.u32 %v3689, 7
        %v3691 = vsub.s32 1, %v3690
        %v3692 = vrot.slane %v3584, %v3691
        %v3693 = vlaneseq
        %v3694 = vshrl.u32 %v3693, 7
        %v3695 = vsub.s32 0, %v3694
        %v3696 = vrot.slane %v3598, %v3695
        %v3697 = vlaneseq
        %v3698 = vshrl.u32 %v3697, 7
        %v3699 = vsub.s32 1, %v3698
        %v3700 = vrot.slane %v3598, %v3699
        %v3701 = vlaneseq
        %v3702 = vshrl.u32 %v3701, 7
        %v3703 = vsub.s32 0, %v3702
        %v3704 = vrot.slane %v3600, %v3703
        %v3705 = vlaneseq
        %v3706 = vshrl.u32 %v3705, 7
        %v3707 = vsub.s32 1, %v3706
        %v3708 = vrot.slane %v3600, %v3707
        %v3709 = vlaneseq
        %v3710 = vshrl.u32 %v3709, 7
        %v3711 = vsub.s32 0, %v3710
        %v3712 = vrot.slane %v3602, %v3711
        %v3713 = vlaneseq
        %v3714 = vshrl.u32 %v3713, 7
        %v3715 = vsub.s32 1, %v3714
        %v3716 = vrot.slane %v3602, %v3715
        %v3717 = vlaneseq
        %v3718 = vshrl.u32 %v3717, 7
        %v3719 = vsub.s32 0, %v3718
        %v3720 = vrot.slane %v3627, %v3719
        %v3721 = vlaneseq
        %v3722 = vshrl.u32 %v3721, 7
        %v3723 = vsub.s32 1, %v3722
        %v3724 = vrot.slane %v3627, %v3723
        %v3725 = vlaneseq
        %v3726 = vshrl.u32 %v3725, 7
        %v3727 = vsub.s32 0, %v3726
        %v3728 = vrot.slane %v3641, %v3727
        %v3729 = vlaneseq
        %v3730 = vshrl.u32 %v3729, 7
        %v3731 = vsub.s32 1, %v3730
        %v3732 = vrot.slane %v3641, %v3731
        %v3733 = vlaneseq
        %v3734 = vshrl.u32 %v3733, 7
        %v3735 = vsub.s32 0, %v3734
        %v3736 = vrot.slane %v3649, %v3735
        %v3737 = vlaneseq
        %v3738 = vshrl.u32 %v3737, 7
        %v3739 = vsub.s32 1, %v3738
        %v3740 = vrot.slane %v3649, %v3739
        %v3741 = vlaneseq
        %v3742 = vshrl.u32 %v3741, 7
        %v3743 = vsub.s32 0, %v3742
        %v3744 = vrot.slane %v3651, %v3743
        %v3745 = vlaneseq
        %v3746 = vshrl.u32 %v3745, 7
        %v3747 = vsub.s32 1, %v3746
        %v3748 = vrot.slane %v3651, %v3747
        %v3749 = vlaneseq
        %v3750 = vshrl.u32 %v3749, 7
        %v3751 = vsub.s32 0, %v3750
        %v3752 = vrot.slane %v3634, %v3751
        %v3753 = vlaneseq
        %v3754 = vshrl.u32 %v3753, 7
        %v3755 = vsub.s32 1, %v3754
        %v3756 = vrot.slane %v3634, %v3755
        %v3757 = vlaneseq
        %v3758 = vshrl.u32 %v3757, 7
        %v3759 = vsub.s32 0, %v3758
        %v3760 = vrot.slane %v3648, %v3759
        %v3761 = vlaneseq
        %v3762 = vshrl.u32 %v3761, 7
        %v3763 = vsub.s32 1, %v3762
        %v3764 = vrot.slane %v3648, %v3763
        %v3765 = vlaneseq
        %v3766 = vshrl.u32 %v3765, 7
        %v3767 = vsub.s32 0, %v3766
        %v3768 = vrot.slane %v3650, %v3767
        %v3769 = vlaneseq
        %v3770 = vshrl.u32 %v3769, 7
        %v3771 = vsub.s32 1, %v3770
        %v3772 = vrot.slane %v3650, %v3771
        %v3773 = vlaneseq
        %v3774 = vshrl.u32 %v3773, 7
        %v3775 = vsub.s32 0, %v3774
        %v3776 = vrot.slane %v3652, %v3775
        %v3777 = vlaneseq
        %v3778 = vshrl.u32 %v3777, 7
        %v3779 = vsub.s32 1, %v3778
        %v3780 = vrot.slane %v3652, %v3779
        %v3813 = vmul.f32 %v3391, %v3656
        %v3814 = vmul.f32 %v3393, %v3660
        %v3815 = vmul.f32 %v3395, %v3656
        %v3816 = vmul.f32 %v3397, %v3660
        %v3817 = vmul.f32 %v3401, %v3664
        %v3818 = vmul.f32 %v3403, %v3668
        %v3819 = vmul.f32 %v3405, %v3664
        %v3820 = vmul.f32 %v3407, %v3668
        %v3821 = vmul.f32 %v3411, %v3672
        %v3822 = vmul.f32 %v3413, %v3676
        %v3823 = vmul.f32 %v3415, %v3672
        %v3824 = vmul.f32 %v3417, %v3676
        %v3825 = vmul.f32 %v3421, %v3680
        %v3826 = vmul.f32 %v3423, %v3684
        %v3827 = vmul.f32 %v3425, %v3680
        %v3828 = vmul.f32 %v3427, %v3684
        %v3829 = vmul.f32 %v3431, %v3688
        %v3830 = vmul.f32 %v3433, %v3692
        %v3831 = vmul.f32 %v3435, %v3688
        %v3832 = vmul.f32 %v3437, %v3692
        %v3833 = vmul.f32 %v3441, %v3696
        %v3834 = vmul.f32 %v3443, %v3700
        %v3835 = vmul.f32 %v3445, %v3696
        %v3836 = vmul.f32 %v3447, %v3700
        %v3837 = vmul.f32 %v3451, %v3704
        %v3838 = vmul.f32 %v3453, %v3708
        %v3839 = vmul.f32 %v3455, %v3704
        %v3840 = vmul.f32 %v3457, %v3708
        %v3841 = vmul.f32 %v3461, %v3712
        %v3842 = vmul.f32 %v3463, %v3716
        %v3843 = vmul.f32 %v3465, %v3712
        %v3844 = vmul.f32 %v3467, %v3716
        %v3845 = vmul.f32 %v3471, %v3720
        %v3846 = vmul.f32 %v3473, %v3724
        %v3847 = vmul.f32 %v3475, %v3720
        %v3848 = vmul.f32 %v3477, %v3724
        %v3849 = vmul.f32 %v3481, %v3728
        %v3850 = vmul.f32 %v3483, %v3732
        %v3851 = vmul.f32 %v3485, %v3728
        %v3852 = vmul.f32 %v3487, %v3732
        %v3853 = vmul.f32 %v3491, %v3736
        %v3854 = vmul.f32 %v3493, %v3740
        %v3855 = vmul.f32 %v3495, %v3736
        %v3856 = vmul.f32 %v3497, %v3740
        %v3857 = vmul.f32 %v3501, %v3744
        %v3858 = vmul.f32 %v3503, %v3748
        %v3859 = vmul.f32 %v3505, %v3744
        %v3860 = vmul.f32 %v3507, %v3748
        %v3861 = vmul.f32 %v3511, %v3752
        %v3862 = vmul.f32 %v3513, %v3756
        %v3863 = vmul.f32 %v3515, %v3752
        %v3864 = vmul.f32 %v3517, %v3756
        %v3865 = vmul.f32 %v3521, %v3760
        %v3866 = vmul.f32 %v3523, %v3764
        %v3867 = vmul.f32 %v3525, %v3760
        %v3868 = vmul.f32 %v3527, %v3764
        %v3869 = vmul.f32 %v3531, %v3768
        %v3870 = vmul.f32 %v3533, %v3772
        %v3871 = vmul.f32 %v3535, %v3768
        %v3872 = vmul.f32 %v3537, %v3772
        %v3873 = vmul.f32 %v3541, %v3776
        %v3874 = vmul.f32 %v3543, %v3780
        %v3875 = vmul.f32 %v3545, %v3776
        %v3876 = vmul.f32 %v3547, %v3780
        %v3877 = vadd.f32 %v3813, %v3817
        %v3878 = vadd.f32 %v3877, %v3821
        %v3879 = vadd.f32 %v3878, %v3825
        %v3880 = vadd.f32 %v3879, %v3829
        %v3881 = vadd.f32 %v3880, %v3833
        %v3882 = vadd.f32 %v3881, %v3837
        %v3883 = vadd.f32 %v3882, %v3841
        %v3884 = vadd.f32 %v3883, %v3845
        %v3885 = vadd.f32 %v3884, %v3849
        %v3886 = vadd.f32 %v3885, %v3853
        %v3887 = vadd.f32 %v3886, %v3857
        %v3888 = vadd.f32 %v3887, %v3861
        %v3889 = vadd.f32 %v3888, %v3865
        %v3890 = vadd.f32 %v3889, %v3869
        %v3891 = vadd.f32 %v3890, %v3873
        %v3892 = vadd.f32 %v3814, %v3818
        %v3893 = vadd.f32 %v3892, %v3822
        %v3894 = vadd.f32 %v3893, %v3826
        %v3895 = vadd.f32 %v3894, %v3830
        %v3896 = vadd.f32 %v3895, %v3834
        %v3897 = vadd.f32 %v3896, %v3838
        %v3898 = vadd.f32 %v3897, %v3842
        %v3899 = vadd.f32 %v3898, %v3846
        %v3900 = vadd.f32 %v3899, %v3850
        %v3901 = vadd.f32 %v3900, %v3854
        %v3902 = vadd.f32 %v3901, %v3858
        %v3903 = vadd.f32 %v3902, %v3862
        %v3904 = vadd.f32 %v3903, %v3866
        %v3905 = vadd.f32 %v3904, %v3870
        %v3906 = vadd.f32 %v3905, %v3874
        %v3907 = vadd.f32 %v3815, %v3819
        %v3908 = vadd.f32 %v3907, %v3823
        %v3909 = vadd.f32 %v3908, %v3827
        %v3910 = vadd.f32 %v3909, %v3831
        %v3911 = vadd.f32 %v3910, %v3835
        %v3912 = vadd.f32 %v3911, %v3839
        %v3913 = vadd.f32 %v3912, %v3843
        %v3914 = vadd.f32 %v3913, %v3847
        %v3915 = vadd.f32 %v3914, %v3851
        %v3916 = vadd.f32 %v3915, %v3855
        %v3917 = vadd.f32 %v3916, %v3859
        %v3918 = vadd.f32 %v3917, %v3863
        %v3919 = vadd.f32 %v3918, %v3867
        %v3920 = vadd.f32 %v3919, %v3871
        %v3921 = vadd.f32 %v3920, %v3875
        %v3922 = vadd.f32 %v3816, %v3820
        %v3923 = vadd.f32 %v3922, %v3824
        %v3924 = vadd.f32 %v3923, %v3828
        %v3925 = vadd.f32 %v3924, %v3832
        %v3926 = vadd.f32 %v3925, %v3836
        %v3927 = vadd.f32 %v3926, %v3840
        %v3928 = vadd.f32 %v3927, %v3844
        %v3929 = vadd.f32 %v3928, %v3848
        %v3930 = vadd.f32 %v3929, %v3852
        %v3931 = vadd.f32 %v3930, %v3856
        %v3932 = vadd.f32 %v3931, %v3860
        %v3933 = vadd.f32 %v3932, %v3864
        %v3934 = vadd.f32 %v3933, %v3868
        %v3935 = vadd.f32 %v3934, %v3872
        %v3936 = vadd.f32 %v3935, %v3876
        %v3937 = vpack.c.bf16 %v3921, %v3891
        %v3938 = vpack.c.bf16 %v3936, %v3906
        %3939 = vst [vmem:[#allocation2 + $0x40] sm:$0xff] %v3937
        %3940 = vst [vmem:[#allocation2 + $0x48] sm:$0xff] %v3938
        %v3941 = vlaneseq
        %v3942 = vshrl.u32 %v3941, 7
        %v3943 = vsub.s32 5, %v3942
        %v3944 = vrot.slane %v326, %v3943
        %v3945 = vlaneseq
        %v3946 = vshrl.u32 %v3945, 7
        %v3947 = vsub.s32 5, %v3946
        %v3948 = vrot.slane %v327, %v3947
        %vm3949 = vcmp.eq.s32.totalorder %v351, %v3944
        %vm3950 = vcmp.eq.s32.totalorder %v351, %v3948
        %vm3951 = vcmp.eq.s32.totalorder %v352, %v3944
        %vm3952 = vcmp.eq.s32.totalorder %v352, %v3948
        %v3953 = vlaneseq
        %v3954 = vshrl.u32 %v3953, 7
        %v3955 = vsub.s32 5, %v3954
        %v3956 = vrot.slane %v334, %v3955
        %v3957 = vlaneseq
        %v3958 = vshrl.u32 %v3957, 7
        %v3959 = vsub.s32 5, %v3958
        %v3960 = vrot.slane %v335, %v3959
        %v3961 = vsel %vm3949, %v3956, 0.0
        %v3962 = vsel %vm3950, %v3960, 0.0
        %v3963 = vsel %vm3951, %v3956, 0.0
        %v3964 = vsel %vm3952, %v3960, 0.0
        %v3965 = vlaneseq
        %v3966 = vshrl.u32 %v3965, 7
        %v3967 = vsub.s32 5, %v3966
        %v3968 = vrot.slane %v377, %v3967
        %v3969 = vlaneseq
        %v3970 = vshrl.u32 %v3969, 7
        %v3971 = vsub.s32 5, %v3970
        %v3972 = vrot.slane %v378, %v3971
        %vm3973 = vcmp.eq.s32.totalorder %v351, %v3968
        %vm3974 = vcmp.eq.s32.totalorder %v351, %v3972
        %vm3975 = vcmp.eq.s32.totalorder %v352, %v3968
        %vm3976 = vcmp.eq.s32.totalorder %v352, %v3972
        %v3977 = vlaneseq
        %v3978 = vshrl.u32 %v3977, 7
        %v3979 = vsub.s32 5, %v3978
        %v3980 = vrot.slane %v318, %v3979
        %v3981 = vlaneseq
        %v3982 = vshrl.u32 %v3981, 7
        %v3983 = vsub.s32 5, %v3982
        %v3984 = vrot.slane %v319, %v3983
        %v3985 = vsel %vm3973, %v3980, 0.0
        %v3986 = vsel %vm3974, %v3984, 0.0
        %v3987 = vsel %vm3975, %v3980, 0.0
        %v3988 = vsel %vm3976, %v3984, 0.0
        %v3989 = vadd.f32 %v3961, %v3985
        %v3990 = vadd.f32 %v3962, %v3986
        %v3991 = vadd.f32 %v3963, %v3987
        %v3992 = vadd.f32 %v3964, %v3988
        %v3993 = vlaneseq
        %v3994 = vshrl.u32 %v3993, 7
        %v3995 = vsub.s32 5, %v3994
        %v3996 = vrot.slane %v330, %v3995
        %v3997 = vlaneseq
        %v3998 = vshrl.u32 %v3997, 7
        %v3999 = vsub.s32 5, %v3998
        %v4000 = vrot.slane %v331, %v3999
        %vm4001 = vcmp.eq.s32.totalorder %v351, %v3996
        %vm4002 = vcmp.eq.s32.totalorder %v351, %v4000
        %vm4003 = vcmp.eq.s32.totalorder %v352, %v3996
        %vm4004 = vcmp.eq.s32.totalorder %v352, %v4000
        %v4005 = vlaneseq
        %v4006 = vshrl.u32 %v4005, 7
        %v4007 = vsub.s32 5, %v4006
        %v4008 = vrot.slane %v342, %v4007
        %v4009 = vlaneseq
        %v4010 = vshrl.u32 %v4009, 7
        %v4011 = vsub.s32 5, %v4010
        %v4012 = vrot.slane %v343, %v4011
        %v4013 = vsel %vm4001, %v4008, 0.0
        %v4014 = vsel %vm4002, %v4012, 0.0
        %v4015 = vsel %vm4003, %v4008, 0.0
        %v4016 = vsel %vm4004, %v4012, 0.0
        %v4017 = vlaneseq
        %v4018 = vshrl.u32 %v4017, 7
        %v4019 = vsub.s32 5, %v4018
        %v4020 = vrot.slane %v431, %v4019
        %v4021 = vlaneseq
        %v4022 = vshrl.u32 %v4021, 7
        %v4023 = vsub.s32 5, %v4022
        %v4024 = vrot.slane %v432, %v4023
        %vm4025 = vcmp.eq.s32.totalorder %v351, %v4020
        %vm4026 = vcmp.eq.s32.totalorder %v351, %v4024
        %vm4027 = vcmp.eq.s32.totalorder %v352, %v4020
        %vm4028 = vcmp.eq.s32.totalorder %v352, %v4024
        %v4029 = vlaneseq
        %v4030 = vshrl.u32 %v4029, 7
        %v4031 = vsub.s32 5, %v4030
        %v4032 = vrot.slane %v346, %v4031
        %v4033 = vlaneseq
        %v4034 = vshrl.u32 %v4033, 7
        %v4035 = vsub.s32 5, %v4034
        %v4036 = vrot.slane %v347, %v4035
        %v4037 = vsel %vm4025, %v4032, 0.0
        %v4038 = vsel %vm4026, %v4036, 0.0
        %v4039 = vsel %vm4027, %v4032, 0.0
        %v4040 = vsel %vm4028, %v4036, 0.0
        %v4041 = vadd.f32 %v4013, %v4037
        %v4042 = vadd.f32 %v4014, %v4038
        %v4043 = vadd.f32 %v4015, %v4039
        %v4044 = vadd.f32 %v4016, %v4040
        %v4045 = vpack.c.bf16 %v3991, %v3989
        %v4046 = vpack.c.bf16 %v3992, %v3990
        %4047 = vmatprep.subr.bf16.mxu0 %v4046
        %4048 = vmatpush1.bf16.msra.mxu0 %v4045
        %4049 = vmatprep.subr.bf16.mxu0 0
        %4050 = vmatpush1.bf16.msra.mxu0 0
        %4051 = vmatprep.subr.bf16.mxu0 0
        %4052 = vmatpush1.bf16.msra.mxu0 0
        %4053 = vmatprep.subr.bf16.mxu0 0
        %4054 = vmatpush1.bf16.msra.mxu0 0
        %4055 = vmatprep.subr.bf16.mxu0 0
        %4056 = vmatpush1.bf16.msra.mxu0 0
        %4057 = vmatprep.subr.bf16.mxu0 0
        %4058 = vmatpush1.bf16.msra.mxu0 0
        %4059 = vmatprep.subr.bf16.mxu0 0
        %4060 = vmatpush1.bf16.msra.mxu0 0
        %4061 = vmatprep.subr.bf16.mxu0 0
        %4062 = vmatpush1.bf16.msra.mxu0 0
        %4063 = vmatprep.subr.bf16.mxu0 0
        %4064 = vmatpush1.bf16.msra.mxu0 0
        %4065 = vmatprep.subr.bf16.mxu0 0
        %4066 = vmatpush1.bf16.msra.mxu0 0
        %4067 = vmatprep.subr.bf16.mxu0 0
        %4068 = vmatpush1.bf16.msra.mxu0 0
        %4069 = vmatprep.subr.bf16.mxu0 0
        %4070 = vmatpush1.bf16.msra.mxu0 0
        %4071 = vmatprep.subr.bf16.mxu0 0
        %4072 = vmatpush1.bf16.msra.mxu0 0
        %4073 = vmatprep.subr.bf16.mxu0 0
        %4074 = vmatpush1.bf16.msra.mxu0 0
        %4075 = vmatprep.subr.bf16.mxu0 0
        %4076 = vmatpush1.bf16.msra.mxu0 0
        %4077 = vmatprep.subr.bf16.mxu0 0
        %4078 = vmatpush1.bf16.msra.mxu0 0
        %4079 = vmatprep.mubr.bf16.mxu0 0
        %4080 = vmatmul.mubr.bf16.gmra.mrb[0].mxu0 %v545
        %v4081 = vpop.f32.mrb[0].mxu0
        %v4082 = vadd.f32 0.0, %v4081
        %v4083 = vpop.f32.mrb[0].mxu0
        %v4084 = vadd.f32 0.0, %v4083
        %v4085 = vpop.f32.mrb[0].mxu0
        %v4086 = vadd.f32 0.0, %v4085
        %v4087 = vpop.f32.mrb[0].mxu0
        %v4088 = vadd.f32 0.0, %v4087
        %4089 = vmatprep.mubr.bf16.mxu0 0
        %4090 = vmatmul.mubr.bf16.gmra.mrb[0].mxu0 %v548
        %v4091 = vpop.f32.mrb[0].mxu0
        %v4092 = vadd.f32 0.0, %v4091
        %v4093 = vpop.f32.mrb[0].mxu0
        %v4094 = vadd.f32 0.0, %v4093
        %v4095 = vpop.f32.mrb[0].mxu0
        %v4096 = vadd.f32 0.0, %v4095
        %v4097 = vpop.f32.mrb[0].mxu0
        %v4098 = vadd.f32 0.0, %v4097
        %4099 = vmatprep.mubr.bf16.mxu0 0
        %4100 = vmatmul.mubr.bf16.gmra.mrb[0].mxu0 %v551
        %v4101 = vpop.f32.mrb[0].mxu0
        %v4102 = vadd.f32 0.0, %v4101
        %v4103 = vpop.f32.mrb[0].mxu0
        %v4104 = vadd.f32 0.0, %v4103
        %v4105 = vpop.f32.mrb[0].mxu0
        %v4106 = vadd.f32 0.0, %v4105
        %v4107 = vpop.f32.mrb[0].mxu0
        %v4108 = vadd.f32 0.0, %v4107
        %4109 = vmatprep.mubr.bf16.mxu0 0
        %4110 = vmatmul.mubr.bf16.gmra.mrb[0].mxu0 %v554
        %v4111 = vpop.f32.mrb[0].mxu0
        %v4112 = vadd.f32 0.0, %v4111
        %v4113 = vpop.f32.mrb[0].mxu0
        %v4114 = vadd.f32 0.0, %v4113
        %v4115 = vpop.f32.mrb[0].mxu0
        %v4116 = vadd.f32 0.0, %v4115
        %v4117 = vpop.f32.mrb[0].mxu0
        %v4118 = vadd.f32 0.0, %v4117
        %4119 = vmatprep.mubr.bf16.mxu0 0
        %4120 = vmatmul.mubr.bf16.gmra.mrb[0].mxu0 %v557
        %v4121 = vpop.f32.mrb[0].mxu0
        %v4122 = vadd.f32 0.0, %v4121
        %v4123 = vpop.f32.mrb[0].mxu0
        %v4124 = vadd.f32 0.0, %v4123
        %v4125 = vpop.f32.mrb[0].mxu0
        %v4126 = vadd.f32 0.0, %v4125
        %v4127 = vpop.f32.mrb[0].mxu0
        %v4128 = vadd.f32 0.0, %v4127
        %4129 = vmatprep.mubr.bf16.mxu0 0
        %4130 = vmatmul.mubr.bf16.gmra.mrb[0].mxu0 %v560
        %v4131 = vpop.f32.mrb[0].mxu0
        %v4132 = vadd.f32 0.0, %v4131
        %v4133 = vpop.f32.mrb[0].mxu0
        %v4134 = vadd.f32 0.0, %v4133
        %v4135 = vpop.f32.mrb[0].mxu0
        %v4136 = vadd.f32 0.0, %v4135
        %v4137 = vpop.f32.mrb[0].mxu0
        %v4138 = vadd.f32 0.0, %v4137
        %4139 = vmatprep.mubr.bf16.mxu0 0
        %4140 = vmatmul.mubr.bf16.gmra.mrb[0].mxu0 %v563
        %v4141 = vpop.f32.mrb[0].mxu0
        %v4142 = vadd.f32 0.0, %v4141
        %v4143 = vpop.f32.mrb[0].mxu0
        %v4144 = vadd.f32 0.0, %v4143
        %v4145 = vpop.f32.mrb[0].mxu0
        %v4146 = vadd.f32 0.0, %v4145
        %v4147 = vpop.f32.mrb[0].mxu0
        %v4148 = vadd.f32 0.0, %v4147
        %4149 = vmatprep.mubr.bf16.mxu0 0
        %4150 = vmatmul.mubr.bf16.gmra.mrb[0].mxu0 %v566
        %v4151 = vpop.f32.mrb[0].mxu0
        %v4152 = vadd.f32 0.0, %v4151
        %v4153 = vpop.f32.mrb[0].mxu0
        %v4154 = vadd.f32 0.0, %v4153
        %v4155 = vpop.f32.mrb[0].mxu0
        %v4156 = vadd.f32 0.0, %v4155
        %v4157 = vpop.f32.mrb[0].mxu0
        %v4158 = vadd.f32 0.0, %v4157
        %4159 = vmatprep.mubr.bf16.mxu0 0
        %4160 = vmatmul.mubr.bf16.gmra.mrb[0].mxu0 %v569
        %v4161 = vpop.f32.mrb[0].mxu0
        %v4162 = vadd.f32 0.0, %v4161
        %v4163 = vpop.f32.mrb[0].mxu0
        %v4164 = vadd.f32 0.0, %v4163
        %v4165 = vpop.f32.mrb[0].mxu0
        %v4166 = vadd.f32 0.0, %v4165
        %v4167 = vpop.f32.mrb[0].mxu0
        %v4168 = vadd.f32 0.0, %v4167
        %4169 = vmatprep.mubr.bf16.mxu0 0
        %4170 = vmatmul.mubr.bf16.gmra.mrb[0].mxu0 %v572
        %v4171 = vpop.f32.mrb[0].mxu0
        %v4172 = vadd.f32 0.0, %v4171
        %v4173 = vpop.f32.mrb[0].mxu0
        %v4174 = vadd.f32 0.0, %v4173
        %v4175 = vpop.f32.mrb[0].mxu0
        %v4176 = vadd.f32 0.0, %v4175
        %v4177 = vpop.f32.mrb[0].mxu0
        %v4178 = vadd.f32 0.0, %v4177
        %4179 = vmatprep.mubr.bf16.mxu0 0
        %4180 = vmatmul.mubr.bf16.gmra.mrb[0].mxu0 %v575
        %v4181 = vpop.f32.mrb[0].mxu0
        %v4182 = vadd.f32 0.0, %v4181
        %v4183 = vpop.f32.mrb[0].mxu0
        %v4184 = vadd.f32 0.0, %v4183
        %v4185 = vpop.f32.mrb[0].mxu0
        %v4186 = vadd.f32 0.0, %v4185
        %v4187 = vpop.f32.mrb[0].mxu0
        %v4188 = vadd.f32 0.0, %v4187
        %4189 = vmatprep.mubr.bf16.mxu0 0
        %4190 = vmatmul.mubr.bf16.gmra.mrb[0].mxu0 %v578
        %v4191 = vpop.f32.mrb[0].mxu0
        %v4192 = vadd.f32 0.0, %v4191
        %v4193 = vpop.f32.mrb[0].mxu0
        %v4194 = vadd.f32 0.0, %v4193
        %v4195 = vpop.f32.mrb[0].mxu0
        %v4196 = vadd.f32 0.0, %v4195
        %v4197 = vpop.f32.mrb[0].mxu0
        %v4198 = vadd.f32 0.0, %v4197
        %4199 = vmatprep.mubr.bf16.mxu0 0
        %4200 = vmatmul.mubr.bf16.gmra.mrb[0].mxu0 %v581
        %v4201 = vpop.f32.mrb[0].mxu0
        %v4202 = vadd.f32 0.0, %v4201
        %v4203 = vpop.f32.mrb[0].mxu0
        %v4204 = vadd.f32 0.0, %v4203
        %v4205 = vpop.f32.mrb[0].mxu0
        %v4206 = vadd.f32 0.0, %v4205
        %v4207 = vpop.f32.mrb[0].mxu0
        %v4208 = vadd.f32 0.0, %v4207
        %4209 = vmatprep.mubr.bf16.mxu0 0
        %4210 = vmatmul.mubr.bf16.gmra.mrb[0].mxu0 %v584
        %v4211 = vpop.f32.mrb[0].mxu0
        %v4212 = vadd.f32 0.0, %v4211
        %v4213 = vpop.f32.mrb[0].mxu0
        %v4214 = vadd.f32 0.0, %v4213
        %v4215 = vpop.f32.mrb[0].mxu0
        %v4216 = vadd.f32 0.0, %v4215
        %v4217 = vpop.f32.mrb[0].mxu0
        %v4218 = vadd.f32 0.0, %v4217
        %4219 = vmatprep.mubr.bf16.mxu0 0
        %4220 = vmatmul.mubr.bf16.gmra.mrb[0].mxu0 %v587
        %v4221 = vpop.f32.mrb[0].mxu0
        %v4222 = vadd.f32 0.0, %v4221
        %v4223 = vpop.f32.mrb[0].mxu0
        %v4224 = vadd.f32 0.0, %v4223
        %v4225 = vpop.f32.mrb[0].mxu0
        %v4226 = vadd.f32 0.0, %v4225
        %v4227 = vpop.f32.mrb[0].mxu0
        %v4228 = vadd.f32 0.0, %v4227
        %4229 = vmatprep.mubr.bf16.mxu0 0
        %4230 = vmatmul.mubr.bf16.gmra.mrb[0].mxu0 %v590
        %v4231 = vpop.f32.mrb[0].mxu0
        %v4232 = vadd.f32 0.0, %v4231
        %v4233 = vpop.f32.mrb[0].mxu0
        %v4234 = vadd.f32 0.0, %v4233
        %v4235 = vpop.f32.mrb[0].mxu0
        %v4236 = vadd.f32 0.0, %v4235
        %v4237 = vpop.f32.mrb[0].mxu0
        %v4238 = vadd.f32 0.0, %v4237
        %4239 = vdwg.mxu0
        %v4244 = vcombine.low %v4041, %v4042
        %v4245 = vcombine.high %v4041, %v4042
        %v4247 = vunpack.c.l.s4 1966171168
        %v4248 = vunpack.c.0.s8 %v4247
        %v4249 = vlaneseq
        %v4250 = vshrl.u32 %v4249, 7
        %v4251 = vsub.s32 %v4248, %v4250
        %v4252 = vrot.slane %v4244, %v4251
        %v4254 = vunpack.c.l.s4 1966171168
        %v4255 = vunpack.c.0.s8 %v4254
        %v4256 = vlaneseq
        %v4257 = vshrl.u32 %v4256, 7
        %v4258 = vsub.s32 %v4255, %v4257
        %v4259 = vrot.slane %v4245, %v4258
        %v4260 = vcombine.high %v4252, %v4252
        %v4261 = vcombine.high %v4259, %v4259
        %v4263 = vunpack.c.l.s4 1966171168
        %v4264 = vunpack.c.0.s8 %v4263
        %v4265 = vlaneseq
        %v4266 = vshrl.u32 %v4265, 7
        %v4267 = vsub.s32 %v4264, %v4266
        %v4268 = vrot.slane %v4252, %v4267
        %v4270 = vunpack.c.l.s4 1966171168
        %v4271 = vunpack.c.0.s8 %v4270
        %v4272 = vlaneseq
        %v4273 = vshrl.u32 %v4272, 7
        %v4274 = vsub.s32 %v4271, %v4273
        %v4275 = vrot.slane %v4259, %v4274
        %v4277 = vunpack.c.l.s4 1966171168
        %v4278 = vunpack.c.0.s8 %v4277
        %v4279 = vlaneseq
        %v4280 = vshrl.u32 %v4279, 7
        %v4281 = vsub.s32 %v4278, %v4280
        %v4282 = vrot.slane %v4260, %v4281
        %v4284 = vunpack.c.l.s4 1966171168
        %v4285 = vunpack.c.0.s8 %v4284
        %v4286 = vlaneseq
        %v4287 = vshrl.u32 %v4286, 7
        %v4288 = vsub.s32 %v4285, %v4287
        %v4289 = vrot.slane %v4261, %v4288
        %v4290 = vcombine.high %v4268, %v4268
        %v4291 = vcombine.high %v4275, %v4275
        %v4292 = vcombine.high %v4282, %v4282
        %v4293 = vcombine.high %v4289, %v4289
        %v4294 = vcombine.low %v4043, %v4044
        %v4295 = vcombine.high %v4043, %v4044
        %v4297 = vunpack.c.l.s4 1966171168
        %v4298 = vunpack.c.0.s8 %v4297
        %v4299 = vlaneseq
        %v4300 = vshrl.u32 %v4299, 7
        %v4301 = vsub.s32 %v4298, %v4300
        %v4302 = vrot.slane %v4294, %v4301
        %v4304 = vunpack.c.l.s4 1966171168
        %v4305 = vunpack.c.0.s8 %v4304
        %v4306 = vlaneseq
        %v4307 = vshrl.u32 %v4306, 7
        %v4308 = vsub.s32 %v4305, %v4307
        %v4309 = vrot.slane %v4295, %v4308
        %v4310 = vcombine.high %v4302, %v4302
        %v4311 = vcombine.high %v4309, %v4309
        %v4313 = vunpack.c.l.s4 1966171168
        %v4314 = vunpack.c.0.s8 %v4313
        %v4315 = vlaneseq
        %v4316 = vshrl.u32 %v4315, 7
        %v4317 = vsub.s32 %v4314, %v4316
        %v4318 = vrot.slane %v4302, %v4317
        %v4320 = vunpack.c.l.s4 1966171168
        %v4321 = vunpack.c.0.s8 %v4320
        %v4322 = vlaneseq
        %v4323 = vshrl.u32 %v4322, 7
        %v4324 = vsub.s32 %v4321, %v4323
        %v4325 = vrot.slane %v4309, %v4324
        %v4327 = vunpack.c.l.s4 1966171168
        %v4328 = vunpack.c.0.s8 %v4327
        %v4329 = vlaneseq
        %v4330 = vshrl.u32 %v4329, 7
        %v4331 = vsub.s32 %v4328, %v4330
        %v4332 = vrot.slane %v4310, %v4331
        %v4334 = vunpack.c.l.s4 1966171168
        %v4335 = vunpack.c.0.s8 %v4334
        %v4336 = vlaneseq
        %v4337 = vshrl.u32 %v4336, 7
        %v4338 = vsub.s32 %v4335, %v4337
        %v4339 = vrot.slane %v4311, %v4338
        %v4340 = vcombine.high %v4318, %v4318
        %v4341 = vcombine.high %v4325, %v4325
        %v4342 = vcombine.high %v4332, %v4332
        %v4343 = vcombine.high %v4339, %v4339
        %v4344 = vlaneseq
        %v4345 = vshrl.u32 %v4344, 7
        %v4346 = vsub.s32 0, %v4345
        %v4347 = vrot.slane %v4268, %v4346
        %v4348 = vlaneseq
        %v4349 = vshrl.u32 %v4348, 7
        %v4350 = vsub.s32 1, %v4349
        %v4351 = vrot.slane %v4268, %v4350
        %v4352 = vlaneseq
        %v4353 = vshrl.u32 %v4352, 7
        %v4354 = vsub.s32 0, %v4353
        %v4355 = vrot.slane %v4282, %v4354
        %v4356 = vlaneseq
        %v4357 = vshrl.u32 %v4356, 7
        %v4358 = vsub.s32 1, %v4357
        %v4359 = vrot.slane %v4282, %v4358
        %v4360 = vlaneseq
        %v4361 = vshrl.u32 %v4360, 7
        %v4362 = vsub.s32 0, %v4361
        %v4363 = vrot.slane %v4290, %v4362
        %v4364 = vlaneseq
        %v4365 = vshrl.u32 %v4364, 7
        %v4366 = vsub.s32 1, %v4365
        %v4367 = vrot.slane %v4290, %v4366
        %v4368 = vlaneseq
        %v4369 = vshrl.u32 %v4368, 7
        %v4370 = vsub.s32 0, %v4369
        %v4371 = vrot.slane %v4292, %v4370
        %v4372 = vlaneseq
        %v4373 = vshrl.u32 %v4372, 7
        %v4374 = vsub.s32 1, %v4373
        %v4375 = vrot.slane %v4292, %v4374
        %v4376 = vlaneseq
        %v4377 = vshrl.u32 %v4376, 7
        %v4378 = vsub.s32 0, %v4377
        %v4379 = vrot.slane %v4275, %v4378
        %v4380 = vlaneseq
        %v4381 = vshrl.u32 %v4380, 7
        %v4382 = vsub.s32 1, %v4381
        %v4383 = vrot.slane %v4275, %v4382
        %v4384 = vlaneseq
        %v4385 = vshrl.u32 %v4384, 7
        %v4386 = vsub.s32 0, %v4385
        %v4387 = vrot.slane %v4289, %v4386
        %v4388 = vlaneseq
        %v4389 = vshrl.u32 %v4388, 7
        %v4390 = vsub.s32 1, %v4389
        %v4391 = vrot.slane %v4289, %v4390
        %v4392 = vlaneseq
        %v4393 = vshrl.u32 %v4392, 7
        %v4394 = vsub.s32 0, %v4393
        %v4395 = vrot.slane %v4291, %v4394
        %v4396 = vlaneseq
        %v4397 = vshrl.u32 %v4396, 7
        %v4398 = vsub.s32 1, %v4397
        %v4399 = vrot.slane %v4291, %v4398
        %v4400 = vlaneseq
        %v4401 = vshrl.u32 %v4400, 7
        %v4402 = vsub.s32 0, %v4401
        %v4403 = vrot.slane %v4293, %v4402
        %v4404 = vlaneseq
        %v4405 = vshrl.u32 %v4404, 7
        %v4406 = vsub.s32 1, %v4405
        %v4407 = vrot.slane %v4293, %v4406
        %v4408 = vlaneseq
        %v4409 = vshrl.u32 %v4408, 7
        %v4410 = vsub.s32 0, %v4409
        %v4411 = vrot.slane %v4318, %v4410
        %v4412 = vlaneseq
        %v4413 = vshrl.u32 %v4412, 7
        %v4414 = vsub.s32 1, %v4413
        %v4415 = vrot.slane %v4318, %v4414
        %v4416 = vlaneseq
        %v4417 = vshrl.u32 %v4416, 7
        %v4418 = vsub.s32 0, %v4417
        %v4419 = vrot.slane %v4332, %v4418
        %v4420 = vlaneseq
        %v4421 = vshrl.u32 %v4420, 7
        %v4422 = vsub.s32 1, %v4421
        %v4423 = vrot.slane %v4332, %v4422
        %v4424 = vlaneseq
        %v4425 = vshrl.u32 %v4424, 7
        %v4426 = vsub.s32 0, %v4425
        %v4427 = vrot.slane %v4340, %v4426
        %v4428 = vlaneseq
        %v4429 = vshrl.u32 %v4428, 7
        %v4430 = vsub.s32 1, %v4429
        %v4431 = vrot.slane %v4340, %v4430
        %v4432 = vlaneseq
        %v4433 = vshrl.u32 %v4432, 7
        %v4434 = vsub.s32 0, %v4433
        %v4435 = vrot.slane %v4342, %v4434
        %v4436 = vlaneseq
        %v4437 = vshrl.u32 %v4436, 7
        %v4438 = vsub.s32 1, %v4437
        %v4439 = vrot.slane %v4342, %v4438
        %v4440 = vlaneseq
        %v4441 = vshrl.u32 %v4440, 7
        %v4442 = vsub.s32 0, %v4441
        %v4443 = vrot.slane %v4325, %v4442
        %v4444 = vlaneseq
        %v4445 = vshrl.u32 %v4444, 7
        %v4446 = vsub.s32 1, %v4445
        %v4447 = vrot.slane %v4325, %v4446
        %v4448 = vlaneseq
        %v4449 = vshrl.u32 %v4448, 7
        %v4450 = vsub.s32 0, %v4449
        %v4451 = vrot.slane %v4339, %v4450
        %v4452 = vlaneseq
        %v4453 = vshrl.u32 %v4452, 7
        %v4454 = vsub.s32 1, %v4453
        %v4455 = vrot.slane %v4339, %v4454
        %v4456 = vlaneseq
        %v4457 = vshrl.u32 %v4456, 7
        %v4458 = vsub.s32 0, %v4457
        %v4459 = vrot.slane %v4341, %v4458
        %v4460 = vlaneseq
        %v4461 = vshrl.u32 %v4460, 7
        %v4462 = vsub.s32 1, %v4461
        %v4463 = vrot.slane %v4341, %v4462
        %v4464 = vlaneseq
        %v4465 = vshrl.u32 %v4464, 7
        %v4466 = vsub.s32 0, %v4465
        %v4467 = vrot.slane %v4343, %v4466
        %v4468 = vlaneseq
        %v4469 = vshrl.u32 %v4468, 7
        %v4470 = vsub.s32 1, %v4469
        %v4471 = vrot.slane %v4343, %v4470
        %v4504 = vmul.f32 %v4082, %v4347
        %v4505 = vmul.f32 %v4084, %v4351
        %v4506 = vmul.f32 %v4086, %v4347
        %v4507 = vmul.f32 %v4088, %v4351
        %v4508 = vmul.f32 %v4092, %v4355
        %v4509 = vmul.f32 %v4094, %v4359
        %v4510 = vmul.f32 %v4096, %v4355
        %v4511 = vmul.f32 %v4098, %v4359
        %v4512 = vmul.f32 %v4102, %v4363
        %v4513 = vmul.f32 %v4104, %v4367
        %v4514 = vmul.f32 %v4106, %v4363
        %v4515 = vmul.f32 %v4108, %v4367
        %v4516 = vmul.f32 %v4112, %v4371
        %v4517 = vmul.f32 %v4114, %v4375
        %v4518 = vmul.f32 %v4116, %v4371
        %v4519 = vmul.f32 %v4118, %v4375
        %v4520 = vmul.f32 %v4122, %v4379
        %v4521 = vmul.f32 %v4124, %v4383
        %v4522 = vmul.f32 %v4126, %v4379
        %v4523 = vmul.f32 %v4128, %v4383
        %v4524 = vmul.f32 %v4132, %v4387
        %v4525 = vmul.f32 %v4134, %v4391
        %v4526 = vmul.f32 %v4136, %v4387
        %v4527 = vmul.f32 %v4138, %v4391
        %v4528 = vmul.f32 %v4142, %v4395
        %v4529 = vmul.f32 %v4144, %v4399
        %v4530 = vmul.f32 %v4146, %v4395
        %v4531 = vmul.f32 %v4148, %v4399
        %v4532 = vmul.f32 %v4152, %v4403
        %v4533 = vmul.f32 %v4154, %v4407
        %v4534 = vmul.f32 %v4156, %v4403
        %v4535 = vmul.f32 %v4158, %v4407
        %v4536 = vmul.f32 %v4162, %v4411
        %v4537 = vmul.f32 %v4164, %v4415
        %v4538 = vmul.f32 %v4166, %v4411
        %v4539 = vmul.f32 %v4168, %v4415
        %v4540 = vmul.f32 %v4172, %v4419
        %v4541 = vmul.f32 %v4174, %v4423
        %v4542 = vmul.f32 %v4176, %v4419
        %v4543 = vmul.f32 %v4178, %v4423
        %v4544 = vmul.f32 %v4182, %v4427
        %v4545 = vmul.f32 %v4184, %v4431
        %v4546 = vmul.f32 %v4186, %v4427
        %v4547 = vmul.f32 %v4188, %v4431
        %v4548 = vmul.f32 %v4192, %v4435
        %v4549 = vmul.f32 %v4194, %v4439
        %v4550 = vmul.f32 %v4196, %v4435
        %v4551 = vmul.f32 %v4198, %v4439
        %v4552 = vmul.f32 %v4202, %v4443
        %v4553 = vmul.f32 %v4204, %v4447
        %v4554 = vmul.f32 %v4206, %v4443
        %v4555 = vmul.f32 %v4208, %v4447
        %v4556 = vmul.f32 %v4212, %v4451
        %v4557 = vmul.f32 %v4214, %v4455
        %v4558 = vmul.f32 %v4216, %v4451
        %v4559 = vmul.f32 %v4218, %v4455
        %v4560 = vmul.f32 %v4222, %v4459
        %v4561 = vmul.f32 %v4224, %v4463
        %v4562 = vmul.f32 %v4226, %v4459
        %v4563 = vmul.f32 %v4228, %v4463
        %v4564 = vmul.f32 %v4232, %v4467
        %v4565 = vmul.f32 %v4234, %v4471
        %v4566 = vmul.f32 %v4236, %v4467
        %v4567 = vmul.f32 %v4238, %v4471
        %v4568 = vadd.f32 %v4504, %v4508
        %v4569 = vadd.f32 %v4568, %v4512
        %v4570 = vadd.f32 %v4569, %v4516
        %v4571 = vadd.f32 %v4570, %v4520
        %v4572 = vadd.f32 %v4571, %v4524
        %v4573 = vadd.f32 %v4572, %v4528
        %v4574 = vadd.f32 %v4573, %v4532
        %v4575 = vadd.f32 %v4574, %v4536
        %v4576 = vadd.f32 %v4575, %v4540
        %v4577 = vadd.f32 %v4576, %v4544
        %v4578 = vadd.f32 %v4577, %v4548
        %v4579 = vadd.f32 %v4578, %v4552
        %v4580 = vadd.f32 %v4579, %v4556
        %v4581 = vadd.f32 %v4580, %v4560
        %v4582 = vadd.f32 %v4581, %v4564
        %v4583 = vadd.f32 %v4505, %v4509
        %v4584 = vadd.f32 %v4583, %v4513
        %v4585 = vadd.f32 %v4584, %v4517
        %v4586 = vadd.f32 %v4585, %v4521
        %v4587 = vadd.f32 %v4586, %v4525
        %v4588 = vadd.f32 %v4587, %v4529
        %v4589 = vadd.f32 %v4588, %v4533
        %v4590 = vadd.f32 %v4589, %v4537
        %v4591 = vadd.f32 %v4590, %v4541
        %v4592 = vadd.f32 %v4591, %v4545
        %v4593 = vadd.f32 %v4592, %v4549
        %v4594 = vadd.f32 %v4593, %v4553
        %v4595 = vadd.f32 %v4594, %v4557
        %v4596 = vadd.f32 %v4595, %v4561
        %v4597 = vadd.f32 %v4596, %v4565
        %v4598 = vadd.f32 %v4506, %v4510
        %v4599 = vadd.f32 %v4598, %v4514
        %v4600 = vadd.f32 %v4599, %v4518
        %v4601 = vadd.f32 %v4600, %v4522
        %v4602 = vadd.f32 %v4601, %v4526
        %v4603 = vadd.f32 %v4602, %v4530
        %v4604 = vadd.f32 %v4603, %v4534
        %v4605 = vadd.f32 %v4604, %v4538
        %v4606 = vadd.f32 %v4605, %v4542
        %v4607 = vadd.f32 %v4606, %v4546
        %v4608 = vadd.f32 %v4607, %v4550
        %v4609 = vadd.f32 %v4608, %v4554
        %v4610 = vadd.f32 %v4609, %v4558
        %v4611 = vadd.f32 %v4610, %v4562
        %v4612 = vadd.f32 %v4611, %v4566
        %v4613 = vadd.f32 %v4507, %v4511
        %v4614 = vadd.f32 %v4613, %v4515
        %v4615 = vadd.f32 %v4614, %v4519
        %v4616 = vadd.f32 %v4615, %v4523
        %v4617 = vadd.f32 %v4616, %v4527
        %v4618 = vadd.f32 %v4617, %v4531
        %v4619 = vadd.f32 %v4618, %v4535
        %v4620 = vadd.f32 %v4619, %v4539
        %v4621 = vadd.f32 %v4620, %v4543
        %v4622 = vadd.f32 %v4621, %v4547
        %v4623 = vadd.f32 %v4622, %v4551
        %v4624 = vadd.f32 %v4623, %v4555
        %v4625 = vadd.f32 %v4624, %v4559
        %v4626 = vadd.f32 %v4625, %v4563
        %v4627 = vadd.f32 %v4626, %v4567
        %v4628 = vpack.c.bf16 %v4612, %v4582
        %v4629 = vpack.c.bf16 %v4627, %v4597
        %4630 = vst [vmem:[#allocation2 + $0x50] sm:$0xff] %v4628
        %4631 = vst [vmem:[#allocation2 + $0x58] sm:$0xff] %v4629
        %v4632 = vlaneseq
        %v4633 = vshrl.u32 %v4632, 7
        %v4634 = vsub.s32 6, %v4633
        %v4635 = vrot.slane %v326, %v4634
        %v4636 = vlaneseq
        %v4637 = vshrl.u32 %v4636, 7
        %v4638 = vsub.s32 6, %v4637
        %v4639 = vrot.slane %v327, %v4638
        %vm4640 = vcmp.eq.s32.totalorder %v351, %v4635
        %vm4641 = vcmp.eq.s32.totalorder %v351, %v4639
        %vm4642 = vcmp.eq.s32.totalorder %v352, %v4635
        %vm4643 = vcmp.eq.s32.totalorder %v352, %v4639
        %v4644 = vlaneseq
        %v4645 = vshrl.u32 %v4644, 7
        %v4646 = vsub.s32 6, %v4645
        %v4647 = vrot.slane %v334, %v4646
        %v4648 = vlaneseq
        %v4649 = vshrl.u32 %v4648, 7
        %v4650 = vsub.s32 6, %v4649
        %v4651 = vrot.slane %v335, %v4650
        %v4652 = vsel %vm4640, %v4647, 0.0
        %v4653 = vsel %vm4641, %v4651, 0.0
        %v4654 = vsel %vm4642, %v4647, 0.0
        %v4655 = vsel %vm4643, %v4651, 0.0
        %v4656 = vlaneseq
        %v4657 = vshrl.u32 %v4656, 7
        %v4658 = vsub.s32 6, %v4657
        %v4659 = vrot.slane %v377, %v4658
        %v4660 = vlaneseq
        %v4661 = vshrl.u32 %v4660, 7
        %v4662 = vsub.s32 6, %v4661
        %v4663 = vrot.slane %v378, %v4662
        %vm4664 = vcmp.eq.s32.totalorder %v351, %v4659
        %vm4665 = vcmp.eq.s32.totalorder %v351, %v4663
        %vm4666 = vcmp.eq.s32.totalorder %v352, %v4659
        %vm4667 = vcmp.eq.s32.totalorder %v352, %v4663
        %v4668 = vlaneseq
        %v4669 = vshrl.u32 %v4668, 7
        %v4670 = vsub.s32 6, %v4669
        %v4671 = vrot.slane %v318, %v4670
        %v4672 = vlaneseq
        %v4673 = vshrl.u32 %v4672, 7
        %v4674 = vsub.s32 6, %v4673
        %v4675 = vrot.slane %v319, %v4674
        %v4676 = vsel %vm4664, %v4671, 0.0
        %v4677 = vsel %vm4665, %v4675, 0.0
        %v4678 = vsel %vm4666, %v4671, 0.0
        %v4679 = vsel %vm4667, %v4675, 0.0
        %v4680 = vadd.f32 %v4652, %v4676
        %v4681 = vadd.f32 %v4653, %v4677
        %v4682 = vadd.f32 %v4654, %v4678
        %v4683 = vadd.f32 %v4655, %v4679
        %v4684 = vlaneseq
        %v4685 = vshrl.u32 %v4684, 7
        %v4686 = vsub.s32 6, %v4685
        %v4687 = vrot.slane %v330, %v4686
        %v4688 = vlaneseq
        %v4689 = vshrl.u32 %v4688, 7
        %v4690 = vsub.s32 6, %v4689
        %v4691 = vrot.slane %v331, %v4690
        %vm4692 = vcmp.eq.s32.totalorder %v351, %v4687
        %vm4693 = vcmp.eq.s32.totalorder %v351, %v4691
        %vm4694 = vcmp.eq.s32.totalorder %v352, %v4687
        %vm4695 = vcmp.eq.s32.totalorder %v352, %v4691
        %v4696 = vlaneseq
        %v4697 = vshrl.u32 %v4696, 7
        %v4698 = vsub.s32 6, %v4697
        %v4699 = vrot.slane %v342, %v4698
        %v4700 = vlaneseq
        %v4701 = vshrl.u32 %v4700, 7
        %v4702 = vsub.s32 6, %v4701
        %v4703 = vrot.slane %v343, %v4702
        %v4704 = vsel %vm4692, %v4699, 0.0
        %v4705 = vsel %vm4693, %v4703, 0.0
        %v4706 = vsel %vm4694, %v4699, 0.0
        %v4707 = vsel %vm4695, %v4703, 0.0
        %v4708 = vlaneseq
        %v4709 = vshrl.u32 %v4708, 7
        %v4710 = vsub.s32 6, %v4709
        %v4711 = vrot.slane %v431, %v4710
        %v4712 = vlaneseq
        %v4713 = vshrl.u32 %v4712, 7
        %v4714 = vsub.s32 6, %v4713
        %v4715 = vrot.slane %v432, %v4714
        %vm4716 = vcmp.eq.s32.totalorder %v351, %v4711
        %vm4717 = vcmp.eq.s32.totalorder %v351, %v4715
        %vm4718 = vcmp.eq.s32.totalorder %v352, %v4711
        %vm4719 = vcmp.eq.s32.totalorder %v352, %v4715
        %v4720 = vlaneseq
        %v4721 = vshrl.u32 %v4720, 7
        %v4722 = vsub.s32 6, %v4721
        %v4723 = vrot.slane %v346, %v4722
        %v4724 = vlaneseq
        %v4725 = vshrl.u32 %v4724, 7
        %v4726 = vsub.s32 6, %v4725
        %v4727 = vrot.slane %v347, %v4726
        %v4728 = vsel %vm4716, %v4723, 0.0
        %v4729 = vsel %vm4717, %v4727, 0.0
        %v4730 = vsel %vm4718, %v4723, 0.0
        %v4731 = vsel %vm4719, %v4727, 0.0
        %v4732 = vadd.f32 %v4704, %v4728
        %v4733 = vadd.f32 %v4705, %v4729
        %v4734 = vadd.f32 %v4706, %v4730
        %v4735 = vadd.f32 %v4707, %v4731
        %v4736 = vpack.c.bf16 %v4682, %v4680
        %v4737 = vpack.c.bf16 %v4683, %v4681
        %4738 = vmatprep.subr.bf16.mxu0 %v4737
        %4739 = vmatpush1.bf16.msra.mxu0 %v4736
        %4740 = vmatprep.subr.bf16.mxu0 0
        %4741 = vmatpush1.bf16.msra.mxu0 0
        %4742 = vmatprep.subr.bf16.mxu0 0
        %4743 = vmatpush1.bf16.msra.mxu0 0
        %4744 = vmatprep.subr.bf16.mxu0 0
        %4745 = vmatpush1.bf16.msra.mxu0 0
        %4746 = vmatprep.subr.bf16.mxu0 0
        %4747 = vmatpush1.bf16.msra.mxu0 0
        %4748 = vmatprep.subr.bf16.mxu0 0
        %4749 = vmatpush1.bf16.msra.mxu0 0
        %4750 = vmatprep.subr.bf16.mxu0 0
        %4751 = vmatpush1.bf16.msra.mxu0 0
        %4752 = vmatprep.subr.bf16.mxu0 0
        %4753 = vmatpush1.bf16.msra.mxu0 0
        %4754 = vmatprep.subr.bf16.mxu0 0
        %4755 = vmatpush1.bf16.msra.mxu0 0
        %4756 = vmatprep.subr.bf16.mxu0 0
        %4757 = vmatpush1.bf16.msra.mxu0 0
        %4758 = vmatprep.subr.bf16.mxu0 0
        %4759 = vmatpush1.bf16.msra.mxu0 0
        %4760 = vmatprep.subr.bf16.mxu0 0
        %4761 = vmatpush1.bf16.msra.mxu0 0
        %4762 = vmatprep.subr.bf16.mxu0 0
        %4763 = vmatpush1.bf16.msra.mxu0 0
        %4764 = vmatprep.subr.bf16.mxu0 0
        %4765 = vmatpush1.bf16.msra.mxu0 0
        %4766 = vmatprep.subr.bf16.mxu0 0
        %4767 = vmatpush1.bf16.msra.mxu0 0
        %4768 = vmatprep.subr.bf16.mxu0 0
        %4769 = vmatpush1.bf16.msra.mxu0 0
        %4770 = vmatprep.mubr.bf16.mxu0 0
        %4771 = vmatmul.mubr.bf16.gmra.mrb[0].mxu0 %v545
        %v4772 = vpop.f32.mrb[0].mxu0
        %v4773 = vadd.f32 0.0, %v4772
        %v4774 = vpop.f32.mrb[0].mxu0
        %v4775 = vadd.f32 0.0, %v4774
        %v4776 = vpop.f32.mrb[0].mxu0
        %v4777 = vadd.f32 0.0, %v4776
        %v4778 = vpop.f32.mrb[0].mxu0
        %v4779 = vadd.f32 0.0, %v4778
        %4780 = vmatprep.mubr.bf16.mxu0 0
        %4781 = vmatmul.mubr.bf16.gmra.mrb[0].mxu0 %v548
        %v4782 = vpop.f32.mrb[0].mxu0
        %v4783 = vadd.f32 0.0, %v4782
        %v4784 = vpop.f32.mrb[0].mxu0
        %v4785 = vadd.f32 0.0, %v4784
        %v4786 = vpop.f32.mrb[0].mxu0
        %v4787 = vadd.f32 0.0, %v4786
        %v4788 = vpop.f32.mrb[0].mxu0
        %v4789 = vadd.f32 0.0, %v4788
        %4790 = vmatprep.mubr.bf16.mxu0 0
        %4791 = vmatmul.mubr.bf16.gmra.mrb[0].mxu0 %v551
        %v4792 = vpop.f32.mrb[0].mxu0
        %v4793 = vadd.f32 0.0, %v4792
        %v4794 = vpop.f32.mrb[0].mxu0
        %v4795 = vadd.f32 0.0, %v4794
        %v4796 = vpop.f32.mrb[0].mxu0
        %v4797 = vadd.f32 0.0, %v4796
        %v4798 = vpop.f32.mrb[0].mxu0
        %v4799 = vadd.f32 0.0, %v4798
        %4800 = vmatprep.mubr.bf16.mxu0 0
        %4801 = vmatmul.mubr.bf16.gmra.mrb[0].mxu0 %v554
        %v4802 = vpop.f32.mrb[0].mxu0
        %v4803 = vadd.f32 0.0, %v4802
        %v4804 = vpop.f32.mrb[0].mxu0
        %v4805 = vadd.f32 0.0, %v4804
        %v4806 = vpop.f32.mrb[0].mxu0
        %v4807 = vadd.f32 0.0, %v4806
        %v4808 = vpop.f32.mrb[0].mxu0
        %v4809 = vadd.f32 0.0, %v4808
        %4810 = vmatprep.mubr.bf16.mxu0 0
        %4811 = vmatmul.mubr.bf16.gmra.mrb[0].mxu0 %v557
        %v4812 = vpop.f32.mrb[0].mxu0
        %v4813 = vadd.f32 0.0, %v4812
        %v4814 = vpop.f32.mrb[0].mxu0
        %v4815 = vadd.f32 0.0, %v4814
        %v4816 = vpop.f32.mrb[0].mxu0
        %v4817 = vadd.f32 0.0, %v4816
        %v4818 = vpop.f32.mrb[0].mxu0
        %v4819 = vadd.f32 0.0, %v4818
        %4820 = vmatprep.mubr.bf16.mxu0 0
        %4821 = vmatmul.mubr.bf16.gmra.mrb[0].mxu0 %v560
        %v4822 = vpop.f32.mrb[0].mxu0
        %v4823 = vadd.f32 0.0, %v4822
        %v4824 = vpop.f32.mrb[0].mxu0
        %v4825 = vadd.f32 0.0, %v4824
        %v4826 = vpop.f32.mrb[0].mxu0
        %v4827 = vadd.f32 0.0, %v4826
        %v4828 = vpop.f32.mrb[0].mxu0
        %v4829 = vadd.f32 0.0, %v4828
        %4830 = vmatprep.mubr.bf16.mxu0 0
        %4831 = vmatmul.mubr.bf16.gmra.mrb[0].mxu0 %v563
        %v4832 = vpop.f32.mrb[0].mxu0
        %v4833 = vadd.f32 0.0, %v4832
        %v4834 = vpop.f32.mrb[0].mxu0
        %v4835 = vadd.f32 0.0, %v4834
        %v4836 = vpop.f32.mrb[0].mxu0
        %v4837 = vadd.f32 0.0, %v4836
        %v4838 = vpop.f32.mrb[0].mxu0
        %v4839 = vadd.f32 0.0, %v4838
        %4840 = vmatprep.mubr.bf16.mxu0 0
        %4841 = vmatmul.mubr.bf16.gmra.mrb[0].mxu0 %v566
        %v4842 = vpop.f32.mrb[0].mxu0
        %v4843 = vadd.f32 0.0, %v4842
        %v4844 = vpop.f32.mrb[0].mxu0
        %v4845 = vadd.f32 0.0, %v4844
        %v4846 = vpop.f32.mrb[0].mxu0
        %v4847 = vadd.f32 0.0, %v4846
        %v4848 = vpop.f32.mrb[0].mxu0
        %v4849 = vadd.f32 0.0, %v4848
        %4850 = vmatprep.mubr.bf16.mxu0 0
        %4851 = vmatmul.mubr.bf16.gmra.mrb[0].mxu0 %v569
        %v4852 = vpop.f32.mrb[0].mxu0
        %v4853 = vadd.f32 0.0, %v4852
        %v4854 = vpop.f32.mrb[0].mxu0
        %v4855 = vadd.f32 0.0, %v4854
        %v4856 = vpop.f32.mrb[0].mxu0
        %v4857 = vadd.f32 0.0, %v4856
        %v4858 = vpop.f32.mrb[0].mxu0
        %v4859 = vadd.f32 0.0, %v4858
        %4860 = vmatprep.mubr.bf16.mxu0 0
        %4861 = vmatmul.mubr.bf16.gmra.mrb[0].mxu0 %v572
        %v4862 = vpop.f32.mrb[0].mxu0
        %v4863 = vadd.f32 0.0, %v4862
        %v4864 = vpop.f32.mrb[0].mxu0
        %v4865 = vadd.f32 0.0, %v4864
        %v4866 = vpop.f32.mrb[0].mxu0
        %v4867 = vadd.f32 0.0, %v4866
        %v4868 = vpop.f32.mrb[0].mxu0
        %v4869 = vadd.f32 0.0, %v4868
        %4870 = vmatprep.mubr.bf16.mxu0 0
        %4871 = vmatmul.mubr.bf16.gmra.mrb[0].mxu0 %v575
        %v4872 = vpop.f32.mrb[0].mxu0
        %v4873 = vadd.f32 0.0, %v4872
        %v4874 = vpop.f32.mrb[0].mxu0
        %v4875 = vadd.f32 0.0, %v4874
        %v4876 = vpop.f32.mrb[0].mxu0
        %v4877 = vadd.f32 0.0, %v4876
        %v4878 = vpop.f32.mrb[0].mxu0
        %v4879 = vadd.f32 0.0, %v4878
        %4880 = vmatprep.mubr.bf16.mxu0 0
        %4881 = vmatmul.mubr.bf16.gmra.mrb[0].mxu0 %v578
        %v4882 = vpop.f32.mrb[0].mxu0
        %v4883 = vadd.f32 0.0, %v4882
        %v4884 = vpop.f32.mrb[0].mxu0
        %v4885 = vadd.f32 0.0, %v4884
        %v4886 = vpop.f32.mrb[0].mxu0
        %v4887 = vadd.f32 0.0, %v4886
        %v4888 = vpop.f32.mrb[0].mxu0
        %v4889 = vadd.f32 0.0, %v4888
        %4890 = vmatprep.mubr.bf16.mxu0 0
        %4891 = vmatmul.mubr.bf16.gmra.mrb[0].mxu0 %v581
        %v4892 = vpop.f32.mrb[0].mxu0
        %v4893 = vadd.f32 0.0, %v4892
        %v4894 = vpop.f32.mrb[0].mxu0
        %v4895 = vadd.f32 0.0, %v4894
        %v4896 = vpop.f32.mrb[0].mxu0
        %v4897 = vadd.f32 0.0, %v4896
        %v4898 = vpop.f32.mrb[0].mxu0
        %v4899 = vadd.f32 0.0, %v4898
        %4900 = vmatprep.mubr.bf16.mxu0 0
        %4901 = vmatmul.mubr.bf16.gmra.mrb[0].mxu0 %v584
        %v4902 = vpop.f32.mrb[0].mxu0
        %v4903 = vadd.f32 0.0, %v4902
        %v4904 = vpop.f32.mrb[0].mxu0
        %v4905 = vadd.f32 0.0, %v4904
        %v4906 = vpop.f32.mrb[0].mxu0
        %v4907 = vadd.f32 0.0, %v4906
        %v4908 = vpop.f32.mrb[0].mxu0
        %v4909 = vadd.f32 0.0, %v4908
        %4910 = vmatprep.mubr.bf16.mxu0 0
        %4911 = vmatmul.mubr.bf16.gmra.mrb[0].mxu0 %v587
        %v4912 = vpop.f32.mrb[0].mxu0
        %v4913 = vadd.f32 0.0, %v4912
        %v4914 = vpop.f32.mrb[0].mxu0
        %v4915 = vadd.f32 0.0, %v4914
        %v4916 = vpop.f32.mrb[0].mxu0
        %v4917 = vadd.f32 0.0, %v4916
        %v4918 = vpop.f32.mrb[0].mxu0
        %v4919 = vadd.f32 0.0, %v4918
        %4920 = vmatprep.mubr.bf16.mxu0 0
        %4921 = vmatmul.mubr.bf16.gmra.mrb[0].mxu0 %v590
        %v4922 = vpop.f32.mrb[0].mxu0
        %v4923 = vadd.f32 0.0, %v4922
        %v4924 = vpop.f32.mrb[0].mxu0
        %v4925 = vadd.f32 0.0, %v4924
        %v4926 = vpop.f32.mrb[0].mxu0
        %v4927 = vadd.f32 0.0, %v4926
        %v4928 = vpop.f32.mrb[0].mxu0
        %v4929 = vadd.f32 0.0, %v4928
        %4930 = vdwg.mxu0
        %v4935 = vcombine.low %v4732, %v4733
        %v4936 = vcombine.high %v4732, %v4733
        %v4938 = vunpack.c.l.s4 1966171168
        %v4939 = vunpack.c.0.s8 %v4938
        %v4940 = vlaneseq
        %v4941 = vshrl.u32 %v4940, 7
        %v4942 = vsub.s32 %v4939, %v4941
        %v4943 = vrot.slane %v4935, %v4942
        %v4945 = vunpack.c.l.s4 1966171168
        %v4946 = vunpack.c.0.s8 %v4945
        %v4947 = vlaneseq
        %v4948 = vshrl.u32 %v4947, 7
        %v4949 = vsub.s32 %v4946, %v4948
        %v4950 = vrot.slane %v4936, %v4949
        %v4951 = vcombine.high %v4943, %v4943
        %v4952 = vcombine.high %v4950, %v4950
        %v4954 = vunpack.c.l.s4 1966171168
        %v4955 = vunpack.c.0.s8 %v4954
        %v4956 = vlaneseq
        %v4957 = vshrl.u32 %v4956, 7
        %v4958 = vsub.s32 %v4955, %v4957
        %v4959 = vrot.slane %v4943, %v4958
        %v4961 = vunpack.c.l.s4 1966171168
        %v4962 = vunpack.c.0.s8 %v4961
        %v4963 = vlaneseq
        %v4964 = vshrl.u32 %v4963, 7
        %v4965 = vsub.s32 %v4962, %v4964
        %v4966 = vrot.slane %v4950, %v4965
        %v4968 = vunpack.c.l.s4 1966171168
        %v4969 = vunpack.c.0.s8 %v4968
        %v4970 = vlaneseq
        %v4971 = vshrl.u32 %v4970, 7
        %v4972 = vsub.s32 %v4969, %v4971
        %v4973 = vrot.slane %v4951, %v4972
        %v4975 = vunpack.c.l.s4 1966171168
        %v4976 = vunpack.c.0.s8 %v4975
        %v4977 = vlaneseq
        %v4978 = vshrl.u32 %v4977, 7
        %v4979 = vsub.s32 %v4976, %v4978
        %v4980 = vrot.slane %v4952, %v4979
        %v4981 = vcombine.high %v4959, %v4959
        %v4982 = vcombine.high %v4966, %v4966
        %v4983 = vcombine.high %v4973, %v4973
        %v4984 = vcombine.high %v4980, %v4980
        %v4985 = vcombine.low %v4734, %v4735
        %v4986 = vcombine.high %v4734, %v4735
        %v4988 = vunpack.c.l.s4 1966171168
        %v4989 = vunpack.c.0.s8 %v4988
        %v4990 = vlaneseq
        %v4991 = vshrl.u32 %v4990, 7
        %v4992 = vsub.s32 %v4989, %v4991
        %v4993 = vrot.slane %v4985, %v4992
        %v4995 = vunpack.c.l.s4 1966171168
        %v4996 = vunpack.c.0.s8 %v4995
        %v4997 = vlaneseq
        %v4998 = vshrl.u32 %v4997, 7
        %v4999 = vsub.s32 %v4996, %v4998
        %v5000 = vrot.slane %v4986, %v4999
        %v5001 = vcombine.high %v4993, %v4993
        %v5002 = vcombine.high %v5000, %v5000
        %v5004 = vunpack.c.l.s4 1966171168
        %v5005 = vunpack.c.0.s8 %v5004
        %v5006 = vlaneseq
        %v5007 = vshrl.u32 %v5006, 7
        %v5008 = vsub.s32 %v5005, %v5007
        %v5009 = vrot.slane %v4993, %v5008
        %v5011 = vunpack.c.l.s4 1966171168
        %v5012 = vunpack.c.0.s8 %v5011
        %v5013 = vlaneseq
        %v5014 = vshrl.u32 %v5013, 7
        %v5015 = vsub.s32 %v5012, %v5014
        %v5016 = vrot.slane %v5000, %v5015
        %v5018 = vunpack.c.l.s4 1966171168
        %v5019 = vunpack.c.0.s8 %v5018
        %v5020 = vlaneseq
        %v5021 = vshrl.u32 %v5020, 7
        %v5022 = vsub.s32 %v5019, %v5021
        %v5023 = vrot.slane %v5001, %v5022
        %v5025 = vunpack.c.l.s4 1966171168
        %v5026 = vunpack.c.0.s8 %v5025
        %v5027 = vlaneseq
        %v5028 = vshrl.u32 %v5027, 7
        %v5029 = vsub.s32 %v5026, %v5028
        %v5030 = vrot.slane %v5002, %v5029
        %v5031 = vcombine.high %v5009, %v5009
        %v5032 = vcombine.high %v5016, %v5016
        %v5033 = vcombine.high %v5023, %v5023
        %v5034 = vcombine.high %v5030, %v5030
        %v5035 = vlaneseq
        %v5036 = vshrl.u32 %v5035, 7
        %v5037 = vsub.s32 0, %v5036
        %v5038 = vrot.slane %v4959, %v5037
        %v5039 = vlaneseq
        %v5040 = vshrl.u32 %v5039, 7
        %v5041 = vsub.s32 1, %v5040
        %v5042 = vrot.slane %v4959, %v5041
        %v5043 = vlaneseq
        %v5044 = vshrl.u32 %v5043, 7
        %v5045 = vsub.s32 0, %v5044
        %v5046 = vrot.slane %v4973, %v5045
        %v5047 = vlaneseq
        %v5048 = vshrl.u32 %v5047, 7
        %v5049 = vsub.s32 1, %v5048
        %v5050 = vrot.slane %v4973, %v5049
        %v5051 = vlaneseq
        %v5052 = vshrl.u32 %v5051, 7
        %v5053 = vsub.s32 0, %v5052
        %v5054 = vrot.slane %v4981, %v5053
        %v5055 = vlaneseq
        %v5056 = vshrl.u32 %v5055, 7
        %v5057 = vsub.s32 1, %v5056
        %v5058 = vrot.slane %v4981, %v5057
        %v5059 = vlaneseq
        %v5060 = vshrl.u32 %v5059, 7
        %v5061 = vsub.s32 0, %v5060
        %v5062 = vrot.slane %v4983, %v5061
        %v5063 = vlaneseq
        %v5064 = vshrl.u32 %v5063, 7
        %v5065 = vsub.s32 1, %v5064
        %v5066 = vrot.slane %v4983, %v5065
        %v5067 = vlaneseq
        %v5068 = vshrl.u32 %v5067, 7
        %v5069 = vsub.s32 0, %v5068
        %v5070 = vrot.slane %v4966, %v5069
        %v5071 = vlaneseq
        %v5072 = vshrl.u32 %v5071, 7
        %v5073 = vsub.s32 1, %v5072
        %v5074 = vrot.slane %v4966, %v5073
        %v5075 = vlaneseq
        %v5076 = vshrl.u32 %v5075, 7
        %v5077 = vsub.s32 0, %v5076
        %v5078 = vrot.slane %v4980, %v5077
        %v5079 = vlaneseq
        %v5080 = vshrl.u32 %v5079, 7
        %v5081 = vsub.s32 1, %v5080
        %v5082 = vrot.slane %v4980, %v5081
        %v5083 = vlaneseq
        %v5084 = vshrl.u32 %v5083, 7
        %v5085 = vsub.s32 0, %v5084
        %v5086 = vrot.slane %v4982, %v5085
        %v5087 = vlaneseq
        %v5088 = vshrl.u32 %v5087, 7
        %v5089 = vsub.s32 1, %v5088
        %v5090 = vrot.slane %v4982, %v5089
        %v5091 = vlaneseq
        %v5092 = vshrl.u32 %v5091, 7
        %v5093 = vsub.s32 0, %v5092
        %v5094 = vrot.slane %v4984, %v5093
        %v5095 = vlaneseq
        %v5096 = vshrl.u32 %v5095, 7
        %v5097 = vsub.s32 1, %v5096
        %v5098 = vrot.slane %v4984, %v5097
        %v5099 = vlaneseq
        %v5100 = vshrl.u32 %v5099, 7
        %v5101 = vsub.s32 0, %v5100
        %v5102 = vrot.slane %v5009, %v5101
        %v5103 = vlaneseq
        %v5104 = vshrl.u32 %v5103, 7
        %v5105 = vsub.s32 1, %v5104
        %v5106 = vrot.slane %v5009, %v5105
        %v5107 = vlaneseq
        %v5108 = vshrl.u32 %v5107, 7
        %v5109 = vsub.s32 0, %v5108
        %v5110 = vrot.slane %v5023, %v5109
        %v5111 = vlaneseq
        %v5112 = vshrl.u32 %v5111, 7
        %v5113 = vsub.s32 1, %v5112
        %v5114 = vrot.slane %v5023, %v5113
        %v5115 = vlaneseq
        %v5116 = vshrl.u32 %v5115, 7
        %v5117 = vsub.s32 0, %v5116
        %v5118 = vrot.slane %v5031, %v5117
        %v5119 = vlaneseq
        %v5120 = vshrl.u32 %v5119, 7
        %v5121 = vsub.s32 1, %v5120
        %v5122 = vrot.slane %v5031, %v5121
        %v5123 = vlaneseq
        %v5124 = vshrl.u32 %v5123, 7
        %v5125 = vsub.s32 0, %v5124
        %v5126 = vrot.slane %v5033, %v5125
        %v5127 = vlaneseq
        %v5128 = vshrl.u32 %v5127, 7
        %v5129 = vsub.s32 1, %v5128
        %v5130 = vrot.slane %v5033, %v5129
        %v5131 = vlaneseq
        %v5132 = vshrl.u32 %v5131, 7
        %v5133 = vsub.s32 0, %v5132
        %v5134 = vrot.slane %v5016, %v5133
        %v5135 = vlaneseq
        %v5136 = vshrl.u32 %v5135, 7
        %v5137 = vsub.s32 1, %v5136
        %v5138 = vrot.slane %v5016, %v5137
        %v5139 = vlaneseq
        %v5140 = vshrl.u32 %v5139, 7
        %v5141 = vsub.s32 0, %v5140
        %v5142 = vrot.slane %v5030, %v5141
        %v5143 = vlaneseq
        %v5144 = vshrl.u32 %v5143, 7
        %v5145 = vsub.s32 1, %v5144
        %v5146 = vrot.slane %v5030, %v5145
        %v5147 = vlaneseq
        %v5148 = vshrl.u32 %v5147, 7
        %v5149 = vsub.s32 0, %v5148
        %v5150 = vrot.slane %v5032, %v5149
        %v5151 = vlaneseq
        %v5152 = vshrl.u32 %v5151, 7
        %v5153 = vsub.s32 1, %v5152
        %v5154 = vrot.slane %v5032, %v5153
        %v5155 = vlaneseq
        %v5156 = vshrl.u32 %v5155, 7
        %v5157 = vsub.s32 0, %v5156
        %v5158 = vrot.slane %v5034, %v5157
        %v5159 = vlaneseq
        %v5160 = vshrl.u32 %v5159, 7
        %v5161 = vsub.s32 1, %v5160
        %v5162 = vrot.slane %v5034, %v5161
        %v5195 = vmul.f32 %v4773, %v5038
        %v5196 = vmul.f32 %v4775, %v5042
        %v5197 = vmul.f32 %v4777, %v5038
        %v5198 = vmul.f32 %v4779, %v5042
        %v5199 = vmul.f32 %v4783, %v5046
        %v5200 = vmul.f32 %v4785, %v5050
        %v5201 = vmul.f32 %v4787, %v5046
        %v5202 = vmul.f32 %v4789, %v5050
        %v5203 = vmul.f32 %v4793, %v5054
        %v5204 = vmul.f32 %v4795, %v5058
        %v5205 = vmul.f32 %v4797, %v5054
        %v5206 = vmul.f32 %v4799, %v5058
        %v5207 = vmul.f32 %v4803, %v5062
        %v5208 = vmul.f32 %v4805, %v5066
        %v5209 = vmul.f32 %v4807, %v5062
        %v5210 = vmul.f32 %v4809, %v5066
        %v5211 = vmul.f32 %v4813, %v5070
        %v5212 = vmul.f32 %v4815, %v5074
        %v5213 = vmul.f32 %v4817, %v5070
        %v5214 = vmul.f32 %v4819, %v5074
        %v5215 = vmul.f32 %v4823, %v5078
        %v5216 = vmul.f32 %v4825, %v5082
        %v5217 = vmul.f32 %v4827, %v5078
        %v5218 = vmul.f32 %v4829, %v5082
        %v5219 = vmul.f32 %v4833, %v5086
        %v5220 = vmul.f32 %v4835, %v5090
        %v5221 = vmul.f32 %v4837, %v5086
        %v5222 = vmul.f32 %v4839, %v5090
        %v5223 = vmul.f32 %v4843, %v5094
        %v5224 = vmul.f32 %v4845, %v5098
        %v5225 = vmul.f32 %v4847, %v5094
        %v5226 = vmul.f32 %v4849, %v5098
        %v5227 = vmul.f32 %v4853, %v5102
        %v5228 = vmul.f32 %v4855, %v5106
        %v5229 = vmul.f32 %v4857, %v5102
        %v5230 = vmul.f32 %v4859, %v5106
        %v5231 = vmul.f32 %v4863, %v5110
        %v5232 = vmul.f32 %v4865, %v5114
        %v5233 = vmul.f32 %v4867, %v5110
        %v5234 = vmul.f32 %v4869, %v5114
        %v5235 = vmul.f32 %v4873, %v5118
        %v5236 = vmul.f32 %v4875, %v5122
        %v5237 = vmul.f32 %v4877, %v5118
        %v5238 = vmul.f32 %v4879, %v5122
        %v5239 = vmul.f32 %v4883, %v5126
        %v5240 = vmul.f32 %v4885, %v5130
        %v5241 = vmul.f32 %v4887, %v5126
        %v5242 = vmul.f32 %v4889, %v5130
        %v5243 = vmul.f32 %v4893, %v5134
        %v5244 = vmul.f32 %v4895, %v5138
        %v5245 = vmul.f32 %v4897, %v5134
        %v5246 = vmul.f32 %v4899, %v5138
        %v5247 = vmul.f32 %v4903, %v5142
        %v5248 = vmul.f32 %v4905, %v5146
        %v5249 = vmul.f32 %v4907, %v5142
        %v5250 = vmul.f32 %v4909, %v5146
        %v5251 = vmul.f32 %v4913, %v5150
        %v5252 = vmul.f32 %v4915, %v5154
        %v5253 = vmul.f32 %v4917, %v5150
        %v5254 = vmul.f32 %v4919, %v5154
        %v5255 = vmul.f32 %v4923, %v5158
        %v5256 = vmul.f32 %v4925, %v5162
        %v5257 = vmul.f32 %v4927, %v5158
        %v5258 = vmul.f32 %v4929, %v5162
        %v5259 = vadd.f32 %v5195, %v5199
        %v5260 = vadd.f32 %v5259, %v5203
        %v5261 = vadd.f32 %v5260, %v5207
        %v5262 = vadd.f32 %v5261, %v5211
        %v5263 = vadd.f32 %v5262, %v5215
        %v5264 = vadd.f32 %v5263, %v5219
        %v5265 = vadd.f32 %v5264, %v5223
        %v5266 = vadd.f32 %v5265, %v5227
        %v5267 = vadd.f32 %v5266, %v5231
        %v5268 = vadd.f32 %v5267, %v5235
        %v5269 = vadd.f32 %v5268, %v5239
        %v5270 = vadd.f32 %v5269, %v5243
        %v5271 = vadd.f32 %v5270, %v5247
        %v5272 = vadd.f32 %v5271, %v5251
        %v5273 = vadd.f32 %v5272, %v5255
        %v5274 = vadd.f32 %v5196, %v5200
        %v5275 = vadd.f32 %v5274, %v5204
        %v5276 = vadd.f32 %v5275, %v5208
        %v5277 = vadd.f32 %v5276, %v5212
        %v5278 = vadd.f32 %v5277, %v5216
        %v5279 = vadd.f32 %v5278, %v5220
        %v5280 = vadd.f32 %v5279, %v5224
        %v5281 = vadd.f32 %v5280, %v5228
        %v5282 = vadd.f32 %v5281, %v5232
        %v5283 = vadd.f32 %v5282, %v5236
        %v5284 = vadd.f32 %v5283, %v5240
        %v5285 = vadd.f32 %v5284, %v5244
        %v5286 = vadd.f32 %v5285, %v5248
        %v5287 = vadd.f32 %v5286, %v5252
        %v5288 = vadd.f32 %v5287, %v5256
        %v5289 = vadd.f32 %v5197, %v5201
        %v5290 = vadd.f32 %v5289, %v5205
        %v5291 = vadd.f32 %v5290, %v5209
        %v5292 = vadd.f32 %v5291, %v5213
        %v5293 = vadd.f32 %v5292, %v5217
        %v5294 = vadd.f32 %v5293, %v5221
        %v5295 = vadd.f32 %v5294, %v5225
        %v5296 = vadd.f32 %v5295, %v5229
        %v5297 = vadd.f32 %v5296, %v5233
        %v5298 = vadd.f32 %v5297, %v5237
        %v5299 = vadd.f32 %v5298, %v5241
        %v5300 = vadd.f32 %v5299, %v5245
        %v5301 = vadd.f32 %v5300, %v5249
        %v5302 = vadd.f32 %v5301, %v5253
        %v5303 = vadd.f32 %v5302, %v5257
        %v5304 = vadd.f32 %v5198, %v5202
        %v5305 = vadd.f32 %v5304, %v5206
        %v5306 = vadd.f32 %v5305, %v5210
        %v5307 = vadd.f32 %v5306, %v5214
        %v5308 = vadd.f32 %v5307, %v5218
        %v5309 = vadd.f32 %v5308, %v5222
        %v5310 = vadd.f32 %v5309, %v5226
        %v5311 = vadd.f32 %v5310, %v5230
        %v5312 = vadd.f32 %v5311, %v5234
        %v5313 = vadd.f32 %v5312, %v5238
        %v5314 = vadd.f32 %v5313, %v5242
        %v5315 = vadd.f32 %v5314, %v5246
        %v5316 = vadd.f32 %v5315, %v5250
        %v5317 = vadd.f32 %v5316, %v5254
        %v5318 = vadd.f32 %v5317, %v5258
        %v5319 = vpack.c.bf16 %v5303, %v5273
        %v5320 = vpack.c.bf16 %v5318, %v5288
        %5321 = vst [vmem:[#allocation2 + $0x60] sm:$0xff] %v5319
        %5322 = vst [vmem:[#allocation2 + $0x68] sm:$0xff] %v5320
        %v5323 = vlaneseq
        %v5324 = vshrl.u32 %v5323, 7
        %v5325 = vsub.s32 7, %v5324
        %v5326 = vrot.slane %v326, %v5325
        %v5327 = vlaneseq
        %v5328 = vshrl.u32 %v5327, 7
        %v5329 = vsub.s32 7, %v5328
        %v5330 = vrot.slane %v327, %v5329
        %vm5331 = vcmp.eq.s32.totalorder %v351, %v5326
        %vm5332 = vcmp.eq.s32.totalorder %v351, %v5330
        %vm5333 = vcmp.eq.s32.totalorder %v352, %v5326
        %vm5334 = vcmp.eq.s32.totalorder %v352, %v5330
        %v5335 = vlaneseq
        %v5336 = vshrl.u32 %v5335, 7
        %v5337 = vsub.s32 7, %v5336
        %v5338 = vrot.slane %v334, %v5337
        %v5339 = vlaneseq
        %v5340 = vshrl.u32 %v5339, 7
        %v5341 = vsub.s32 7, %v5340
        %v5342 = vrot.slane %v335, %v5341
        %v5343 = vsel %vm5331, %v5338, 0.0
        %v5344 = vsel %vm5332, %v5342, 0.0
        %v5345 = vsel %vm5333, %v5338, 0.0
        %v5346 = vsel %vm5334, %v5342, 0.0
        %v5347 = vlaneseq
        %v5348 = vshrl.u32 %v5347, 7
        %v5349 = vsub.s32 7, %v5348
        %v5350 = vrot.slane %v377, %v5349
        %v5351 = vlaneseq
        %v5352 = vshrl.u32 %v5351, 7
        %v5353 = vsub.s32 7, %v5352
        %v5354 = vrot.slane %v378, %v5353
        %vm5355 = vcmp.eq.s32.totalorder %v351, %v5350
        %vm5356 = vcmp.eq.s32.totalorder %v351, %v5354
        %vm5357 = vcmp.eq.s32.totalorder %v352, %v5350
        %vm5358 = vcmp.eq.s32.totalorder %v352, %v5354
        %v5359 = vlaneseq
        %v5360 = vshrl.u32 %v5359, 7
        %v5361 = vsub.s32 7, %v5360
        %v5362 = vrot.slane %v318, %v5361
        %v5363 = vlaneseq
        %v5364 = vshrl.u32 %v5363, 7
        %v5365 = vsub.s32 7, %v5364
        %v5366 = vrot.slane %v319, %v5365
        %v5367 = vsel %vm5355, %v5362, 0.0
        %v5368 = vsel %vm5356, %v5366, 0.0
        %v5369 = vsel %vm5357, %v5362, 0.0
        %v5370 = vsel %vm5358, %v5366, 0.0
        %v5371 = vadd.f32 %v5343, %v5367
        %v5372 = vadd.f32 %v5344, %v5368
        %v5373 = vadd.f32 %v5345, %v5369
        %v5374 = vadd.f32 %v5346, %v5370
        %v5375 = vlaneseq
        %v5376 = vshrl.u32 %v5375, 7
        %v5377 = vsub.s32 7, %v5376
        %v5378 = vrot.slane %v330, %v5377
        %v5379 = vlaneseq
        %v5380 = vshrl.u32 %v5379, 7
        %v5381 = vsub.s32 7, %v5380
        %v5382 = vrot.slane %v331, %v5381
        %vm5383 = vcmp.eq.s32.totalorder %v351, %v5378
        %vm5384 = vcmp.eq.s32.totalorder %v351, %v5382
        %vm5385 = vcmp.eq.s32.totalorder %v352, %v5378
        %vm5386 = vcmp.eq.s32.totalorder %v352, %v5382
        %v5387 = vlaneseq
        %v5388 = vshrl.u32 %v5387, 7
        %v5389 = vsub.s32 7, %v5388
        %v5390 = vrot.slane %v342, %v5389
        %v5391 = vlaneseq
        %v5392 = vshrl.u32 %v5391, 7
        %v5393 = vsub.s32 7, %v5392
        %v5394 = vrot.slane %v343, %v5393
        %v5395 = vsel %vm5383, %v5390, 0.0
        %v5396 = vsel %vm5384, %v5394, 0.0
        %v5397 = vsel %vm5385, %v5390, 0.0
        %v5398 = vsel %vm5386, %v5394, 0.0
        %v5399 = vlaneseq
        %v5400 = vshrl.u32 %v5399, 7
        %v5401 = vsub.s32 7, %v5400
        %v5402 = vrot.slane %v431, %v5401
        %v5403 = vlaneseq
        %v5404 = vshrl.u32 %v5403, 7
        %v5405 = vsub.s32 7, %v5404
        %v5406 = vrot.slane %v432, %v5405
        %vm5407 = vcmp.eq.s32.totalorder %v351, %v5402
        %vm5408 = vcmp.eq.s32.totalorder %v351, %v5406
        %vm5409 = vcmp.eq.s32.totalorder %v352, %v5402
        %vm5410 = vcmp.eq.s32.totalorder %v352, %v5406
        %v5411 = vlaneseq
        %v5412 = vshrl.u32 %v5411, 7
        %v5413 = vsub.s32 7, %v5412
        %v5414 = vrot.slane %v346, %v5413
        %v5415 = vlaneseq
        %v5416 = vshrl.u32 %v5415, 7
        %v5417 = vsub.s32 7, %v5416
        %v5418 = vrot.slane %v347, %v5417
        %v5419 = vsel %vm5407, %v5414, 0.0
        %v5420 = vsel %vm5408, %v5418, 0.0
        %v5421 = vsel %vm5409, %v5414, 0.0
        %v5422 = vsel %vm5410, %v5418, 0.0
        %v5423 = vadd.f32 %v5395, %v5419
        %v5424 = vadd.f32 %v5396, %v5420
        %v5425 = vadd.f32 %v5397, %v5421
        %v5426 = vadd.f32 %v5398, %v5422
        %v5427 = vpack.c.bf16 %v5373, %v5371
        %v5428 = vpack.c.bf16 %v5374, %v5372
        %5429 = vmatprep.subr.bf16.mxu0 %v5428
        %5430 = vmatpush1.bf16.msra.mxu0 %v5427
        %5431 = vmatprep.subr.bf16.mxu0 0
        %5432 = vmatpush1.bf16.msra.mxu0 0
        %5433 = vmatprep.subr.bf16.mxu0 0
        %5434 = vmatpush1.bf16.msra.mxu0 0
        %5435 = vmatprep.subr.bf16.mxu0 0
        %5436 = vmatpush1.bf16.msra.mxu0 0
        %5437 = vmatprep.subr.bf16.mxu0 0
        %5438 = vmatpush1.bf16.msra.mxu0 0
        %5439 = vmatprep.subr.bf16.mxu0 0
        %5440 = vmatpush1.bf16.msra.mxu0 0
        %5441 = vmatprep.subr.bf16.mxu0 0
        %5442 = vmatpush1.bf16.msra.mxu0 0
        %5443 = vmatprep.subr.bf16.mxu0 0
        %5444 = vmatpush1.bf16.msra.mxu0 0
        %5445 = vmatprep.subr.bf16.mxu0 0
        %5446 = vmatpush1.bf16.msra.mxu0 0
        %5447 = vmatprep.subr.bf16.mxu0 0
        %5448 = vmatpush1.bf16.msra.mxu0 0
        %5449 = vmatprep.subr.bf16.mxu0 0
        %5450 = vmatpush1.bf16.msra.mxu0 0
        %5451 = vmatprep.subr.bf16.mxu0 0
        %5452 = vmatpush1.bf16.msra.mxu0 0
        %5453 = vmatprep.subr.bf16.mxu0 0
        %5454 = vmatpush1.bf16.msra.mxu0 0
        %5455 = vmatprep.subr.bf16.mxu0 0
        %5456 = vmatpush1.bf16.msra.mxu0 0
        %5457 = vmatprep.subr.bf16.mxu0 0
        %5458 = vmatpush1.bf16.msra.mxu0 0
        %5459 = vmatprep.subr.bf16.mxu0 0
        %5460 = vmatpush1.bf16.msra.mxu0 0
        %5461 = vmatprep.mubr.bf16.mxu0 0
        %5462 = vmatmul.mubr.bf16.gmra.mrb[0].mxu0 %v545
        %v5463 = vpop.f32.mrb[0].mxu0
        %v5464 = vadd.f32 0.0, %v5463
        %v5465 = vpop.f32.mrb[0].mxu0
        %v5466 = vadd.f32 0.0, %v5465
        %v5467 = vpop.f32.mrb[0].mxu0
        %v5468 = vadd.f32 0.0, %v5467
        %v5469 = vpop.f32.mrb[0].mxu0
        %v5470 = vadd.f32 0.0, %v5469
        %5471 = vmatprep.mubr.bf16.mxu0 0
        %5472 = vmatmul.mubr.bf16.gmra.mrb[0].mxu0 %v548
        %v5473 = vpop.f32.mrb[0].mxu0
        %v5474 = vadd.f32 0.0, %v5473
        %v5475 = vpop.f32.mrb[0].mxu0
        %v5476 = vadd.f32 0.0, %v5475
        %v5477 = vpop.f32.mrb[0].mxu0
        %v5478 = vadd.f32 0.0, %v5477
        %v5479 = vpop.f32.mrb[0].mxu0
        %v5480 = vadd.f32 0.0, %v5479
        %5481 = vmatprep.mubr.bf16.mxu0 0
        %5482 = vmatmul.mubr.bf16.gmra.mrb[0].mxu0 %v551
        %v5483 = vpop.f32.mrb[0].mxu0
        %v5484 = vadd.f32 0.0, %v5483
        %v5485 = vpop.f32.mrb[0].mxu0
        %v5486 = vadd.f32 0.0, %v5485
        %v5487 = vpop.f32.mrb[0].mxu0
        %v5488 = vadd.f32 0.0, %v5487
        %v5489 = vpop.f32.mrb[0].mxu0
        %v5490 = vadd.f32 0.0, %v5489
        %5491 = vmatprep.mubr.bf16.mxu0 0
        %5492 = vmatmul.mubr.bf16.gmra.mrb[0].mxu0 %v554
        %v5493 = vpop.f32.mrb[0].mxu0
        %v5494 = vadd.f32 0.0, %v5493
        %v5495 = vpop.f32.mrb[0].mxu0
        %v5496 = vadd.f32 0.0, %v5495
        %v5497 = vpop.f32.mrb[0].mxu0
        %v5498 = vadd.f32 0.0, %v5497
        %v5499 = vpop.f32.mrb[0].mxu0
        %v5500 = vadd.f32 0.0, %v5499
        %5501 = vmatprep.mubr.bf16.mxu0 0
        %5502 = vmatmul.mubr.bf16.gmra.mrb[0].mxu0 %v557
        %v5503 = vpop.f32.mrb[0].mxu0
        %v5504 = vadd.f32 0.0, %v5503
        %v5505 = vpop.f32.mrb[0].mxu0
        %v5506 = vadd.f32 0.0, %v5505
        %v5507 = vpop.f32.mrb[0].mxu0
        %v5508 = vadd.f32 0.0, %v5507
        %v5509 = vpop.f32.mrb[0].mxu0
        %v5510 = vadd.f32 0.0, %v5509
        %5511 = vmatprep.mubr.bf16.mxu0 0
        %5512 = vmatmul.mubr.bf16.gmra.mrb[0].mxu0 %v560
        %v5513 = vpop.f32.mrb[0].mxu0
        %v5514 = vadd.f32 0.0, %v5513
        %v5515 = vpop.f32.mrb[0].mxu0
        %v5516 = vadd.f32 0.0, %v5515
        %v5517 = vpop.f32.mrb[0].mxu0
        %v5518 = vadd.f32 0.0, %v5517
        %v5519 = vpop.f32.mrb[0].mxu0
        %v5520 = vadd.f32 0.0, %v5519
        %5521 = vmatprep.mubr.bf16.mxu0 0
        %5522 = vmatmul.mubr.bf16.gmra.mrb[0].mxu0 %v563
        %v5523 = vpop.f32.mrb[0].mxu0
        %v5524 = vadd.f32 0.0, %v5523
        %v5525 = vpop.f32.mrb[0].mxu0
        %v5526 = vadd.f32 0.0, %v5525
        %v5527 = vpop.f32.mrb[0].mxu0
        %v5528 = vadd.f32 0.0, %v5527
        %v5529 = vpop.f32.mrb[0].mxu0
        %v5530 = vadd.f32 0.0, %v5529
        %5531 = vmatprep.mubr.bf16.mxu0 0
        %5532 = vmatmul.mubr.bf16.gmra.mrb[0].mxu0 %v566
        %v5533 = vpop.f32.mrb[0].mxu0
        %v5534 = vadd.f32 0.0, %v5533
        %v5535 = vpop.f32.mrb[0].mxu0
        %v5536 = vadd.f32 0.0, %v5535
        %v5537 = vpop.f32.mrb[0].mxu0
        %v5538 = vadd.f32 0.0, %v5537
        %v5539 = vpop.f32.mrb[0].mxu0
        %v5540 = vadd.f32 0.0, %v5539
        %5541 = vmatprep.mubr.bf16.mxu0 0
        %5542 = vmatmul.mubr.bf16.gmra.mrb[0].mxu0 %v569
        %v5543 = vpop.f32.mrb[0].mxu0
        %v5544 = vadd.f32 0.0, %v5543
        %v5545 = vpop.f32.mrb[0].mxu0
        %v5546 = vadd.f32 0.0, %v5545
        %v5547 = vpop.f32.mrb[0].mxu0
        %v5548 = vadd.f32 0.0, %v5547
        %v5549 = vpop.f32.mrb[0].mxu0
        %v5550 = vadd.f32 0.0, %v5549
        %5551 = vmatprep.mubr.bf16.mxu0 0
        %5552 = vmatmul.mubr.bf16.gmra.mrb[0].mxu0 %v572
        %v5553 = vpop.f32.mrb[0].mxu0
        %v5554 = vadd.f32 0.0, %v5553
        %v5555 = vpop.f32.mrb[0].mxu0
        %v5556 = vadd.f32 0.0, %v5555
        %v5557 = vpop.f32.mrb[0].mxu0
        %v5558 = vadd.f32 0.0, %v5557
        %v5559 = vpop.f32.mrb[0].mxu0
        %v5560 = vadd.f32 0.0, %v5559
        %5561 = vmatprep.mubr.bf16.mxu0 0
        %5562 = vmatmul.mubr.bf16.gmra.mrb[0].mxu0 %v575
        %v5563 = vpop.f32.mrb[0].mxu0
        %v5564 = vadd.f32 0.0, %v5563
        %v5565 = vpop.f32.mrb[0].mxu0
        %v5566 = vadd.f32 0.0, %v5565
        %v5567 = vpop.f32.mrb[0].mxu0
        %v5568 = vadd.f32 0.0, %v5567
        %v5569 = vpop.f32.mrb[0].mxu0
        %v5570 = vadd.f32 0.0, %v5569
        %5571 = vmatprep.mubr.bf16.mxu0 0
        %5572 = vmatmul.mubr.bf16.gmra.mrb[0].mxu0 %v578
        %v5573 = vpop.f32.mrb[0].mxu0
        %v5574 = vadd.f32 0.0, %v5573
        %v5575 = vpop.f32.mrb[0].mxu0
        %v5576 = vadd.f32 0.0, %v5575
        %v5577 = vpop.f32.mrb[0].mxu0
        %v5578 = vadd.f32 0.0, %v5577
        %v5579 = vpop.f32.mrb[0].mxu0
        %v5580 = vadd.f32 0.0, %v5579
        %5581 = vmatprep.mubr.bf16.mxu0 0
        %5582 = vmatmul.mubr.bf16.gmra.mrb[0].mxu0 %v581
        %v5583 = vpop.f32.mrb[0].mxu0
        %v5584 = vadd.f32 0.0, %v5583
        %v5585 = vpop.f32.mrb[0].mxu0
        %v5586 = vadd.f32 0.0, %v5585
        %v5587 = vpop.f32.mrb[0].mxu0
        %v5588 = vadd.f32 0.0, %v5587
        %v5589 = vpop.f32.mrb[0].mxu0
        %v5590 = vadd.f32 0.0, %v5589
        %5591 = vmatprep.mubr.bf16.mxu0 0
        %5592 = vmatmul.mubr.bf16.gmra.mrb[0].mxu0 %v584
        %v5593 = vpop.f32.mrb[0].mxu0
        %v5594 = vadd.f32 0.0, %v5593
        %v5595 = vpop.f32.mrb[0].mxu0
        %v5596 = vadd.f32 0.0, %v5595
        %v5597 = vpop.f32.mrb[0].mxu0
        %v5598 = vadd.f32 0.0, %v5597
        %v5599 = vpop.f32.mrb[0].mxu0
        %v5600 = vadd.f32 0.0, %v5599
        %5601 = vmatprep.mubr.bf16.mxu0 0
        %5602 = vmatmul.mubr.bf16.gmra.mrb[0].mxu0 %v587
        %v5603 = vpop.f32.mrb[0].mxu0
        %v5604 = vadd.f32 0.0, %v5603
        %v5605 = vpop.f32.mrb[0].mxu0
        %v5606 = vadd.f32 0.0, %v5605
        %v5607 = vpop.f32.mrb[0].mxu0
        %v5608 = vadd.f32 0.0, %v5607
        %v5609 = vpop.f32.mrb[0].mxu0
        %v5610 = vadd.f32 0.0, %v5609
        %5611 = vmatprep.mubr.bf16.mxu0 0
        %5612 = vmatmul.mubr.bf16.gmra.mrb[0].mxu0 %v590
        %v5613 = vpop.f32.mrb[0].mxu0
        %v5614 = vadd.f32 0.0, %v5613
        %v5615 = vpop.f32.mrb[0].mxu0
        %v5616 = vadd.f32 0.0, %v5615
        %v5617 = vpop.f32.mrb[0].mxu0
        %v5618 = vadd.f32 0.0, %v5617
        %v5619 = vpop.f32.mrb[0].mxu0
        %v5620 = vadd.f32 0.0, %v5619
        %5621 = vdwg.mxu0
        %v5626 = vcombine.low %v5423, %v5424
        %v5627 = vcombine.high %v5423, %v5424
        %v5629 = vunpack.c.l.s4 1966171168
        %v5630 = vunpack.c.0.s8 %v5629
        %v5631 = vlaneseq
        %v5632 = vshrl.u32 %v5631, 7
        %v5633 = vsub.s32 %v5630, %v5632
        %v5634 = vrot.slane %v5626, %v5633
        %v5636 = vunpack.c.l.s4 1966171168
        %v5637 = vunpack.c.0.s8 %v5636
        %v5638 = vlaneseq
        %v5639 = vshrl.u32 %v5638, 7
        %v5640 = vsub.s32 %v5637, %v5639
        %v5641 = vrot.slane %v5627, %v5640
        %v5642 = vcombine.high %v5634, %v5634
        %v5643 = vcombine.high %v5641, %v5641
        %v5645 = vunpack.c.l.s4 1966171168
        %v5646 = vunpack.c.0.s8 %v5645
        %v5647 = vlaneseq
        %v5648 = vshrl.u32 %v5647, 7
        %v5649 = vsub.s32 %v5646, %v5648
        %v5650 = vrot.slane %v5634, %v5649
        %v5652 = vunpack.c.l.s4 1966171168
        %v5653 = vunpack.c.0.s8 %v5652
        %v5654 = vlaneseq
        %v5655 = vshrl.u32 %v5654, 7
        %v5656 = vsub.s32 %v5653, %v5655
        %v5657 = vrot.slane %v5641, %v5656
        %v5659 = vunpack.c.l.s4 1966171168
        %v5660 = vunpack.c.0.s8 %v5659
        %v5661 = vlaneseq
        %v5662 = vshrl.u32 %v5661, 7
        %v5663 = vsub.s32 %v5660, %v5662
        %v5664 = vrot.slane %v5642, %v5663
        %v5666 = vunpack.c.l.s4 1966171168
        %v5667 = vunpack.c.0.s8 %v5666
        %v5668 = vlaneseq
        %v5669 = vshrl.u32 %v5668, 7
        %v5670 = vsub.s32 %v5667, %v5669
        %v5671 = vrot.slane %v5643, %v5670
        %v5672 = vcombine.high %v5650, %v5650
        %v5673 = vcombine.high %v5657, %v5657
        %v5674 = vcombine.high %v5664, %v5664
        %v5675 = vcombine.high %v5671, %v5671
        %v5676 = vcombine.low %v5425, %v5426
        %v5677 = vcombine.high %v5425, %v5426
        %v5679 = vunpack.c.l.s4 1966171168
        %v5680 = vunpack.c.0.s8 %v5679
        %v5681 = vlaneseq
        %v5682 = vshrl.u32 %v5681, 7
        %v5683 = vsub.s32 %v5680, %v5682
        %v5684 = vrot.slane %v5676, %v5683
        %v5686 = vunpack.c.l.s4 1966171168
        %v5687 = vunpack.c.0.s8 %v5686
        %v5688 = vlaneseq
        %v5689 = vshrl.u32 %v5688, 7
        %v5690 = vsub.s32 %v5687, %v5689
        %v5691 = vrot.slane %v5677, %v5690
        %v5692 = vcombine.high %v5684, %v5684
        %v5693 = vcombine.high %v5691, %v5691
        %v5695 = vunpack.c.l.s4 1966171168
        %v5696 = vunpack.c.0.s8 %v5695
        %v5697 = vlaneseq
        %v5698 = vshrl.u32 %v5697, 7
        %v5699 = vsub.s32 %v5696, %v5698
        %v5700 = vrot.slane %v5684, %v5699
        %v5702 = vunpack.c.l.s4 1966171168
        %v5703 = vunpack.c.0.s8 %v5702
        %v5704 = vlaneseq
        %v5705 = vshrl.u32 %v5704, 7
        %v5706 = vsub.s32 %v5703, %v5705
        %v5707 = vrot.slane %v5691, %v5706
        %v5709 = vunpack.c.l.s4 1966171168
        %v5710 = vunpack.c.0.s8 %v5709
        %v5711 = vlaneseq
        %v5712 = vshrl.u32 %v5711, 7
        %v5713 = vsub.s32 %v5710, %v5712
        %v5714 = vrot.slane %v5692, %v5713
        %v5716 = vunpack.c.l.s4 1966171168
        %v5717 = vunpack.c.0.s8 %v5716
        %v5718 = vlaneseq
        %v5719 = vshrl.u32 %v5718, 7
        %v5720 = vsub.s32 %v5717, %v5719
        %v5721 = vrot.slane %v5693, %v5720
        %v5722 = vcombine.high %v5700, %v5700
        %v5723 = vcombine.high %v5707, %v5707
        %v5724 = vcombine.high %v5714, %v5714
        %v5725 = vcombine.high %v5721, %v5721
        %v5726 = vlaneseq
        %v5727 = vshrl.u32 %v5726, 7
        %v5728 = vsub.s32 0, %v5727
        %v5729 = vrot.slane %v5650, %v5728
        %v5730 = vlaneseq
        %v5731 = vshrl.u32 %v5730, 7
        %v5732 = vsub.s32 1, %v5731
        %v5733 = vrot.slane %v5650, %v5732
        %v5734 = vlaneseq
        %v5735 = vshrl.u32 %v5734, 7
        %v5736 = vsub.s32 0, %v5735
        %v5737 = vrot.slane %v5664, %v5736
        %v5738 = vlaneseq
        %v5739 = vshrl.u32 %v5738, 7
        %v5740 = vsub.s32 1, %v5739
        %v5741 = vrot.slane %v5664, %v5740
        %v5742 = vlaneseq
        %v5743 = vshrl.u32 %v5742, 7
        %v5744 = vsub.s32 0, %v5743
        %v5745 = vrot.slane %v5672, %v5744
        %v5746 = vlaneseq
        %v5747 = vshrl.u32 %v5746, 7
        %v5748 = vsub.s32 1, %v5747
        %v5749 = vrot.slane %v5672, %v5748
        %v5750 = vlaneseq
        %v5751 = vshrl.u32 %v5750, 7
        %v5752 = vsub.s32 0, %v5751
        %v5753 = vrot.slane %v5674, %v5752
        %v5754 = vlaneseq
        %v5755 = vshrl.u32 %v5754, 7
        %v5756 = vsub.s32 1, %v5755
        %v5757 = vrot.slane %v5674, %v5756
        %v5758 = vlaneseq
        %v5759 = vshrl.u32 %v5758, 7
        %v5760 = vsub.s32 0, %v5759
        %v5761 = vrot.slane %v5657, %v5760
        %v5762 = vlaneseq
        %v5763 = vshrl.u32 %v5762, 7
        %v5764 = vsub.s32 1, %v5763
        %v5765 = vrot.slane %v5657, %v5764
        %v5766 = vlaneseq
        %v5767 = vshrl.u32 %v5766, 7
        %v5768 = vsub.s32 0, %v5767
        %v5769 = vrot.slane %v5671, %v5768
        %v5770 = vlaneseq
        %v5771 = vshrl.u32 %v5770, 7
        %v5772 = vsub.s32 1, %v5771
        %v5773 = vrot.slane %v5671, %v5772
        %v5774 = vlaneseq
        %v5775 = vshrl.u32 %v5774, 7
        %v5776 = vsub.s32 0, %v5775
        %v5777 = vrot.slane %v5673, %v5776
        %v5778 = vlaneseq
        %v5779 = vshrl.u32 %v5778, 7
        %v5780 = vsub.s32 1, %v5779
        %v5781 = vrot.slane %v5673, %v5780
        %v5782 = vlaneseq
        %v5783 = vshrl.u32 %v5782, 7
        %v5784 = vsub.s32 0, %v5783
        %v5785 = vrot.slane %v5675, %v5784
        %v5786 = vlaneseq
        %v5787 = vshrl.u32 %v5786, 7
        %v5788 = vsub.s32 1, %v5787
        %v5789 = vrot.slane %v5675, %v5788
        %v5790 = vlaneseq
        %v5791 = vshrl.u32 %v5790, 7
        %v5792 = vsub.s32 0, %v5791
        %v5793 = vrot.slane %v5700, %v5792
        %v5794 = vlaneseq
        %v5795 = vshrl.u32 %v5794, 7
        %v5796 = vsub.s32 1, %v5795
        %v5797 = vrot.slane %v5700, %v5796
        %v5798 = vlaneseq
        %v5799 = vshrl.u32 %v5798, 7
        %v5800 = vsub.s32 0, %v5799
        %v5801 = vrot.slane %v5714, %v5800
        %v5802 = vlaneseq
        %v5803 = vshrl.u32 %v5802, 7
        %v5804 = vsub.s32 1, %v5803
        %v5805 = vrot.slane %v5714, %v5804
        %v5806 = vlaneseq
        %v5807 = vshrl.u32 %v5806, 7
        %v5808 = vsub.s32 0, %v5807
        %v5809 = vrot.slane %v5722, %v5808
        %v5810 = vlaneseq
        %v5811 = vshrl.u32 %v5810, 7
        %v5812 = vsub.s32 1, %v5811
        %v5813 = vrot.slane %v5722, %v5812
        %v5814 = vlaneseq
        %v5815 = vshrl.u32 %v5814, 7
        %v5816 = vsub.s32 0, %v5815
        %v5817 = vrot.slane %v5724, %v5816
        %v5818 = vlaneseq
        %v5819 = vshrl.u32 %v5818, 7
        %v5820 = vsub.s32 1, %v5819
        %v5821 = vrot.slane %v5724, %v5820
        %v5822 = vlaneseq
        %v5823 = vshrl.u32 %v5822, 7
        %v5824 = vsub.s32 0, %v5823
        %v5825 = vrot.slane %v5707, %v5824
        %v5826 = vlaneseq
        %v5827 = vshrl.u32 %v5826, 7
        %v5828 = vsub.s32 1, %v5827
        %v5829 = vrot.slane %v5707, %v5828
        %v5830 = vlaneseq
        %v5831 = vshrl.u32 %v5830, 7
        %v5832 = vsub.s32 0, %v5831
        %v5833 = vrot.slane %v5721, %v5832
        %v5834 = vlaneseq
        %v5835 = vshrl.u32 %v5834, 7
        %v5836 = vsub.s32 1, %v5835
        %v5837 = vrot.slane %v5721, %v5836
        %v5838 = vlaneseq
        %v5839 = vshrl.u32 %v5838, 7
        %v5840 = vsub.s32 0, %v5839
        %v5841 = vrot.slane %v5723, %v5840
        %v5842 = vlaneseq
        %v5843 = vshrl.u32 %v5842, 7
        %v5844 = vsub.s32 1, %v5843
        %v5845 = vrot.slane %v5723, %v5844
        %v5846 = vlaneseq
        %v5847 = vshrl.u32 %v5846, 7
        %v5848 = vsub.s32 0, %v5847
        %v5849 = vrot.slane %v5725, %v5848
        %v5850 = vlaneseq
        %v5851 = vshrl.u32 %v5850, 7
        %v5852 = vsub.s32 1, %v5851
        %v5853 = vrot.slane %v5725, %v5852
        %v5886 = vmul.f32 %v5464, %v5729
        %v5887 = vmul.f32 %v5466, %v5733
        %v5888 = vmul.f32 %v5468, %v5729
        %v5889 = vmul.f32 %v5470, %v5733
        %v5890 = vmul.f32 %v5474, %v5737
        %v5891 = vmul.f32 %v5476, %v5741
        %v5892 = vmul.f32 %v5478, %v5737
        %v5893 = vmul.f32 %v5480, %v5741
        %v5894 = vmul.f32 %v5484, %v5745
        %v5895 = vmul.f32 %v5486, %v5749
        %v5896 = vmul.f32 %v5488, %v5745
        %v5897 = vmul.f32 %v5490, %v5749
        %v5898 = vmul.f32 %v5494, %v5753
        %v5899 = vmul.f32 %v5496, %v5757
        %v5900 = vmul.f32 %v5498, %v5753
        %v5901 = vmul.f32 %v5500, %v5757
        %v5902 = vmul.f32 %v5504, %v5761
        %v5903 = vmul.f32 %v5506, %v5765
        %v5904 = vmul.f32 %v5508, %v5761
        %v5905 = vmul.f32 %v5510, %v5765
        %v5906 = vmul.f32 %v5514, %v5769
        %v5907 = vmul.f32 %v5516, %v5773
        %v5908 = vmul.f32 %v5518, %v5769
        %v5909 = vmul.f32 %v5520, %v5773
        %v5910 = vmul.f32 %v5524, %v5777
        %v5911 = vmul.f32 %v5526, %v5781
        %v5912 = vmul.f32 %v5528, %v5777
        %v5913 = vmul.f32 %v5530, %v5781
        %v5914 = vmul.f32 %v5534, %v5785
        %v5915 = vmul.f32 %v5536, %v5789
        %v5916 = vmul.f32 %v5538, %v5785
        %v5917 = vmul.f32 %v5540, %v5789
        %v5918 = vmul.f32 %v5544, %v5793
        %v5919 = vmul.f32 %v5546, %v5797
        %v5920 = vmul.f32 %v5548, %v5793
        %v5921 = vmul.f32 %v5550, %v5797
        %v5922 = vmul.f32 %v5554, %v5801
        %v5923 = vmul.f32 %v5556, %v5805
        %v5924 = vmul.f32 %v5558, %v5801
        %v5925 = vmul.f32 %v5560, %v5805
        %v5926 = vmul.f32 %v5564, %v5809
        %v5927 = vmul.f32 %v5566, %v5813
        %v5928 = vmul.f32 %v5568, %v5809
        %v5929 = vmul.f32 %v5570, %v5813
        %v5930 = vmul.f32 %v5574, %v5817
        %v5931 = vmul.f32 %v5576, %v5821
        %v5932 = vmul.f32 %v5578, %v5817
        %v5933 = vmul.f32 %v5580, %v5821
        %v5934 = vmul.f32 %v5584, %v5825
        %v5935 = vmul.f32 %v5586, %v5829
        %v5936 = vmul.f32 %v5588, %v5825
        %v5937 = vmul.f32 %v5590, %v5829
        %v5938 = vmul.f32 %v5594, %v5833
        %v5939 = vmul.f32 %v5596, %v5837
        %v5940 = vmul.f32 %v5598, %v5833
        %v5941 = vmul.f32 %v5600, %v5837
        %v5942 = vmul.f32 %v5604, %v5841
        %v5943 = vmul.f32 %v5606, %v5845
        %v5944 = vmul.f32 %v5608, %v5841
        %v5945 = vmul.f32 %v5610, %v5845
        %v5946 = vmul.f32 %v5614, %v5849
        %v5947 = vmul.f32 %v5616, %v5853
        %v5948 = vmul.f32 %v5618, %v5849
        %v5949 = vmul.f32 %v5620, %v5853
        %v5950 = vadd.f32 %v5886, %v5890
        %v5951 = vadd.f32 %v5950, %v5894
        %v5952 = vadd.f32 %v5951, %v5898
        %v5953 = vadd.f32 %v5952, %v5902
        %v5954 = vadd.f32 %v5953, %v5906
        %v5955 = vadd.f32 %v5954, %v5910
        %v5956 = vadd.f32 %v5955, %v5914
        %v5957 = vadd.f32 %v5956, %v5918
        %v5958 = vadd.f32 %v5957, %v5922
        %v5959 = vadd.f32 %v5958, %v5926
        %v5960 = vadd.f32 %v5959, %v5930
        %v5961 = vadd.f32 %v5960, %v5934
        %v5962 = vadd.f32 %v5961, %v5938
        %v5963 = vadd.f32 %v5962, %v5942
        %v5964 = vadd.f32 %v5963, %v5946
        %v5965 = vadd.f32 %v5887, %v5891
        %v5966 = vadd.f32 %v5965, %v5895
        %v5967 = vadd.f32 %v5966, %v5899
        %v5968 = vadd.f32 %v5967, %v5903
        %v5969 = vadd.f32 %v5968, %v5907
        %v5970 = vadd.f32 %v5969, %v5911
        %v5971 = vadd.f32 %v5970, %v5915
        %v5972 = vadd.f32 %v5971, %v5919
        %v5973 = vadd.f32 %v5972, %v5923
        %v5974 = vadd.f32 %v5973, %v5927
        %v5975 = vadd.f32 %v5974, %v5931
        %v5976 = vadd.f32 %v5975, %v5935
        %v5977 = vadd.f32 %v5976, %v5939
        %v5978 = vadd.f32 %v5977, %v5943
        %v5979 = vadd.f32 %v5978, %v5947
        %v5980 = vadd.f32 %v5888, %v5892
        %v5981 = vadd.f32 %v5980, %v5896
        %v5982 = vadd.f32 %v5981, %v5900
        %v5983 = vadd.f32 %v5982, %v5904
        %v5984 = vadd.f32 %v5983, %v5908
        %v5985 = vadd.f32 %v5984, %v5912
        %v5986 = vadd.f32 %v5985, %v5916
        %v5987 = vadd.f32 %v5986, %v5920
        %v5988 = vadd.f32 %v5987, %v5924
        %v5989 = vadd.f32 %v5988, %v5928
        %v5990 = vadd.f32 %v5989, %v5932
        %v5991 = vadd.f32 %v5990, %v5936
        %v5992 = vadd.f32 %v5991, %v5940
        %v5993 = vadd.f32 %v5992, %v5944
        %v5994 = vadd.f32 %v5993, %v5948
        %v5995 = vadd.f32 %v5889, %v5893
        %v5996 = vadd.f32 %v5995, %v5897
        %v5997 = vadd.f32 %v5996, %v5901
        %v5998 = vadd.f32 %v5997, %v5905
        %v5999 = vadd.f32 %v5998, %v5909
        %v6000 = vadd.f32 %v5999, %v5913
        %v6001 = vadd.f32 %v6000, %v5917
        %v6002 = vadd.f32 %v6001, %v5921
        %v6003 = vadd.f32 %v6002, %v5925
        %v6004 = vadd.f32 %v6003, %v5929
        %v6005 = vadd.f32 %v6004, %v5933
        %v6006 = vadd.f32 %v6005, %v5937
        %v6007 = vadd.f32 %v6006, %v5941
        %v6008 = vadd.f32 %v6007, %v5945
        %v6009 = vadd.f32 %v6008, %v5949
        %v6010 = vpack.c.bf16 %v5994, %v5964
        %v6011 = vpack.c.bf16 %v6009, %v5979
        %6012 = vst [vmem:[#allocation2 + $0x70] sm:$0xff] %v6010
        %6013 = vst [vmem:[#allocation2 + $0x78] sm:$0xff] %v6011
        %v6014 = vlaneseq
        %v6015 = vshrl.u32 %v6014, 7
        %v6016 = vsub.s32 0, %v6015
        %v6017 = vrot.slane %v328, %v6016
        %v6018 = vlaneseq
        %v6019 = vshrl.u32 %v6018, 7
        %v6020 = vsub.s32 0, %v6019
        %v6021 = vrot.slane %v329, %v6020
        %vm6022 = vcmp.eq.s32.totalorder %v351, %v6017
        %vm6023 = vcmp.eq.s32.totalorder %v351, %v6021
        %vm6024 = vcmp.eq.s32.totalorder %v352, %v6017
        %vm6025 = vcmp.eq.s32.totalorder %v352, %v6021
        %v6026 = vlaneseq
        %v6027 = vshrl.u32 %v6026, 7
        %v6028 = vsub.s32 0, %v6027
        %v6029 = vrot.slane %v336, %v6028
        %v6030 = vlaneseq
        %v6031 = vshrl.u32 %v6030, 7
        %v6032 = vsub.s32 0, %v6031
        %v6033 = vrot.slane %v337, %v6032
        %v6034 = vsel %vm6022, %v6029, 0.0
        %v6035 = vsel %vm6023, %v6033, 0.0
        %v6036 = vsel %vm6024, %v6029, 0.0
        %v6037 = vsel %vm6025, %v6033, 0.0
        %v6038 = vadd.s32 %v328, 1
        %v6039 = vadd.s32 %v329, 1
        %v6040 = vlaneseq
        %v6041 = vshrl.u32 %v6040, 7
        %v6042 = vsub.s32 0, %v6041
        %v6043 = vrot.slane %v6038, %v6042
        %v6044 = vlaneseq
        %v6045 = vshrl.u32 %v6044, 7
        %v6046 = vsub.s32 0, %v6045
        %v6047 = vrot.slane %v6039, %v6046
        %vm6048 = vcmp.eq.s32.totalorder %v351, %v6043
        %vm6049 = vcmp.eq.s32.totalorder %v351, %v6047
        %vm6050 = vcmp.eq.s32.totalorder %v352, %v6043
        %vm6051 = vcmp.eq.s32.totalorder %v352, %v6047
        %v6052 = vlaneseq
        %v6053 = vshrl.u32 %v6052, 7
        %v6054 = vsub.s32 0, %v6053
        %v6055 = vrot.slane %v320, %v6054
        %v6056 = vlaneseq
        %v6057 = vshrl.u32 %v6056, 7
        %v6058 = vsub.s32 0, %v6057
        %v6059 = vrot.slane %v321, %v6058
        %v6060 = vsel %vm6048, %v6055, 0.0
        %v6061 = vsel %vm6049, %v6059, 0.0
        %v6062 = vsel %vm6050, %v6055, 0.0
        %v6063 = vsel %vm6051, %v6059, 0.0
        %v6064 = vadd.f32 %v6034, %v6060
        %v6065 = vadd.f32 %v6035, %v6061
        %v6066 = vadd.f32 %v6036, %v6062
        %v6067 = vadd.f32 %v6037, %v6063
        %v6068 = vlaneseq
        %v6069 = vshrl.u32 %v6068, 7
        %v6070 = vsub.s32 0, %v6069
        %v6071 = vrot.slane %v332, %v6070
        %v6072 = vlaneseq
        %v6073 = vshrl.u32 %v6072, 7
        %v6074 = vsub.s32 0, %v6073
        %v6075 = vrot.slane %v333, %v6074
        %vm6076 = vcmp.eq.s32.totalorder %v351, %v6071
        %vm6077 = vcmp.eq.s32.totalorder %v351, %v6075
        %vm6078 = vcmp.eq.s32.totalorder %v352, %v6071
        %vm6079 = vcmp.eq.s32.totalorder %v352, %v6075
        %v6080 = vlaneseq
        %v6081 = vshrl.u32 %v6080, 7
        %v6082 = vsub.s32 0, %v6081
        %v6083 = vrot.slane %v344, %v6082
        %v6084 = vlaneseq
        %v6085 = vshrl.u32 %v6084, 7
        %v6086 = vsub.s32 0, %v6085
        %v6087 = vrot.slane %v345, %v6086
        %v6088 = vsel %vm6076, %v6083, 0.0
        %v6089 = vsel %vm6077, %v6087, 0.0
        %v6090 = vsel %vm6078, %v6083, 0.0
        %v6091 = vsel %vm6079, %v6087, 0.0
        %v6092 = vadd.s32 %v332, 1
        %v6093 = vadd.s32 %v333, 1
        %v6094 = vlaneseq
        %v6095 = vshrl.u32 %v6094, 7
        %v6096 = vsub.s32 0, %v6095
        %v6097 = vrot.slane %v6092, %v6096
        %v6098 = vlaneseq
        %v6099 = vshrl.u32 %v6098, 7
        %v6100 = vsub.s32 0, %v6099
        %v6101 = vrot.slane %v6093, %v6100
        %vm6102 = vcmp.eq.s32.totalorder %v351, %v6097
        %vm6103 = vcmp.eq.s32.totalorder %v351, %v6101
        %vm6104 = vcmp.eq.s32.totalorder %v352, %v6097
        %vm6105 = vcmp.eq.s32.totalorder %v352, %v6101
        %v6106 = vlaneseq
        %v6107 = vshrl.u32 %v6106, 7
        %v6108 = vsub.s32 0, %v6107
        %v6109 = vrot.slane %v348, %v6108
        %v6110 = vlaneseq
        %v6111 = vshrl.u32 %v6110, 7
        %v6112 = vsub.s32 0, %v6111
        %v6113 = vrot.slane %v349, %v6112
        %v6114 = vsel %vm6102, %v6109, 0.0
        %v6115 = vsel %vm6103, %v6113, 0.0
        %v6116 = vsel %vm6104, %v6109, 0.0
        %v6117 = vsel %vm6105, %v6113, 0.0
        %v6118 = vadd.f32 %v6088, %v6114
        %v6119 = vadd.f32 %v6089, %v6115
        %v6120 = vadd.f32 %v6090, %v6116
        %v6121 = vadd.f32 %v6091, %v6117
        %v6122 = vpack.c.bf16 %v6066, %v6064
        %v6123 = vpack.c.bf16 %v6067, %v6065
        %6124 = vmatprep.subr.bf16.mxu0 %v6123
        %6125 = vmatpush1.bf16.msra.mxu0 %v6122
        %6126 = vmatprep.subr.bf16.mxu0 0
        %6127 = vmatpush1.bf16.msra.mxu0 0
        %6128 = vmatprep.subr.bf16.mxu0 0
        %6129 = vmatpush1.bf16.msra.mxu0 0
        %6130 = vmatprep.subr.bf16.mxu0 0
        %6131 = vmatpush1.bf16.msra.mxu0 0
        %6132 = vmatprep.subr.bf16.mxu0 0
        %6133 = vmatpush1.bf16.msra.mxu0 0
        %6134 = vmatprep.subr.bf16.mxu0 0
        %6135 = vmatpush1.bf16.msra.mxu0 0
        %6136 = vmatprep.subr.bf16.mxu0 0
        %6137 = vmatpush1.bf16.msra.mxu0 0
        %6138 = vmatprep.subr.bf16.mxu0 0
        %6139 = vmatpush1.bf16.msra.mxu0 0
        %6140 = vmatprep.subr.bf16.mxu0 0
        %6141 = vmatpush1.bf16.msra.mxu0 0
        %6142 = vmatprep.subr.bf16.mxu0 0
        %6143 = vmatpush1.bf16.msra.mxu0 0
        %6144 = vmatprep.subr.bf16.mxu0 0
        %6145 = vmatpush1.bf16.msra.mxu0 0
        %6146 = vmatprep.subr.bf16.mxu0 0
        %6147 = vmatpush1.bf16.msra.mxu0 0
        %6148 = vmatprep.subr.bf16.mxu0 0
        %6149 = vmatpush1.bf16.msra.mxu0 0
        %6150 = vmatprep.subr.bf16.mxu0 0
        %6151 = vmatpush1.bf16.msra.mxu0 0
        %6152 = vmatprep.subr.bf16.mxu0 0
        %6153 = vmatpush1.bf16.msra.mxu0 0
        %6154 = vmatprep.subr.bf16.mxu0 0
        %6155 = vmatpush1.bf16.msra.mxu0 0
        %6156 = vmatprep.mubr.bf16.mxu0 0
        %6157 = vmatmul.mubr.bf16.gmra.mrb[0].mxu0 %v545
        %v6158 = vpop.f32.mrb[0].mxu0
        %v6159 = vadd.f32 0.0, %v6158
        %v6160 = vpop.f32.mrb[0].mxu0
        %v6161 = vadd.f32 0.0, %v6160
        %v6162 = vpop.f32.mrb[0].mxu0
        %v6163 = vadd.f32 0.0, %v6162
        %v6164 = vpop.f32.mrb[0].mxu0
        %v6165 = vadd.f32 0.0, %v6164
        %6166 = vmatprep.mubr.bf16.mxu0 0
        %6167 = vmatmul.mubr.bf16.gmra.mrb[0].mxu0 %v548
        %v6168 = vpop.f32.mrb[0].mxu0
        %v6169 = vadd.f32 0.0, %v6168
        %v6170 = vpop.f32.mrb[0].mxu0
        %v6171 = vadd.f32 0.0, %v6170
        %v6172 = vpop.f32.mrb[0].mxu0
        %v6173 = vadd.f32 0.0, %v6172
        %v6174 = vpop.f32.mrb[0].mxu0
        %v6175 = vadd.f32 0.0, %v6174
        %6176 = vmatprep.mubr.bf16.mxu0 0
        %6177 = vmatmul.mubr.bf16.gmra.mrb[0].mxu0 %v551
        %v6178 = vpop.f32.mrb[0].mxu0
        %v6179 = vadd.f32 0.0, %v6178
        %v6180 = vpop.f32.mrb[0].mxu0
        %v6181 = vadd.f32 0.0, %v6180
        %v6182 = vpop.f32.mrb[0].mxu0
        %v6183 = vadd.f32 0.0, %v6182
        %v6184 = vpop.f32.mrb[0].mxu0
        %v6185 = vadd.f32 0.0, %v6184
        %6186 = vmatprep.mubr.bf16.mxu0 0
        %6187 = vmatmul.mubr.bf16.gmra.mrb[0].mxu0 %v554
        %v6188 = vpop.f32.mrb[0].mxu0
        %v6189 = vadd.f32 0.0, %v6188
        %v6190 = vpop.f32.mrb[0].mxu0
        %v6191 = vadd.f32 0.0, %v6190
        %v6192 = vpop.f32.mrb[0].mxu0
        %v6193 = vadd.f32 0.0, %v6192
        %v6194 = vpop.f32.mrb[0].mxu0
        %v6195 = vadd.f32 0.0, %v6194
        %6196 = vmatprep.mubr.bf16.mxu0 0
        %6197 = vmatmul.mubr.bf16.gmra.mrb[0].mxu0 %v557
        %v6198 = vpop.f32.mrb[0].mxu0
        %v6199 = vadd.f32 0.0, %v6198
        %v6200 = vpop.f32.mrb[0].mxu0
        %v6201 = vadd.f32 0.0, %v6200
        %v6202 = vpop.f32.mrb[0].mxu0
        %v6203 = vadd.f32 0.0, %v6202
        %v6204 = vpop.f32.mrb[0].mxu0
        %v6205 = vadd.f32 0.0, %v6204
        %6206 = vmatprep.mubr.bf16.mxu0 0
        %6207 = vmatmul.mubr.bf16.gmra.mrb[0].mxu0 %v560
        %v6208 = vpop.f32.mrb[0].mxu0
        %v6209 = vadd.f32 0.0, %v6208
        %v6210 = vpop.f32.mrb[0].mxu0
        %v6211 = vadd.f32 0.0, %v6210
        %v6212 = vpop.f32.mrb[0].mxu0
        %v6213 = vadd.f32 0.0, %v6212
        %v6214 = vpop.f32.mrb[0].mxu0
        %v6215 = vadd.f32 0.0, %v6214
        %6216 = vmatprep.mubr.bf16.mxu0 0
        %6217 = vmatmul.mubr.bf16.gmra.mrb[0].mxu0 %v563
        %v6218 = vpop.f32.mrb[0].mxu0
        %v6219 = vadd.f32 0.0, %v6218
        %v6220 = vpop.f32.mrb[0].mxu0
        %v6221 = vadd.f32 0.0, %v6220
        %v6222 = vpop.f32.mrb[0].mxu0
        %v6223 = vadd.f32 0.0, %v6222
        %v6224 = vpop.f32.mrb[0].mxu0
        %v6225 = vadd.f32 0.0, %v6224
        %6226 = vmatprep.mubr.bf16.mxu0 0
        %6227 = vmatmul.mubr.bf16.gmra.mrb[0].mxu0 %v566
        %v6228 = vpop.f32.mrb[0].mxu0
        %v6229 = vadd.f32 0.0, %v6228
        %v6230 = vpop.f32.mrb[0].mxu0
        %v6231 = vadd.f32 0.0, %v6230
        %v6232 = vpop.f32.mrb[0].mxu0
        %v6233 = vadd.f32 0.0, %v6232
        %v6234 = vpop.f32.mrb[0].mxu0
        %v6235 = vadd.f32 0.0, %v6234
        %6236 = vmatprep.mubr.bf16.mxu0 0
        %6237 = vmatmul.mubr.bf16.gmra.mrb[0].mxu0 %v569
        %v6238 = vpop.f32.mrb[0].mxu0
        %v6239 = vadd.f32 0.0, %v6238
        %v6240 = vpop.f32.mrb[0].mxu0
        %v6241 = vadd.f32 0.0, %v6240
        %v6242 = vpop.f32.mrb[0].mxu0
        %v6243 = vadd.f32 0.0, %v6242
        %v6244 = vpop.f32.mrb[0].mxu0
        %v6245 = vadd.f32 0.0, %v6244
        %6246 = vmatprep.mubr.bf16.mxu0 0
        %6247 = vmatmul.mubr.bf16.gmra.mrb[0].mxu0 %v572
        %v6248 = vpop.f32.mrb[0].mxu0
        %v6249 = vadd.f32 0.0, %v6248
        %v6250 = vpop.f32.mrb[0].mxu0
        %v6251 = vadd.f32 0.0, %v6250
        %v6252 = vpop.f32.mrb[0].mxu0
        %v6253 = vadd.f32 0.0, %v6252
        %v6254 = vpop.f32.mrb[0].mxu0
        %v6255 = vadd.f32 0.0, %v6254
        %6256 = vmatprep.mubr.bf16.mxu0 0
        %6257 = vmatmul.mubr.bf16.gmra.mrb[0].mxu0 %v575
        %v6258 = vpop.f32.mrb[0].mxu0
        %v6259 = vadd.f32 0.0, %v6258
        %v6260 = vpop.f32.mrb[0].mxu0
        %v6261 = vadd.f32 0.0, %v6260
        %v6262 = vpop.f32.mrb[0].mxu0
        %v6263 = vadd.f32 0.0, %v6262
        %v6264 = vpop.f32.mrb[0].mxu0
        %v6265 = vadd.f32 0.0, %v6264
        %6266 = vmatprep.mubr.bf16.mxu0 0
        %6267 = vmatmul.mubr.bf16.gmra.mrb[0].mxu0 %v578
        %v6268 = vpop.f32.mrb[0].mxu0
        %v6269 = vadd.f32 0.0, %v6268
        %v6270 = vpop.f32.mrb[0].mxu0
        %v6271 = vadd.f32 0.0, %v6270
        %v6272 = vpop.f32.mrb[0].mxu0
        %v6273 = vadd.f32 0.0, %v6272
        %v6274 = vpop.f32.mrb[0].mxu0
        %v6275 = vadd.f32 0.0, %v6274
        %6276 = vmatprep.mubr.bf16.mxu0 0
        %6277 = vmatmul.mubr.bf16.gmra.mrb[0].mxu0 %v581
        %v6278 = vpop.f32.mrb[0].mxu0
        %v6279 = vadd.f32 0.0, %v6278
        %v6280 = vpop.f32.mrb[0].mxu0
        %v6281 = vadd.f32 0.0, %v6280
        %v6282 = vpop.f32.mrb[0].mxu0
        %v6283 = vadd.f32 0.0, %v6282
        %v6284 = vpop.f32.mrb[0].mxu0
        %v6285 = vadd.f32 0.0, %v6284
        %6286 = vmatprep.mubr.bf16.mxu0 0
        %6287 = vmatmul.mubr.bf16.gmra.mrb[0].mxu0 %v584
        %v6288 = vpop.f32.mrb[0].mxu0
        %v6289 = vadd.f32 0.0, %v6288
        %v6290 = vpop.f32.mrb[0].mxu0
        %v6291 = vadd.f32 0.0, %v6290
        %v6292 = vpop.f32.mrb[0].mxu0
        %v6293 = vadd.f32 0.0, %v6292
        %v6294 = vpop.f32.mrb[0].mxu0
        %v6295 = vadd.f32 0.0, %v6294
        %6296 = vmatprep.mubr.bf16.mxu0 0
        %6297 = vmatmul.mubr.bf16.gmra.mrb[0].mxu0 %v587
        %v6298 = vpop.f32.mrb[0].mxu0
        %v6299 = vadd.f32 0.0, %v6298
        %v6300 = vpop.f32.mrb[0].mxu0
        %v6301 = vadd.f32 0.0, %v6300
        %v6302 = vpop.f32.mrb[0].mxu0
        %v6303 = vadd.f32 0.0, %v6302
        %v6304 = vpop.f32.mrb[0].mxu0
        %v6305 = vadd.f32 0.0, %v6304
        %6306 = vmatprep.mubr.bf16.mxu0 0
        %6307 = vmatmul.mubr.bf16.gmra.mrb[0].mxu0 %v590
        %v6308 = vpop.f32.mrb[0].mxu0
        %v6309 = vadd.f32 0.0, %v6308
        %v6310 = vpop.f32.mrb[0].mxu0
        %v6311 = vadd.f32 0.0, %v6310
        %v6312 = vpop.f32.mrb[0].mxu0
        %v6313 = vadd.f32 0.0, %v6312
        %v6314 = vpop.f32.mrb[0].mxu0
        %v6315 = vadd.f32 0.0, %v6314
        %6316 = vdwg.mxu0
        %v6321 = vcombine.low %v6118, %v6119
        %v6322 = vcombine.high %v6118, %v6119
        %v6324 = vunpack.c.l.s4 1966171168
        %v6325 = vunpack.c.0.s8 %v6324
        %v6326 = vlaneseq
        %v6327 = vshrl.u32 %v6326, 7
        %v6328 = vsub.s32 %v6325, %v6327
        %v6329 = vrot.slane %v6321, %v6328
        %v6331 = vunpack.c.l.s4 1966171168
        %v6332 = vunpack.c.0.s8 %v6331
        %v6333 = vlaneseq
        %v6334 = vshrl.u32 %v6333, 7
        %v6335 = vsub.s32 %v6332, %v6334
        %v6336 = vrot.slane %v6322, %v6335
        %v6337 = vcombine.high %v6329, %v6329
        %v6338 = vcombine.high %v6336, %v6336
        %v6340 = vunpack.c.l.s4 1966171168
        %v6341 = vunpack.c.0.s8 %v6340
        %v6342 = vlaneseq
        %v6343 = vshrl.u32 %v6342, 7
        %v6344 = vsub.s32 %v6341, %v6343
        %v6345 = vrot.slane %v6329, %v6344
        %v6347 = vunpack.c.l.s4 1966171168
        %v6348 = vunpack.c.0.s8 %v6347
        %v6349 = vlaneseq
        %v6350 = vshrl.u32 %v6349, 7
        %v6351 = vsub.s32 %v6348, %v6350
        %v6352 = vrot.slane %v6336, %v6351
        %v6354 = vunpack.c.l.s4 1966171168
        %v6355 = vunpack.c.0.s8 %v6354
        %v6356 = vlaneseq
        %v6357 = vshrl.u32 %v6356, 7
        %v6358 = vsub.s32 %v6355, %v6357
        %v6359 = vrot.slane %v6337, %v6358
        %v6361 = vunpack.c.l.s4 1966171168
        %v6362 = vunpack.c.0.s8 %v6361
        %v6363 = vlaneseq
        %v6364 = vshrl.u32 %v6363, 7
        %v6365 = vsub.s32 %v6362, %v6364
        %v6366 = vrot.slane %v6338, %v6365
        %v6367 = vcombine.high %v6345, %v6345
        %v6368 = vcombine.high %v6352, %v6352
        %v6369 = vcombine.high %v6359, %v6359
        %v6370 = vcombine.high %v6366, %v6366
        %v6371 = vcombine.low %v6120, %v6121
        %v6372 = vcombine.high %v6120, %v6121
        %v6374 = vunpack.c.l.s4 1966171168
        %v6375 = vunpack.c.0.s8 %v6374
        %v6376 = vlaneseq
        %v6377 = vshrl.u32 %v6376, 7
        %v6378 = vsub.s32 %v6375, %v6377
        %v6379 = vrot.slane %v6371, %v6378
        %v6381 = vunpack.c.l.s4 1966171168
        %v6382 = vunpack.c.0.s8 %v6381
        %v6383 = vlaneseq
        %v6384 = vshrl.u32 %v6383, 7
        %v6385 = vsub.s32 %v6382, %v6384
        %v6386 = vrot.slane %v6372, %v6385
        %v6387 = vcombine.high %v6379, %v6379
        %v6388 = vcombine.high %v6386, %v6386
        %v6390 = vunpack.c.l.s4 1966171168
        %v6391 = vunpack.c.0.s8 %v6390
        %v6392 = vlaneseq
        %v6393 = vshrl.u32 %v6392, 7
        %v6394 = vsub.s32 %v6391, %v6393
        %v6395 = vrot.slane %v6379, %v6394
        %v6397 = vunpack.c.l.s4 1966171168
        %v6398 = vunpack.c.0.s8 %v6397
        %v6399 = vlaneseq
        %v6400 = vshrl.u32 %v6399, 7
        %v6401 = vsub.s32 %v6398, %v6400
        %v6402 = vrot.slane %v6386, %v6401
        %v6404 = vunpack.c.l.s4 1966171168
        %v6405 = vunpack.c.0.s8 %v6404
        %v6406 = vlaneseq
        %v6407 = vshrl.u32 %v6406, 7
        %v6408 = vsub.s32 %v6405, %v6407
        %v6409 = vrot.slane %v6387, %v6408
        %v6411 = vunpack.c.l.s4 1966171168
        %v6412 = vunpack.c.0.s8 %v6411
        %v6413 = vlaneseq
        %v6414 = vshrl.u32 %v6413, 7
        %v6415 = vsub.s32 %v6412, %v6414
        %v6416 = vrot.slane %v6388, %v6415
        %v6417 = vcombine.high %v6395, %v6395
        %v6418 = vcombine.high %v6402, %v6402
        %v6419 = vcombine.high %v6409, %v6409
        %v6420 = vcombine.high %v6416, %v6416
        %v6421 = vlaneseq
        %v6422 = vshrl.u32 %v6421, 7
        %v6423 = vsub.s32 0, %v6422
        %v6424 = vrot.slane %v6345, %v6423
        %v6425 = vlaneseq
        %v6426 = vshrl.u32 %v6425, 7
        %v6427 = vsub.s32 1, %v6426
        %v6428 = vrot.slane %v6345, %v6427
        %v6429 = vlaneseq
        %v6430 = vshrl.u32 %v6429, 7
        %v6431 = vsub.s32 0, %v6430
        %v6432 = vrot.slane %v6359, %v6431
        %v6433 = vlaneseq
        %v6434 = vshrl.u32 %v6433, 7
        %v6435 = vsub.s32 1, %v6434
        %v6436 = vrot.slane %v6359, %v6435
        %v6437 = vlaneseq
        %v6438 = vshrl.u32 %v6437, 7
        %v6439 = vsub.s32 0, %v6438
        %v6440 = vrot.slane %v6367, %v6439
        %v6441 = vlaneseq
        %v6442 = vshrl.u32 %v6441, 7
        %v6443 = vsub.s32 1, %v6442
        %v6444 = vrot.slane %v6367, %v6443
        %v6445 = vlaneseq
        %v6446 = vshrl.u32 %v6445, 7
        %v6447 = vsub.s32 0, %v6446
        %v6448 = vrot.slane %v6369, %v6447
        %v6449 = vlaneseq
        %v6450 = vshrl.u32 %v6449, 7
        %v6451 = vsub.s32 1, %v6450
        %v6452 = vrot.slane %v6369, %v6451
        %v6453 = vlaneseq
        %v6454 = vshrl.u32 %v6453, 7
        %v6455 = vsub.s32 0, %v6454
        %v6456 = vrot.slane %v6352, %v6455
        %v6457 = vlaneseq
        %v6458 = vshrl.u32 %v6457, 7
        %v6459 = vsub.s32 1, %v6458
        %v6460 = vrot.slane %v6352, %v6459
        %v6461 = vlaneseq
        %v6462 = vshrl.u32 %v6461, 7
        %v6463 = vsub.s32 0, %v6462
        %v6464 = vrot.slane %v6366, %v6463
        %v6465 = vlaneseq
        %v6466 = vshrl.u32 %v6465, 7
        %v6467 = vsub.s32 1, %v6466
        %v6468 = vrot.slane %v6366, %v6467
        %v6469 = vlaneseq
        %v6470 = vshrl.u32 %v6469, 7
        %v6471 = vsub.s32 0, %v6470
        %v6472 = vrot.slane %v6368, %v6471
        %v6473 = vlaneseq
        %v6474 = vshrl.u32 %v6473, 7
        %v6475 = vsub.s32 1, %v6474
        %v6476 = vrot.slane %v6368, %v6475
        %v6477 = vlaneseq
        %v6478 = vshrl.u32 %v6477, 7
        %v6479 = vsub.s32 0, %v6478
        %v6480 = vrot.slane %v6370, %v6479
        %v6481 = vlaneseq
        %v6482 = vshrl.u32 %v6481, 7
        %v6483 = vsub.s32 1, %v6482
        %v6484 = vrot.slane %v6370, %v6483
        %v6485 = vlaneseq
        %v6486 = vshrl.u32 %v6485, 7
        %v6487 = vsub.s32 0, %v6486
        %v6488 = vrot.slane %v6395, %v6487
        %v6489 = vlaneseq
        %v6490 = vshrl.u32 %v6489, 7
        %v6491 = vsub.s32 1, %v6490
        %v6492 = vrot.slane %v6395, %v6491
        %v6493 = vlaneseq
        %v6494 = vshrl.u32 %v6493, 7
        %v6495 = vsub.s32 0, %v6494
        %v6496 = vrot.slane %v6409, %v6495
        %v6497 = vlaneseq
        %v6498 = vshrl.u32 %v6497, 7
        %v6499 = vsub.s32 1, %v6498
        %v6500 = vrot.slane %v6409, %v6499
        %v6501 = vlaneseq
        %v6502 = vshrl.u32 %v6501, 7
        %v6503 = vsub.s32 0, %v6502
        %v6504 = vrot.slane %v6417, %v6503
        %v6505 = vlaneseq
        %v6506 = vshrl.u32 %v6505, 7
        %v6507 = vsub.s32 1, %v6506
        %v6508 = vrot.slane %v6417, %v6507
        %v6509 = vlaneseq
        %v6510 = vshrl.u32 %v6509, 7
        %v6511 = vsub.s32 0, %v6510
        %v6512 = vrot.slane %v6419, %v6511
        %v6513 = vlaneseq
        %v6514 = vshrl.u32 %v6513, 7
        %v6515 = vsub.s32 1, %v6514
        %v6516 = vrot.slane %v6419, %v6515
        %v6517 = vlaneseq
        %v6518 = vshrl.u32 %v6517, 7
        %v6519 = vsub.s32 0, %v6518
        %v6520 = vrot.slane %v6402, %v6519
        %v6521 = vlaneseq
        %v6522 = vshrl.u32 %v6521, 7
        %v6523 = vsub.s32 1, %v6522
        %v6524 = vrot.slane %v6402, %v6523
        %v6525 = vlaneseq
        %v6526 = vshrl.u32 %v6525, 7
        %v6527 = vsub.s32 0, %v6526
        %v6528 = vrot.slane %v6416, %v6527
        %v6529 = vlaneseq
        %v6530 = vshrl.u32 %v6529, 7
        %v6531 = vsub.s32 1, %v6530
        %v6532 = vrot.slane %v6416, %v6531
        %v6533 = vlaneseq
        %v6534 = vshrl.u32 %v6533, 7
        %v6535 = vsub.s32 0, %v6534
        %v6536 = vrot.slane %v6418, %v6535
        %v6537 = vlaneseq
        %v6538 = vshrl.u32 %v6537, 7
        %v6539 = vsub.s32 1, %v6538
        %v6540 = vrot.slane %v6418, %v6539
        %v6541 = vlaneseq
        %v6542 = vshrl.u32 %v6541, 7
        %v6543 = vsub.s32 0, %v6542
        %v6544 = vrot.slane %v6420, %v6543
        %v6545 = vlaneseq
        %v6546 = vshrl.u32 %v6545, 7
        %v6547 = vsub.s32 1, %v6546
        %v6548 = vrot.slane %v6420, %v6547
        %v6581 = vmul.f32 %v6159, %v6424
        %v6582 = vmul.f32 %v6161, %v6428
        %v6583 = vmul.f32 %v6163, %v6424
        %v6584 = vmul.f32 %v6165, %v6428
        %v6585 = vmul.f32 %v6169, %v6432
        %v6586 = vmul.f32 %v6171, %v6436
        %v6587 = vmul.f32 %v6173, %v6432
        %v6588 = vmul.f32 %v6175, %v6436
        %v6589 = vmul.f32 %v6179, %v6440
        %v6590 = vmul.f32 %v6181, %v6444
        %v6591 = vmul.f32 %v6183, %v6440
        %v6592 = vmul.f32 %v6185, %v6444
        %v6593 = vmul.f32 %v6189, %v6448
        %v6594 = vmul.f32 %v6191, %v6452
        %v6595 = vmul.f32 %v6193, %v6448
        %v6596 = vmul.f32 %v6195, %v6452
        %v6597 = vmul.f32 %v6199, %v6456
        %v6598 = vmul.f32 %v6201, %v6460
        %v6599 = vmul.f32 %v6203, %v6456
        %v6600 = vmul.f32 %v6205, %v6460
        %v6601 = vmul.f32 %v6209, %v6464
        %v6602 = vmul.f32 %v6211, %v6468
        %v6603 = vmul.f32 %v6213, %v6464
        %v6604 = vmul.f32 %v6215, %v6468
        %v6605 = vmul.f32 %v6219, %v6472
        %v6606 = vmul.f32 %v6221, %v6476
        %v6607 = vmul.f32 %v6223, %v6472
        %v6608 = vmul.f32 %v6225, %v6476
        %v6609 = vmul.f32 %v6229, %v6480
        %v6610 = vmul.f32 %v6231, %v6484
        %v6611 = vmul.f32 %v6233, %v6480
        %v6612 = vmul.f32 %v6235, %v6484
        %v6613 = vmul.f32 %v6239, %v6488
        %v6614 = vmul.f32 %v6241, %v6492
        %v6615 = vmul.f32 %v6243, %v6488
        %v6616 = vmul.f32 %v6245, %v6492
        %v6617 = vmul.f32 %v6249, %v6496
        %v6618 = vmul.f32 %v6251, %v6500
        %v6619 = vmul.f32 %v6253, %v6496
        %v6620 = vmul.f32 %v6255, %v6500
        %v6621 = vmul.f32 %v6259, %v6504
        %v6622 = vmul.f32 %v6261, %v6508
        %v6623 = vmul.f32 %v6263, %v6504
        %v6624 = vmul.f32 %v6265, %v6508
        %v6625 = vmul.f32 %v6269, %v6512
        %v6626 = vmul.f32 %v6271, %v6516
        %v6627 = vmul.f32 %v6273, %v6512
        %v6628 = vmul.f32 %v6275, %v6516
        %v6629 = vmul.f32 %v6279, %v6520
        %v6630 = vmul.f32 %v6281, %v6524
        %v6631 = vmul.f32 %v6283, %v6520
        %v6632 = vmul.f32 %v6285, %v6524
        %v6633 = vmul.f32 %v6289, %v6528
        %v6634 = vmul.f32 %v6291, %v6532
        %v6635 = vmul.f32 %v6293, %v6528
        %v6636 = vmul.f32 %v6295, %v6532
        %v6637 = vmul.f32 %v6299, %v6536
        %v6638 = vmul.f32 %v6301, %v6540
        %v6639 = vmul.f32 %v6303, %v6536
        %v6640 = vmul.f32 %v6305, %v6540
        %v6641 = vmul.f32 %v6309, %v6544
        %v6642 = vmul.f32 %v6311, %v6548
        %v6643 = vmul.f32 %v6313, %v6544
        %v6644 = vmul.f32 %v6315, %v6548
        %v6645 = vadd.f32 %v6581, %v6585
        %v6646 = vadd.f32 %v6645, %v6589
        %v6647 = vadd.f32 %v6646, %v6593
        %v6648 = vadd.f32 %v6647, %v6597
        %v6649 = vadd.f32 %v6648, %v6601
        %v6650 = vadd.f32 %v6649, %v6605
        %v6651 = vadd.f32 %v6650, %v6609
        %v6652 = vadd.f32 %v6651, %v6613
        %v6653 = vadd.f32 %v6652, %v6617
        %v6654 = vadd.f32 %v6653, %v6621
        %v6655 = vadd.f32 %v6654, %v6625
        %v6656 = vadd.f32 %v6655, %v6629
        %v6657 = vadd.f32 %v6656, %v6633
        %v6658 = vadd.f32 %v6657, %v6637
        %v6659 = vadd.f32 %v6658, %v6641
        %v6660 = vadd.f32 %v6582, %v6586
        %v6661 = vadd.f32 %v6660, %v6590
        %v6662 = vadd.f32 %v6661, %v6594
        %v6663 = vadd.f32 %v6662, %v6598
        %v6664 = vadd.f32 %v6663, %v6602
        %v6665 = vadd.f32 %v6664, %v6606
        %v6666 = vadd.f32 %v6665, %v6610
        %v6667 = vadd.f32 %v6666, %v6614
        %v6668 = vadd.f32 %v6667, %v6618
        %v6669 = vadd.f32 %v6668, %v6622
        %v6670 = vadd.f32 %v6669, %v6626
        %v6671 = vadd.f32 %v6670, %v6630
        %v6672 = vadd.f32 %v6671, %v6634
        %v6673 = vadd.f32 %v6672, %v6638
        %v6674 = vadd.f32 %v6673, %v6642
        %v6675 = vadd.f32 %v6583, %v6587
        %v6676 = vadd.f32 %v6675, %v6591
        %v6677 = vadd.f32 %v6676, %v6595
        %v6678 = vadd.f32 %v6677, %v6599
        %v6679 = vadd.f32 %v6678, %v6603
        %v6680 = vadd.f32 %v6679, %v6607
        %v6681 = vadd.f32 %v6680, %v6611
        %v6682 = vadd.f32 %v6681, %v6615
        %v6683 = vadd.f32 %v6682, %v6619
        %v6684 = vadd.f32 %v6683, %v6623
        %v6685 = vadd.f32 %v6684, %v6627
        %v6686 = vadd.f32 %v6685, %v6631
        %v6687 = vadd.f32 %v6686, %v6635
        %v6688 = vadd.f32 %v6687, %v6639
        %v6689 = vadd.f32 %v6688, %v6643
        %v6690 = vadd.f32 %v6584, %v6588
        %v6691 = vadd.f32 %v6690, %v6592
        %v6692 = vadd.f32 %v6691, %v6596
        %v6693 = vadd.f32 %v6692, %v6600
        %v6694 = vadd.f32 %v6693, %v6604
        %v6695 = vadd.f32 %v6694, %v6608
        %v6696 = vadd.f32 %v6695, %v6612
        %v6697 = vadd.f32 %v6696, %v6616
        %v6698 = vadd.f32 %v6697, %v6620
        %v6699 = vadd.f32 %v6698, %v6624
        %v6700 = vadd.f32 %v6699, %v6628
        %v6701 = vadd.f32 %v6700, %v6632
        %v6702 = vadd.f32 %v6701, %v6636
        %v6703 = vadd.f32 %v6702, %v6640
        %v6704 = vadd.f32 %v6703, %v6644
        %v6705 = vpack.c.bf16 %v6689, %v6659
        %v6706 = vpack.c.bf16 %v6704, %v6674
        %6707 = vst [vmem:[#allocation2 + $0x80] sm:$0xff] %v6705
        %6708 = vst [vmem:[#allocation2 + $0x88] sm:$0xff] %v6706
        %v6709 = vld [vmem:[%s2] sm:$0xff]
        %v6710 = vld [vmem:[#allocation2] sm:$0xff]
        %v6711 = vld [vmem:[#allocation2 + $0x8] sm:$0xff]
        %v6712 = vld [vmem:[#allocation2 + $0x10] sm:$0xff]
        %v6713 = vld [vmem:[#allocation2 + $0x18] sm:$0xff]
        %v6714 = vld [vmem:[#allocation2 + $0x20] sm:$0xff]
        %v6715 = vld [vmem:[#allocation2 + $0x28] sm:$0xff]
        %v6716 = vld [vmem:[#allocation2 + $0x30] sm:$0xff]
        %v6717 = vld [vmem:[#allocation2 + $0x38] sm:$0xff]
        %v6718 = vld [vmem:[#allocation2 + $0x40] sm:$0xff]
        %v6719 = vld [vmem:[#allocation2 + $0x48] sm:$0xff]
        %v6720 = vld [vmem:[#allocation2 + $0x50] sm:$0xff]
        %v6721 = vld [vmem:[#allocation2 + $0x58] sm:$0xff]
        %v6722 = vld [vmem:[#allocation2 + $0x60] sm:$0xff]
        %v6723 = vld [vmem:[#allocation2 + $0x68] sm:$0xff]
        %v6724 = vld [vmem:[#allocation2 + $0x70] sm:$0xff]
        %v6725 = vld [vmem:[#allocation2 + $0x78] sm:$0xff]
        %v6726 = vld [vmem:[#allocation2 + $0x80] sm:$0xff]
        %v6727 = vld [vmem:[#allocation2 + $0x88] sm:$0xff]
        %v6728 = vld [vmem:[%s3] sm:$0xff]
        %6730 = vset.pattern.permute.xlu0 0
        %6731 = vperm.xlu0 %6730, %v6728
        %v6732 = vpop.permute.xlu0 %6731
        %v6735 = vunpack.c.l.b16 %v6709
        %v6736 = vunpack.c.h.b16 %v6709
        %v6737 = vpack.c.b16 %v6735, %v6735
        %v6738 = vpack.c.b16 %v6736, %v6736
        %v6741 = vsel %vm543, %v6738, 0
        %6743 = vmatprep.subr.bf16.mxu0 %v6711
        %6744 = vmatpush1.bf16.msra.mxu0 %v6710
        %6745 = vmatprep.subr.bf16.mxu0 %v6713
        %6746 = vmatpush1.bf16.msra.mxu0 %v6712
        %6747 = vmatprep.subr.bf16.mxu0 %v6715
        %6748 = vmatpush1.bf16.msra.mxu0 %v6714
        %6749 = vmatprep.subr.bf16.mxu0 %v6717
        %6750 = vmatpush1.bf16.msra.mxu0 %v6716
        %6751 = vmatprep.subr.bf16.mxu0 %v6719
        %6752 = vmatpush1.bf16.msra.mxu0 %v6718
        %6753 = vmatprep.subr.bf16.mxu0 %v6721
        %6754 = vmatpush1.bf16.msra.mxu0 %v6720
        %6755 = vmatprep.subr.bf16.mxu0 %v6723
        %6756 = vmatpush1.bf16.msra.mxu0 %v6722
        %6757 = vmatprep.subr.bf16.mxu0 %v6725
        %6758 = vmatpush1.bf16.msra.mxu0 %v6724
        %6759 = vmatprep.subr.bf16.mxu0 %v6727
        %6760 = vmatpush1.bf16.msra.mxu0 %v6726
        %6761 = vmatprep.subr.bf16.mxu0 0
        %6762 = vmatpush1.bf16.msra.mxu0 0
        %6763 = vmatprep.subr.bf16.mxu0 0
        %6764 = vmatpush1.bf16.msra.mxu0 0
        %6765 = vmatprep.subr.bf16.mxu0 0
        %6766 = vmatpush1.bf16.msra.mxu0 0
        %6767 = vmatprep.subr.bf16.mxu0 0
        %6768 = vmatpush1.bf16.msra.mxu0 0
        %6769 = vmatprep.subr.bf16.mxu0 0
        %6770 = vmatpush1.bf16.msra.mxu0 0
        %6771 = vmatprep.subr.bf16.mxu0 0
        %6772 = vmatpush1.bf16.msra.mxu0 0
        %6773 = vmatprep.subr.bf16.mxu0 0
        %6774 = vmatpush1.bf16.msra.mxu0 0
        %6775 = vmatprep.mubr.bf16.mxu0 %v6741
        %6776 = vmatmul.mubr.bf16.gmra.mrb[0].mxu0 %v6737
        %v6777 = vpop.f32.mrb[0].mxu0
        %v6778 = vadd.f32 %v6732, %v6777
        %v6779 = vpop.f32.mrb[0].mxu0
        %v6780 = vadd.f32 %v6732, %v6779
        %v6781 = vpop.f32.mrb[0].mxu0
        %v6782 = vpop.f32.mrb[0].mxu0
        %6783 = vdwg.mxu0
        %6784 = vst [vmem:[%s230] sm:$0xff] %v6778
        %6785 = vst [vmem:[%s230 + $0x8] sm:$0xff] %v6780
        %s6786 = sand.u32 %s136, 1
        %s6787 = scalar_lea.sflag [#allocation4], %s6786
        %s6788 = sand.u32 %s136, 1
        %s6789 = smul.addr %s6788, 16
        %s6790 = scalar_lea.vmem [#allocation3], %s6789
        // Predicated region
        $region37: #{tpu_custom_call.1} parent=35 // pred_check
          %p6791 = pneg %p146
        $region38: #{tpu_custom_call.1} parent=35 // pred_check_branch
          %6793 = sbr.rel (%p6791) target = $region40
        $region39: #{tpu_custom_call.1} parent=35 // pred_region
          %s6794 = smul.u32 2, %s23
          %s6796 = ssub.s32 256, 256
          %6797 = vsyncadd %s6787, %s6796
          %s6798 = smul.addr %s22, 2
          %s6799 = sadd.s32 %s6794, %s6798
          %s6800 = smul.addr %s6799, 128
          %s6801 = scalar_lea.hbm %s4, %s6800
          %s6803 = sshll.u32 %s6790, 4
          %s6804 = int_to_ptr.vmem [resolvable:$true] %s6803
          %6806 = dma.vmem_to_hbm [thread:$0]  %s6804, 256, %s6801, %s6787
        $region40: #{tpu_custom_call.1} parent=35 // pred_fallthru
          _
      $region36: #{tpu_custom_call.1} parent=5 // pred_fallthru
        _
      %p6807 = scmp.le.s32.totalorder 2, %s13
      // Predicated region
      $region41: #{tpu_custom_call.1} parent=5 // pred_check
        %p6808 = pneg %p6807
      $region42: #{tpu_custom_call.1} parent=5 // pred_check_branch
        %6810 = sbr.rel (%p6808) target = $region44
      $region43: #{tpu_custom_call.1} parent=5 // pred_region
        %s6811 = ssub.s32 %s13, 2
        // Predicated region
        $region45: #{tpu_custom_call.1} parent=43 // pred_check
          %p6812 = pneg %p152
        $region46: #{tpu_custom_call.1} parent=43 // pred_check_branch
          %6814 = sbr.rel (%p6812) target = $region48
        $region47: #{tpu_custom_call.1} parent=43 // pred_region
          %s6815 = sand.u32 %s137, 1
          %s6816 = scalar_lea.sflag [#allocation4], %s6815
          %s6817 = sand.u32 %s137, 1
          %s6818 = smul.addr %s6817, 16
          %s6819 = scalar_lea.vmem [#allocation3], %s6818
          %6820 = dma.done %s6816, 256
        $region48: #{tpu_custom_call.1} parent=43 // pred_fallthru
          _
      $region44: #{tpu_custom_call.1} parent=5 // pred_fallthru
        _
    $region6: #{tpu_custom_call.1} parent=1 // loop_footer
      %s17 = sadd.s32 1, %s13
    $region7: #{tpu_custom_call.1} parent=1 // loop_footer_branch
      %12 = sbr.rel target = $region3
    $region8: #{tpu_custom_call.1} parent=1 // loop_exit
      _
    %6821 = vsyncpa [#allocation4], 1
    %s6822 = scalar_lea.sflag [#allocation4], 1
    %6823 = vsyncpa %s6822, 1

</llo_original>
